<compile_context>
chip_gen: v6e
topology: v6e:2x2x1
jax: 0.10.0
libtpu: 0.0.40
codegen_flags: <defaults>
</compile_context>

<pallas_src>
import functools
import math

import jax
import jax.numpy as jnp
from jax import lax
from jax.experimental import pallas as pl
from jax.experimental.pallas import tpu as pltpu

LN_EPS = 1e-6
NEG_INF = -1e30                      # finite masked logit (avoids -inf - -inf = NaN)


def _vmem_limit_bytes():
    """Generation-specific scoped-VMEM limit (v7x: ~48 MiB, v5e/v6e: 96 MiB)."""
    try:
        cap = int(pltpu.get_tpu_info().vmem_capacity_bytes)
        return int(min(cap * 3 // 4, 96 * 1024 * 1024))
    except Exception:
        return 32 * 1024 * 1024


VMEM_LIMIT = _vmem_limit_bytes()
# budget under which a whole (bf16) weight matrix is kept VMEM-resident
WEIGHT_RESIDENT_BYTES = min(16 * 1024 * 1024, VMEM_LIMIT // 3)

_ROW_TILES = (256, 128, 64, 32, 16, 8)   # second-to-last dim (multiples of 8)
_LANE_TILES = (512, 256, 128)            # last dim (multiples of 128, 256-biased)
_KV_TILES = (256, 128)                   # KV-sequence tile for attention


def _pick_tile(dim, candidates):
    """Largest candidate tile that evenly divides dim, else the full dim."""
    for c in candidates:
        if c <= dim and dim % c == 0:
            return c
    return dim


def _cparams(dimension_semantics):
    return pltpu.CompilerParams(dimension_semantics=dimension_semantics,
                                vmem_limit_bytes=VMEM_LIMIT)


# --------------------------------------------------------------------------- #
# Kernel 1: (optional LN) -> matmul -> (+bias, optional relu, optional residual)
# --------------------------------------------------------------------------- #

def _matmul_kernel(*refs, apply_ln, activation, add_residual):
    idx = 0
    x_ref = refs[idx]; idx += 1
    if apply_ln:
        g_ref, bt_ref = refs[idx], refs[idx + 1]; idx += 2
    w_ref, b_ref = refs[idx], refs[idx + 1]; idx += 2
    r_ref = refs[idx] if add_residual else None
    o_ref = refs[-1]

    x = x_ref[...].astype(jnp.float32)
    if apply_ln:
        mean = jnp.mean(x, axis=-1, keepdims=True)
        var = jnp.mean(jnp.square(x - mean), axis=-1, keepdims=True)
        x = (x - mean) * lax.rsqrt(var + LN_EPS)
        x = x * g_ref[...].astype(jnp.float32) + bt_ref[...].astype(jnp.float32)

    y = jnp.dot(x.astype(jnp.bfloat16), w_ref[...].astype(jnp.bfloat16),
                preferred_element_type=jnp.float32)
    y = y + b_ref[...].astype(jnp.float32)
    if activation == "relu":
        y = jnp.maximum(y, 0.0)
    if add_residual:
        y = y + r_ref[...].astype(jnp.float32)
    o_ref[...] = y.astype(o_ref.dtype)


def fused_linear(x2d, w, b, *, gamma=None, beta=None, residual=None,
                 activation="none", out_dtype=jnp.bfloat16):
    """out = [LN(x)] @ W + b  [+relu] [+residual];  x2d: (M, K), W: (K, N)."""
    M, K = x2d.shape
    N = w.shape[1]
    tm = _pick_tile(M, _ROW_TILES)
    # keep the whole weight VMEM-resident when it fits -> fetched once, and
    # LN is computed once per row tile (single N tile).
    tn = N if 2 * K * N <= WEIGHT_RESIDENT_BYTES else _pick_tile(N, _LANE_TILES)
    apply_ln = gamma is not None
    add_res = residual is not None

    args = [x2d]
    in_specs = [pl.BlockSpec((tm, K), lambda i, j: (i, 0))]
    if apply_ln:
        args += [gamma.reshape(1, K), beta.reshape(1, K)]
        in_specs += [pl.BlockSpec((1, K), lambda i, j: (0, 0)),
                     pl.BlockSpec((1, K), lambda i, j: (0, 0))]
    args += [w, b.reshape(1, N)]
    in_specs += [pl.BlockSpec((K, tn), lambda i, j: (0, j)),
                 pl.BlockSpec((1, tn), lambda i, j: (0, j))]
    if add_res:
        args.append(residual)
        in_specs.append(pl.BlockSpec((tm, tn), lambda i, j: (i, j)))

    kernel = functools.partial(_matmul_kernel, apply_ln=apply_ln,
                               activation=activation, add_residual=add_res)
    return pl.pallas_call(
        kernel,
        out_shape=jax.ShapeDtypeStruct((M, N), out_dtype),
        grid=(M // tm, N // tn),
        in_specs=in_specs,
        out_specs=pl.BlockSpec((tm, tn), lambda i, j: (i, j)),
        compiler_params=_cparams(("parallel", "parallel")),
    )(*args)


# --------------------------------------------------------------------------- #
# Kernel 2: fused feed-forward block: LN -> W1 -> ReLU -> W2 (+b2, +residual)
#           FF axis is a reduction grid axis; LN result cached in VMEM scratch.
# --------------------------------------------------------------------------- #

def _ffn_kernel(x_ref, g_ref, bt_ref, w1_ref, b1_ref, w2_ref, b2_ref,
                o_ref, xn_sc, acc_ref):
    j = pl.program_id(1)

    @pl.when(j == 0)
    def _():
        x = x_ref[...].astype(jnp.float32)
        mean = jnp.mean(x, axis=-1, keepdims=True)
        var = jnp.mean(jnp.square(x - mean), axis=-1, keepdims=True)
        xn = (x - mean) * lax.rsqrt(var + LN_EPS)
        xn = xn * g_ref[...].astype(jnp.float32) + bt_ref[...].astype(jnp.float32)
        xn_sc[...] = xn.astype(jnp.bfloat16)      # computed once per row tile
        acc_ref[...] = jnp.zeros_like(acc_ref)

    h = jnp.dot(xn_sc[...], w1_ref[...].astype(jnp.bfloat16),
                preferred_element_type=jnp.float32)
    h = jnp.maximum(h + b1_ref[...].astype(jnp.float32), 0.0)
    acc_ref[...] += jnp.dot(h.astype(jnp.bfloat16), w2_ref[...].astype(jnp.bfloat16),
                            preferred_element_type=jnp.float32)

    @pl.when(j == pl.num_programs(1) - 1)
    def _():
        o_ref[...] = (acc_ref[...] + b2_ref[...].astype(jnp.float32)
                      + x_ref[...].astype(jnp.float32)).astype(o_ref.dtype)


def fused_ffn(x2d, gamma, beta, w1, b1, w2, b2, *, out_dtype=jnp.bfloat16):
    M, H = x2d.shape
    FF = w1.shape[1]
    tm = _pick_tile(M, _ROW_TILES)
    # keep W1 + W2 (bf16) VMEM-resident when they fit -> single FF tile,
    # weights streamed from HBM once instead of once per row tile.
    if 4 * H * FF <= WEIGHT_RESIDENT_BYTES:
        tf = FF
    else:
        tf = _pick_tile(FF, _LANE_TILES)
    return pl.pallas_call(
        _ffn_kernel,
        out_shape=jax.ShapeDtypeStruct((M, H), out_dtype),
        grid=(M // tm, FF // tf),
        in_specs=[
            pl.BlockSpec((tm, H), lambda i, j: (i, 0)),
            pl.BlockSpec((1, H), lambda i, j: (0, 0)),
            pl.BlockSpec((1, H), lambda i, j: (0, 0)),
            pl.BlockSpec((H, tf), lambda i, j: (0, j)),
            pl.BlockSpec((1, tf), lambda i, j: (0, j)),
            pl.BlockSpec((tf, H), lambda i, j: (j, 0)),
            pl.BlockSpec((1, H), lambda i, j: (0, 0)),
        ],
        out_specs=pl.BlockSpec((tm, H), lambda i, j: (i, 0)),
        scratch_shapes=[pltpu.VMEM((tm, H), jnp.bfloat16),   # cached LN(x)
                        pltpu.VMEM((tm, H), jnp.float32)],   # f32 accumulator
        compiler_params=_cparams(("parallel", "arbitrary")),
    )(x2d, gamma.reshape(1, H), beta.reshape(1, H),
      w1, b1.reshape(1, FF), w2, b2.reshape(1, H))


# --------------------------------------------------------------------------- #
# Kernel 3: flash-style multi-head attention core (online softmax over KV).
#           Heads are a grid axis; per-head Q/K/V blocks are selected directly
#           from the fused QKV / KV projection arrays via the BlockSpec
#           index_map, and the output store is one lane-dense block per step.
# --------------------------------------------------------------------------- #

def _flash_attn_kernel(kmask_ref, q_ref, k_ref, v_ref, o_ref,
                       m_sc, l_sc, acc_sc, *,
                       causal, q_blk, kv_blk, head_dim, heads_per_blk):
    qi = pl.program_id(2)
    ki = pl.program_id(3)

    @pl.when(ki == 0)
    def _init():
        m_sc[...] = jnp.full_like(m_sc, NEG_INF)
        l_sc[...] = jnp.zeros_like(l_sc)
        acc_sc[...] = jnp.zeros_like(acc_sc)

    def _compute():
        # key-validity (padding) mask for this KV block, shape (1, kv_blk)
        kvalid = kmask_ref[0] > 0
        if causal:
            q_pos = qi * q_blk + lax.broadcasted_iota(jnp.int32, (q_blk, kv_blk), 0)
            k_pos = ki * kv_blk + lax.broadcasted_iota(jnp.int32, (q_blk, kv_blk), 1)
            mask2d = jnp.logical_and(k_pos <= q_pos, kvalid)
        else:
            mask2d = jnp.broadcast_to(kvalid, (q_blk, kv_blk))

        # softmax scale is folded into Wq/bq; single cast before the head loop
        q_all = q_ref[0].astype(jnp.bfloat16)   # (q_blk,  heads_per_blk*Dh)
        k_all = k_ref[0].astype(jnp.bfloat16)   # (kv_blk, heads_per_blk*Dh)
        v_all = v_ref[0].astype(jnp.bfloat16)   # (kv_blk, heads_per_blk*Dh)

        for hh in range(heads_per_blk):          # == 1 when head_dim is 128-aligned
            if heads_per_blk > 1:
                lo, hi = hh * head_dim, (hh + 1) * head_dim
                q_h, k_h, v_h = q_all[:, lo:hi], k_all[:, lo:hi], v_all[:, lo:hi]
            else:
                q_h, k_h, v_h = q_all, k_all, v_all

            # scores = q @ k^T via contraction on head_dim (no explicit transpose)
            s = lax.dot_general(q_h, k_h, (((1,), (1,)), ((), ())),
                                preferred_element_type=jnp.float32)
            s = jnp.where(mask2d, s, NEG_INF)

            m_prev = m_sc[hh]                                         # (q_blk, 1)
            m_new = jnp.maximum(m_prev, jnp.max(s, axis=-1, keepdims=True))
            alpha = jnp.exp(m_prev - m_new)
            p = jnp.exp(s - m_new)
            l_sc[hh] = alpha * l_sc[hh] + jnp.sum(p, axis=-1, keepdims=True)
            acc_sc[hh] = alpha * acc_sc[hh] + jnp.dot(
                p.astype(jnp.bfloat16), v_h, preferred_element_type=jnp.float32)
            m_sc[hh] = m_new

    if causal:
        # skip KV blocks that are entirely in the future of this query block
        @pl.when(ki * kv_blk <= qi * q_blk + (q_blk - 1))
        def _():
            _compute()
    else:
        _compute()

    @pl.when(ki == pl.num_programs(3) - 1)
    def _finalize():
        outs = []
        for hh in range(heads_per_blk):
            inv_l = pl.reciprocal(l_sc[hh], approx=True)              # EUP slot
            outs.append(acc_sc[hh] * inv_l)
        out = outs[0] if heads_per_blk == 1 else jnp.concatenate(outs, axis=-1)
        o_ref[0] = out.astype(o_ref.dtype)                            # one dense store


def flash_attention(q_src, k_src, v_src, key_mask, *, num_heads, head_dim,
                    causal, q_head_start=0, k_head_start=0, v_head_start=0,
                    out_dtype=jnp.bfloat16):
    """Multi-head attention over fused projection arrays.

    q_src: (B, Tq, *) and k_src/v_src: (B, Tk, *) whose last dim is a sequence
    of head_dim-wide per-head column chunks; the chunks of Q/K/V start at head
    index q/k/v_head_start.  key_mask: (B, 1, Tk), nonzero == valid key.
    """
    B, Tq = q_src.shape[0], q_src.shape[1]
    Tk = k_src.shape[1]
    H = num_heads * head_dim

    # head grouping: process g heads per grid step so the column width g*Dh is
    # lane-aligned (multiple of 128) whenever possible (g == 1 if Dh % 128 == 0).
    g = num_heads
    for cand in range(1, num_heads + 1):
        if num_heads % cand == 0 and (cand * head_dim) % 128 == 0:
            g = cand
            break
    hw = g * head_dim
    n_hblk = num_heads // g
    q_off = q_head_start // g
    k_off = k_head_start // g
    v_off = v_head_start // g

    q_blk = _pick_tile(Tq, _ROW_TILES)
    kv_blk = _pick_tile(Tk, _KV_TILES)
    km = key_mask.astype(jnp.int32)

    kernel = functools.partial(_flash_attn_kernel, causal=causal,
                               q_blk=q_blk, kv_blk=kv_blk,
                               head_dim=head_dim, heads_per_blk=g)
    return pl.pallas_call(
        kernel,
        out_shape=jax.ShapeDtypeStruct((B, Tq, H), out_dtype),
        grid=(B, n_hblk, Tq // q_blk, Tk // kv_blk),
        in_specs=[
            pl.BlockSpec((1, 1, kv_blk), lambda b, h, qi, ki: (b, 0, ki)),
            pl.BlockSpec((1, q_blk, hw),
                         lambda b, h, qi, ki, o=q_off: (b, qi, o + h)),
            pl.BlockSpec((1, kv_blk, hw),
                         lambda b, h, qi, ki, o=k_off: (b, ki, o + h)),
            pl.BlockSpec((1, kv_blk, hw),
                         lambda b, h, qi, ki, o=v_off: (b, ki, o + h)),
        ],
        out_specs=pl.BlockSpec((1, q_blk, hw), lambda b, h, qi, ki: (b, qi, h)),
        scratch_shapes=[
            pltpu.VMEM((g, q_blk, 1), jnp.float32),        # running max m
            pltpu.VMEM((g, q_blk, 1), jnp.float32),        # running sum l
            pltpu.VMEM((g, q_blk, head_dim), jnp.float32), # running acc
        ],
        compiler_params=_cparams(("parallel", "parallel", "parallel", "arbitrary")),
    )(km, q_src, k_src, v_src)


# --------------------------------------------------------------------------- #
# Kernel 4: standalone row-tiled LayerNorm (final decoder norm)
# --------------------------------------------------------------------------- #

def _layernorm_kernel(x_ref, g_ref, b_ref, o_ref):
    x = x_ref[...].astype(jnp.float32)
    mean = jnp.mean(x, axis=-1, keepdims=True)
    var = jnp.mean(jnp.square(x - mean), axis=-1, keepdims=True)
    xn = (x - mean) * lax.rsqrt(var + LN_EPS)
    o_ref[...] = (xn * g_ref[...].astype(jnp.float32)
                  + b_ref[...].astype(jnp.float32)).astype(o_ref.dtype)


def layernorm(x2d, gamma, beta, *, out_dtype=jnp.float32):
    M, H = x2d.shape
    tm = _pick_tile(M, (1024, 512) + _ROW_TILES)
    return pl.pallas_call(
        _layernorm_kernel,
        out_shape=jax.ShapeDtypeStruct((M, H), out_dtype),
        grid=(M // tm,),
        in_specs=[pl.BlockSpec((tm, H), lambda i: (i, 0)),
                  pl.BlockSpec((1, H), lambda i: (0, 0)),
                  pl.BlockSpec((1, H), lambda i: (0, 0))],
        out_specs=pl.BlockSpec((tm, H), lambda i: (i, 0)),
        compiler_params=_cparams(("parallel",)),
    )(x2d, gamma.reshape(1, H), beta.reshape(1, H))


# ------------------------------ decoder glue ------------------------------- #

def decoder_layer(lp, x, memory, src_key_mask, trg_key_mask, num_heads):
    B, T, H = x.shape
    S = memory.shape[1]
    Dh = H // num_heads
    x2d = x.reshape(B * T, H)
    mem2d = memory.reshape(B * S, H)

    # --- masked target-target self-attention (pre-norm LN fused into QKV) ---
    qkv = fused_linear(x2d, lp["sa_wqkv"], lp["sa_bqkv"],
                       gamma=lp["ln_x_g"], beta=lp["ln_x_b"]).reshape(B, T, 3 * H)
    # Q/K/V selected straight from the fused array via BlockSpec index maps
    ctx = flash_attention(qkv, qkv, qkv, trg_key_mask,
                          num_heads=num_heads, head_dim=Dh, causal=True,
                          q_head_start=0, k_head_start=num_heads,
                          v_head_start=2 * num_heads)
    h1_2d = fused_linear(ctx.reshape(B * T, H), lp["sa_wo"], lp["sa_bo"],
                         residual=x2d)                       # out-proj + residual

    # --- source-target attention (LN fused into Q projection) ---
    qc = fused_linear(h1_2d, lp["ca_wq"], lp["ca_bq"],
                      gamma=lp["ln_dec_g"], beta=lp["ln_dec_b"]).reshape(B, T, H)
    kv = fused_linear(mem2d, lp["ca_wkv"], lp["ca_bkv"]).reshape(B, S, 2 * H)
    ctx2 = flash_attention(qc, kv, kv, src_key_mask,
                           num_heads=num_heads, head_dim=Dh, causal=False,
                           q_head_start=0, k_head_start=0,
                           v_head_start=num_heads)
    x2_2d = fused_linear(ctx2.reshape(B * T, H), lp["ca_wo"], lp["ca_bo"],
                         residual=h1_2d)                     # out-proj + residual

    # --- position-wise feed forward: LN -> W1 -> ReLU -> W2 (+residual), fused ---
    out2d = fused_ffn(x2_2d, lp["ff_ln_g"], lp["ff_ln_b"],
                      lp["ff_w1"], lp["ff_b1"], lp["ff_w2"], lp["ff_b2"])
    return out2d.reshape(B, T, H)


def transformer_decoder_forward(params, trg_embed, encoder_output,
                                src_mask, trg_mask, num_heads):
    """Mirrors TransformerDecoder.forward (eval mode).

    trg_mask: (B,1,T) key-padding mask; the subsequent (causal) mask is applied
    inside the attention kernel via broadcasted_iota. src_mask: (B,1,S).
    """
    B, T, H = trg_embed.shape
    trg_key_mask = trg_mask.astype(jnp.int32)   # (B,1,T)
    src_key_mask = src_mask.astype(jnp.int32)   # (B,1,S)
    x = trg_embed                               # emb_dropout not applied (matches ref fwd)
    for lp in params["layers"]:
        x = decoder_layer(lp, x, encoder_output, src_key_mask, trg_key_mask,
                          num_heads)
    x2d = layernorm(x.reshape(B * T, H), params["ln_g"], params["ln_b"],
                    out_dtype=trg_embed.dtype)
    return x2d.reshape(B, T, H)


# --------------------------- deterministic init ----------------------------- #

def _init_linear(key, din, dout):
    kw, kb = jax.random.split(key)
    w = jax.random.normal(kw, (din, dout), jnp.float32) * 0.05
    b = jax.random.normal(kb, (dout,), jnp.float32) * 0.01
    return w, b


def _init_attention(key, h):
    ks = jax.random.split(key, 4)
    p = {}
    for name, kk in zip(("q", "k", "v", "o"), ks):
        w, b = _init_linear(kk, h, h)
        p["w" + name] = w
        p["b" + name] = b
    return p


def init_params(key, hidden, ff, num_layers):
    layers = []
    for _ in range(num_layers):
        key, k_self, k_cross, k_ff1, k_ff2 = jax.random.split(key, 5)
        w1, b1 = _init_linear(k_ff1, hidden, ff)
        w2, b2 = _init_linear(k_ff2, ff, hidden)
        layers.append({
            "self_att": _init_attention(k_self, hidden),
            "cross_att": _init_attention(k_cross, hidden),
            "ln_x_g": jnp.ones((hidden,), jnp.float32),
            "ln_x_b": jnp.zeros((hidden,), jnp.float32),
            "ln_dec_g": jnp.ones((hidden,), jnp.float32),
            "ln_dec_b": jnp.zeros((hidden,), jnp.float32),
            "ff_ln_g": jnp.ones((hidden,), jnp.float32),
            "ff_ln_b": jnp.zeros((hidden,), jnp.float32),
            "ff_w1": w1, "ff_b1": b1, "ff_w2": w2, "ff_b2": b2,
        })
    return {
        "layers": layers,
        "ln_g": jnp.ones((hidden,), jnp.float32),
        "ln_b": jnp.zeros((hidden,), jnp.float32),
    }


def prepare_params(raw, num_heads):
    """Fuse QKV / KV weights, fold softmax scale into Wq, store weights in bf16."""
    hidden = raw["ln_g"].shape[0]
    scale = 1.0 / math.sqrt(hidden // num_heads)
    layers = []
    for lp in raw["layers"]:
        sa, ca = lp["self_att"], lp["cross_att"]
        layers.append({
            "ln_x_g": lp["ln_x_g"], "ln_x_b": lp["ln_x_b"],
            "ln_dec_g": lp["ln_dec_g"], "ln_dec_b": lp["ln_dec_b"],
            "ff_ln_g": lp["ff_ln_g"], "ff_ln_b": lp["ff_ln_b"],
            # self-attention: fused QKV, softmax scale folded into the Q part
            "sa_wqkv": jnp.concatenate([sa["wq"] * scale, sa["wk"], sa["wv"]],
                                       axis=1).astype(jnp.bfloat16),
            "sa_bqkv": jnp.concatenate([sa["bq"] * scale, sa["bk"], sa["bv"]]),
            "sa_wo": sa["wo"].astype(jnp.bfloat16), "sa_bo": sa["bo"],
            # cross-attention: scaled Q projection, fused KV projection of memory
            "ca_wq": (ca["wq"] * scale).astype(jnp.bfloat16),
            "ca_bq": ca["bq"] * scale,
            "ca_wkv": jnp.concatenate([ca["wk"], ca["wv"]],
                                      axis=1).astype(jnp.bfloat16),
            "ca_bkv": jnp.concatenate([ca["bk"], ca["bv"]]),
            "ca_wo": ca["wo"].astype(jnp.bfloat16), "ca_bo": ca["bo"],
            # feed-forward
            "ff_w1": lp["ff_w1"].astype(jnp.bfloat16), "ff_b1": lp["ff_b1"],
            "ff_w2": lp["ff_w2"].astype(jnp.bfloat16), "ff_b2": lp["ff_b2"],
        })
    return {"layers": layers, "ln_g": raw["ln_g"], "ln_b": raw["ln_b"]}


# ---------------------------------- main ------------------------------------ #

if __name__ == "__main__":
    # small shapes: batch=2, trg_len=8, src_len=16, hidden=256, ff=512,
    # heads=2 (head_dim=128 -> fully lane-aligned per-head blocks), layers=2
    B, T, S, H, FF, NH, NL = 2, 8, 16, 256, 512, 2, 2

    key = jax.random.PRNGKey(0)
    key, k_emb, k_enc, k_par = jax.random.split(key, 4)

    trg_embed = jax.random.normal(k_emb, (B, T, H), jnp.float32)
    encoder_output = jax.random.normal(k_enc, (B, S, H), jnp.float32)

    # masks: True = valid. batch 1 has one padded target step and two padded
    # source steps, so masking is actually exercised.
    trg_mask = jnp.ones((B, 1, T), dtype=jnp.bool_).at[1, 0, T - 1].set(False)
    src_mask = jnp.ones((B, 1, S), dtype=jnp.bool_).at[1, 0, S - 2:].set(False)

    # TODO(synk): dropout / emb_dropout are train-time stochastic ops; this
    # implements the eval-mode (identity) forward pass only.
    params = prepare_params(init_params(k_par, H, FF, NL), NH)

    fwd = jax.jit(functools.partial(transformer_decoder_forward, num_heads=NH))
    out = fwd(params, trg_embed, encoder_output, src_mask, trg_mask)
    out = jax.block_until_ready(out)

    assert out.shape == (B, T, H), out.shape
    assert bool(jnp.all(jnp.isfinite(out))), "non-finite values in output"
    print("KERNEL_OK")
</pallas_src>

<mosaic_0001>
module attributes {stable_mosaic.version = 11 : i64} {
  func.func @_matmul_kernel(%arg0: i32, %arg1: i32, %arg2: memref<16x256xf32, #tpu.memory_space<vmem>>, %arg3: memref<1x256xf32, #tpu.memory_space<vmem>>, %arg4: memref<1x256xf32, #tpu.memory_space<vmem>>, %arg5: memref<256x768xbf16, #tpu.memory_space<vmem>>, %arg6: memref<1x768xf32, #tpu.memory_space<vmem>>, %arg7: memref<16x768xbf16, #tpu.memory_space<vmem>>) attributes {dimension_semantics = [#tpu.dimension_semantics<parallel>, #tpu.dimension_semantics<parallel>], iteration_bounds = array<i64: 1, 1>, scalar_prefetch = 0 : i64, scratch_operands = 0 : i64, tpu.core_type = #tpu.core_type<tc>, window_params = [{transform_indices = @transform_0, window_bounds = array<i64: 16, 256>}, {pipeline_mode = #tpu.pipeline_mode<synchronous>, transform_indices = @transform_1, window_bounds = array<i64: 1, 256>}, {pipeline_mode = #tpu.pipeline_mode<synchronous>, transform_indices = @transform_2, window_bounds = array<i64: 1, 256>}, {transform_indices = @transform_3, window_bounds = array<i64: 256, 768>}, {transform_indices = @transform_4, window_bounds = array<i64: 1, 768>}, {transform_indices = @transform_5, window_bounds = array<i64: 16, 768>}]} {
    %c0 = arith.constant 0 : index
    %c0_0 = arith.constant 0 : index
    %0 = vector.load %arg2[%c0, %c0_0] : memref<16x256xf32, #tpu.memory_space<vmem>>, vector<16x256xf32>
    %cst = arith.constant dense<0.000000e+00> : vector<16xf32>
    %1 = vector.multi_reduction <add>, %0, %cst [1] : vector<16x256xf32> to vector<16xf32>
    %2 = vector.shape_cast %1 : vector<16xf32> to vector<16x1xf32>
    %cst_1 = arith.constant 2.560000e+02 : f32
    %3 = vector.broadcast %cst_1 : f32 to vector<16x1xf32>
    %4 = arith.divf %2, %3 : vector<16x1xf32>
    %5 = vector.broadcast %4 : vector<16x1xf32> to vector<16x256xf32>
    %6 = arith.subf %0, %5 : vector<16x256xf32>
    %7 = arith.mulf %6, %6 : vector<16x256xf32>
    %cst_2 = arith.constant dense<0.000000e+00> : vector<16xf32>
    %8 = vector.multi_reduction <add>, %7, %cst_2 [1] : vector<16x256xf32> to vector<16xf32>
    %9 = vector.shape_cast %8 : vector<16xf32> to vector<16x1xf32>
    %cst_3 = arith.constant 2.560000e+02 : f32
    %10 = vector.broadcast %cst_3 : f32 to vector<16x1xf32>
    %11 = arith.divf %9, %10 : vector<16x1xf32>
    %12 = vector.broadcast %4 : vector<16x1xf32> to vector<16x256xf32>
    %13 = arith.subf %0, %12 : vector<16x256xf32>
    %cst_4 = arith.constant 9.99999997E-7 : f32
    %14 = vector.broadcast %cst_4 : f32 to vector<16x1xf32>
    %15 = arith.addf %11, %14 : vector<16x1xf32>
    %16 = math.rsqrt %15 : vector<16x1xf32>
    %17 = vector.broadcast %16 : vector<16x1xf32> to vector<16x256xf32>
    %18 = arith.mulf %13, %17 : vector<16x256xf32>
    %c0_5 = arith.constant 0 : index
    %c0_6 = arith.constant 0 : index
    %19 = vector.load %arg3[%c0_5, %c0_6] : memref<1x256xf32, #tpu.memory_space<vmem>>, vector<1x256xf32>
    %20 = vector.broadcast %19 : vector<1x256xf32> to vector<16x256xf32>
    %21 = arith.mulf %18, %20 : vector<16x256xf32>
    %c0_7 = arith.constant 0 : index
    %c0_8 = arith.constant 0 : index
    %22 = vector.load %arg4[%c0_7, %c0_8] : memref<1x256xf32, #tpu.memory_space<vmem>>, vector<1x256xf32>
    %23 = vector.broadcast %22 : vector<1x256xf32> to vector<16x256xf32>
    %24 = arith.addf %21, %23 : vector<16x256xf32>
    %25 = arith.truncf %24 : vector<16x256xf32> to vector<16x256xbf16>
    %c0_9 = arith.constant 0 : index
    %c0_10 = arith.constant 0 : index
    %26 = vector.load %arg5[%c0_9, %c0_10] : memref<256x768xbf16, #tpu.memory_space<vmem>>, vector<256x768xbf16>
    %cst_11 = arith.constant dense<0.000000e+00> : vector<16x768xf32>
    %27 = tpu.matmul %25, %26, %cst_11 {dimension_numbers = #tpu.dot_dimension_numbers<[1], [0], [0], [1], [0, 0, 1, 1], [], []>} : vector<16x256xbf16>, vector<256x768xbf16>, vector<16x768xf32> -> vector<16x768xf32>
    %c0_12 = arith.constant 0 : index
    %c0_13 = arith.constant 0 : index
    %28 = vector.load %arg6[%c0_12, %c0_13] : memref<1x768xf32, #tpu.memory_space<vmem>>, vector<1x768xf32>
    %29 = vector.broadcast %28 : vector<1x768xf32> to vector<16x768xf32>
    %30 = arith.addf %27, %29 : vector<16x768xf32>
    %31 = arith.truncf %30 : vector<16x768xf32> to vector<16x768xbf16>
    %c0_14 = arith.constant 0 : index
    %c0_15 = arith.constant 0 : index
    %32 = vector.load %arg7[%c0_14, %c0_15] : memref<16x768xbf16, #tpu.memory_space<vmem>>, vector<16x768xbf16>
    tpu.vector_store %arg7[%c0_14, %c0_15], %31 {strides = array<i32>} : memref<16x768xbf16, #tpu.memory_space<vmem>>, vector<16x768xbf16>,
    return
  }
  func.func @transform_0(%arg0: i32, %arg1: i32) -> (i32, i32) {
    %c0_i32 = arith.constant 0 : i32
    %c0_i32_0 = arith.constant 0 : i32
    return %arg0, %c0_i32 : i32, i32
  }
  func.func @transform_1(%arg0: i32, %arg1: i32) -> (i32, i32) {
    %c0_i32 = arith.constant 0 : i32
    %c0_i32_0 = arith.constant 0 : i32
    %c0_i32_1 = arith.constant 0 : i32
    return %c0_i32, %c0_i32_0 : i32, i32
  }
  func.func @transform_2(%arg0: i32, %arg1: i32) -> (i32, i32) {
    %c0_i32 = arith.constant 0 : i32
    %c0_i32_0 = arith.constant 0 : i32
    %c0_i32_1 = arith.constant 0 : i32
    return %c0_i32, %c0_i32_0 : i32, i32
  }
  func.func @transform_3(%arg0: i32, %arg1: i32) -> (i32, i32) {
    %c0_i32 = arith.constant 0 : i32
    %c0_i32_0 = arith.constant 0 : i32
    return %c0_i32, %arg1 : i32, i32
  }
  func.func @transform_4(%arg0: i32, %arg1: i32) -> (i32, i32) {
    %c0_i32 = arith.constant 0 : i32
    %c0_i32_0 = arith.constant 0 : i32
    return %c0_i32, %arg1 : i32, i32
  }
  func.func @transform_5(%arg0: i32, %arg1: i32) -> (i32, i32) {
    %c0_i32 = arith.constant 0 : i32
    return %arg0, %arg1 : i32, i32
  }
}

module attributes {stable_mosaic.version = 11 : i64} {
  func.func @_matmul_kernel(%arg0: i32, %arg1: i32, %arg2: memref<16x256xbf16, #tpu.memory_space<vmem>>, %arg3: memref<256x256xbf16, #tpu.memory_space<vmem>>, %arg4: memref<1x256xf32, #tpu.memory_space<vmem>>, %arg5: memref<16x256xf32, #tpu.memory_space<vmem>>, %arg6: memref<16x256xbf16, #tpu.memory_space<vmem>>) attributes {dimension_semantics = [#tpu.dimension_semantics<parallel>, #tpu.dimension_semantics<parallel>], iteration_bounds = array<i64: 1, 1>, scalar_prefetch = 0 : i64, scratch_operands = 0 : i64, tpu.core_type = #tpu.core_type<tc>, window_params = [{transform_indices = @transform_0, window_bounds = array<i64: 16, 256>}, {transform_indices = @transform_1, window_bounds = array<i64: 256, 256>}, {transform_indices = @transform_2, window_bounds = array<i64: 1, 256>}, {transform_indices = @transform_3, window_bounds = array<i64: 16, 256>}, {transform_indices = @transform_4, window_bounds = array<i64: 16, 256>}]} {
    %c0 = arith.constant 0 : index
    %c0_0 = arith.constant 0 : index
    %0 = vector.load %arg2[%c0, %c0_0] : memref<16x256xbf16, #tpu.memory_space<vmem>>, vector<16x256xbf16>
    %1 = arith.extf %0 : vector<16x256xbf16> to vector<16x256xf32>
    %2 = arith.truncf %1 : vector<16x256xf32> to vector<16x256xbf16>
    %c0_1 = arith.constant 0 : index
    %c0_2 = arith.constant 0 : index
    %3 = vector.load %arg3[%c0_1, %c0_2] : memref<256x256xbf16, #tpu.memory_space<vmem>>, vector<256x256xbf16>
    %cst = arith.constant dense<0.000000e+00> : vector<16x256xf32>
    %4 = tpu.matmul %2, %3, %cst {dimension_numbers = #tpu.dot_dimension_numbers<[1], [0], [0], [1], [0, 0, 1, 1], [], []>} : vector<16x256xbf16>, vector<256x256xbf16>, vector<16x256xf32> -> vector<16x256xf32>
    %c0_3 = arith.constant 0 : index
    %c0_4 = arith.constant 0 : index
    %5 = vector.load %arg4[%c0_3, %c0_4] : memref<1x256xf32, #tpu.memory_space<vmem>>, vector<1x256xf32>
    %6 = vector.broadcast %5 : vector<1x256xf32> to vector<16x256xf32>
    %7 = arith.addf %4, %6 : vector<16x256xf32>
    %c0_5 = arith.constant 0 : index
    %c0_6 = arith.constant 0 : index
    %8 = vector.load %arg5[%c0_5, %c0_6] : memref<16x256xf32, #tpu.memory_space<vmem>>, vector<16x256xf32>
    %9 = arith.addf %7, %8 : vector<16x256xf32>
    %10 = arith.truncf %9 : vector<16x256xf32> to vector<16x256xbf16>
    %c0_7 = arith.constant 0 : index
    %c0_8 = arith.constant 0 : index
    %11 = vector.load %arg6[%c0_7, %c0_8] : memref<16x256xbf16, #tpu.memory_space<vmem>>, vector<16x256xbf16>
    tpu.vector_store %arg6[%c0_7, %c0_8], %10 {strides = array<i32>} : memref<16x256xbf16, #tpu.memory_space<vmem>>, vector<16x256xbf16>,
    return
  }
  func.func @transform_0(%arg0: i32, %arg1: i32) -> (i32, i32) {
    %c0_i32 = arith.constant 0 : i32
    %c0_i32_0 = arith.constant 0 : i32
    return %arg0, %c0_i32 : i32, i32
  }
  func.func @transform_1(%arg0: i32, %arg1: i32) -> (i32, i32) {
    %c0_i32 = arith.constant 0 : i32
    %c0_i32_0 = arith.constant 0 : i32
    return %c0_i32, %arg1 : i32, i32
  }
  func.func @transform_2(%arg0: i32, %arg1: i32) -> (i32, i32) {
    %c0_i32 = arith.constant 0 : i32
    %c0_i32_0 = arith.constant 0 : i32
    return %c0_i32, %arg1 : i32, i32
  }
  func.func @transform_3(%arg0: i32, %arg1: i32) -> (i32, i32) {
    %c0_i32 = arith.constant 0 : i32
    return %arg0, %arg1 : i32, i32
  }
  func.func @transform_4(%arg0: i32, %arg1: i32) -> (i32, i32) {
    %c0_i32 = arith.constant 0 : i32
    return %arg0, %arg1 : i32, i32
  }
}

module attributes {stable_mosaic.version = 11 : i64} {
  func.func @_flash_attn_kernel(%arg0: i32, %arg1: i32, %arg2: i32, %arg3: i32, %arg4: memref<1x1x8xi32, #tpu.memory_space<vmem>>, %arg5: memref<1x8x128xbf16, #tpu.memory_space<vmem>>, %arg6: memref<1x8x128xbf16, #tpu.memory_space<vmem>>, %arg7: memref<1x8x128xbf16, #tpu.memory_space<vmem>>, %arg8: memref<1x8x128xbf16, #tpu.memory_space<vmem>>, %arg9: memref<1x8x1xf32, #tpu.memory_space<vmem>>, %arg10: memref<1x8x1xf32, #tpu.memory_space<vmem>>, %arg11: memref<1x8x128xf32, #tpu.memory_space<vmem>>) attributes {dimension_semantics = [#tpu.dimension_semantics<parallel>, #tpu.dimension_semantics<parallel>, #tpu.dimension_semantics<parallel>, #tpu.dimension_semantics<arbitrary>], iteration_bounds = array<i64: 2, 2, 1, 1>, scalar_prefetch = 0 : i64, scratch_operands = 3 : i64, tpu.core_type = #tpu.core_type<tc>, window_params = [{transform_indices = @transform_0, window_bounds = array<i64: 1, 1, 8>}, {transform_indices = @transform_1, window_bounds = array<i64: 1, 8, 128>}, {transform_indices = @transform_2, window_bounds = array<i64: 1, 8, 128>}, {transform_indices = @transform_3, window_bounds = array<i64: 1, 8, 128>}, {transform_indices = @transform_4, window_bounds = array<i64: 1, 8, 128>}]} {
    %c0_i32 = arith.constant 0 : i32
    %0 = arith.cmpi eq, %arg3, %c0_i32 : i32
    %1 = arith.extui %0 : i1 to i32
    %c0_i32_0 = arith.constant 0 : i32
    %2 = arith.cmpi ne, %1, %c0_i32_0 : i32
    scf.if %2 {
      %cst = arith.constant -1.000000e+30 : f32
      %12 = vector.broadcast %cst : f32 to vector<1x8x1xf32>
      %c0 = arith.constant 0 : index
      %c0_5 = arith.constant 0 : index
      %c0_6 = arith.constant 0 : index
      %13 = vector.load %arg9[%c0, %c0_5, %c0_6] : memref<1x8x1xf32, #tpu.memory_space<vmem>>, vector<1x8x1xf32>
      tpu.vector_store %arg9[%c0, %c0_5, %c0_6], %12 {strides = array<i32>} : memref<1x8x1xf32, #tpu.memory_space<vmem>>, vector<1x8x1xf32>,
      %cst_7 = arith.constant 0.000000e+00 : f32
      %14 = vector.broadcast %cst_7 : f32 to vector<1x8x1xf32>
      %c0_8 = arith.constant 0 : index
      %c0_9 = arith.constant 0 : index
      %c0_10 = arith.constant 0 : index
      %15 = vector.load %arg10[%c0_8, %c0_9, %c0_10] : memref<1x8x1xf32, #tpu.memory_space<vmem>>, vector<1x8x1xf32>
      tpu.vector_store %arg10[%c0_8, %c0_9, %c0_10], %14 {strides = array<i32>} : memref<1x8x1xf32, #tpu.memory_space<vmem>>, vector<1x8x1xf32>,
      %cst_11 = arith.constant 0.000000e+00 : f32
      %16 = vector.broadcast %cst_11 : f32 to vector<1x8x128xf32>
      %c0_12 = arith.constant 0 : index
      %c0_13 = arith.constant 0 : index
      %c0_14 = arith.constant 0 : index
      %17 = vector.load %arg11[%c0_12, %c0_13, %c0_14] : memref<1x8x128xf32, #tpu.memory_space<vmem>>, vector<1x8x128xf32>
      tpu.vector_store %arg11[%c0_12, %c0_13, %c0_14], %16 {strides = array<i32>} : memref<1x8x128xf32, #tpu.memory_space<vmem>>, vector<1x8x128xf32>,
    } else {
    }
    %c8_i32 = arith.constant 8 : i32
    %3 = arith.muli %arg3, %c8_i32 : i32
    %c8_i32_1 = arith.constant 8 : i32
    %4 = arith.muli %arg2, %c8_i32_1 : i32
    %c7_i32 = arith.constant 7 : i32
    %5 = arith.addi %4, %c7_i32 : i32
    %6 = arith.cmpi sle, %3, %5 : i32
    %7 = arith.extui %6 : i1 to i32
    %c0_i32_2 = arith.constant 0 : i32
    %8 = arith.cmpi ne, %7, %c0_i32_2 : i32
    scf.if %8 {
      %c0 = arith.constant 0 : index
      %c0_5 = arith.constant 0 : index
      %c0_6 = arith.constant 0 : index
      %12 = vector.load %arg4[%c0, %c0_5, %c0_6] : memref<1x1x8xi32, #tpu.memory_space<vmem>>, vector<1x1x8xi32>
      %13 = vector.shape_cast %12 : vector<1x1x8xi32> to vector<1x8xi32>
      %c0_i32_7 = arith.constant 0 : i32
      %14 = vector.broadcast %c0_i32_7 : i32 to vector<1x8xi32>
      %15 = arith.cmpi sgt, %13, %14 : vector<1x8xi32>
      %c8_i32_8 = arith.constant 8 : i32
      %16 = arith.muli %arg2, %c8_i32_8 : i32
      %17 = tpu.iota {dimensions = array<i32: 0>} : vector<8x8xi32>
      %18 = vector.broadcast %16 : i32 to vector<8x8xi32>
      %19 = arith.addi %18, %17 : vector<8x8xi32>
      %c8_i32_9 = arith.constant 8 : i32
      %20 = arith.muli %arg3, %c8_i32_9 : i32
      %21 = tpu.iota {dimensions = array<i32: 1>} : vector<8x8xi32>
      %22 = vector.broadcast %20 : i32 to vector<8x8xi32>
      %23 = arith.addi %22, %21 : vector<8x8xi32>
      %24 = arith.cmpi sle, %23, %19 : vector<8x8xi32>
      %25 = vector.broadcast %15 : vector<1x8xi1> to vector<8x8xi1>
      %26 = arith.andi %24, %25 : vector<8x8xi1>
      %c0_10 = arith.constant 0 : index
      %c0_11 = arith.constant 0 : index
      %c0_12 = arith.constant 0 : index
      %27 = vector.load %arg5[%c0_10, %c0_11, %c0_12] : memref<1x8x128xbf16, #tpu.memory_space<vmem>>, vector<1x8x128xbf16>
      %28 = vector.shape_cast %27 : vector<1x8x128xbf16> to vector<8x128xbf16>
      %c0_13 = arith.constant 0 : index
      %c0_14 = arith.constant 0 : index
      %c0_15 = arith.constant 0 : index
      %29 = vector.load %arg6[%c0_13, %c0_14, %c0_15] : memref<1x8x128xbf16, #tpu.memory_space<vmem>>, vector<1x8x128xbf16>
      %30 = vector.shape_cast %29 : vector<1x8x128xbf16> to vector<8x128xbf16>
      %c0_16 = arith.constant 0 : index
      %c0_17 = arith.constant 0 : index
      %c0_18 = arith.constant 0 : index
      %31 = vector.load %arg7[%c0_16, %c0_17, %c0_18] : memref<1x8x128xbf16, #tpu.memory_space<vmem>>, vector<1x8x128xbf16>
      %32 = vector.shape_cast %31 : vector<1x8x128xbf16> to vector<8x128xbf16>
      %cst = arith.constant dense<0.000000e+00> : vector<8x8xf32>
      %33 = tpu.matmul %28, %30, %cst {dimension_numbers = #tpu.dot_dimension_numbers<[1], [1], [0], [0], [0, 0, 1, 0], [], []>} : vector<8x128xbf16>, vector<8x128xbf16>, vector<8x8xf32> -> vector<8x8xf32>
      %cst_19 = arith.constant -1.000000e+30 : f32
      %34 = vector.broadcast %cst_19 : f32 to vector<8x8xf32>
      %35 = arith.select %26, %33, %34 : vector<8x8xi1>, vector<8x8xf32>
      %c0_20 = arith.constant 0 : index
      %c0_21 = arith.constant 0 : index
      %c0_22 = arith.constant 0 : index
      %36 = vector.load %arg9[%c0_20, %c0_21, %c0_22] : memref<1x8x1xf32, #tpu.memory_space<vmem>>, vector<1x8x1xf32>
      %37 = vector.shape_cast %36 : vector<1x8x1xf32> to vector<8x1xf32>
      %cst_23 = arith.constant dense<0xFF800000> : vector<8xf32>
      %38 = vector.multi_reduction <maximumf>, %35, %cst_23 [1] : vector<8x8xf32> to vector<8xf32>
      %39 = vector.shape_cast %38 : vector<8xf32> to vector<8x1xf32>
      %40 = arith.maximumf %37, %39 : vector<8x1xf32>
      %41 = arith.subf %37, %40 : vector<8x1xf32>
      %42 = math.exp %41 : vector<8x1xf32>
      %43 = vector.broadcast %40 : vector<8x1xf32> to vector<8x8xf32>
      %44 = arith.subf %35, %43 : vector<8x8xf32>
      %45 = math.exp %44 : vector<8x8xf32>
      %c0_24 = arith.constant 0 : index
      %c0_25 = arith.constant 0 : index
      %c0_26 = arith.constant 0 : index
      %46 = vector.load %arg10[%c0_24, %c0_25, %c0_26] : memref<1x8x1xf32, #tpu.memory_space<vmem>>, vector<1x8x1xf32>
      %47 = vector.shape_cast %46 : vector<1x8x1xf32> to vector<8x1xf32>
      %48 = arith.mulf %42, %47 : vector<8x1xf32>
      %cst_27 = arith.constant dense<0.000000e+00> : vector<8xf32>
      %49 = vector.multi_reduction <add>, %45, %cst_27 [1] : vector<8x8xf32> to vector<8xf32>
      %50 = vector.shape_cast %49 : vector<8xf32> to vector<8x1xf32>
      %51 = arith.addf %48, %50 : vector<8x1xf32>
      %c0_28 = arith.constant 0 : index
      %c0_29 = arith.constant 0 : index
      %c0_30 = arith.constant 0 : index
      %52 = vector.load %arg10[%c0_28, %c0_29, %c0_30] : memref<1x8x1xf32, #tpu.memory_space<vmem>>, vector<1x8x1xf32>
      %53 = vector.shape_cast %52 : vector<1x8x1xf32> to vector<8x1xf32>
      %54 = vector.shape_cast %51 : vector<8x1xf32> to vector<1x8x1xf32>
      tpu.vector_store %arg10[%c0_28, %c0_29, %c0_30], %54 {strides = array<i32>} : memref<1x8x1xf32, #tpu.memory_space<vmem>>, vector<1x8x1xf32>,
      %c0_31 = arith.constant 0 : index
      %c0_32 = arith.constant 0 : index
      %c0_33 = arith.constant 0 : index
      %55 = vector.load %arg11[%c0_31, %c0_32, %c0_33] : memref<1x8x128xf32, #tpu.memory_space<vmem>>, vector<1x8x128xf32>
      %56 = vector.shape_cast %55 : vector<1x8x128xf32> to vector<8x128xf32>
      %57 = vector.broadcast %42 : vector<8x1xf32> to vector<8x128xf32>
      %58 = arith.mulf %57, %56 : vector<8x128xf32>
      %59 = arith.truncf %45 : vector<8x8xf32> to vector<8x8xbf16>
      %cst_34 = arith.constant dense<0.000000e+00> : vector<8x128xf32>
      %60 = tpu.matmul %59, %32, %cst_34 {dimension_numbers = #tpu.dot_dimension_numbers<[1], [0], [0], [1], [0, 0, 1, 1], [], []>} : vector<8x8xbf16>, vector<8x128xbf16>, vector<8x128xf32> -> vector<8x128xf32>
      %61 = arith.addf %58, %60 : vector<8x128xf32>
      %c0_35 = arith.constant 0 : index
      %c0_36 = arith.constant 0 : index
      %c0_37 = arith.constant 0 : index
      %62 = vector.load %arg11[%c0_35, %c0_36, %c0_37] : memref<1x8x128xf32, #tpu.memory_space<vmem>>, vector<1x8x128xf32>
      %63 = vector.shape_cast %62 : vector<1x8x128xf32> to vector<8x128xf32>
      %64 = vector.shape_cast %61 : vector<8x128xf32> to vector<1x8x128xf32>
      tpu.vector_store %arg11[%c0_35, %c0_36, %c0_37], %64 {strides = array<i32>} : memref<1x8x128xf32, #tpu.memory_space<vmem>>, vector<1x8x128xf32>,
      %c0_38 = arith.constant 0 : index
      %c0_39 = arith.constant 0 : index
      %c0_40 = arith.constant 0 : index
      %65 = vector.load %arg9[%c0_38, %c0_39, %c0_40] : memref<1x8x1xf32, #tpu.memory_space<vmem>>, vector<1x8x1xf32>
      %66 = vector.shape_cast %65 : vector<1x8x1xf32> to vector<8x1xf32>
      %67 = vector.shape_cast %40 : vector<8x1xf32> to vector<1x8x1xf32>
      tpu.vector_store %arg9[%c0_38, %c0_39, %c0_40], %67 {strides = array<i32>} : memref<1x8x1xf32, #tpu.memory_space<vmem>>, vector<1x8x1xf32>,
    } else {
    }
    %c0_i32_3 = arith.constant 0 : i32
    %9 = arith.cmpi eq, %arg3, %c0_i32_3 : i32
    %10 = arith.extui %9 : i1 to i32
    %c0_i32_4 = arith.constant 0 : i32
    %11 = arith.cmpi ne, %10, %c0_i32_4 : i32
    scf.if %11 {
      %c0 = arith.constant 0 : index
      %c0_5 = arith.constant 0 : index
      %c0_6 = arith.constant 0 : index
      %12 = vector.load %arg10[%c0, %c0_5, %c0_6] : memref<1x8x1xf32, #tpu.memory_space<vmem>>, vector<1x8x1xf32>
      %13 = vector.shape_cast %12 : vector<1x8x1xf32> to vector<8x1xf32>
      %14 = tpu.reciprocal %13 {approx = true} : vector<8x1xf32> -> vector<8x1xf32>
      %c0_7 = arith.constant 0 : index
      %c0_8 = arith.constant 0 : index
      %c0_9 = arith.constant 0 : index
      %15 = vector.load %arg11[%c0_7, %c0_8, %c0_9] : memref<1x8x128xf32, #tpu.memory_space<vmem>>, vector<1x8x128xf32>
      %16 = vector.shape_cast %15 : vector<1x8x128xf32> to vector<8x128xf32>
      %17 = vector.broadcast %14 : vector<8x1xf32> to vector<8x128xf32>
      %18 = arith.mulf %16, %17 : vector<8x128xf32>
      %19 = arith.truncf %18 : vector<8x128xf32> to vector<8x128xbf16>
      %c0_10 = arith.constant 0 : index
      %c0_11 = arith.constant 0 : index
      %c0_12 = arith.constant 0 : index
      %20 = vector.load %arg8[%c0_10, %c0_11, %c0_12] : memref<1x8x128xbf16, #tpu.memory_space<vmem>>, vector<1x8x128xbf16>
      %21 = vector.shape_cast %20 : vector<1x8x128xbf16> to vector<8x128xbf16>
      %22 = vector.shape_cast %19 : vector<8x128xbf16> to vector<1x8x128xbf16>
      tpu.vector_store %arg8[%c0_10, %c0_11, %c0_12], %22 {strides = array<i32>} : memref<1x8x128xbf16, #tpu.memory_space<vmem>>, vector<1x8x128xbf16>,
    } else {
    }
    return
  }
  func.func @transform_0(%arg0: i32, %arg1: i32, %arg2: i32, %arg3: i32) -> (i32, i32, i32) {
    %c0_i32 = arith.constant 0 : i32
    %c0_i32_0 = arith.constant 0 : i32
    return %arg0, %c0_i32, %arg3 : i32, i32, i32
  }
  func.func @transform_1(%arg0: i32, %arg1: i32, %arg2: i32, %arg3: i32) -> (i32, i32, i32) {
    %c0_i32 = arith.constant 0 : i32
    %0 = arith.addi %c0_i32, %arg1 : i32
    %c0_i32_0 = arith.constant 0 : i32
    return %arg0, %arg2, %0 : i32, i32, i32
  }
  func.func @transform_2(%arg0: i32, %arg1: i32, %arg2: i32, %arg3: i32) -> (i32, i32, i32) {
    %c2_i32 = arith.constant 2 : i32
    %0 = arith.addi %c2_i32, %arg1 : i32
    %c0_i32 = arith.constant 0 : i32
    return %arg0, %arg3, %0 : i32, i32, i32
  }
  func.func @transform_3(%arg0: i32, %arg1: i32, %arg2: i32, %arg3: i32) -> (i32, i32, i32) {
    %c4_i32 = arith.constant 4 : i32
    %0 = arith.addi %c4_i32, %arg1 : i32
    %c0_i32 = arith.constant 0 : i32
    return %arg0, %arg3, %0 : i32, i32, i32
  }
  func.func @transform_4(%arg0: i32, %arg1: i32, %arg2: i32, %arg3: i32) -> (i32, i32, i32) {
    %c0_i32 = arith.constant 0 : i32
    return %arg0, %arg2, %arg1 : i32, i32, i32
  }
}

module attributes {stable_mosaic.version = 11 : i64} {
  func.func @_matmul_kernel(%arg0: i32, %arg1: i32, %arg2: memref<16x256xbf16, #tpu.memory_space<vmem>>, %arg3: memref<1x256xf32, #tpu.memory_space<vmem>>, %arg4: memref<1x256xf32, #tpu.memory_space<vmem>>, %arg5: memref<256x256xbf16, #tpu.memory_space<vmem>>, %arg6: memref<1x256xf32, #tpu.memory_space<vmem>>, %arg7: memref<16x256xbf16, #tpu.memory_space<vmem>>) attributes {dimension_semantics = [#tpu.dimension_semantics<parallel>, #tpu.dimension_semantics<parallel>], iteration_bounds = array<i64: 1, 1>, scalar_prefetch = 0 : i64, scratch_operands = 0 : i64, tpu.core_type = #tpu.core_type<tc>, window_params = [{transform_indices = @transform_0, window_bounds = array<i64: 16, 256>}, {pipeline_mode = #tpu.pipeline_mode<synchronous>, transform_indices = @transform_1, window_bounds = array<i64: 1, 256>}, {pipeline_mode = #tpu.pipeline_mode<synchronous>, transform_indices = @transform_2, window_bounds = array<i64: 1, 256>}, {transform_indices = @transform_3, window_bounds = array<i64: 256, 256>}, {transform_indices = @transform_4, window_bounds = array<i64: 1, 256>}, {transform_indices = @transform_5, window_bounds = array<i64: 16, 256>}]} {
    %c0 = arith.constant 0 : index
    %c0_0 = arith.constant 0 : index
    %0 = vector.load %arg2[%c0, %c0_0] : memref<16x256xbf16, #tpu.memory_space<vmem>>, vector<16x256xbf16>
    %1 = arith.extf %0 : vector<16x256xbf16> to vector<16x256xf32>
    %cst = arith.constant dense<0.000000e+00> : vector<16xf32>
    %2 = vector.multi_reduction <add>, %1, %cst [1] : vector<16x256xf32> to vector<16xf32>
    %3 = vector.shape_cast %2 : vector<16xf32> to vector<16x1xf32>
    %cst_1 = arith.constant 2.560000e+02 : f32
    %4 = vector.broadcast %cst_1 : f32 to vector<16x1xf32>
    %5 = arith.divf %3, %4 : vector<16x1xf32>
    %6 = vector.broadcast %5 : vector<16x1xf32> to vector<16x256xf32>
    %7 = arith.subf %1, %6 : vector<16x256xf32>
    %8 = arith.mulf %7, %7 : vector<16x256xf32>
    %cst_2 = arith.constant dense<0.000000e+00> : vector<16xf32>
    %9 = vector.multi_reduction <add>, %8, %cst_2 [1] : vector<16x256xf32> to vector<16xf32>
    %10 = vector.shape_cast %9 : vector<16xf32> to vector<16x1xf32>
    %cst_3 = arith.constant 2.560000e+02 : f32
    %11 = vector.broadcast %cst_3 : f32 to vector<16x1xf32>
    %12 = arith.divf %10, %11 : vector<16x1xf32>
    %13 = vector.broadcast %5 : vector<16x1xf32> to vector<16x256xf32>
    %14 = arith.subf %1, %13 : vector<16x256xf32>
    %cst_4 = arith.constant 9.99999997E-7 : f32
    %15 = vector.broadcast %cst_4 : f32 to vector<16x1xf32>
    %16 = arith.addf %12, %15 : vector<16x1xf32>
    %17 = math.rsqrt %16 : vector<16x1xf32>
    %18 = vector.broadcast %17 : vector<16x1xf32> to vector<16x256xf32>
    %19 = arith.mulf %14, %18 : vector<16x256xf32>
    %c0_5 = arith.constant 0 : index
    %c0_6 = arith.constant 0 : index
    %20 = vector.load %arg3[%c0_5, %c0_6] : memref<1x256xf32, #tpu.memory_space<vmem>>, vector<1x256xf32>
    %21 = vector.broadcast %20 : vector<1x256xf32> to vector<16x256xf32>
    %22 = arith.mulf %19, %21 : vector<16x256xf32>
    %c0_7 = arith.constant 0 : index
    %c0_8 = arith.constant 0 : index
    %23 = vector.load %arg4[%c0_7, %c0_8] : memref<1x256xf32, #tpu.memory_space<vmem>>, vector<1x256xf32>
    %24 = vector.broadcast %23 : vector<1x256xf32> to vector<16x256xf32>
    %25 = arith.addf %22, %24 : vector<16x256xf32>
    %26 = arith.truncf %25 : vector<16x256xf32> to vector<16x256xbf16>
    %c0_9 = arith.constant 0 : index
    %c0_10 = arith.constant 0 : index
    %27 = vector.load %arg5[%c0_9, %c0_10] : memref<256x256xbf16, #tpu.memory_space<vmem>>, vector<256x256xbf16>
    %cst_11 = arith.constant dense<0.000000e+00> : vector<16x256xf32>
    %28 = tpu.matmul %26, %27, %cst_11 {dimension_numbers = #tpu.dot_dimension_numbers<[1], [0], [0], [1], [0, 0, 1, 1], [], []>} : vector<16x256xbf16>, vector<256x256xbf16>, vector<16x256xf32> -> vector<16x256xf32>
    %c0_12 = arith.constant 0 : index
    %c0_13 = arith.constant 0 : index
    %29 = vector.load %arg6[%c0_12, %c0_13] : memref<1x256xf32, #tpu.memory_space<vmem>>, vector<1x256xf32>
    %30 = vector.broadcast %29 : vector<1x256xf32> to vector<16x256xf32>
    %31 = arith.addf %28, %30 : vector<16x256xf32>
    %32 = arith.truncf %31 : vector<16x256xf32> to vector<16x256xbf16>
    %c0_14 = arith.constant 0 : index
    %c0_15 = arith.constant 0 : index
    %33 = vector.load %arg7[%c0_14, %c0_15] : memref<16x256xbf16, #tpu.memory_space<vmem>>, vector<16x256xbf16>
    tpu.vector_store %arg7[%c0_14, %c0_15], %32 {strides = array<i32>} : memref<16x256xbf16, #tpu.memory_space<vmem>>, vector<16x256xbf16>,
    return
  }
  func.func @transform_0(%arg0: i32, %arg1: i32) -> (i32, i32) {
    %c0_i32 = arith.constant 0 : i32
    %c0_i32_0 = arith.constant 0 : i32
    return %arg0, %c0_i32 : i32, i32
  }
  func.func @transform_1(%arg0: i32, %arg1: i32) -> (i32, i32) {
    %c0_i32 = arith.constant 0 : i32
    %c0_i32_0 = arith.constant 0 : i32
    %c0_i32_1 = arith.constant 0 : i32
    return %c0_i32, %c0_i32_0 : i32, i32
  }
  func.func @transform_2(%arg0: i32, %arg1: i32) -> (i32, i32) {
    %c0_i32 = arith.constant 0 : i32
    %c0_i32_0 = arith.constant 0 : i32
    %c0_i32_1 = arith.constant 0 : i32
    return %c0_i32, %c0_i32_0 : i32, i32
  }
  func.func @transform_3(%arg0: i32, %arg1: i32) -> (i32, i32) {
    %c0_i32 = arith.constant 0 : i32
    %c0_i32_0 = arith.constant 0 : i32
    return %c0_i32, %arg1 : i32, i32
  }
  func.func @transform_4(%arg0: i32, %arg1: i32) -> (i32, i32) {
    %c0_i32 = arith.constant 0 : i32
    %c0_i32_0 = arith.constant 0 : i32
    return %c0_i32, %arg1 : i32, i32
  }
  func.func @transform_5(%arg0: i32, %arg1: i32) -> (i32, i32) {
    %c0_i32 = arith.constant 0 : i32
    return %arg0, %arg1 : i32, i32
  }
}

module attributes {stable_mosaic.version = 11 : i64} {
  func.func @_matmul_kernel(%arg0: i32, %arg1: i32, %arg2: memref<32x256xf32, #tpu.memory_space<vmem>>, %arg3: memref<256x512xbf16, #tpu.memory_space<vmem>>, %arg4: memref<1x512xf32, #tpu.memory_space<vmem>>, %arg5: memref<32x512xbf16, #tpu.memory_space<vmem>>) attributes {dimension_semantics = [#tpu.dimension_semantics<parallel>, #tpu.dimension_semantics<parallel>], iteration_bounds = array<i64: 1, 1>, scalar_prefetch = 0 : i64, scratch_operands = 0 : i64, tpu.core_type = #tpu.core_type<tc>, window_params = [{transform_indices = @transform_0, window_bounds = array<i64: 32, 256>}, {transform_indices = @transform_1, window_bounds = array<i64: 256, 512>}, {transform_indices = @transform_2, window_bounds = array<i64: 1, 512>}, {transform_indices = @transform_3, window_bounds = array<i64: 32, 512>}]} {
    %c0 = arith.constant 0 : index
    %c0_0 = arith.constant 0 : index
    %0 = vector.load %arg2[%c0, %c0_0] : memref<32x256xf32, #tpu.memory_space<vmem>>, vector<32x256xf32>
    %1 = arith.truncf %0 : vector<32x256xf32> to vector<32x256xbf16>
    %c0_1 = arith.constant 0 : index
    %c0_2 = arith.constant 0 : index
    %2 = vector.load %arg3[%c0_1, %c0_2] : memref<256x512xbf16, #tpu.memory_space<vmem>>, vector<256x512xbf16>
    %cst = arith.constant dense<0.000000e+00> : vector<32x512xf32>
    %3 = tpu.matmul %1, %2, %cst {dimension_numbers = #tpu.dot_dimension_numbers<[1], [0], [0], [1], [0, 0, 1, 1], [], []>} : vector<32x256xbf16>, vector<256x512xbf16>, vector<32x512xf32> -> vector<32x512xf32>
    %c0_3 = arith.constant 0 : index
    %c0_4 = arith.constant 0 : index
    %4 = vector.load %arg4[%c0_3, %c0_4] : memref<1x512xf32, #tpu.memory_space<vmem>>, vector<1x512xf32>
    %5 = vector.broadcast %4 : vector<1x512xf32> to vector<32x512xf32>
    %6 = arith.addf %3, %5 : vector<32x512xf32>
    %7 = arith.truncf %6 : vector<32x512xf32> to vector<32x512xbf16>
    %c0_5 = arith.constant 0 : index
    %c0_6 = arith.constant 0 : index
    %8 = vector.load %arg5[%c0_5, %c0_6] : memref<32x512xbf16, #tpu.memory_space<vmem>>, vector<32x512xbf16>
    tpu.vector_store %arg5[%c0_5, %c0_6], %7 {strides = array<i32>} : memref<32x512xbf16, #tpu.memory_space<vmem>>, vector<32x512xbf16>,
    return
  }
  func.func @transform_0(%arg0: i32, %arg1: i32) -> (i32, i32) {
    %c0_i32 = arith.constant 0 : i32
    %c0_i32_0 = arith.constant 0 : i32
    return %arg0, %c0_i32 : i32, i32
  }
  func.func @transform_1(%arg0: i32, %arg1: i32) -> (i32, i32) {
    %c0_i32 = arith.constant 0 : i32
    %c0_i32_0 = arith.constant 0 : i32
    return %c0_i32, %arg1 : i32, i32
  }
  func.func @transform_2(%arg0: i32, %arg1: i32) -> (i32, i32) {
    %c0_i32 = arith.constant 0 : i32
    %c0_i32_0 = arith.constant 0 : i32
    return %c0_i32, %arg1 : i32, i32
  }
  func.func @transform_3(%arg0: i32, %arg1: i32) -> (i32, i32) {
    %c0_i32 = arith.constant 0 : i32
    return %arg0, %arg1 : i32, i32
  }
}

module attributes {stable_mosaic.version = 11 : i64} {
  func.func @_flash_attn_kernel(%arg0: i32, %arg1: i32, %arg2: i32, %arg3: i32, %arg4: memref<1x1x16xi32, #tpu.memory_space<vmem>>, %arg5: memref<1x8x128xbf16, #tpu.memory_space<vmem>>, %arg6: memref<1x16x128xbf16, #tpu.memory_space<vmem>>, %arg7: memref<1x16x128xbf16, #tpu.memory_space<vmem>>, %arg8: memref<1x8x128xbf16, #tpu.memory_space<vmem>>, %arg9: memref<1x8x1xf32, #tpu.memory_space<vmem>>, %arg10: memref<1x8x1xf32, #tpu.memory_space<vmem>>, %arg11: memref<1x8x128xf32, #tpu.memory_space<vmem>>) attributes {dimension_semantics = [#tpu.dimension_semantics<parallel>, #tpu.dimension_semantics<parallel>, #tpu.dimension_semantics<parallel>, #tpu.dimension_semantics<arbitrary>], iteration_bounds = array<i64: 2, 2, 1, 1>, scalar_prefetch = 0 : i64, scratch_operands = 3 : i64, tpu.core_type = #tpu.core_type<tc>, window_params = [{transform_indices = @transform_0, window_bounds = array<i64: 1, 1, 16>}, {transform_indices = @transform_1, window_bounds = array<i64: 1, 8, 128>}, {transform_indices = @transform_2, window_bounds = array<i64: 1, 16, 128>}, {transform_indices = @transform_3, window_bounds = array<i64: 1, 16, 128>}, {transform_indices = @transform_4, window_bounds = array<i64: 1, 8, 128>}]} {
    %c0_i32 = arith.constant 0 : i32
    %0 = arith.cmpi eq, %arg3, %c0_i32 : i32
    %1 = arith.extui %0 : i1 to i32
    %c0_i32_0 = arith.constant 0 : i32
    %2 = arith.cmpi ne, %1, %c0_i32_0 : i32
    scf.if %2 {
      %cst_37 = arith.constant -1.000000e+30 : f32
      %53 = vector.broadcast %cst_37 : f32 to vector<1x8x1xf32>
      %c0_38 = arith.constant 0 : index
      %c0_39 = arith.constant 0 : index
      %c0_40 = arith.constant 0 : index
      %54 = vector.load %arg9[%c0_38, %c0_39, %c0_40] : memref<1x8x1xf32, #tpu.memory_space<vmem>>, vector<1x8x1xf32>
      tpu.vector_store %arg9[%c0_38, %c0_39, %c0_40], %53 {strides = array<i32>} : memref<1x8x1xf32, #tpu.memory_space<vmem>>, vector<1x8x1xf32>,
      %cst_41 = arith.constant 0.000000e+00 : f32
      %55 = vector.broadcast %cst_41 : f32 to vector<1x8x1xf32>
      %c0_42 = arith.constant 0 : index
      %c0_43 = arith.constant 0 : index
      %c0_44 = arith.constant 0 : index
      %56 = vector.load %arg10[%c0_42, %c0_43, %c0_44] : memref<1x8x1xf32, #tpu.memory_space<vmem>>, vector<1x8x1xf32>
      tpu.vector_store %arg10[%c0_42, %c0_43, %c0_44], %55 {strides = array<i32>} : memref<1x8x1xf32, #tpu.memory_space<vmem>>, vector<1x8x1xf32>,
      %cst_45 = arith.constant 0.000000e+00 : f32
      %57 = vector.broadcast %cst_45 : f32 to vector<1x8x128xf32>
      %c0_46 = arith.constant 0 : index
      %c0_47 = arith.constant 0 : index
      %c0_48 = arith.constant 0 : index
      %58 = vector.load %arg11[%c0_46, %c0_47, %c0_48] : memref<1x8x128xf32, #tpu.memory_space<vmem>>, vector<1x8x128xf32>
      tpu.vector_store %arg11[%c0_46, %c0_47, %c0_48], %57 {strides = array<i32>} : memref<1x8x128xf32, #tpu.memory_space<vmem>>, vector<1x8x128xf32>,
    } else {
    }
    %c0 = arith.constant 0 : index
    %c0_1 = arith.constant 0 : index
    %c0_2 = arith.constant 0 : index
    %3 = vector.load %arg4[%c0, %c0_1, %c0_2] : memref<1x1x16xi32, #tpu.memory_space<vmem>>, vector<1x1x16xi32>
    %4 = vector.shape_cast %3 : vector<1x1x16xi32> to vector<1x16xi32>
    %c0_i32_3 = arith.constant 0 : i32
    %5 = vector.broadcast %c0_i32_3 : i32 to vector<1x16xi32>
    %6 = arith.cmpi sgt, %4, %5 : vector<1x16xi32>
    %7 = vector.shape_cast %6 : vector<1x16xi1> to vector<1x16xi1>
    %8 = vector.broadcast %7 : vector<1x16xi1> to vector<8x16xi1>
    %c0_4 = arith.constant 0 : index
    %c0_5 = arith.constant 0 : index
    %c0_6 = arith.constant 0 : index
    %9 = vector.load %arg5[%c0_4, %c0_5, %c0_6] : memref<1x8x128xbf16, #tpu.memory_space<vmem>>, vector<1x8x128xbf16>
    %10 = vector.shape_cast %9 : vector<1x8x128xbf16> to vector<8x128xbf16>
    %c0_7 = arith.constant 0 : index
    %c0_8 = arith.constant 0 : index
    %c0_9 = arith.constant 0 : index
    %11 = vector.load %arg6[%c0_7, %c0_8, %c0_9] : memref<1x16x128xbf16, #tpu.memory_space<vmem>>, vector<1x16x128xbf16>
    %12 = vector.shape_cast %11 : vector<1x16x128xbf16> to vector<16x128xbf16>
    %c0_10 = arith.constant 0 : index
    %c0_11 = arith.constant 0 : index
    %c0_12 = arith.constant 0 : index
    %13 = vector.load %arg7[%c0_10, %c0_11, %c0_12] : memref<1x16x128xbf16, #tpu.memory_space<vmem>>, vector<1x16x128xbf16>
    %14 = vector.shape_cast %13 : vector<1x16x128xbf16> to vector<16x128xbf16>
    %cst = arith.constant dense<0.000000e+00> : vector<8x16xf32>
    %15 = tpu.matmul %10, %12, %cst {dimension_numbers = #tpu.dot_dimension_numbers<[1], [1], [0], [0], [0, 0, 1, 0], [], []>} : vector<8x128xbf16>, vector<16x128xbf16>, vector<8x16xf32> -> vector<8x16xf32>
    %cst_13 = arith.constant -1.000000e+30 : f32
    %16 = vector.broadcast %cst_13 : f32 to vector<8x16xf32>
    %17 = arith.select %8, %15, %16 : vector<8x16xi1>, vector<8x16xf32>
    %c0_14 = arith.constant 0 : index
    %c0_15 = arith.constant 0 : index
    %c0_16 = arith.constant 0 : index
    %18 = vector.load %arg9[%c0_14, %c0_15, %c0_16] : memref<1x8x1xf32, #tpu.memory_space<vmem>>, vector<1x8x1xf32>
    %19 = vector.shape_cast %18 : vector<1x8x1xf32> to vector<8x1xf32>
    %cst_17 = arith.constant dense<0xFF800000> : vector<8xf32>
    %20 = vector.multi_reduction <maximumf>, %17, %cst_17 [1] : vector<8x16xf32> to vector<8xf32>
    %21 = vector.shape_cast %20 : vector<8xf32> to vector<8x1xf32>
    %22 = arith.maximumf %19, %21 : vector<8x1xf32>
    %23 = arith.subf %19, %22 : vector<8x1xf32>
    %24 = math.exp %23 : vector<8x1xf32>
    %25 = vector.broadcast %22 : vector<8x1xf32> to vector<8x16xf32>
    %26 = arith.subf %17, %25 : vector<8x16xf32>
    %27 = math.exp %26 : vector<8x16xf32>
    %c0_18 = arith.constant 0 : index
    %c0_19 = arith.constant 0 : index
    %c0_20 = arith.constant 0 : index
    %28 = vector.load %arg10[%c0_18, %c0_19, %c0_20] : memref<1x8x1xf32, #tpu.memory_space<vmem>>, vector<1x8x1xf32>
    %29 = vector.shape_cast %28 : vector<1x8x1xf32> to vector<8x1xf32>
    %30 = arith.mulf %24, %29 : vector<8x1xf32>
    %cst_21 = arith.constant dense<0.000000e+00> : vector<8xf32>
    %31 = vector.multi_reduction <add>, %27, %cst_21 [1] : vector<8x16xf32> to vector<8xf32>
    %32 = vector.shape_cast %31 : vector<8xf32> to vector<8x1xf32>
    %33 = arith.addf %30, %32 : vector<8x1xf32>
    %c0_22 = arith.constant 0 : index
    %c0_23 = arith.constant 0 : index
    %c0_24 = arith.constant 0 : index
    %34 = vector.load %arg10[%c0_22, %c0_23, %c0_24] : memref<1x8x1xf32, #tpu.memory_space<vmem>>, vector<1x8x1xf32>
    %35 = vector.shape_cast %34 : vector<1x8x1xf32> to vector<8x1xf32>
    %36 = vector.shape_cast %33 : vector<8x1xf32> to vector<1x8x1xf32>
    tpu.vector_store %arg10[%c0_22, %c0_23, %c0_24], %36 {strides = array<i32>} : memref<1x8x1xf32, #tpu.memory_space<vmem>>, vector<1x8x1xf32>,
    %c0_25 = arith.constant 0 : index
    %c0_26 = arith.constant 0 : index
    %c0_27 = arith.constant 0 : index
    %37 = vector.load %arg11[%c0_25, %c0_26, %c0_27] : memref<1x8x128xf32, #tpu.memory_space<vmem>>, vector<1x8x128xf32>
    %38 = vector.shape_cast %37 : vector<1x8x128xf32> to vector<8x128xf32>
    %39 = vector.broadcast %24 : vector<8x1xf32> to vector<8x128xf32>
    %40 = arith.mulf %39, %38 : vector<8x128xf32>
    %41 = arith.truncf %27 : vector<8x16xf32> to vector<8x16xbf16>
    %cst_28 = arith.constant dense<0.000000e+00> : vector<8x128xf32>
    %42 = tpu.matmul %41, %14, %cst_28 {dimension_numbers = #tpu.dot_dimension_numbers<[1], [0], [0], [1], [0, 0, 1, 1], [], []>} : vector<8x16xbf16>, vector<16x128xbf16>, vector<8x128xf32> -> vector<8x128xf32>
    %43 = arith.addf %40, %42 : vector<8x128xf32>
    %c0_29 = arith.constant 0 : index
    %c0_30 = arith.constant 0 : index
    %c0_31 = arith.constant 0 : index
    %44 = vector.load %arg11[%c0_29, %c0_30, %c0_31] : memref<1x8x128xf32, #tpu.memory_space<vmem>>, vector<1x8x128xf32>
    %45 = vector.shape_cast %44 : vector<1x8x128xf32> to vector<8x128xf32>
    %46 = vector.shape_cast %43 : vector<8x128xf32> to vector<1x8x128xf32>
    tpu.vector_store %arg11[%c0_29, %c0_30, %c0_31], %46 {strides = array<i32>} : memref<1x8x128xf32, #tpu.memory_space<vmem>>, vector<1x8x128xf32>,
    %c0_32 = arith.constant 0 : index
    %c0_33 = arith.constant 0 : index
    %c0_34 = arith.constant 0 : index
    %47 = vector.load %arg9[%c0_32, %c0_33, %c0_34] : memref<1x8x1xf32, #tpu.memory_space<vmem>>, vector<1x8x1xf32>
    %48 = vector.shape_cast %47 : vector<1x8x1xf32> to vector<8x1xf32>
    %49 = vector.shape_cast %22 : vector<8x1xf32> to vector<1x8x1xf32>
    tpu.vector_store %arg9[%c0_32, %c0_33, %c0_34], %49 {strides = array<i32>} : memref<1x8x1xf32, #tpu.memory_space<vmem>>, vector<1x8x1xf32>,
    %c0_i32_35 = arith.constant 0 : i32
    %50 = arith.cmpi eq, %arg3, %c0_i32_35 : i32
    %51 = arith.extui %50 : i1 to i32
    %c0_i32_36 = arith.constant 0 : i32
    %52 = arith.cmpi ne, %51, %c0_i32_36 : i32
    scf.if %52 {
      %c0_37 = arith.constant 0 : index
      %c0_38 = arith.constant 0 : index
      %c0_39 = arith.constant 0 : index
      %53 = vector.load %arg10[%c0_37, %c0_38, %c0_39] : memref<1x8x1xf32, #tpu.memory_space<vmem>>, vector<1x8x1xf32>
      %54 = vector.shape_cast %53 : vector<1x8x1xf32> to vector<8x1xf32>
      %55 = tpu.reciprocal %54 {approx = true} : vector<8x1xf32> -> vector<8x1xf32>
      %c0_40 = arith.constant 0 : index
      %c0_41 = arith.constant 0 : index
      %c0_42 = arith.constant 0 : index
      %56 = vector.load %arg11[%c0_40, %c0_41, %c0_42] : memref<1x8x128xf32, #tpu.memory_space<vmem>>, vector<1x8x128xf32>
      %57 = vector.shape_cast %56 : vector<1x8x128xf32> to vector<8x128xf32>
      %58 = vector.broadcast %55 : vector<8x1xf32> to vector<8x128xf32>
      %59 = arith.mulf %57, %58 : vector<8x128xf32>
      %60 = arith.truncf %59 : vector<8x128xf32> to vector<8x128xbf16>
      %c0_43 = arith.constant 0 : index
      %c0_44 = arith.constant 0 : index
      %c0_45 = arith.constant 0 : index
      %61 = vector.load %arg8[%c0_43, %c0_44, %c0_45] : memref<1x8x128xbf16, #tpu.memory_space<vmem>>, vector<1x8x128xbf16>
      %62 = vector.shape_cast %61 : vector<1x8x128xbf16> to vector<8x128xbf16>
      %63 = vector.shape_cast %60 : vector<8x128xbf16> to vector<1x8x128xbf16>
      tpu.vector_store %arg8[%c0_43, %c0_44, %c0_45], %63 {strides = array<i32>} : memref<1x8x128xbf16, #tpu.memory_space<vmem>>, vector<1x8x128xbf16>,
    } else {
    }
    return
  }
  func.func @transform_0(%arg0: i32, %arg1: i32, %arg2: i32, %arg3: i32) -> (i32, i32, i32) {
    %c0_i32 = arith.constant 0 : i32
    %c0_i32_0 = arith.constant 0 : i32
    return %arg0, %c0_i32, %arg3 : i32, i32, i32
  }
  func.func @transform_1(%arg0: i32, %arg1: i32, %arg2: i32, %arg3: i32) -> (i32, i32, i32) {
    %c0_i32 = arith.constant 0 : i32
    %0 = arith.addi %c0_i32, %arg1 : i32
    %c0_i32_0 = arith.constant 0 : i32
    return %arg0, %arg2, %0 : i32, i32, i32
  }
  func.func @transform_2(%arg0: i32, %arg1: i32, %arg2: i32, %arg3: i32) -> (i32, i32, i32) {
    %c0_i32 = arith.constant 0 : i32
    %0 = arith.addi %c0_i32, %arg1 : i32
    %c0_i32_0 = arith.constant 0 : i32
    return %arg0, %arg3, %0 : i32, i32, i32
  }
  func.func @transform_3(%arg0: i32, %arg1: i32, %arg2: i32, %arg3: i32) -> (i32, i32, i32) {
    %c2_i32 = arith.constant 2 : i32
    %0 = arith.addi %c2_i32, %arg1 : i32
    %c0_i32 = arith.constant 0 : i32
    return %arg0, %arg3, %0 : i32, i32, i32
  }
  func.func @transform_4(%arg0: i32, %arg1: i32, %arg2: i32, %arg3: i32) -> (i32, i32, i32) {
    %c0_i32 = arith.constant 0 : i32
    return %arg0, %arg2, %arg1 : i32, i32, i32
  }
}

module attributes {stable_mosaic.version = 11 : i64} {
  func.func @_matmul_kernel(%arg0: i32, %arg1: i32, %arg2: memref<16x256xbf16, #tpu.memory_space<vmem>>, %arg3: memref<256x256xbf16, #tpu.memory_space<vmem>>, %arg4: memref<1x256xf32, #tpu.memory_space<vmem>>, %arg5: memref<16x256xbf16, #tpu.memory_space<vmem>>, %arg6: memref<16x256xbf16, #tpu.memory_space<vmem>>) attributes {dimension_semantics = [#tpu.dimension_semantics<parallel>, #tpu.dimension_semantics<parallel>], iteration_bounds = array<i64: 1, 1>, scalar_prefetch = 0 : i64, scratch_operands = 0 : i64, tpu.core_type = #tpu.core_type<tc>, window_params = [{transform_indices = @transform_0, window_bounds = array<i64: 16, 256>}, {transform_indices = @transform_1, window_bounds = array<i64: 256, 256>}, {transform_indices = @transform_2, window_bounds = array<i64: 1, 256>}, {transform_indices = @transform_3, window_bounds = array<i64: 16, 256>}, {transform_indices = @transform_4, window_bounds = array<i64: 16, 256>}]} {
    %c0 = arith.constant 0 : index
    %c0_0 = arith.constant 0 : index
    %0 = vector.load %arg2[%c0, %c0_0] : memref<16x256xbf16, #tpu.memory_space<vmem>>, vector<16x256xbf16>
    %1 = arith.extf %0 : vector<16x256xbf16> to vector<16x256xf32>
    %2 = arith.truncf %1 : vector<16x256xf32> to vector<16x256xbf16>
    %c0_1 = arith.constant 0 : index
    %c0_2 = arith.constant 0 : index
    %3 = vector.load %arg3[%c0_1, %c0_2] : memref<256x256xbf16, #tpu.memory_space<vmem>>, vector<256x256xbf16>
    %cst = arith.constant dense<0.000000e+00> : vector<16x256xf32>
    %4 = tpu.matmul %2, %3, %cst {dimension_numbers = #tpu.dot_dimension_numbers<[1], [0], [0], [1], [0, 0, 1, 1], [], []>} : vector<16x256xbf16>, vector<256x256xbf16>, vector<16x256xf32> -> vector<16x256xf32>
    %c0_3 = arith.constant 0 : index
    %c0_4 = arith.constant 0 : index
    %5 = vector.load %arg4[%c0_3, %c0_4] : memref<1x256xf32, #tpu.memory_space<vmem>>, vector<1x256xf32>
    %6 = vector.broadcast %5 : vector<1x256xf32> to vector<16x256xf32>
    %7 = arith.addf %4, %6 : vector<16x256xf32>
    %c0_5 = arith.constant 0 : index
    %c0_6 = arith.constant 0 : index
    %8 = vector.load %arg5[%c0_5, %c0_6] : memref<16x256xbf16, #tpu.memory_space<vmem>>, vector<16x256xbf16>
    %9 = arith.extf %8 : vector<16x256xbf16> to vector<16x256xf32>
    %10 = arith.addf %7, %9 : vector<16x256xf32>
    %11 = arith.truncf %10 : vector<16x256xf32> to vector<16x256xbf16>
    %c0_7 = arith.constant 0 : index
    %c0_8 = arith.constant 0 : index
    %12 = vector.load %arg6[%c0_7, %c0_8] : memref<16x256xbf16, #tpu.memory_space<vmem>>, vector<16x256xbf16>
    tpu.vector_store %arg6[%c0_7, %c0_8], %11 {strides = array<i32>} : memref<16x256xbf16, #tpu.memory_space<vmem>>, vector<16x256xbf16>,
    return
  }
  func.func @transform_0(%arg0: i32, %arg1: i32) -> (i32, i32) {
    %c0_i32 = arith.constant 0 : i32
    %c0_i32_0 = arith.constant 0 : i32
    return %arg0, %c0_i32 : i32, i32
  }
  func.func @transform_1(%arg0: i32, %arg1: i32) -> (i32, i32) {
    %c0_i32 = arith.constant 0 : i32
    %c0_i32_0 = arith.constant 0 : i32
    return %c0_i32, %arg1 : i32, i32
  }
  func.func @transform_2(%arg0: i32, %arg1: i32) -> (i32, i32) {
    %c0_i32 = arith.constant 0 : i32
    %c0_i32_0 = arith.constant 0 : i32
    return %c0_i32, %arg1 : i32, i32
  }
  func.func @transform_3(%arg0: i32, %arg1: i32) -> (i32, i32) {
    %c0_i32 = arith.constant 0 : i32
    return %arg0, %arg1 : i32, i32
  }
  func.func @transform_4(%arg0: i32, %arg1: i32) -> (i32, i32) {
    %c0_i32 = arith.constant 0 : i32
    return %arg0, %arg1 : i32, i32
  }
}

module attributes {stable_mosaic.version = 11 : i64} {
  func.func @_ffn_kernel(%arg0: i32, %arg1: i32, %arg2: memref<16x256xbf16, #tpu.memory_space<vmem>>, %arg3: memref<1x256xf32, #tpu.memory_space<vmem>>, %arg4: memref<1x256xf32, #tpu.memory_space<vmem>>, %arg5: memref<256x512xbf16, #tpu.memory_space<vmem>>, %arg6: memref<1x512xf32, #tpu.memory_space<vmem>>, %arg7: memref<512x256xbf16, #tpu.memory_space<vmem>>, %arg8: memref<1x256xf32, #tpu.memory_space<vmem>>, %arg9: memref<16x256xbf16, #tpu.memory_space<vmem>>, %arg10: memref<16x256xbf16, #tpu.memory_space<vmem>>, %arg11: memref<16x256xf32, #tpu.memory_space<vmem>>) attributes {dimension_semantics = [#tpu.dimension_semantics<parallel>, #tpu.dimension_semantics<arbitrary>], iteration_bounds = array<i64: 1, 1>, scalar_prefetch = 0 : i64, scratch_operands = 2 : i64, tpu.core_type = #tpu.core_type<tc>, window_params = [{transform_indices = @transform_0, window_bounds = array<i64: 16, 256>}, {pipeline_mode = #tpu.pipeline_mode<synchronous>, transform_indices = @transform_1, window_bounds = array<i64: 1, 256>}, {pipeline_mode = #tpu.pipeline_mode<synchronous>, transform_indices = @transform_2, window_bounds = array<i64: 1, 256>}, {transform_indices = @transform_3, window_bounds = array<i64: 256, 512>}, {transform_indices = @transform_4, window_bounds = array<i64: 1, 512>}, {transform_indices = @transform_5, window_bounds = array<i64: 512, 256>}, {pipeline_mode = #tpu.pipeline_mode<synchronous>, transform_indices = @transform_6, window_bounds = array<i64: 1, 256>}, {transform_indices = @transform_7, window_bounds = array<i64: 16, 256>}]} {
    %c0_i32 = arith.constant 0 : i32
    %0 = arith.cmpi eq, %arg1, %c0_i32 : i32
    %1 = arith.extui %0 : i1 to i32
    %c0_i32_0 = arith.constant 0 : i32
    %2 = arith.cmpi ne, %1, %c0_i32_0 : i32
    scf.if %2 {
      %c0_16 = arith.constant 0 : index
      %c0_17 = arith.constant 0 : index
      %20 = vector.load %arg2[%c0_16, %c0_17] : memref<16x256xbf16, #tpu.memory_space<vmem>>, vector<16x256xbf16>
      %21 = arith.extf %20 : vector<16x256xbf16> to vector<16x256xf32>
      %cst_18 = arith.constant dense<0.000000e+00> : vector<16xf32>
      %22 = vector.multi_reduction <add>, %21, %cst_18 [1] : vector<16x256xf32> to vector<16xf32>
      %23 = vector.shape_cast %22 : vector<16xf32> to vector<16x1xf32>
      %cst_19 = arith.constant 2.560000e+02 : f32
      %24 = vector.broadcast %cst_19 : f32 to vector<16x1xf32>
      %25 = arith.divf %23, %24 : vector<16x1xf32>
      %26 = vector.broadcast %25 : vector<16x1xf32> to vector<16x256xf32>
      %27 = arith.subf %21, %26 : vector<16x256xf32>
      %28 = arith.mulf %27, %27 : vector<16x256xf32>
      %cst_20 = arith.constant dense<0.000000e+00> : vector<16xf32>
      %29 = vector.multi_reduction <add>, %28, %cst_20 [1] : vector<16x256xf32> to vector<16xf32>
      %30 = vector.shape_cast %29 : vector<16xf32> to vector<16x1xf32>
      %cst_21 = arith.constant 2.560000e+02 : f32
      %31 = vector.broadcast %cst_21 : f32 to vector<16x1xf32>
      %32 = arith.divf %30, %31 : vector<16x1xf32>
      %33 = vector.broadcast %25 : vector<16x1xf32> to vector<16x256xf32>
      %34 = arith.subf %21, %33 : vector<16x256xf32>
      %cst_22 = arith.constant 9.99999997E-7 : f32
      %35 = vector.broadcast %cst_22 : f32 to vector<16x1xf32>
      %36 = arith.addf %32, %35 : vector<16x1xf32>
      %37 = math.rsqrt %36 : vector<16x1xf32>
      %38 = vector.broadcast %37 : vector<16x1xf32> to vector<16x256xf32>
      %39 = arith.mulf %34, %38 : vector<16x256xf32>
      %c0_23 = arith.constant 0 : index
      %c0_24 = arith.constant 0 : index
      %40 = vector.load %arg3[%c0_23, %c0_24] : memref<1x256xf32, #tpu.memory_space<vmem>>, vector<1x256xf32>
      %41 = vector.broadcast %40 : vector<1x256xf32> to vector<16x256xf32>
      %42 = arith.mulf %39, %41 : vector<16x256xf32>
      %c0_25 = arith.constant 0 : index
      %c0_26 = arith.constant 0 : index
      %43 = vector.load %arg4[%c0_25, %c0_26] : memref<1x256xf32, #tpu.memory_space<vmem>>, vector<1x256xf32>
      %44 = vector.broadcast %43 : vector<1x256xf32> to vector<16x256xf32>
      %45 = arith.addf %42, %44 : vector<16x256xf32>
      %46 = arith.truncf %45 : vector<16x256xf32> to vector<16x256xbf16>
      %c0_27 = arith.constant 0 : index
      %c0_28 = arith.constant 0 : index
      %47 = vector.load %arg10[%c0_27, %c0_28] : memref<16x256xbf16, #tpu.memory_space<vmem>>, vector<16x256xbf16>
      tpu.vector_store %arg10[%c0_27, %c0_28], %46 {strides = array<i32>} : memref<16x256xbf16, #tpu.memory_space<vmem>>, vector<16x256xbf16>,
      %cst_29 = arith.constant 0.000000e+00 : f32
      %48 = vector.broadcast %cst_29 : f32 to vector<16x256xf32>
      %c0_30 = arith.constant 0 : index
      %c0_31 = arith.constant 0 : index
      %49 = vector.load %arg11[%c0_30, %c0_31] : memref<16x256xf32, #tpu.memory_space<vmem>>, vector<16x256xf32>
      tpu.vector_store %arg11[%c0_30, %c0_31], %48 {strides = array<i32>} : memref<16x256xf32, #tpu.memory_space<vmem>>, vector<16x256xf32>,
    } else {
    }
    %c0 = arith.constant 0 : index
    %c0_1 = arith.constant 0 : index
    %3 = vector.load %arg10[%c0, %c0_1] : memref<16x256xbf16, #tpu.memory_space<vmem>>, vector<16x256xbf16>
    %c0_2 = arith.constant 0 : index
    %c0_3 = arith.constant 0 : index
    %4 = vector.load %arg5[%c0_2, %c0_3] : memref<256x512xbf16, #tpu.memory_space<vmem>>, vector<256x512xbf16>
    %cst = arith.constant dense<0.000000e+00> : vector<16x512xf32>
    %5 = tpu.matmul %3, %4, %cst {dimension_numbers = #tpu.dot_dimension_numbers<[1], [0], [0], [1], [0, 0, 1, 1], [], []>} : vector<16x256xbf16>, vector<256x512xbf16>, vector<16x512xf32> -> vector<16x512xf32>
    %c0_4 = arith.constant 0 : index
    %c0_5 = arith.constant 0 : index
    %6 = vector.load %arg6[%c0_4, %c0_5] : memref<1x512xf32, #tpu.memory_space<vmem>>, vector<1x512xf32>
    %7 = vector.broadcast %6 : vector<1x512xf32> to vector<16x512xf32>
    %8 = arith.addf %5, %7 : vector<16x512xf32>
    %cst_6 = arith.constant 0.000000e+00 : f32
    %9 = vector.broadcast %cst_6 : f32 to vector<16x512xf32>
    %10 = arith.maximumf %8, %9 : vector<16x512xf32>
    %c0_7 = arith.constant 0 : index
    %c0_8 = arith.constant 0 : index
    %11 = vector.load %arg11[%c0_7, %c0_8] : memref<16x256xf32, #tpu.memory_space<vmem>>, vector<16x256xf32>
    %12 = arith.truncf %10 : vector<16x512xf32> to vector<16x512xbf16>
    %c0_9 = arith.constant 0 : index
    %c0_10 = arith.constant 0 : index
    %13 = vector.load %arg7[%c0_9, %c0_10] : memref<512x256xbf16, #tpu.memory_space<vmem>>, vector<512x256xbf16>
    %cst_11 = arith.constant dense<0.000000e+00> : vector<16x256xf32>
    %14 = tpu.matmul %12, %13, %cst_11 {dimension_numbers = #tpu.dot_dimension_numbers<[1], [0], [0], [1], [0, 0, 1, 1], [], []>} : vector<16x512xbf16>, vector<512x256xbf16>, vector<16x256xf32> -> vector<16x256xf32>
    %15 = arith.addf %11, %14 : vector<16x256xf32>
    %c0_12 = arith.constant 0 : index
    %c0_13 = arith.constant 0 : index
    %16 = vector.load %arg11[%c0_12, %c0_13] : memref<16x256xf32, #tpu.memory_space<vmem>>, vector<16x256xf32>
    tpu.vector_store %arg11[%c0_12, %c0_13], %15 {strides = array<i32>} : memref<16x256xf32, #tpu.memory_space<vmem>>, vector<16x256xf32>,
    %c0_i32_14 = arith.constant 0 : i32
    %17 = arith.cmpi eq, %arg1, %c0_i32_14 : i32
    %18 = arith.extui %17 : i1 to i32
    %c0_i32_15 = arith.constant 0 : i32
    %19 = arith.cmpi ne, %18, %c0_i32_15 : i32
    scf.if %19 {
      %c0_16 = arith.constant 0 : index
      %c0_17 = arith.constant 0 : index
      %20 = vector.load %arg11[%c0_16, %c0_17] : memref<16x256xf32, #tpu.memory_space<vmem>>, vector<16x256xf32>
      %c0_18 = arith.constant 0 : index
      %c0_19 = arith.constant 0 : index
      %21 = vector.load %arg8[%c0_18, %c0_19] : memref<1x256xf32, #tpu.memory_space<vmem>>, vector<1x256xf32>
      %22 = vector.broadcast %21 : vector<1x256xf32> to vector<16x256xf32>
      %23 = arith.addf %20, %22 : vector<16x256xf32>
      %c0_20 = arith.constant 0 : index
      %c0_21 = arith.constant 0 : index
      %24 = vector.load %arg2[%c0_20, %c0_21] : memref<16x256xbf16, #tpu.memory_space<vmem>>, vector<16x256xbf16>
      %25 = arith.extf %24 : vector<16x256xbf16> to vector<16x256xf32>
      %26 = arith.addf %23, %25 : vector<16x256xf32>
      %27 = arith.truncf %26 : vector<16x256xf32> to vector<16x256xbf16>
      %c0_22 = arith.constant 0 : index
      %c0_23 = arith.constant 0 : index
      %28 = vector.load %arg9[%c0_22, %c0_23] : memref<16x256xbf16, #tpu.memory_space<vmem>>, vector<16x256xbf16>
      tpu.vector_store %arg9[%c0_22, %c0_23], %27 {strides = array<i32>} : memref<16x256xbf16, #tpu.memory_space<vmem>>, vector<16x256xbf16>,
    } else {
    }
    return
  }
  func.func @transform_0(%arg0: i32, %arg1: i32) -> (i32, i32) {
    %c0_i32 = arith.constant 0 : i32
    %c0_i32_0 = arith.constant 0 : i32
    return %arg0, %c0_i32 : i32, i32
  }
  func.func @transform_1(%arg0: i32, %arg1: i32) -> (i32, i32) {
    %c0_i32 = arith.constant 0 : i32
    %c0_i32_0 = arith.constant 0 : i32
    %c0_i32_1 = arith.constant 0 : i32
    return %c0_i32, %c0_i32_0 : i32, i32
  }
  func.func @transform_2(%arg0: i32, %arg1: i32) -> (i32, i32) {
    %c0_i32 = arith.constant 0 : i32
    %c0_i32_0 = arith.constant 0 : i32
    %c0_i32_1 = arith.constant 0 : i32
    return %c0_i32, %c0_i32_0 : i32, i32
  }
  func.func @transform_3(%arg0: i32, %arg1: i32) -> (i32, i32) {
    %c0_i32 = arith.constant 0 : i32
    %c0_i32_0 = arith.constant 0 : i32
    return %c0_i32, %arg1 : i32, i32
  }
  func.func @transform_4(%arg0: i32, %arg1: i32) -> (i32, i32) {
    %c0_i32 = arith.constant 0 : i32
    %c0_i32_0 = arith.constant 0 : i32
    return %c0_i32, %arg1 : i32, i32
  }
  func.func @transform_5(%arg0: i32, %arg1: i32) -> (i32, i32) {
    %c0_i32 = arith.constant 0 : i32
    %c0_i32_0 = arith.constant 0 : i32
    return %arg1, %c0_i32 : i32, i32
  }
  func.func @transform_6(%arg0: i32, %arg1: i32) -> (i32, i32) {
    %c0_i32 = arith.constant 0 : i32
    %c0_i32_0 = arith.constant 0 : i32
    %c0_i32_1 = arith.constant 0 : i32
    return %c0_i32, %c0_i32_0 : i32, i32
  }
  func.func @transform_7(%arg0: i32, %arg1: i32) -> (i32, i32) {
    %c0_i32 = arith.constant 0 : i32
    %c0_i32_0 = arith.constant 0 : i32
    return %arg0, %c0_i32 : i32, i32
  }
}

module attributes {stable_mosaic.version = 11 : i64} {
  func.func @_matmul_kernel(%arg0: i32, %arg1: i32, %arg2: memref<16x256xbf16, #tpu.memory_space<vmem>>, %arg3: memref<1x256xf32, #tpu.memory_space<vmem>>, %arg4: memref<1x256xf32, #tpu.memory_space<vmem>>, %arg5: memref<256x768xbf16, #tpu.memory_space<vmem>>, %arg6: memref<1x768xf32, #tpu.memory_space<vmem>>, %arg7: memref<16x768xbf16, #tpu.memory_space<vmem>>) attributes {dimension_semantics = [#tpu.dimension_semantics<parallel>, #tpu.dimension_semantics<parallel>], iteration_bounds = array<i64: 1, 1>, scalar_prefetch = 0 : i64, scratch_operands = 0 : i64, tpu.core_type = #tpu.core_type<tc>, window_params = [{transform_indices = @transform_0, window_bounds = array<i64: 16, 256>}, {pipeline_mode = #tpu.pipeline_mode<synchronous>, transform_indices = @transform_1, window_bounds = array<i64: 1, 256>}, {pipeline_mode = #tpu.pipeline_mode<synchronous>, transform_indices = @transform_2, window_bounds = array<i64: 1, 256>}, {transform_indices = @transform_3, window_bounds = array<i64: 256, 768>}, {transform_indices = @transform_4, window_bounds = array<i64: 1, 768>}, {transform_indices = @transform_5, window_bounds = array<i64: 16, 768>}]} {
    %c0 = arith.constant 0 : index
    %c0_0 = arith.constant 0 : index
    %0 = vector.load %arg2[%c0, %c0_0] : memref<16x256xbf16, #tpu.memory_space<vmem>>, vector<16x256xbf16>
    %1 = arith.extf %0 : vector<16x256xbf16> to vector<16x256xf32>
    %cst = arith.constant dense<0.000000e+00> : vector<16xf32>
    %2 = vector.multi_reduction <add>, %1, %cst [1] : vector<16x256xf32> to vector<16xf32>
    %3 = vector.shape_cast %2 : vector<16xf32> to vector<16x1xf32>
    %cst_1 = arith.constant 2.560000e+02 : f32
    %4 = vector.broadcast %cst_1 : f32 to vector<16x1xf32>
    %5 = arith.divf %3, %4 : vector<16x1xf32>
    %6 = vector.broadcast %5 : vector<16x1xf32> to vector<16x256xf32>
    %7 = arith.subf %1, %6 : vector<16x256xf32>
    %8 = arith.mulf %7, %7 : vector<16x256xf32>
    %cst_2 = arith.constant dense<0.000000e+00> : vector<16xf32>
    %9 = vector.multi_reduction <add>, %8, %cst_2 [1] : vector<16x256xf32> to vector<16xf32>
    %10 = vector.shape_cast %9 : vector<16xf32> to vector<16x1xf32>
    %cst_3 = arith.constant 2.560000e+02 : f32
    %11 = vector.broadcast %cst_3 : f32 to vector<16x1xf32>
    %12 = arith.divf %10, %11 : vector<16x1xf32>
    %13 = vector.broadcast %5 : vector<16x1xf32> to vector<16x256xf32>
    %14 = arith.subf %1, %13 : vector<16x256xf32>
    %cst_4 = arith.constant 9.99999997E-7 : f32
    %15 = vector.broadcast %cst_4 : f32 to vector<16x1xf32>
    %16 = arith.addf %12, %15 : vector<16x1xf32>
    %17 = math.rsqrt %16 : vector<16x1xf32>
    %18 = vector.broadcast %17 : vector<16x1xf32> to vector<16x256xf32>
    %19 = arith.mulf %14, %18 : vector<16x256xf32>
    %c0_5 = arith.constant 0 : index
    %c0_6 = arith.constant 0 : index
    %20 = vector.load %arg3[%c0_5, %c0_6] : memref<1x256xf32, #tpu.memory_space<vmem>>, vector<1x256xf32>
    %21 = vector.broadcast %20 : vector<1x256xf32> to vector<16x256xf32>
    %22 = arith.mulf %19, %21 : vector<16x256xf32>
    %c0_7 = arith.constant 0 : index
    %c0_8 = arith.constant 0 : index
    %23 = vector.load %arg4[%c0_7, %c0_8] : memref<1x256xf32, #tpu.memory_space<vmem>>, vector<1x256xf32>
    %24 = vector.broadcast %23 : vector<1x256xf32> to vector<16x256xf32>
    %25 = arith.addf %22, %24 : vector<16x256xf32>
    %26 = arith.truncf %25 : vector<16x256xf32> to vector<16x256xbf16>
    %c0_9 = arith.constant 0 : index
    %c0_10 = arith.constant 0 : index
    %27 = vector.load %arg5[%c0_9, %c0_10] : memref<256x768xbf16, #tpu.memory_space<vmem>>, vector<256x768xbf16>
    %cst_11 = arith.constant dense<0.000000e+00> : vector<16x768xf32>
    %28 = tpu.matmul %26, %27, %cst_11 {dimension_numbers = #tpu.dot_dimension_numbers<[1], [0], [0], [1], [0, 0, 1, 1], [], []>} : vector<16x256xbf16>, vector<256x768xbf16>, vector<16x768xf32> -> vector<16x768xf32>
    %c0_12 = arith.constant 0 : index
    %c0_13 = arith.constant 0 : index
    %29 = vector.load %arg6[%c0_12, %c0_13] : memref<1x768xf32, #tpu.memory_space<vmem>>, vector<1x768xf32>
    %30 = vector.broadcast %29 : vector<1x768xf32> to vector<16x768xf32>
    %31 = arith.addf %28, %30 : vector<16x768xf32>
    %32 = arith.truncf %31 : vector<16x768xf32> to vector<16x768xbf16>
    %c0_14 = arith.constant 0 : index
    %c0_15 = arith.constant 0 : index
    %33 = vector.load %arg7[%c0_14, %c0_15] : memref<16x768xbf16, #tpu.memory_space<vmem>>, vector<16x768xbf16>
    tpu.vector_store %arg7[%c0_14, %c0_15], %32 {strides = array<i32>} : memref<16x768xbf16, #tpu.memory_space<vmem>>, vector<16x768xbf16>,
    return
  }
  func.func @transform_0(%arg0: i32, %arg1: i32) -> (i32, i32) {
    %c0_i32 = arith.constant 0 : i32
    %c0_i32_0 = arith.constant 0 : i32
    return %arg0, %c0_i32 : i32, i32
  }
  func.func @transform_1(%arg0: i32, %arg1: i32) -> (i32, i32) {
    %c0_i32 = arith.constant 0 : i32
    %c0_i32_0 = arith.constant 0 : i32
    %c0_i32_1 = arith.constant 0 : i32
    return %c0_i32, %c0_i32_0 : i32, i32
  }
  func.func @transform_2(%arg0: i32, %arg1: i32) -> (i32, i32) {
    %c0_i32 = arith.constant 0 : i32
    %c0_i32_0 = arith.constant 0 : i32
    %c0_i32_1 = arith.constant 0 : i32
    return %c0_i32, %c0_i32_0 : i32, i32
  }
  func.func @transform_3(%arg0: i32, %arg1: i32) -> (i32, i32) {
    %c0_i32 = arith.constant 0 : i32
    %c0_i32_0 = arith.constant 0 : i32
    return %c0_i32, %arg1 : i32, i32
  }
  func.func @transform_4(%arg0: i32, %arg1: i32) -> (i32, i32) {
    %c0_i32 = arith.constant 0 : i32
    %c0_i32_0 = arith.constant 0 : i32
    return %c0_i32, %arg1 : i32, i32
  }
  func.func @transform_5(%arg0: i32, %arg1: i32) -> (i32, i32) {
    %c0_i32 = arith.constant 0 : i32
    return %arg0, %arg1 : i32, i32
  }
}

module attributes {stable_mosaic.version = 11 : i64} {
  func.func @_layernorm_kernel(%arg0: i32, %arg1: memref<16x256xbf16, #tpu.memory_space<vmem>>, %arg2: memref<1x256xf32, #tpu.memory_space<vmem>>, %arg3: memref<1x256xf32, #tpu.memory_space<vmem>>, %arg4: memref<16x256xf32, #tpu.memory_space<vmem>>) attributes {dimension_semantics = [#tpu.dimension_semantics<parallel>], iteration_bounds = array<i64: 1>, scalar_prefetch = 0 : i64, scratch_operands = 0 : i64, tpu.core_type = #tpu.core_type<tc>, window_params = [{transform_indices = @transform_0, window_bounds = array<i64: 16, 256>}, {pipeline_mode = #tpu.pipeline_mode<synchronous>, transform_indices = @transform_1, window_bounds = array<i64: 1, 256>}, {pipeline_mode = #tpu.pipeline_mode<synchronous>, transform_indices = @transform_2, window_bounds = array<i64: 1, 256>}, {transform_indices = @transform_3, window_bounds = array<i64: 16, 256>}]} {
    %c0 = arith.constant 0 : index
    %c0_0 = arith.constant 0 : index
    %0 = vector.load %arg1[%c0, %c0_0] : memref<16x256xbf16, #tpu.memory_space<vmem>>, vector<16x256xbf16>
    %1 = arith.extf %0 : vector<16x256xbf16> to vector<16x256xf32>
    %cst = arith.constant dense<0.000000e+00> : vector<16xf32>
    %2 = vector.multi_reduction <add>, %1, %cst [1] : vector<16x256xf32> to vector<16xf32>
    %3 = vector.shape_cast %2 : vector<16xf32> to vector<16x1xf32>
    %cst_1 = arith.constant 2.560000e+02 : f32
    %4 = vector.broadcast %cst_1 : f32 to vector<16x1xf32>
    %5 = arith.divf %3, %4 : vector<16x1xf32>
    %6 = vector.broadcast %5 : vector<16x1xf32> to vector<16x256xf32>
    %7 = arith.subf %1, %6 : vector<16x256xf32>
    %8 = arith.mulf %7, %7 : vector<16x256xf32>
    %cst_2 = arith.constant dense<0.000000e+00> : vector<16xf32>
    %9 = vector.multi_reduction <add>, %8, %cst_2 [1] : vector<16x256xf32> to vector<16xf32>
    %10 = vector.shape_cast %9 : vector<16xf32> to vector<16x1xf32>
    %cst_3 = arith.constant 2.560000e+02 : f32
    %11 = vector.broadcast %cst_3 : f32 to vector<16x1xf32>
    %12 = arith.divf %10, %11 : vector<16x1xf32>
    %13 = vector.broadcast %5 : vector<16x1xf32> to vector<16x256xf32>
    %14 = arith.subf %1, %13 : vector<16x256xf32>
    %cst_4 = arith.constant 9.99999997E-7 : f32
    %15 = vector.broadcast %cst_4 : f32 to vector<16x1xf32>
    %16 = arith.addf %12, %15 : vector<16x1xf32>
    %17 = math.rsqrt %16 : vector<16x1xf32>
    %18 = vector.broadcast %17 : vector<16x1xf32> to vector<16x256xf32>
    %19 = arith.mulf %14, %18 : vector<16x256xf32>
    %c0_5 = arith.constant 0 : index
    %c0_6 = arith.constant 0 : index
    %20 = vector.load %arg2[%c0_5, %c0_6] : memref<1x256xf32, #tpu.memory_space<vmem>>, vector<1x256xf32>
    %21 = vector.broadcast %20 : vector<1x256xf32> to vector<16x256xf32>
    %22 = arith.mulf %19, %21 : vector<16x256xf32>
    %c0_7 = arith.constant 0 : index
    %c0_8 = arith.constant 0 : index
    %23 = vector.load %arg3[%c0_7, %c0_8] : memref<1x256xf32, #tpu.memory_space<vmem>>, vector<1x256xf32>
    %24 = vector.broadcast %23 : vector<1x256xf32> to vector<16x256xf32>
    %25 = arith.addf %22, %24 : vector<16x256xf32>
    %c0_9 = arith.constant 0 : index
    %c0_10 = arith.constant 0 : index
    %26 = vector.load %arg4[%c0_9, %c0_10] : memref<16x256xf32, #tpu.memory_space<vmem>>, vector<16x256xf32>
    tpu.vector_store %arg4[%c0_9, %c0_10], %25 {strides = array<i32>} : memref<16x256xf32, #tpu.memory_space<vmem>>, vector<16x256xf32>,
    return
  }
  func.func @transform_0(%arg0: i32) -> (i32, i32) {
    %c0_i32 = arith.constant 0 : i32
    %c0_i32_0 = arith.constant 0 : i32
    return %arg0, %c0_i32 : i32, i32
  }
  func.func @transform_1(%arg0: i32) -> (i32, i32) {
    %c0_i32 = arith.constant 0 : i32
    %c0_i32_0 = arith.constant 0 : i32
    %c0_i32_1 = arith.constant 0 : i32
    return %c0_i32, %c0_i32_0 : i32, i32
  }
  func.func @transform_2(%arg0: i32) -> (i32, i32) {
    %c0_i32 = arith.constant 0 : i32
    %c0_i32_0 = arith.constant 0 : i32
    %c0_i32_1 = arith.constant 0 : i32
    return %c0_i32, %c0_i32_0 : i32, i32
  }
  func.func @transform_3(%arg0: i32) -> (i32, i32) {
    %c0_i32 = arith.constant 0 : i32
    %c0_i32_0 = arith.constant 0 : i32
    return %arg0, %c0_i32 : i32, i32
  }
}

</mosaic_0001>

<llo_original>
// kernel: transformer_decoder_forward.19
$region0: #{transformer_decoder_forward.19}
  #allocation0 [shape = 'u32[]', space=smem, size = 0x4, offset = 0x4, fixed_abs, tag = 'smem constant byte address 0x4 - core index']
  #allocation1 [shape = 'u32[144,128]{1,0:T(1,128)}', space=vmem, size = 0x12000, scoped, tag = 'internal scratch']
  %s0 = inlined_call_operand.vmem [shape: bf16[16,256], index: 0, kind: input, shape index: {}]
  %s1 = inlined_call_operand.vmem [shape: bf16[256,256], index: 1, kind: input, shape index: {}]
  %s2 = inlined_call_operand.vmem [shape: f32[1,256], index: 2, kind: input, shape index: {}]
  %s3 = inlined_call_operand.vmem [shape: f32[16,256], index: 3, kind: input, shape index: {}]
  %s4 = inlined_call_operand.vmem [shape: bf16[16,256], index: 4, kind: output, shape index: {}]
  %s5 = sld [smem:[#allocation0]]
  $region26: #{transformer_decoder_forward.19} parent=0
    _
  %s7 = ssub.s32 1, %s5
  %s8 = scalar_select 0, %s7, %s5
  // Predicated region
  $region2: #{transformer_decoder_forward.19} parent=0 // pred_check
    _
  $region3: #{transformer_decoder_forward.19} parent=0 // pred_check_branch
    %10 = sbr.rel (0) target = $region5
  $region4: #{transformer_decoder_forward.19} parent=0 // pred_region
    _
  $region5: #{transformer_decoder_forward.19} parent=0 // pred_fallthru
    _
  // Predicated region
  $region6: #{transformer_decoder_forward.19} parent=0 // pred_check
    _
  $region7: #{transformer_decoder_forward.19} parent=0 // pred_check_branch
    %12 = sbr.rel (0) target = $region9
  $region8: #{transformer_decoder_forward.19} parent=0 // pred_region
    _
  $region9: #{transformer_decoder_forward.19} parent=0 // pred_fallthru
    _
  // Predicated region
  $region10: #{transformer_decoder_forward.19} parent=0 // pred_check
    _
  $region11: #{transformer_decoder_forward.19} parent=0 // pred_check_branch
    %14 = sbr.rel (0) target = $region13
  $region12: #{transformer_decoder_forward.19} parent=0 // pred_region
    _
  $region13: #{transformer_decoder_forward.19} parent=0 // pred_fallthru
    _
  // Predicated region
  $region14: #{transformer_decoder_forward.19} parent=0 // pred_check
    _
  $region15: #{transformer_decoder_forward.19} parent=0 // pred_check_branch
    %16 = sbr.rel (0) target = $region17
  $region16: #{transformer_decoder_forward.19} parent=0 // pred_region
    _
  $region17: #{transformer_decoder_forward.19} parent=0 // pred_fallthru
    _
  %v17 = vld [vmem:[%s0] sm:$0xff]
  %v18 = vld [vmem:[%s0 + $0x8] sm:$0xff]
  %v19 = vld [vmem:[%s1] sm:$0xff]
  %v20 = vld [vmem:[%s1 + $0x8] sm:$0xff]
  %v21 = vld [vmem:[%s1 + $0x10] sm:$0xff]
  %v22 = vld [vmem:[%s1 + $0x18] sm:$0xff]
  %v23 = vld [vmem:[%s1 + $0x20] sm:$0xff]
  %v24 = vld [vmem:[%s1 + $0x28] sm:$0xff]
  %v25 = vld [vmem:[%s1 + $0x30] sm:$0xff]
  %v26 = vld [vmem:[%s1 + $0x38] sm:$0xff]
  %v27 = vld [vmem:[%s1 + $0x40] sm:$0xff]
  %v28 = vld [vmem:[%s1 + $0x48] sm:$0xff]
  %v29 = vld [vmem:[%s1 + $0x50] sm:$0xff]
  %v30 = vld [vmem:[%s1 + $0x58] sm:$0xff]
  %v31 = vld [vmem:[%s1 + $0x60] sm:$0xff]
  %v32 = vld [vmem:[%s1 + $0x68] sm:$0xff]
  %v33 = vld [vmem:[%s1 + $0x70] sm:$0xff]
  %v34 = vld [vmem:[%s1 + $0x78] sm:$0xff]
  %v35 = vld [vmem:[%s1 + $0x80] sm:$0xff]
  %v36 = vld [vmem:[%s1 + $0x88] sm:$0xff]
  %v37 = vld [vmem:[%s1 + $0x90] sm:$0xff]
  %v38 = vld [vmem:[%s1 + $0x98] sm:$0xff]
  %v39 = vld [vmem:[%s1 + $0xa0] sm:$0xff]
  %v40 = vld [vmem:[%s1 + $0xa8] sm:$0xff]
  %v41 = vld [vmem:[%s1 + $0xb0] sm:$0xff]
  %v42 = vld [vmem:[%s1 + $0xb8] sm:$0xff]
  %v43 = vld [vmem:[%s1 + $0xc0] sm:$0xff]
  %v44 = vld [vmem:[%s1 + $0xc8] sm:$0xff]
  %v45 = vld [vmem:[%s1 + $0xd0] sm:$0xff]
  %v46 = vld [vmem:[%s1 + $0xd8] sm:$0xff]
  %v47 = vld [vmem:[%s1 + $0xe0] sm:$0xff]
  %v48 = vld [vmem:[%s1 + $0xe8] sm:$0xff]
  %v49 = vld [vmem:[%s1 + $0xf0] sm:$0xff]
  %v50 = vld [vmem:[%s1 + $0xf8] sm:$0xff]
  %v51 = vld [vmem:[%s2] sm:$0x3]
  %v53 = vlaneseq
  %v54 = vshrl.u32 %v53, 7
  %v55 = vsub.s32 0, %v54
  %v56 = vrot.slane %v51, %v55
  %v57 = vlaneseq
  %v58 = vshrl.u32 %v57, 7
  %v59 = vsub.s32 1, %v58
  %v60 = vrot.slane %v51, %v59
  %v65 = vunpack.c.l.b16 %v17
  %v66 = vunpack.c.h.b16 %v17
  %v67 = vunpack.c.l.b16 %v18
  %v68 = vunpack.c.h.b16 %v18
  %v69 = vpack.c.b16 %v67, %v65
  %v70 = vpack.c.b16 %v68, %v66
  %v105 = vunpack.c.l.b16 %v19
  %v106 = vunpack.c.h.b16 %v19
  %v107 = vunpack.c.l.b16 %v20
  %v108 = vunpack.c.h.b16 %v20
  %v109 = vunpack.c.l.b16 %v21
  %v110 = vunpack.c.h.b16 %v21
  %v111 = vunpack.c.l.b16 %v22
  %v112 = vunpack.c.h.b16 %v22
  %v113 = vunpack.c.l.b16 %v23
  %v114 = vunpack.c.h.b16 %v23
  %v115 = vunpack.c.l.b16 %v24
  %v116 = vunpack.c.h.b16 %v24
  %v117 = vunpack.c.l.b16 %v25
  %v118 = vunpack.c.h.b16 %v25
  %v119 = vunpack.c.l.b16 %v26
  %v120 = vunpack.c.h.b16 %v26
  %v121 = vunpack.c.l.b16 %v27
  %v122 = vunpack.c.h.b16 %v27
  %v123 = vunpack.c.l.b16 %v28
  %v124 = vunpack.c.h.b16 %v28
  %v125 = vunpack.c.l.b16 %v29
  %v126 = vunpack.c.h.b16 %v29
  %v127 = vunpack.c.l.b16 %v30
  %v128 = vunpack.c.h.b16 %v30
  %v129 = vunpack.c.l.b16 %v31
  %v130 = vunpack.c.h.b16 %v31
  %v131 = vunpack.c.l.b16 %v32
  %v132 = vunpack.c.h.b16 %v32
  %v133 = vunpack.c.l.b16 %v33
  %v134 = vunpack.c.h.b16 %v33
  %v135 = vunpack.c.l.b16 %v34
  %v136 = vunpack.c.h.b16 %v34
  %v137 = vunpack.c.l.b16 %v35
  %v138 = vunpack.c.h.b16 %v35
  %v139 = vunpack.c.l.b16 %v36
  %v140 = vunpack.c.h.b16 %v36
  %v141 = vunpack.c.l.b16 %v37
  %v142 = vunpack.c.h.b16 %v37
  %v143 = vunpack.c.l.b16 %v38
  %v144 = vunpack.c.h.b16 %v38
  %v145 = vunpack.c.l.b16 %v39
  %v146 = vunpack.c.h.b16 %v39
  %v147 = vunpack.c.l.b16 %v40
  %v148 = vunpack.c.h.b16 %v40
  %v149 = vunpack.c.l.b16 %v41
  %v150 = vunpack.c.h.b16 %v41
  %v151 = vunpack.c.l.b16 %v42
  %v152 = vunpack.c.h.b16 %v42
  %v153 = vunpack.c.l.b16 %v43
  %v154 = vunpack.c.h.b16 %v43
  %v155 = vunpack.c.l.b16 %v44
  %v156 = vunpack.c.h.b16 %v44
  %v157 = vunpack.c.l.b16 %v45
  %v158 = vunpack.c.h.b16 %v45
  %v159 = vunpack.c.l.b16 %v46
  %v160 = vunpack.c.h.b16 %v46
  %v161 = vunpack.c.l.b16 %v47
  %v162 = vunpack.c.h.b16 %v47
  %v163 = vunpack.c.l.b16 %v48
  %v164 = vunpack.c.h.b16 %v48
  %v165 = vunpack.c.l.b16 %v49
  %v166 = vunpack.c.h.b16 %v49
  %v167 = vunpack.c.l.b16 %v50
  %v168 = vunpack.c.h.b16 %v50
  %v169 = vpack.c.b16 %v107, %v105
  %v170 = vpack.c.b16 %v108, %v106
  %v171 = vpack.c.b16 %v111, %v109
  %v172 = vpack.c.b16 %v112, %v110
  %v173 = vpack.c.b16 %v115, %v113
  %v174 = vpack.c.b16 %v116, %v114
  %v175 = vpack.c.b16 %v119, %v117
  %v176 = vpack.c.b16 %v120, %v118
  %v177 = vpack.c.b16 %v123, %v121
  %v178 = vpack.c.b16 %v124, %v122
  %v179 = vpack.c.b16 %v127, %v125
  %v180 = vpack.c.b16 %v128, %v126
  %v181 = vpack.c.b16 %v131, %v129
  %v182 = vpack.c.b16 %v132, %v130
  %v183 = vpack.c.b16 %v135, %v133
  %v184 = vpack.c.b16 %v136, %v134
  %v185 = vpack.c.b16 %v139, %v137
  %v186 = vpack.c.b16 %v140, %v138
  %v187 = vpack.c.b16 %v143, %v141
  %v188 = vpack.c.b16 %v144, %v142
  %v189 = vpack.c.b16 %v147, %v145
  %v190 = vpack.c.b16 %v148, %v146
  %v191 = vpack.c.b16 %v151, %v149
  %v192 = vpack.c.b16 %v152, %v150
  %v193 = vpack.c.b16 %v155, %v153
  %v194 = vpack.c.b16 %v156, %v154
  %v195 = vpack.c.b16 %v159, %v157
  %v196 = vpack.c.b16 %v160, %v158
  %v197 = vpack.c.b16 %v163, %v161
  %v198 = vpack.c.b16 %v164, %v162
  %v199 = vpack.c.b16 %v167, %v165
  %v200 = vpack.c.b16 %v168, %v166
  %233 = vmatprep.subr.bf16.mxu0 %v184
  %234 = vmatpush1.bf16.msra.mxu0 %v183
  %235 = vmatprep.subr.bf16.mxu0 %v182
  %236 = vmatpush1.bf16.msra.mxu0 %v181
  %237 = vmatprep.subr.bf16.mxu0 %v180
  %238 = vmatpush1.bf16.msra.mxu0 %v179
  %239 = vmatprep.subr.bf16.mxu0 %v178
  %240 = vmatpush1.bf16.msra.mxu0 %v177
  %241 = vmatprep.subr.bf16.mxu0 %v176
  %242 = vmatpush1.bf16.msra.mxu0 %v175
  %243 = vmatprep.subr.bf16.mxu0 %v174
  %244 = vmatpush1.bf16.msra.mxu0 %v173
  %245 = vmatprep.subr.bf16.mxu0 %v172
  %246 = vmatpush1.bf16.msra.mxu0 %v171
  %247 = vmatprep.subr.bf16.mxu0 %v170
  %248 = vmatpush1.bf16.msra.mxu0 %v169
  %249 = vmatprep.subr.bf16.mxu0 %v200
  %250 = vmatpush2.bf16.msra.mxu0 %v199
  %251 = vmatprep.subr.bf16.mxu0 %v198
  %252 = vmatpush2.bf16.msra.mxu0 %v197
  %253 = vmatprep.subr.bf16.mxu0 %v196
  %254 = vmatpush2.bf16.msra.mxu0 %v195
  %255 = vmatprep.subr.bf16.mxu0 %v194
  %256 = vmatpush2.bf16.msra.mxu0 %v193
  %257 = vmatprep.subr.bf16.mxu0 %v192
  %258 = vmatpush2.bf16.msra.mxu0 %v191
  %259 = vmatprep.subr.bf16.mxu0 %v190
  %260 = vmatpush2.bf16.msra.mxu0 %v189
  %261 = vmatprep.subr.bf16.mxu0 %v188
  %262 = vmatpush2.bf16.msra.mxu0 %v187
  %263 = vmatprep.subr.bf16.mxu0 %v186
  %264 = vmatpush2.bf16.msra.mxu0 %v185
  %265 = vmatprep.mubr.bf16.mxu0 %v70
  %266 = vmatmul.mubr.bf16.gmra.mxu0 %v69
  %v267 = vpop.f32.mrf.mxu0
  %v268 = vadd.f32 %v56, %v267
  %v269 = vpop.f32.mrf.mxu0
  %v270 = vadd.f32 %v60, %v269
  %v271 = vpop.f32.mrf.mxu0
  %v272 = vadd.f32 %v56, %v271
  %v273 = vpop.f32.mrf.mxu0
  %v274 = vadd.f32 %v60, %v273
  %275 = vdwg.mxu0
  %v276 = vld [vmem:[%s3] sm:$0xff]
  %v277 = vld [vmem:[%s3 + $0x8] sm:$0xff]
  %v278 = vld [vmem:[%s3 + $0x10] sm:$0xff]
  %v279 = vld [vmem:[%s3 + $0x18] sm:$0xff]
  %v280 = vadd.f32 %v268, %v276
  %v281 = vadd.f32 %v270, %v277
  %v282 = vadd.f32 %v272, %v278
  %v283 = vadd.f32 %v274, %v279
  %v284 = vpack.c.bf16 %v282, %v280
  %v285 = vpack.c.bf16 %v283, %v281
  %v288 = vunpack.c.l.b16 %v284
  %v289 = vunpack.c.l.b16 %v285
  %v290 = vunpack.c.h.b16 %v284
  %v291 = vunpack.c.h.b16 %v285
  %v292 = vpack.c.b16 %v289, %v288
  %v293 = vpack.c.b16 %v291, %v290
  %296 = vst [vmem:[%s4] sm:$0xff] %v292
  %297 = vst [vmem:[%s4 + $0x8] sm:$0xff] %v293
  // Predicated region
  $region18: #{transformer_decoder_forward.19} parent=0 // pred_check
    _
  $region19: #{transformer_decoder_forward.19} parent=0 // pred_check_branch
    %299 = sbr.rel (0) target = $region21
  $region20: #{transformer_decoder_forward.19} parent=0 // pred_region
    _
  $region21: #{transformer_decoder_forward.19} parent=0 // pred_fallthru
    _
  // Predicated region
  $region22: #{transformer_decoder_forward.19} parent=0 // pred_check
    _
  $region23: #{transformer_decoder_forward.19} parent=0 // pred_check_branch
    %301 = sbr.rel (0) target = $region25
  $region24: #{transformer_decoder_forward.19} parent=0 // pred_region
    _
  $region25: #{transformer_decoder_forward.19} parent=0 // pred_fallthru
    _

// kernel: transformer_decoder_forward.18
$region0: #{transformer_decoder_forward.18}
  #allocation0 [shape = 'u32[]', space=smem, size = 0x4, offset = 0x4, fixed_abs, tag = 'smem constant byte address 0x4 - core index']
  #allocation1 [shape = 'u32[144,128]{1,0:T(1,128)}', space=vmem, size = 0x12000, scoped, tag = 'internal scratch']
  #allocation2 [shape = 'f32[1,8,1]{2,1,0:T(8,128)}', space=vmem, size = 0x1000, scoped, tag = 'scratch operand']
  #allocation3 [shape = 'f32[1,8,1]{2,1,0:T(8,128)}', space=vmem, size = 0x1000, scoped, tag = 'scratch operand']
  #allocation4 [shape = 'f32[1,8,128]{2,1,0:T(8,128)}', space=vmem, size = 0x1000, scoped, tag = 'scratch operand']
  %s0 = inlined_call_operand.vmem [shape: s32[2,1,8], index: 0, kind: input, shape index: {}]
  %s1 = inlined_call_operand.vmem [shape: bf16[2,8,768], index: 1, kind: input, shape index: {}, may-alias: {1,2,3}]
  %s2 = inlined_call_operand.vmem [shape: bf16[2,8,768], index: 2, kind: input, shape index: {}, may-alias: {1,2,3}]
  %s3 = inlined_call_operand.vmem [shape: bf16[2,8,768], index: 3, kind: input, shape index: {}, may-alias: {1,2,3}]
  %s4 = inlined_call_operand.vmem [shape: bf16[2,8,256], index: 4, kind: output, shape index: {}]
  %s5 = sld [smem:[#allocation0]]
  $region61: #{transformer_decoder_forward.18} parent=0
    _
  %s7 = ssub.s32 1, %s5
  %s8 = scalar_select 0, %s7, %s5
  loop: start=0, step=1, limit=6
  $region2: #{transformer_decoder_forward.18} parent=0 // loop_pre_header
    _
  $region3: #{transformer_decoder_forward.18} parent=0 // loop_header
    %s10 = sphi 0, %s14
    %p11 = scmp.ge.s32.totalorder %s10, 6
    %s17 = sphi 0, %s43
    %s18 = sphi 0, %s39
    %s19 = sphi 0, %s35
    %s20 = sphi 0, %s31
    %s21 = sphi 0, %s17
    %s22 = sphi 0, %s18
    %s23 = sphi 0, %s19
    %s24 = sphi 0, %s20
    %s25 = sphi 0, %s21
    %s26 = sphi 0, %s22
    %s27 = sphi 0, %s23
    %s28 = sphi 0, %s24
    %s48 = sphi 0, %s50
    %s51 = sphi 0, %s48
    %s52 = sphi 0, %s51
    %s68 = sphi 0, %s52
    %s78 = sphi 0, %s80
    %s81 = sphi 0, %s78
    %s82 = sphi 0, %s81
    %s98 = sphi 0, %s82
    %s110 = sphi 0, %s112
    %s113 = sphi 0, %s110
    %s114 = sphi 0, %s113
    %s130 = sphi 0, %s114
    %s142 = sphi 0, %s144
    %s145 = sphi 0, %s142
    %s146 = sphi 0, %s145
    %s162 = sphi 0, %s146
    %s172 = sphi 0, %s174
    %s175 = sphi 0, %s172
    %s176 = sphi 0, %s175
    %s192 = sphi 0, %s176
  $region4: #{transformer_decoder_forward.18} parent=0 // loop_header_branch
    %13 = sbr.rel (%p11) target = $region8
  $region5: #{transformer_decoder_forward.18} parent=0 // loop_body
    %s15 = ssub.s32 %s10, 1
    %s16 = ssub.s32 %s10, 2
    %s29 = sadd.s32 1, %s20
    %p30 = scmp.ge.s32.totalorder %s29, 1
    %s31 = scalar_select %p30, 0, %s29
    %s32 = sadd.s32 1, %s19
    %s33 = scalar_select %p30, %s32, %s19
    %p34 = scmp.ge.s32.totalorder %s33, 1
    %s35 = scalar_select %p34, 0, %s33
    %s36 = sadd.s32 1, %s18
    %s37 = scalar_select %p34, %s36, %s18
    %p38 = scmp.ge.s32.totalorder %s37, 2
    %s39 = scalar_select %p38, 0, %s37
    %s40 = sadd.s32 1, %s17
    %s41 = scalar_select %p38, %s40, %s17
    %p42 = scmp.ge.s32.totalorder %s41, 2
    %s43 = scalar_select %p42, 0, %s41
    %s44 = ssub.s32 %s17, %s43
    %s45 = ssub.s32 %s20, %s31
    %s46 = sor.u32 %s44, %s45
    %p47 = scmp.eq.s32.totalorder %s46, 0
    %s49 = sadd.s32 %s48, 1
    %s50 = scalar_select %p47, %s48, %s49
    %p53 = pneg %p47
    %p54 = scmp.eq.s32.totalorder %s10, 3
    %p55 = por %p53, %p54
    %p56 = scmp.ne.s32.totalorder %s48, %s51
    %p57 = scmp.eq.s32.totalorder %s10, 0
    %p58 = por %p56, %p57
    %p59 = scmp.ne.s32.totalorder %s48, %s51
    %p60 = scmp.eq.s32.totalorder %s15, 3
    %p61 = por %p59, %p60
    %p62 = scmp.ne.s32.totalorder %s51, %s52
    %p63 = scmp.eq.s32.totalorder %s15, 0
    %p64 = por %p62, %p63
    %p65 = scmp.ne.s32.totalorder %s51, %s52
    %p66 = scmp.eq.s32.totalorder %s16, 3
    %p67 = por %p65, %p66
    %p69 = scmp.ne.s32.totalorder %s52, %s68
    %p70 = scmp.eq.s32.totalorder %s16, 0
    %p71 = por %p69, %p70
    %s72 = ssub.s32 %s17, %s43
    %s73 = ssub.s32 %s19, %s35
    %s74 = sor.u32 %s72, %s73
    %s75 = ssub.s32 %s18, %s39
    %s76 = sor.u32 %s74, %s75
    %p77 = scmp.eq.s32.totalorder %s76, 0
    %s79 = sadd.s32 %s78, 1
    %s80 = scalar_select %p77, %s78, %s79
    %p83 = pneg %p77
    %p84 = scmp.eq.s32.totalorder %s10, 3
    %p85 = por %p83, %p84
    %p86 = scmp.ne.s32.totalorder %s78, %s81
    %p87 = scmp.eq.s32.totalorder %s10, 0
    %p88 = por %p86, %p87
    %p89 = scmp.ne.s32.totalorder %s78, %s81
    %p90 = scmp.eq.s32.totalorder %s15, 3
    %p91 = por %p89, %p90
    %p92 = scmp.ne.s32.totalorder %s81, %s82
    %p93 = scmp.eq.s32.totalorder %s15, 0
    %p94 = por %p92, %p93
    %p95 = scmp.ne.s32.totalorder %s81, %s82
    %p96 = scmp.eq.s32.totalorder %s16, 3
    %p97 = por %p95, %p96
    %p99 = scmp.ne.s32.totalorder %s82, %s98
    %p100 = scmp.eq.s32.totalorder %s16, 0
    %p101 = por %p99, %p100
    %s102 = sadd.s32 %s18, 2
    %s103 = sadd.s32 %s39, 2
    %s104 = ssub.s32 %s17, %s43
    %s105 = ssub.s32 %s20, %s31
    %s106 = sor.u32 %s104, %s105
    %s107 = ssub.s32 %s102, %s103
    %s108 = sor.u32 %s106, %s107
    %p109 = scmp.eq.s32.totalorder %s108, 0
    %s111 = sadd.s32 %s110, 1
    %s112 = scalar_select %p109, %s110, %s111
    %p115 = pneg %p109
    %p116 = scmp.eq.s32.totalorder %s10, 3
    %p117 = por %p115, %p116
    %p118 = scmp.ne.s32.totalorder %s110, %s113
    %p119 = scmp.eq.s32.totalorder %s10, 0
    %p120 = por %p118, %p119
    %p121 = scmp.ne.s32.totalorder %s110, %s113
    %p122 = scmp.eq.s32.totalorder %s15, 3
    %p123 = por %p121, %p122
    %p124 = scmp.ne.s32.totalorder %s113, %s114
    %p125 = scmp.eq.s32.totalorder %s15, 0
    %p126 = por %p124, %p125
    %p127 = scmp.ne.s32.totalorder %s113, %s114
    %p128 = scmp.eq.s32.totalorder %s16, 3
    %p129 = por %p127, %p128
    %p131 = scmp.ne.s32.totalorder %s114, %s130
    %p132 = scmp.eq.s32.totalorder %s16, 0
    %p133 = por %p131, %p132
    %s134 = sadd.s32 %s18, 4
    %s135 = sadd.s32 %s39, 4
    %s136 = ssub.s32 %s17, %s43
    %s137 = ssub.s32 %s20, %s31
    %s138 = sor.u32 %s136, %s137
    %s139 = ssub.s32 %s134, %s135
    %s140 = sor.u32 %s138, %s139
    %p141 = scmp.eq.s32.totalorder %s140, 0
    %s143 = sadd.s32 %s142, 1
    %s144 = scalar_select %p141, %s142, %s143
    %p147 = pneg %p141
    %p148 = scmp.eq.s32.totalorder %s10, 3
    %p149 = por %p147, %p148
    %p150 = scmp.ne.s32.totalorder %s142, %s145
    %p151 = scmp.eq.s32.totalorder %s10, 0
    %p152 = por %p150, %p151
    %p153 = scmp.ne.s32.totalorder %s142, %s145
    %p154 = scmp.eq.s32.totalorder %s15, 3
    %p155 = por %p153, %p154
    %p156 = scmp.ne.s32.totalorder %s145, %s146
    %p157 = scmp.eq.s32.totalorder %s15, 0
    %p158 = por %p156, %p157
    %p159 = scmp.ne.s32.totalorder %s145, %s146
    %p160 = scmp.eq.s32.totalorder %s16, 3
    %p161 = por %p159, %p160
    %p163 = scmp.ne.s32.totalorder %s146, %s162
    %p164 = scmp.eq.s32.totalorder %s16, 0
    %p165 = por %p163, %p164
    %s166 = ssub.s32 %s17, %s43
    %s167 = ssub.s32 %s19, %s35
    %s168 = sor.u32 %s166, %s167
    %s169 = ssub.s32 %s18, %s39
    %s170 = sor.u32 %s168, %s169
    %p171 = scmp.eq.s32.totalorder %s170, 0
    %s173 = sadd.s32 %s172, 1
    %s174 = scalar_select %p171, %s172, %s173
    %p177 = pneg %p171
    %p178 = scmp.eq.s32.totalorder %s10, 3
    %p179 = por %p177, %p178
    %p180 = scmp.ne.s32.totalorder %s172, %s175
    %p181 = scmp.eq.s32.totalorder %s10, 0
    %p182 = por %p180, %p181
    %p183 = scmp.ne.s32.totalorder %s172, %s175
    %p184 = scmp.eq.s32.totalorder %s15, 3
    %p185 = por %p183, %p184
    %p186 = scmp.ne.s32.totalorder %s175, %s176
    %p187 = scmp.eq.s32.totalorder %s15, 0
    %p188 = por %p186, %p187
    %p189 = scmp.ne.s32.totalorder %s175, %s176
    %p190 = scmp.eq.s32.totalorder %s16, 3
    %p191 = por %p189, %p190
    %p193 = scmp.ne.s32.totalorder %s176, %s192
    %p194 = scmp.eq.s32.totalorder %s16, 0
    %p195 = por %p193, %p194
    %p196 = scmp.le.s32.totalorder 1, %s10
    %p197 = scmp.lt.s32.totalorder %s10, 5
    %p198 = pnand %p196, %p197
    %p199 = pneg %p198
    // Predicated region
    $region9: #{transformer_decoder_forward.18} parent=5 // pred_check
      _
    $region10: #{transformer_decoder_forward.18} parent=5 // pred_check_branch
      %201 = sbr.rel (%p198) target = $region12
    $region11: #{transformer_decoder_forward.18} parent=5 // pred_region
      %s202 = ssub.s32 %s10, 1
    $region12: #{transformer_decoder_forward.18} parent=5 // pred_fallthru
      _
    %p203 = scmp.lt.s32.totalorder %s10, 4
    // Predicated region
    $region13: #{transformer_decoder_forward.18} parent=5 // pred_check
      %p204 = pneg %p203
    $region14: #{transformer_decoder_forward.18} parent=5 // pred_check_branch
      %206 = sbr.rel (%p204) target = $region16
    $region15: #{transformer_decoder_forward.18} parent=5 // pred_region
      // Predicated region
      $region17: #{transformer_decoder_forward.18} parent=15 // pred_check
        %p207 = pneg %p58
      $region18: #{transformer_decoder_forward.18} parent=15 // pred_check_branch
        %209 = sbr.rel (%p207) target = $region20
      $region19: #{transformer_decoder_forward.18} parent=15 // pred_region
        %p210 = scmp.lt.s32.totalorder %s17, 1
        %s211 = scalar_select %p210, %s17, 1
        %p212 = scmp.lt.s32.totalorder %s20, 0
        %s213 = scalar_select %p212, %s20, 0
        %s214 = sadd.s32 %s213, %s211
        %s215 = scalar_lea.vmem %s0, %s214
      $region20: #{transformer_decoder_forward.18} parent=15 // pred_fallthru
        _
      // Predicated region
      $region21: #{transformer_decoder_forward.18} parent=15 // pred_check
        %p216 = pneg %p88
      $region22: #{transformer_decoder_forward.18} parent=15 // pred_check_branch
        %218 = sbr.rel (%p216) target = $region24
      $region23: #{transformer_decoder_forward.18} parent=15 // pred_region
        %p219 = scmp.lt.s32.totalorder %s17, 1
        %s220 = scalar_select %p219, %s17, 1
        %p221 = scmp.lt.s32.totalorder %s19, 0
        %s222 = scalar_select %p221, %s19, 0
        %p223 = scmp.lt.s32.totalorder %s18, 5
        %s224 = scalar_select %p223, %s18, 5
        %s225 = smul.addr %s222, 6
        %s226 = sadd.s32 %s224, %s225
        %s227 = smul.addr %s220, 6
        %s228 = sadd.s32 %s226, %s227
        %s229 = smul.addr %s228, 4
        %s230 = scalar_lea.vmem %s1, %s229
      $region24: #{transformer_decoder_forward.18} parent=15 // pred_fallthru
        _
      // Predicated region
      $region25: #{transformer_decoder_forward.18} parent=15 // pred_check
        %p231 = pneg %p120
      $region26: #{transformer_decoder_forward.18} parent=15 // pred_check_branch
        %233 = sbr.rel (%p231) target = $region28
      $region27: #{transformer_decoder_forward.18} parent=15 // pred_region
        %s234 = sadd.s32 %s18, 2
        %p235 = scmp.lt.s32.totalorder %s17, 1
        %s236 = scalar_select %p235, %s17, 1
        %p237 = scmp.lt.s32.totalorder %s20, 0
        %s238 = scalar_select %p237, %s20, 0
        %p239 = scmp.lt.s32.totalorder %s234, 5
        %s240 = scalar_select %p239, %s234, 5
        %s241 = smul.addr %s238, 6
        %s242 = sadd.s32 %s240, %s241
        %s243 = smul.addr %s236, 6
        %s244 = sadd.s32 %s242, %s243
        %s245 = smul.addr %s244, 4
        %s246 = scalar_lea.vmem %s2, %s245
        %s247 = sadd.s32 %s18, 2
      $region28: #{transformer_decoder_forward.18} parent=15 // pred_fallthru
        _
      // Predicated region
      $region29: #{transformer_decoder_forward.18} parent=15 // pred_check
        %p248 = pneg %p152
      $region30: #{transformer_decoder_forward.18} parent=15 // pred_check_branch
        %250 = sbr.rel (%p248) target = $region32
      $region31: #{transformer_decoder_forward.18} parent=15 // pred_region
        %s251 = sadd.s32 %s18, 4
        %p252 = scmp.lt.s32.totalorder %s17, 1
        %s253 = scalar_select %p252, %s17, 1
        %p254 = scmp.lt.s32.totalorder %s20, 0
        %s255 = scalar_select %p254, %s20, 0
        %p256 = scmp.lt.s32.totalorder %s251, 5
        %s257 = scalar_select %p256, %s251, 5
        %s258 = smul.addr %s255, 6
        %s259 = sadd.s32 %s257, %s258
        %s260 = smul.addr %s253, 6
        %s261 = sadd.s32 %s259, %s260
        %s262 = smul.addr %s261, 4
        %s263 = scalar_lea.vmem %s3, %s262
        %s264 = sadd.s32 %s18, 4
      $region32: #{transformer_decoder_forward.18} parent=15 // pred_fallthru
        _
    $region16: #{transformer_decoder_forward.18} parent=5 // pred_fallthru
      _
    %p265 = scmp.le.s32.totalorder 1, %s10
    %p266 = scmp.lt.s32.totalorder %s10, 5
    %p267 = pnand %p265, %p266
    %p268 = pneg %p267
    // Predicated region
    $region33: #{transformer_decoder_forward.18} parent=5 // pred_check
      _
    $region34: #{transformer_decoder_forward.18} parent=5 // pred_check_branch
      %270 = sbr.rel (%p267) target = $region36
    $region35: #{transformer_decoder_forward.18} parent=5 // pred_region
      %s271 = ssub.s32 %s10, 1
      %p272 = scmp.lt.s32.totalorder %s21, 1
      %s273 = scalar_select %p272, %s21, 1
      %p274 = scmp.lt.s32.totalorder %s24, 0
      %s275 = scalar_select %p274, %s24, 0
      %s276 = sadd.s32 %s275, %s273
      %s277 = scalar_lea.vmem %s0, %s276
      %p278 = pneg %p64
      %p279 = pneg %p61
      %p280 = scmp.lt.s32.totalorder %s21, 1
      %s281 = scalar_select %p280, %s21, 1
      %p282 = scmp.lt.s32.totalorder %s23, 0
      %s283 = scalar_select %p282, %s23, 0
      %p284 = scmp.lt.s32.totalorder %s22, 5
      %s285 = scalar_select %p284, %s22, 5
      %s286 = smul.addr %s283, 6
      %s287 = sadd.s32 %s285, %s286
      %s288 = smul.addr %s281, 6
      %s289 = sadd.s32 %s287, %s288
      %s290 = smul.addr %s289, 4
      %s291 = scalar_lea.vmem %s1, %s290
      %p292 = pneg %p94
      %p293 = pneg %p91
      %s294 = sadd.s32 %s22, 2
      %p295 = scmp.lt.s32.totalorder %s21, 1
      %s296 = scalar_select %p295, %s21, 1
      %p297 = scmp.lt.s32.totalorder %s24, 0
      %s298 = scalar_select %p297, %s24, 0
      %p299 = scmp.lt.s32.totalorder %s294, 5
      %s300 = scalar_select %p299, %s294, 5
      %s301 = smul.addr %s298, 6
      %s302 = sadd.s32 %s300, %s301
      %s303 = smul.addr %s296, 6
      %s304 = sadd.s32 %s302, %s303
      %s305 = smul.addr %s304, 4
      %s306 = scalar_lea.vmem %s2, %s305
      %p307 = pneg %p126
      %p308 = pneg %p123
      %s309 = sadd.s32 %s22, 4
      %p310 = scmp.lt.s32.totalorder %s21, 1
      %s311 = scalar_select %p310, %s21, 1
      %p312 = scmp.lt.s32.totalorder %s24, 0
      %s313 = scalar_select %p312, %s24, 0
      %p314 = scmp.lt.s32.totalorder %s309, 5
      %s315 = scalar_select %p314, %s309, 5
      %s316 = smul.addr %s313, 6
      %s317 = sadd.s32 %s315, %s316
      %s318 = smul.addr %s311, 6
      %s319 = sadd.s32 %s317, %s318
      %s320 = smul.addr %s319, 4
      %s321 = scalar_lea.vmem %s3, %s320
      %p322 = pneg %p158
      %p323 = pneg %p155
      %p324 = pneg %p188
      %p325 = pneg %p185
      %p326 = scmp.lt.s32.totalorder %s21, 1
      %s327 = scalar_select %p326, %s21, 1
      %p328 = scmp.lt.s32.totalorder %s23, 0
      %s329 = scalar_select %p328, %s23, 0
      %p330 = scmp.lt.s32.totalorder %s22, 1
      %s331 = scalar_select %p330, %s22, 1
      %s332 = smul.addr %s329, 2
      %s333 = sadd.s32 %s331, %s332
      %s334 = smul.addr %s327, 2
      %s335 = sadd.s32 %s333, %s334
      %s336 = smul.addr %s335, 4
      %s337 = scalar_lea.vmem %s4, %s336
      %p338 = scmp.lt.s32.totalorder %s21, 1
      %s339 = scalar_select %p338, %s21, 1
      %p340 = scmp.lt.s32.totalorder %s24, 0
      %s341 = scalar_select %p340, %s24, 0
      %s342 = sadd.s32 %s341, %s339
      %s343 = scalar_lea.vmem %s0, %s342
      %p344 = scmp.lt.s32.totalorder %s21, 1
      %s345 = scalar_select %p344, %s21, 1
      %p346 = scmp.lt.s32.totalorder %s23, 0
      %s347 = scalar_select %p346, %s23, 0
      %p348 = scmp.lt.s32.totalorder %s22, 5
      %s349 = scalar_select %p348, %s22, 5
      %s350 = smul.addr %s347, 6
      %s351 = sadd.s32 %s349, %s350
      %s352 = smul.addr %s345, 6
      %s353 = sadd.s32 %s351, %s352
      %s354 = smul.addr %s353, 4
      %s355 = scalar_lea.vmem %s1, %s354
      %s356 = sadd.s32 %s22, 2
      %p357 = scmp.lt.s32.totalorder %s21, 1
      %s358 = scalar_select %p357, %s21, 1
      %p359 = scmp.lt.s32.totalorder %s24, 0
      %s360 = scalar_select %p359, %s24, 0
      %p361 = scmp.lt.s32.totalorder %s356, 5
      %s362 = scalar_select %p361, %s356, 5
      %s363 = smul.addr %s360, 6
      %s364 = sadd.s32 %s362, %s363
      %s365 = smul.addr %s358, 6
      %s366 = sadd.s32 %s364, %s365
      %s367 = smul.addr %s366, 4
      %s368 = scalar_lea.vmem %s2, %s367
      %s369 = sadd.s32 %s22, 2
      %s370 = sadd.s32 %s22, 4
      %p371 = scmp.lt.s32.totalorder %s21, 1
      %s372 = scalar_select %p371, %s21, 1
      %p373 = scmp.lt.s32.totalorder %s24, 0
      %s374 = scalar_select %p373, %s24, 0
      %p375 = scmp.lt.s32.totalorder %s370, 5
      %s376 = scalar_select %p375, %s370, 5
      %s377 = smul.addr %s374, 6
      %s378 = sadd.s32 %s376, %s377
      %s379 = smul.addr %s372, 6
      %s380 = sadd.s32 %s378, %s379
      %s381 = smul.addr %s380, 4
      %s382 = scalar_lea.vmem %s3, %s381
      %s383 = sadd.s32 %s22, 4
      %p384 = scmp.lt.s32.totalorder %s21, 1
      %s385 = scalar_select %p384, %s21, 1
      %p386 = scmp.lt.s32.totalorder %s23, 0
      %s387 = scalar_select %p386, %s23, 0
      %p388 = scmp.lt.s32.totalorder %s22, 1
      %s389 = scalar_select %p388, %s22, 1
      %s390 = smul.addr %s387, 2
      %s391 = sadd.s32 %s389, %s390
      %s392 = smul.addr %s385, 2
      %s393 = sadd.s32 %s391, %s392
      %s394 = smul.addr %s393, 4
      %s395 = scalar_lea.vmem %s4, %s394
      %p397 = scmp.eq.s32.totalorder %s24, 0
      // Predicated region
      $region37: #{transformer_decoder_forward.18} parent=35 // pred_check
        %p398 = pneg %p397
      $region38: #{transformer_decoder_forward.18} parent=35 // pred_check_branch
        %400 = sbr.rel (%p398) target = $region40
      $region39: #{transformer_decoder_forward.18} parent=35 // pred_region
        %vm401 = vcmask 7168
        %402 = vst.msk [vmem:[#allocation2] sm:$0xff] %vm401, -1e+30
        %403 = vst.msk [vmem:[#allocation3] sm:$0xff] %vm401, 0.0
        %404 = vst [vmem:[#allocation4] sm:$0xff] 0.0
      $region40: #{transformer_decoder_forward.18} parent=35 // pred_fallthru
        _
      %s405 = smul.u32 %s24, 8
      %s406 = smul.u32 %s23, 8
      %s407 = sadd.s32 %s406, 7
      %p408 = scmp.le.s32.totalorder %s405, %s407
      // Predicated region
      $region41: #{transformer_decoder_forward.18} parent=35 // pred_check
        %p409 = pneg %p408
      $region42: #{transformer_decoder_forward.18} parent=35 // pred_check_branch
        %411 = sbr.rel (%p409) target = $region44
      $region43: #{transformer_decoder_forward.18} parent=35 // pred_region
        %v412 = vld [vmem:[%s343] sm:$0x1]
        %vm413 = vcmp.gt.s32.totalorder %v412, 0
        %v414 = vlaneseq
        %v415 = vshrl.u32 %v414, 7
        %v416 = vstv %s406
        %v417 = vadd.s32 %v416, %v415
        %v418 = vlaneseq
        %v419 = vand.u32 %v418, 127
        %v420 = vstv %s405
        %v421 = vadd.s32 %v420, %v419
        %vm422 = vcmp.le.s32.totalorder %v421, %v417
        %v423 = vsel %vm413, 1, 0
        %v424 = vlaneseq
        %v425 = vshrl.u32 %v424, 7
        %v426 = vsub.s32 0, %v425
        %v427 = vrot.slane %v423, %v426
        %vm428 = vcmp.eq.s32.totalorder %v427, 1
        %vm429 = vmand %vm422, %vm428
        %v430 = vld [vmem:[%s355] sm:$0xf]
        %v431 = vld [vmem:[%s368] sm:$0xf]
        %v432 = vld [vmem:[%s382] sm:$0xf]
        %433 = vmatprep.subr.bf16.mxu0 0
        %434 = vmatpush1.bf16.xpose.msra.mxu0 0
        %435 = vmatprep.subr.bf16.mxu0 0
        %436 = vmatpush1.bf16.xpose.msra.mxu0 0
        %437 = vmatprep.subr.bf16.mxu0 0
        %438 = vmatpush1.bf16.xpose.msra.mxu0 0
        %439 = vmatprep.subr.bf16.mxu0 0
        %440 = vmatpush1.bf16.xpose.msra.mxu0 0
        %441 = vmatprep.subr.bf16.mxu0 0
        %442 = vmatpush1.bf16.xpose.msra.mxu0 0
        %443 = vmatprep.subr.bf16.mxu0 0
        %444 = vmatpush1.bf16.xpose.msra.mxu0 0
        %445 = vmatprep.subr.bf16.mxu0 0
        %446 = vmatpush1.bf16.xpose.msra.mxu0 0
        %447 = vmatprep.subr.bf16.mxu0 0
        %448 = vmatpush1.bf16.xpose.msra.mxu0 %v431
        %449 = vmatprep.subr.bf16.mxu0 0
        %450 = vmatpush2.bf16.xpose.msra.mxu0 0
        %451 = vmatprep.subr.bf16.mxu0 0
        %452 = vmatpush2.bf16.xpose.msra.mxu0 0
        %453 = vmatprep.subr.bf16.mxu0 0
        %454 = vmatpush2.bf16.xpose.msra.mxu0 0
        %455 = vmatprep.subr.bf16.mxu0 0
        %456 = vmatpush2.bf16.xpose.msra.mxu0 0
        %457 = vmatprep.subr.bf16.mxu0 0
        %458 = vmatpush2.bf16.xpose.msra.mxu0 0
        %459 = vmatprep.subr.bf16.mxu0 0
        %460 = vmatpush2.bf16.xpose.msra.mxu0 0
        %461 = vmatprep.subr.bf16.mxu0 0
        %462 = vmatpush2.bf16.xpose.msra.mxu0 0
        %463 = vmatprep.subr.bf16.mxu0 0
        %464 = vmatpush2.bf16.xpose.msra.mxu0 0
        %465 = vmatprep.mubr.bf16.mxu0 0
        %466 = vmatmul.mubr.bf16.gmra.mxu0 %v430
        %v467 = vpop.f32.mrf.mxu0
        %v468 = vadd.f32 0.0, %v467
        %v469 = vpop.f32.mrf.mxu0
        %v470 = vpop.f32.mrf.mxu0
        %v471 = vpop.f32.mrf.mxu0
        %472 = vdwg.mxu0
        %v473 = vsel %vm429, %v468, -1e+30
        %v474 = vld [vmem:[#allocation2] sm:$0xff]
        %vm475 = vcmask 64512
        %v476 = vsel %vm475, %v473, -inf
        %477 = vmax.xlane.f32.xlu0 %v476
        %v478 = vpop.xlane.xlu0 %477
        %v479 = vmax.f32 %v474, %v478
        %v480 = vsub.f32 %v474, %v479
        %v481 = vmul.f32 %v480, 1.442695
        %v482 = vpow.pop %v481
        %484 = vset.pattern.permute.xlu0 0
        %485 = vperm.xlu0 %484, %v479
        %v486 = vpop.permute.xlu0 %485
        %v488 = vsub.f32 %v473, %v486
        %v489 = vmul.f32 %v488, 1.442695
        %v490 = vpow.pop %v489
        %v491 = vld [vmem:[#allocation3] sm:$0xff]
        %v492 = vmul.f32 %v482, %v491
        %v493 = vsel %vm475, %v490, 0.0
        %494 = vadd.xlane.f32.xlu0 %v493
        %v495 = vpop.xlane.xlu0 %494
        %v496 = vadd.f32 %v492, %v495
        %vm497 = vcmask 7168
        %498 = vst.msk [vmem:[#allocation3] sm:$0xff] %vm497, %v496
        %v499 = vld [vmem:[#allocation4] sm:$0xff]
        %501 = vset.pattern.permute.xlu0 0
        %502 = vperm.xlu0 %501, %v482
        %v503 = vpop.permute.xlu0 %502
        %v505 = vmul.f32 %v503, %v499
        %v506 = vpack.c.bf16 %v490, %v490
        %v508 = vsel %vm475, %v506, 0
        %vm510 = vcmask 1043456
        %v512 = vsel %vm510, %v432, 0
        %514 = vmatprep.subr.bf16.mxu0 0
        %515 = vmatpush1.bf16.msra.mxu0 0
        %516 = vmatprep.subr.bf16.mxu0 0
        %517 = vmatpush1.bf16.msra.mxu0 0
        %518 = vmatprep.subr.bf16.mxu0 0
        %519 = vmatpush1.bf16.msra.mxu0 0
        %520 = vmatprep.subr.bf16.mxu0 0
        %521 = vmatpush1.bf16.msra.mxu0 0
        %522 = vmatprep.subr.bf16.mxu0 0
        %523 = vmatpush1.bf16.msra.mxu0 0
        %524 = vmatprep.subr.bf16.mxu0 0
        %525 = vmatpush1.bf16.msra.mxu0 0
        %526 = vmatprep.subr.bf16.mxu0 0
        %527 = vmatpush1.bf16.msra.mxu0 0
        %528 = vmatprep.subr.bf16.mxu0 0
        %529 = vmatpush1.bf16.msra.mxu0 %v512
        %530 = vmatprep.subr.bf16.mxu0 0
        %531 = vmatpush2.bf16.msra.mxu0 0
        %532 = vmatprep.subr.bf16.mxu0 0
        %533 = vmatpush2.bf16.msra.mxu0 0
        %534 = vmatprep.subr.bf16.mxu0 0
        %535 = vmatpush2.bf16.msra.mxu0 0
        %536 = vmatprep.subr.bf16.mxu0 0
        %537 = vmatpush2.bf16.msra.mxu0 0
        %538 = vmatprep.subr.bf16.mxu0 0
        %539 = vmatpush2.bf16.msra.mxu0 0
        %540 = vmatprep.subr.bf16.mxu0 0
        %541 = vmatpush2.bf16.msra.mxu0 0
        %542 = vmatprep.subr.bf16.mxu0 0
        %543 = vmatpush2.bf16.msra.mxu0 0
        %544 = vmatprep.subr.bf16.mxu0 0
        %545 = vmatpush2.bf16.msra.mxu0 0
        %546 = vmatprep.mubr.bf16.mxu0 0
        %547 = vmatmul.mubr.bf16.gmra.mxu0 %v508
        %v548 = vpop.f32.mrf.mxu0
        %v549 = vadd.f32 0.0, %v548
        %v550 = vpop.f32.mrf.mxu0
        %v551 = vpop.f32.mrf.mxu0
        %v552 = vpop.f32.mrf.mxu0
        %553 = vdwg.mxu0
        %v554 = vadd.f32 %v505, %v549
        %555 = vst [vmem:[#allocation4] sm:$0xff] %v554
        %556 = vst.msk [vmem:[#allocation2] sm:$0xff] %vm497, %v479
      $region44: #{transformer_decoder_forward.18} parent=35 // pred_fallthru
        _
      // Predicated region
      $region45: #{transformer_decoder_forward.18} parent=35 // pred_check
        %p557 = pneg %p397
      $region46: #{transformer_decoder_forward.18} parent=35 // pred_check_branch
        %559 = sbr.rel (%p557) target = $region48
      $region47: #{transformer_decoder_forward.18} parent=35 // pred_region
        %v560 = vld [vmem:[#allocation3] sm:$0xff]
        %v561 = vrcp.pop %v560
        %v562 = vld [vmem:[#allocation4] sm:$0xff]
        %564 = vset.pattern.permute.xlu0 0
        %565 = vperm.xlu0 %564, %v561
        %v566 = vpop.permute.xlu0 %565
        %v568 = vmul.f32 %v562, %v566
        %v569 = vpack.c.bf16 %v568, %v568
        %570 = vst [vmem:[%s395] sm:$0xf] %v569
      $region48: #{transformer_decoder_forward.18} parent=35 // pred_fallthru
        _
      %p571 = scmp.lt.s32.totalorder %s21, 1
      %s572 = scalar_select %p571, %s21, 1
      %p573 = scmp.lt.s32.totalorder %s23, 0
      %s574 = scalar_select %p573, %s23, 0
      %p575 = scmp.lt.s32.totalorder %s22, 1
      %s576 = scalar_select %p575, %s22, 1
      %s577 = smul.addr %s574, 2
      %s578 = sadd.s32 %s576, %s577
      %s579 = smul.addr %s572, 2
      %s580 = sadd.s32 %s578, %s579
      %s581 = smul.addr %s580, 4
      %s582 = scalar_lea.vmem %s4, %s581
      // Predicated region
      $region49: #{transformer_decoder_forward.18} parent=35 // pred_check
        %p583 = pneg %p185
      $region50: #{transformer_decoder_forward.18} parent=35 // pred_check_branch
        %585 = sbr.rel (%p583) target = $region52
      $region51: #{transformer_decoder_forward.18} parent=35 // pred_region
        _
      $region52: #{transformer_decoder_forward.18} parent=35 // pred_fallthru
        _
    $region36: #{transformer_decoder_forward.18} parent=5 // pred_fallthru
      _
    %p586 = scmp.le.s32.totalorder 2, %s10
    // Predicated region
    $region53: #{transformer_decoder_forward.18} parent=5 // pred_check
      %p587 = pneg %p586
    $region54: #{transformer_decoder_forward.18} parent=5 // pred_check_branch
      %589 = sbr.rel (%p587) target = $region56
    $region55: #{transformer_decoder_forward.18} parent=5 // pred_region
      %s590 = ssub.s32 %s10, 2
      // Predicated region
      $region57: #{transformer_decoder_forward.18} parent=55 // pred_check
        %p591 = pneg %p191
      $region58: #{transformer_decoder_forward.18} parent=55 // pred_check_branch
        %593 = sbr.rel (%p591) target = $region60
      $region59: #{transformer_decoder_forward.18} parent=55 // pred_region
        %p594 = scmp.lt.s32.totalorder %s25, 1
        %s595 = scalar_select %p594, %s25, 1
        %p596 = scmp.lt.s32.totalorder %s27, 0
        %s597 = scalar_select %p596, %s27, 0
        %p598 = scmp.lt.s32.totalorder %s26, 1
        %s599 = scalar_select %p598, %s26, 1
        %s600 = smul.addr %s597, 2
        %s601 = sadd.s32 %s599, %s600
        %s602 = smul.addr %s595, 2
        %s603 = sadd.s32 %s601, %s602
        %s604 = smul.addr %s603, 4
        %s605 = scalar_lea.vmem %s4, %s604
      $region60: #{transformer_decoder_forward.18} parent=55 // pred_fallthru
        _
    $region56: #{transformer_decoder_forward.18} parent=5 // pred_fallthru
      _
  $region6: #{transformer_decoder_forward.18} parent=0 // loop_footer
    %s14 = sadd.s32 1, %s10
  $region7: #{transformer_decoder_forward.18} parent=0 // loop_footer_branch
    %9 = sbr.rel target = $region3
  $region8: #{transformer_decoder_forward.18} parent=0 // loop_exit
    _

// kernel: transformer_decoder_forward.20
$region0: #{transformer_decoder_forward.20}
  #allocation0 [shape = 'u32[]', space=smem, size = 0x4, offset = 0x4, fixed_abs, tag = 'smem constant byte address 0x4 - core index']
  #allocation1 [shape = 'u32[144,128]{1,0:T(1,128)}', space=vmem, size = 0x12000, scoped, tag = 'internal scratch']
  %s0 = inlined_call_operand.vmem [shape: bf16[16,256], index: 0, kind: input, shape index: {}]
  %s1 = inlined_call_operand.vmem [shape: f32[1,256], index: 1, kind: input, shape index: {}]
  %s2 = inlined_call_operand.vmem [shape: f32[1,256], index: 2, kind: input, shape index: {}]
  %s3 = inlined_call_operand.vmem [shape: bf16[256,256], index: 3, kind: input, shape index: {}]
  %s4 = inlined_call_operand.vmem [shape: f32[1,256], index: 4, kind: input, shape index: {}]
  %s5 = inlined_call_operand.vmem [shape: bf16[16,256], index: 5, kind: output, shape index: {}]
  %s6 = sld [smem:[#allocation0]]
  $region30: #{transformer_decoder_forward.20} parent=0
    _
  %s8 = ssub.s32 1, %s6
  %s9 = scalar_select 0, %s8, %s6
  // Predicated region
  $region2: #{transformer_decoder_forward.20} parent=0 // pred_check
    _
  $region3: #{transformer_decoder_forward.20} parent=0 // pred_check_branch
    %11 = sbr.rel (0) target = $region5
  $region4: #{transformer_decoder_forward.20} parent=0 // pred_region
    _
  $region5: #{transformer_decoder_forward.20} parent=0 // pred_fallthru
    _
  // Predicated region
  $region6: #{transformer_decoder_forward.20} parent=0 // pred_check
    _
  $region7: #{transformer_decoder_forward.20} parent=0 // pred_check_branch
    %13 = sbr.rel (0) target = $region9
  $region8: #{transformer_decoder_forward.20} parent=0 // pred_region
    _
  $region9: #{transformer_decoder_forward.20} parent=0 // pred_fallthru
    _
  // Predicated region
  $region10: #{transformer_decoder_forward.20} parent=0 // pred_check
    _
  $region11: #{transformer_decoder_forward.20} parent=0 // pred_check_branch
    %15 = sbr.rel (0) target = $region13
  $region12: #{transformer_decoder_forward.20} parent=0 // pred_region
    _
  $region13: #{transformer_decoder_forward.20} parent=0 // pred_fallthru
    _
  // Predicated region
  $region14: #{transformer_decoder_forward.20} parent=0 // pred_check
    _
  $region15: #{transformer_decoder_forward.20} parent=0 // pred_check_branch
    %17 = sbr.rel (0) target = $region17
  $region16: #{transformer_decoder_forward.20} parent=0 // pred_region
    _
  $region17: #{transformer_decoder_forward.20} parent=0 // pred_fallthru
    _
  // Predicated region
  $region18: #{transformer_decoder_forward.20} parent=0 // pred_check
    _
  $region19: #{transformer_decoder_forward.20} parent=0 // pred_check_branch
    %19 = sbr.rel (0) target = $region21
  $region20: #{transformer_decoder_forward.20} parent=0 // pred_region
    _
  $region21: #{transformer_decoder_forward.20} parent=0 // pred_fallthru
    _
  %v20 = vld [vmem:[%s0] sm:$0xff]
  %v21 = vld [vmem:[%s0 + $0x8] sm:$0xff]
  %v22 = vunpack.c.l.bf16 %v20
  %v23 = vunpack.c.h.bf16 %v20
  %v24 = vunpack.c.l.bf16 %v21
  %v25 = vunpack.c.h.bf16 %v21
  %v26 = vadd.f32 %v22, %v23
  %27 = vadd.xlane.f32.xlu0 %v26
  %v28 = vpop.xlane.xlu0 %27
  %v29 = vadd.f32 %v24, %v25
  %30 = vadd.xlane.f32.xlu0 %v29
  %v31 = vpop.xlane.xlu0 %30
  %v32 = vrcp.pop 256.0
  %v33 = vmul.f32 %v28, %v32
  %v34 = vmul.f32 %v31, %v32
  %v35 = vsub.f32 %v22, %v33
  %v36 = vsub.f32 %v23, %v33
  %v37 = vsub.f32 %v24, %v34
  %v38 = vsub.f32 %v25, %v34
  %v39 = vmul.f32 %v35, %v35
  %v40 = vmul.f32 %v36, %v36
  %v41 = vmul.f32 %v37, %v37
  %v42 = vmul.f32 %v38, %v38
  %v43 = vadd.f32 %v39, %v40
  %44 = vadd.xlane.f32.xlu0 %v43
  %v45 = vpop.xlane.xlu0 %44
  %v46 = vadd.f32 %v41, %v42
  %47 = vadd.xlane.f32.xlu0 %v46
  %v48 = vpop.xlane.xlu0 %47
  %v49 = vmul.f32 %v45, %v32
  %v50 = vmul.f32 %v48, %v32
  %v51 = vadd.f32 %v49, 1e-06
  %v52 = vadd.f32 %v50, 1e-06
  %v53 = vrsqrt.pop %v51
  %v54 = vrsqrt.pop %v52
  %v55 = vmul.f32 %v35, %v53
  %v56 = vmul.f32 %v36, %v53
  %v57 = vmul.f32 %v37, %v54
  %v58 = vmul.f32 %v38, %v54
  %v59 = vld [vmem:[%s1] sm:$0x3]
  %v61 = vlaneseq
  %v62 = vshrl.u32 %v61, 7
  %v63 = vsub.s32 0, %v62
  %v64 = vrot.slane %v59, %v63
  %v65 = vlaneseq
  %v66 = vshrl.u32 %v65, 7
  %v67 = vsub.s32 1, %v66
  %v68 = vrot.slane %v59, %v67
  %v71 = vmul.f32 %v55, %v64
  %v72 = vmul.f32 %v56, %v68
  %v73 = vmul.f32 %v57, %v64
  %v74 = vmul.f32 %v58, %v68
  %v75 = vld [vmem:[%s2] sm:$0x3]
  %v77 = vlaneseq
  %v78 = vshrl.u32 %v77, 7
  %v79 = vsub.s32 0, %v78
  %v80 = vrot.slane %v75, %v79
  %v81 = vlaneseq
  %v82 = vshrl.u32 %v81, 7
  %v83 = vsub.s32 1, %v82
  %v84 = vrot.slane %v75, %v83
  %v87 = vadd.f32 %v71, %v80
  %v88 = vadd.f32 %v72, %v84
  %v89 = vadd.f32 %v73, %v80
  %v90 = vadd.f32 %v74, %v84
  %v91 = vpack.c.bf16 %v89, %v87
  %v92 = vpack.c.bf16 %v90, %v88
  %v93 = vld [vmem:[%s3] sm:$0xff]
  %v94 = vld [vmem:[%s3 + $0x8] sm:$0xff]
  %v95 = vld [vmem:[%s3 + $0x10] sm:$0xff]
  %v96 = vld [vmem:[%s3 + $0x18] sm:$0xff]
  %v97 = vld [vmem:[%s3 + $0x20] sm:$0xff]
  %v98 = vld [vmem:[%s3 + $0x28] sm:$0xff]
  %v99 = vld [vmem:[%s3 + $0x30] sm:$0xff]
  %v100 = vld [vmem:[%s3 + $0x38] sm:$0xff]
  %v101 = vld [vmem:[%s3 + $0x40] sm:$0xff]
  %v102 = vld [vmem:[%s3 + $0x48] sm:$0xff]
  %v103 = vld [vmem:[%s3 + $0x50] sm:$0xff]
  %v104 = vld [vmem:[%s3 + $0x58] sm:$0xff]
  %v105 = vld [vmem:[%s3 + $0x60] sm:$0xff]
  %v106 = vld [vmem:[%s3 + $0x68] sm:$0xff]
  %v107 = vld [vmem:[%s3 + $0x70] sm:$0xff]
  %v108 = vld [vmem:[%s3 + $0x78] sm:$0xff]
  %v109 = vld [vmem:[%s3 + $0x80] sm:$0xff]
  %v110 = vld [vmem:[%s3 + $0x88] sm:$0xff]
  %v111 = vld [vmem:[%s3 + $0x90] sm:$0xff]
  %v112 = vld [vmem:[%s3 + $0x98] sm:$0xff]
  %v113 = vld [vmem:[%s3 + $0xa0] sm:$0xff]
  %v114 = vld [vmem:[%s3 + $0xa8] sm:$0xff]
  %v115 = vld [vmem:[%s3 + $0xb0] sm:$0xff]
  %v116 = vld [vmem:[%s3 + $0xb8] sm:$0xff]
  %v117 = vld [vmem:[%s3 + $0xc0] sm:$0xff]
  %v118 = vld [vmem:[%s3 + $0xc8] sm:$0xff]
  %v119 = vld [vmem:[%s3 + $0xd0] sm:$0xff]
  %v120 = vld [vmem:[%s3 + $0xd8] sm:$0xff]
  %v121 = vld [vmem:[%s3 + $0xe0] sm:$0xff]
  %v122 = vld [vmem:[%s3 + $0xe8] sm:$0xff]
  %v123 = vld [vmem:[%s3 + $0xf0] sm:$0xff]
  %v124 = vld [vmem:[%s3 + $0xf8] sm:$0xff]
  %v125 = vld [vmem:[%s4] sm:$0x3]
  %v127 = vlaneseq
  %v128 = vshrl.u32 %v127, 7
  %v129 = vsub.s32 0, %v128
  %v130 = vrot.slane %v125, %v129
  %v131 = vlaneseq
  %v132 = vshrl.u32 %v131, 7
  %v133 = vsub.s32 1, %v132
  %v134 = vrot.slane %v125, %v133
  %v169 = vunpack.c.l.b16 %v93
  %v170 = vunpack.c.h.b16 %v93
  %v171 = vunpack.c.l.b16 %v94
  %v172 = vunpack.c.h.b16 %v94
  %v173 = vunpack.c.l.b16 %v95
  %v174 = vunpack.c.h.b16 %v95
  %v175 = vunpack.c.l.b16 %v96
  %v176 = vunpack.c.h.b16 %v96
  %v177 = vunpack.c.l.b16 %v97
  %v178 = vunpack.c.h.b16 %v97
  %v179 = vunpack.c.l.b16 %v98
  %v180 = vunpack.c.h.b16 %v98
  %v181 = vunpack.c.l.b16 %v99
  %v182 = vunpack.c.h.b16 %v99
  %v183 = vunpack.c.l.b16 %v100
  %v184 = vunpack.c.h.b16 %v100
  %v185 = vunpack.c.l.b16 %v101
  %v186 = vunpack.c.h.b16 %v101
  %v187 = vunpack.c.l.b16 %v102
  %v188 = vunpack.c.h.b16 %v102
  %v189 = vunpack.c.l.b16 %v103
  %v190 = vunpack.c.h.b16 %v103
  %v191 = vunpack.c.l.b16 %v104
  %v192 = vunpack.c.h.b16 %v104
  %v193 = vunpack.c.l.b16 %v105
  %v194 = vunpack.c.h.b16 %v105
  %v195 = vunpack.c.l.b16 %v106
  %v196 = vunpack.c.h.b16 %v106
  %v197 = vunpack.c.l.b16 %v107
  %v198 = vunpack.c.h.b16 %v107
  %v199 = vunpack.c.l.b16 %v108
  %v200 = vunpack.c.h.b16 %v108
  %v201 = vunpack.c.l.b16 %v109
  %v202 = vunpack.c.h.b16 %v109
  %v203 = vunpack.c.l.b16 %v110
  %v204 = vunpack.c.h.b16 %v110
  %v205 = vunpack.c.l.b16 %v111
  %v206 = vunpack.c.h.b16 %v111
  %v207 = vunpack.c.l.b16 %v112
  %v208 = vunpack.c.h.b16 %v112
  %v209 = vunpack.c.l.b16 %v113
  %v210 = vunpack.c.h.b16 %v113
  %v211 = vunpack.c.l.b16 %v114
  %v212 = vunpack.c.h.b16 %v114
  %v213 = vunpack.c.l.b16 %v115
  %v214 = vunpack.c.h.b16 %v115
  %v215 = vunpack.c.l.b16 %v116
  %v216 = vunpack.c.h.b16 %v116
  %v217 = vunpack.c.l.b16 %v117
  %v218 = vunpack.c.h.b16 %v117
  %v219 = vunpack.c.l.b16 %v118
  %v220 = vunpack.c.h.b16 %v118
  %v221 = vunpack.c.l.b16 %v119
  %v222 = vunpack.c.h.b16 %v119
  %v223 = vunpack.c.l.b16 %v120
  %v224 = vunpack.c.h.b16 %v120
  %v225 = vunpack.c.l.b16 %v121
  %v226 = vunpack.c.h.b16 %v121
  %v227 = vunpack.c.l.b16 %v122
  %v228 = vunpack.c.h.b16 %v122
  %v229 = vunpack.c.l.b16 %v123
  %v230 = vunpack.c.h.b16 %v123
  %v231 = vunpack.c.l.b16 %v124
  %v232 = vunpack.c.h.b16 %v124
  %v233 = vpack.c.b16 %v171, %v169
  %v234 = vpack.c.b16 %v172, %v170
  %v235 = vpack.c.b16 %v175, %v173
  %v236 = vpack.c.b16 %v176, %v174
  %v237 = vpack.c.b16 %v179, %v177
  %v238 = vpack.c.b16 %v180, %v178
  %v239 = vpack.c.b16 %v183, %v181
  %v240 = vpack.c.b16 %v184, %v182
  %v241 = vpack.c.b16 %v187, %v185
  %v242 = vpack.c.b16 %v188, %v186
  %v243 = vpack.c.b16 %v191, %v189
  %v244 = vpack.c.b16 %v192, %v190
  %v245 = vpack.c.b16 %v195, %v193
  %v246 = vpack.c.b16 %v196, %v194
  %v247 = vpack.c.b16 %v199, %v197
  %v248 = vpack.c.b16 %v200, %v198
  %v249 = vpack.c.b16 %v203, %v201
  %v250 = vpack.c.b16 %v204, %v202
  %v251 = vpack.c.b16 %v207, %v205
  %v252 = vpack.c.b16 %v208, %v206
  %v253 = vpack.c.b16 %v211, %v209
  %v254 = vpack.c.b16 %v212, %v210
  %v255 = vpack.c.b16 %v215, %v213
  %v256 = vpack.c.b16 %v216, %v214
  %v257 = vpack.c.b16 %v219, %v217
  %v258 = vpack.c.b16 %v220, %v218
  %v259 = vpack.c.b16 %v223, %v221
  %v260 = vpack.c.b16 %v224, %v222
  %v261 = vpack.c.b16 %v227, %v225
  %v262 = vpack.c.b16 %v228, %v226
  %v263 = vpack.c.b16 %v231, %v229
  %v264 = vpack.c.b16 %v232, %v230
  %297 = vmatprep.subr.bf16.mxu0 %v248
  %298 = vmatpush1.bf16.msra.mxu0 %v247
  %299 = vmatprep.subr.bf16.mxu0 %v246
  %300 = vmatpush1.bf16.msra.mxu0 %v245
  %301 = vmatprep.subr.bf16.mxu0 %v244
  %302 = vmatpush1.bf16.msra.mxu0 %v243
  %303 = vmatprep.subr.bf16.mxu0 %v242
  %304 = vmatpush1.bf16.msra.mxu0 %v241
  %305 = vmatprep.subr.bf16.mxu0 %v240
  %306 = vmatpush1.bf16.msra.mxu0 %v239
  %307 = vmatprep.subr.bf16.mxu0 %v238
  %308 = vmatpush1.bf16.msra.mxu0 %v237
  %309 = vmatprep.subr.bf16.mxu0 %v236
  %310 = vmatpush1.bf16.msra.mxu0 %v235
  %311 = vmatprep.subr.bf16.mxu0 %v234
  %312 = vmatpush1.bf16.msra.mxu0 %v233
  %313 = vmatprep.subr.bf16.mxu0 %v264
  %314 = vmatpush2.bf16.msra.mxu0 %v263
  %315 = vmatprep.subr.bf16.mxu0 %v262
  %316 = vmatpush2.bf16.msra.mxu0 %v261
  %317 = vmatprep.subr.bf16.mxu0 %v260
  %318 = vmatpush2.bf16.msra.mxu0 %v259
  %319 = vmatprep.subr.bf16.mxu0 %v258
  %320 = vmatpush2.bf16.msra.mxu0 %v257
  %321 = vmatprep.subr.bf16.mxu0 %v256
  %322 = vmatpush2.bf16.msra.mxu0 %v255
  %323 = vmatprep.subr.bf16.mxu0 %v254
  %324 = vmatpush2.bf16.msra.mxu0 %v253
  %325 = vmatprep.subr.bf16.mxu0 %v252
  %326 = vmatpush2.bf16.msra.mxu0 %v251
  %327 = vmatprep.subr.bf16.mxu0 %v250
  %328 = vmatpush2.bf16.msra.mxu0 %v249
  %329 = vmatprep.mubr.bf16.mxu0 %v92
  %330 = vmatmul.mubr.bf16.gmra.mxu0 %v91
  %v331 = vpop.f32.mrf.mxu0
  %v332 = vadd.f32 %v130, %v331
  %v333 = vpop.f32.mrf.mxu0
  %v334 = vadd.f32 %v134, %v333
  %v335 = vpop.f32.mrf.mxu0
  %v336 = vadd.f32 %v130, %v335
  %v337 = vpop.f32.mrf.mxu0
  %v338 = vadd.f32 %v134, %v337
  %339 = vdwg.mxu0
  %v340 = vpack.c.bf16 %v336, %v332
  %v341 = vpack.c.bf16 %v338, %v334
  %v344 = vunpack.c.l.b16 %v340
  %v345 = vunpack.c.l.b16 %v341
  %v346 = vunpack.c.h.b16 %v340
  %v347 = vunpack.c.h.b16 %v341
  %v348 = vpack.c.b16 %v345, %v344
  %v349 = vpack.c.b16 %v347, %v346
  %352 = vst [vmem:[%s5] sm:$0xff] %v348
  %353 = vst [vmem:[%s5 + $0x8] sm:$0xff] %v349
  // Predicated region
  $region22: #{transformer_decoder_forward.20} parent=0 // pred_check
    _
  $region23: #{transformer_decoder_forward.20} parent=0 // pred_check_branch
    %355 = sbr.rel (0) target = $region25
  $region24: #{transformer_decoder_forward.20} parent=0 // pred_region
    _
  $region25: #{transformer_decoder_forward.20} parent=0 // pred_fallthru
    _
  // Predicated region
  $region26: #{transformer_decoder_forward.20} parent=0 // pred_check
    _
  $region27: #{transformer_decoder_forward.20} parent=0 // pred_check_branch
    %357 = sbr.rel (0) target = $region29
  $region28: #{transformer_decoder_forward.20} parent=0 // pred_region
    _
  $region29: #{transformer_decoder_forward.20} parent=0 // pred_fallthru
    _

// kernel: transformer_decoder_forward.17
$region0: #{transformer_decoder_forward.17}
  #allocation0 [shape = 'u32[]', space=smem, size = 0x4, offset = 0x4, fixed_abs, tag = 'smem constant byte address 0x4 - core index']
  #allocation1 [shape = 'u32[144,128]{1,0:T(1,128)}', space=vmem, size = 0x12000, scoped, tag = 'internal scratch']
  %s0 = inlined_call_operand.vmem [shape: f32[16,256], index: 0, kind: input, shape index: {}]
  %s1 = inlined_call_operand.vmem [shape: f32[1,256], index: 1, kind: input, shape index: {}]
  %s2 = inlined_call_operand.vmem [shape: f32[1,256], index: 2, kind: input, shape index: {}]
  %s3 = inlined_call_operand.hbm [shape: bf16[256,768], index: 3, kind: input, shape index: {}]
  %s4 = inlined_call_operand.vmem [shape: f32[1,768], index: 4, kind: input, shape index: {}]
  %s5 = inlined_call_operand.vmem [shape: bf16[16,768], index: 5, kind: output, shape index: {}]
  %s6 = sld [smem:[#allocation0]]
  $region34: #{transformer_decoder_forward.17} parent=0
    _
  %s8 = ssub.s32 1, %s6
  %s9 = scalar_select 0, %s8, %s6
  $region1: #{transformer_decoder_forward.17} parent=0
    #allocation2 [shape = 'u8[393216]{0}', space=vmem, size = 0x60000, scoped, tag = 'input window, operand 3, single buffered']
    #allocation3 [shape = 's32[1]{0}', space=sflag, size = 0x4, scoped, tag = 'scoped memory for transformer_decoder_forward.17']
    %10 = vsyncpa [#allocation3], 0
    // Predicated region
    $region2: #{transformer_decoder_forward.17} parent=1 // pred_check
      _
    $region3: #{transformer_decoder_forward.17} parent=1 // pred_check_branch
      %12 = sbr.rel (0) target = $region5
    $region4: #{transformer_decoder_forward.17} parent=1 // pred_region
      _
    $region5: #{transformer_decoder_forward.17} parent=1 // pred_fallthru
      _
    // Predicated region
    $region6: #{transformer_decoder_forward.17} parent=1 // pred_check
      _
    $region7: #{transformer_decoder_forward.17} parent=1 // pred_check_branch
      %14 = sbr.rel (0) target = $region9
    $region8: #{transformer_decoder_forward.17} parent=1 // pred_region
      _
    $region9: #{transformer_decoder_forward.17} parent=1 // pred_fallthru
      _
    // Predicated region
    $region10: #{transformer_decoder_forward.17} parent=1 // pred_check
      _
    $region11: #{transformer_decoder_forward.17} parent=1 // pred_check_branch
      %16 = sbr.rel (0) target = $region13
    $region12: #{transformer_decoder_forward.17} parent=1 // pred_region
      _
    $region13: #{transformer_decoder_forward.17} parent=1 // pred_fallthru
      _
    // Predicated region
    $region14: #{transformer_decoder_forward.17} parent=1 // pred_check
      _
    $region15: #{transformer_decoder_forward.17} parent=1 // pred_check_branch
      %18 = sbr.rel (0) target = $region17
    $region16: #{transformer_decoder_forward.17} parent=1 // pred_region
      %s20 = ssub.s32 12288, 12288
      %21 = vsyncadd [#allocation3], %s20
      %s22 = sshll.u32 [#allocation2], 4
      %s23 = int_to_ptr.vmem [resolvable:$true] %s22
      %28 = dma.hbm_to_vmem [thread:$0]  %s3, 12288, %s23, [#allocation3], 384, 384, 24
    $region17: #{transformer_decoder_forward.17} parent=1 // pred_fallthru
      _
    // Predicated region
    $region18: #{transformer_decoder_forward.17} parent=1 // pred_check
      _
    $region19: #{transformer_decoder_forward.17} parent=1 // pred_check_branch
      %30 = sbr.rel (0) target = $region21
    $region20: #{transformer_decoder_forward.17} parent=1 // pred_region
      _
    $region21: #{transformer_decoder_forward.17} parent=1 // pred_fallthru
      _
    // Predicated region
    $region22: #{transformer_decoder_forward.17} parent=1 // pred_check
      _
    $region23: #{transformer_decoder_forward.17} parent=1 // pred_check_branch
      %32 = sbr.rel (0) target = $region25
    $region24: #{transformer_decoder_forward.17} parent=1 // pred_region
      %33 = dma.done [#allocation3], 12288
    $region25: #{transformer_decoder_forward.17} parent=1 // pred_fallthru
      _
    %v34 = vld [vmem:[%s0] sm:$0xff]
    %v35 = vld [vmem:[%s0 + $0x8] sm:$0xff]
    %v36 = vld [vmem:[%s0 + $0x10] sm:$0xff]
    %v37 = vld [vmem:[%s0 + $0x18] sm:$0xff]
    %v38 = vadd.f32 %v34, %v35
    %39 = vadd.xlane.f32.xlu0 %v38
    %v40 = vpop.xlane.xlu0 %39
    %v41 = vadd.f32 %v36, %v37
    %42 = vadd.xlane.f32.xlu0 %v41
    %v43 = vpop.xlane.xlu0 %42
    %v44 = vrcp.pop 256.0
    %v45 = vmul.f32 %v40, %v44
    %v46 = vmul.f32 %v43, %v44
    %v47 = vsub.f32 %v34, %v45
    %v48 = vsub.f32 %v35, %v45
    %v49 = vsub.f32 %v36, %v46
    %v50 = vsub.f32 %v37, %v46
    %v51 = vmul.f32 %v47, %v47
    %v52 = vmul.f32 %v48, %v48
    %v53 = vmul.f32 %v49, %v49
    %v54 = vmul.f32 %v50, %v50
    %v55 = vadd.f32 %v51, %v52
    %56 = vadd.xlane.f32.xlu0 %v55
    %v57 = vpop.xlane.xlu0 %56
    %v58 = vadd.f32 %v53, %v54
    %59 = vadd.xlane.f32.xlu0 %v58
    %v60 = vpop.xlane.xlu0 %59
    %v61 = vmul.f32 %v57, %v44
    %v62 = vmul.f32 %v60, %v44
    %v63 = vadd.f32 %v61, 1e-06
    %v64 = vadd.f32 %v62, 1e-06
    %v65 = vrsqrt.pop %v63
    %v66 = vrsqrt.pop %v64
    %v67 = vmul.f32 %v47, %v65
    %v68 = vmul.f32 %v48, %v65
    %v69 = vmul.f32 %v49, %v66
    %v70 = vmul.f32 %v50, %v66
    %v71 = vld [vmem:[%s1] sm:$0x3]
    %v73 = vlaneseq
    %v74 = vshrl.u32 %v73, 7
    %v75 = vsub.s32 0, %v74
    %v76 = vrot.slane %v71, %v75
    %v77 = vlaneseq
    %v78 = vshrl.u32 %v77, 7
    %v79 = vsub.s32 1, %v78
    %v80 = vrot.slane %v71, %v79
    %v83 = vmul.f32 %v67, %v76
    %v84 = vmul.f32 %v68, %v80
    %v85 = vmul.f32 %v69, %v76
    %v86 = vmul.f32 %v70, %v80
    %v87 = vld [vmem:[%s2] sm:$0x3]
    %v89 = vlaneseq
    %v90 = vshrl.u32 %v89, 7
    %v91 = vsub.s32 0, %v90
    %v92 = vrot.slane %v87, %v91
    %v93 = vlaneseq
    %v94 = vshrl.u32 %v93, 7
    %v95 = vsub.s32 1, %v94
    %v96 = vrot.slane %v87, %v95
    %v99 = vadd.f32 %v83, %v92
    %v100 = vadd.f32 %v84, %v96
    %v101 = vadd.f32 %v85, %v92
    %v102 = vadd.f32 %v86, %v96
    %v103 = vpack.c.bf16 %v101, %v99
    %v104 = vpack.c.bf16 %v102, %v100
    %v105 = vld [vmem:[#allocation2] sm:$0xff]
    %v106 = vld [vmem:[#allocation2 + $0x8] sm:$0xff]
    %v107 = vld [vmem:[#allocation2 + $0x10] sm:$0xff]
    %v108 = vld [vmem:[#allocation2 + $0x18] sm:$0xff]
    %v109 = vld [vmem:[#allocation2 + $0x20] sm:$0xff]
    %v110 = vld [vmem:[#allocation2 + $0x28] sm:$0xff]
    %v111 = vld [vmem:[#allocation2 + $0x30] sm:$0xff]
    %v112 = vld [vmem:[#allocation2 + $0x38] sm:$0xff]
    %v113 = vld [vmem:[#allocation2 + $0x40] sm:$0xff]
    %v114 = vld [vmem:[#allocation2 + $0x48] sm:$0xff]
    %v115 = vld [vmem:[#allocation2 + $0x50] sm:$0xff]
    %v116 = vld [vmem:[#allocation2 + $0x58] sm:$0xff]
    %v117 = vld [vmem:[#allocation2 + $0x60] sm:$0xff]
    %v118 = vld [vmem:[#allocation2 + $0x68] sm:$0xff]
    %v119 = vld [vmem:[#allocation2 + $0x70] sm:$0xff]
    %v120 = vld [vmem:[#allocation2 + $0x78] sm:$0xff]
    %v121 = vld [vmem:[#allocation2 + $0x80] sm:$0xff]
    %v122 = vld [vmem:[#allocation2 + $0x88] sm:$0xff]
    %v123 = vld [vmem:[#allocation2 + $0x90] sm:$0xff]
    %v124 = vld [vmem:[#allocation2 + $0x98] sm:$0xff]
    %v125 = vld [vmem:[#allocation2 + $0xa0] sm:$0xff]
    %v126 = vld [vmem:[#allocation2 + $0xa8] sm:$0xff]
    %v127 = vld [vmem:[#allocation2 + $0xb0] sm:$0xff]
    %v128 = vld [vmem:[#allocation2 + $0xb8] sm:$0xff]
    %v129 = vld [vmem:[#allocation2 + $0xc0] sm:$0xff]
    %v130 = vld [vmem:[#allocation2 + $0xc8] sm:$0xff]
    %v131 = vld [vmem:[#allocation2 + $0xd0] sm:$0xff]
    %v132 = vld [vmem:[#allocation2 + $0xd8] sm:$0xff]
    %v133 = vld [vmem:[#allocation2 + $0xe0] sm:$0xff]
    %v134 = vld [vmem:[#allocation2 + $0xe8] sm:$0xff]
    %v135 = vld [vmem:[#allocation2 + $0xf0] sm:$0xff]
    %v136 = vld [vmem:[#allocation2 + $0xf8] sm:$0xff]
    %v137 = vld [vmem:[#allocation2 + $0x100] sm:$0xff]
    %v138 = vld [vmem:[#allocation2 + $0x108] sm:$0xff]
    %v139 = vld [vmem:[#allocation2 + $0x110] sm:$0xff]
    %v140 = vld [vmem:[#allocation2 + $0x118] sm:$0xff]
    %v141 = vld [vmem:[#allocation2 + $0x120] sm:$0xff]
    %v142 = vld [vmem:[#allocation2 + $0x128] sm:$0xff]
    %v143 = vld [vmem:[#allocation2 + $0x130] sm:$0xff]
    %v144 = vld [vmem:[#allocation2 + $0x138] sm:$0xff]
    %v145 = vld [vmem:[#allocation2 + $0x140] sm:$0xff]
    %v146 = vld [vmem:[#allocation2 + $0x148] sm:$0xff]
    %v147 = vld [vmem:[#allocation2 + $0x150] sm:$0xff]
    %v148 = vld [vmem:[#allocation2 + $0x158] sm:$0xff]
    %v149 = vld [vmem:[#allocation2 + $0x160] sm:$0xff]
    %v150 = vld [vmem:[#allocation2 + $0x168] sm:$0xff]
    %v151 = vld [vmem:[#allocation2 + $0x170] sm:$0xff]
    %v152 = vld [vmem:[#allocation2 + $0x178] sm:$0xff]
    %v153 = vld [vmem:[#allocation2 + $0x180] sm:$0xff]
    %v154 = vld [vmem:[#allocation2 + $0x188] sm:$0xff]
    %v155 = vld [vmem:[#allocation2 + $0x190] sm:$0xff]
    %v156 = vld [vmem:[#allocation2 + $0x198] sm:$0xff]
    %v157 = vld [vmem:[#allocation2 + $0x1a0] sm:$0xff]
    %v158 = vld [vmem:[#allocation2 + $0x1a8] sm:$0xff]
    %v159 = vld [vmem:[#allocation2 + $0x1b0] sm:$0xff]
    %v160 = vld [vmem:[#allocation2 + $0x1b8] sm:$0xff]
    %v161 = vld [vmem:[#allocation2 + $0x1c0] sm:$0xff]
    %v162 = vld [vmem:[#allocation2 + $0x1c8] sm:$0xff]
    %v163 = vld [vmem:[#allocation2 + $0x1d0] sm:$0xff]
    %v164 = vld [vmem:[#allocation2 + $0x1d8] sm:$0xff]
    %v165 = vld [vmem:[#allocation2 + $0x1e0] sm:$0xff]
    %v166 = vld [vmem:[#allocation2 + $0x1e8] sm:$0xff]
    %v167 = vld [vmem:[#allocation2 + $0x1f0] sm:$0xff]
    %v168 = vld [vmem:[#allocation2 + $0x1f8] sm:$0xff]
    %v169 = vld [vmem:[#allocation2 + $0x200] sm:$0xff]
    %v170 = vld [vmem:[#allocation2 + $0x208] sm:$0xff]
    %v171 = vld [vmem:[#allocation2 + $0x210] sm:$0xff]
    %v172 = vld [vmem:[#allocation2 + $0x218] sm:$0xff]
    %v173 = vld [vmem:[#allocation2 + $0x220] sm:$0xff]
    %v174 = vld [vmem:[#allocation2 + $0x228] sm:$0xff]
    %v175 = vld [vmem:[#allocation2 + $0x230] sm:$0xff]
    %v176 = vld [vmem:[#allocation2 + $0x238] sm:$0xff]
    %v177 = vld [vmem:[#allocation2 + $0x240] sm:$0xff]
    %v178 = vld [vmem:[#allocation2 + $0x248] sm:$0xff]
    %v179 = vld [vmem:[#allocation2 + $0x250] sm:$0xff]
    %v180 = vld [vmem:[#allocation2 + $0x258] sm:$0xff]
    %v181 = vld [vmem:[#allocation2 + $0x260] sm:$0xff]
    %v182 = vld [vmem:[#allocation2 + $0x268] sm:$0xff]
    %v183 = vld [vmem:[#allocation2 + $0x270] sm:$0xff]
    %v184 = vld [vmem:[#allocation2 + $0x278] sm:$0xff]
    %v185 = vld [vmem:[#allocation2 + $0x280] sm:$0xff]
    %v186 = vld [vmem:[#allocation2 + $0x288] sm:$0xff]
    %v187 = vld [vmem:[#allocation2 + $0x290] sm:$0xff]
    %v188 = vld [vmem:[#allocation2 + $0x298] sm:$0xff]
    %v189 = vld [vmem:[#allocation2 + $0x2a0] sm:$0xff]
    %v190 = vld [vmem:[#allocation2 + $0x2a8] sm:$0xff]
    %v191 = vld [vmem:[#allocation2 + $0x2b0] sm:$0xff]
    %v192 = vld [vmem:[#allocation2 + $0x2b8] sm:$0xff]
    %v193 = vld [vmem:[#allocation2 + $0x2c0] sm:$0xff]
    %v194 = vld [vmem:[#allocation2 + $0x2c8] sm:$0xff]
    %v195 = vld [vmem:[#allocation2 + $0x2d0] sm:$0xff]
    %v196 = vld [vmem:[#allocation2 + $0x2d8] sm:$0xff]
    %v197 = vld [vmem:[#allocation2 + $0x2e0] sm:$0xff]
    %v198 = vld [vmem:[#allocation2 + $0x2e8] sm:$0xff]
    %v199 = vld [vmem:[#allocation2 + $0x2f0] sm:$0xff]
    %v200 = vld [vmem:[#allocation2 + $0x2f8] sm:$0xff]
    %v201 = vld [vmem:[%s4] sm:$0x3f]
    %v203 = vlaneseq
    %v204 = vshrl.u32 %v203, 7
    %v205 = vsub.s32 0, %v204
    %v206 = vrot.slane %v201, %v205
    %v207 = vlaneseq
    %v208 = vshrl.u32 %v207, 7
    %v209 = vsub.s32 1, %v208
    %v210 = vrot.slane %v201, %v209
    %v211 = vlaneseq
    %v212 = vshrl.u32 %v211, 7
    %v213 = vsub.s32 2, %v212
    %v214 = vrot.slane %v201, %v213
    %v215 = vlaneseq
    %v216 = vshrl.u32 %v215, 7
    %v217 = vsub.s32 3, %v216
    %v218 = vrot.slane %v201, %v217
    %v219 = vlaneseq
    %v220 = vshrl.u32 %v219, 7
    %v221 = vsub.s32 4, %v220
    %v222 = vrot.slane %v201, %v221
    %v223 = vlaneseq
    %v224 = vshrl.u32 %v223, 7
    %v225 = vsub.s32 5, %v224
    %v226 = vrot.slane %v201, %v225
    %v329 = vunpack.c.l.b16 %v105
    %v330 = vunpack.c.h.b16 %v105
    %v331 = vunpack.c.l.b16 %v106
    %v332 = vunpack.c.h.b16 %v106
    %v333 = vunpack.c.l.b16 %v107
    %v334 = vunpack.c.h.b16 %v107
    %v335 = vunpack.c.l.b16 %v108
    %v336 = vunpack.c.h.b16 %v108
    %v337 = vunpack.c.l.b16 %v109
    %v338 = vunpack.c.h.b16 %v109
    %v339 = vunpack.c.l.b16 %v110
    %v340 = vunpack.c.h.b16 %v110
    %v341 = vunpack.c.l.b16 %v111
    %v342 = vunpack.c.h.b16 %v111
    %v343 = vunpack.c.l.b16 %v112
    %v344 = vunpack.c.h.b16 %v112
    %v345 = vunpack.c.l.b16 %v113
    %v346 = vunpack.c.h.b16 %v113
    %v347 = vunpack.c.l.b16 %v114
    %v348 = vunpack.c.h.b16 %v114
    %v349 = vunpack.c.l.b16 %v115
    %v350 = vunpack.c.h.b16 %v115
    %v351 = vunpack.c.l.b16 %v116
    %v352 = vunpack.c.h.b16 %v116
    %v353 = vunpack.c.l.b16 %v117
    %v354 = vunpack.c.h.b16 %v117
    %v355 = vunpack.c.l.b16 %v118
    %v356 = vunpack.c.h.b16 %v118
    %v357 = vunpack.c.l.b16 %v119
    %v358 = vunpack.c.h.b16 %v119
    %v359 = vunpack.c.l.b16 %v120
    %v360 = vunpack.c.h.b16 %v120
    %v361 = vunpack.c.l.b16 %v121
    %v362 = vunpack.c.h.b16 %v121
    %v363 = vunpack.c.l.b16 %v122
    %v364 = vunpack.c.h.b16 %v122
    %v365 = vunpack.c.l.b16 %v123
    %v366 = vunpack.c.h.b16 %v123
    %v367 = vunpack.c.l.b16 %v124
    %v368 = vunpack.c.h.b16 %v124
    %v369 = vunpack.c.l.b16 %v125
    %v370 = vunpack.c.h.b16 %v125
    %v371 = vunpack.c.l.b16 %v126
    %v372 = vunpack.c.h.b16 %v126
    %v373 = vunpack.c.l.b16 %v127
    %v374 = vunpack.c.h.b16 %v127
    %v375 = vunpack.c.l.b16 %v128
    %v376 = vunpack.c.h.b16 %v128
    %v377 = vunpack.c.l.b16 %v129
    %v378 = vunpack.c.h.b16 %v129
    %v379 = vunpack.c.l.b16 %v130
    %v380 = vunpack.c.h.b16 %v130
    %v381 = vunpack.c.l.b16 %v131
    %v382 = vunpack.c.h.b16 %v131
    %v383 = vunpack.c.l.b16 %v132
    %v384 = vunpack.c.h.b16 %v132
    %v385 = vunpack.c.l.b16 %v133
    %v386 = vunpack.c.h.b16 %v133
    %v387 = vunpack.c.l.b16 %v134
    %v388 = vunpack.c.h.b16 %v134
    %v389 = vunpack.c.l.b16 %v135
    %v390 = vunpack.c.h.b16 %v135
    %v391 = vunpack.c.l.b16 %v136
    %v392 = vunpack.c.h.b16 %v136
    %v393 = vunpack.c.l.b16 %v137
    %v394 = vunpack.c.h.b16 %v137
    %v395 = vunpack.c.l.b16 %v138
    %v396 = vunpack.c.h.b16 %v138
    %v397 = vunpack.c.l.b16 %v139
    %v398 = vunpack.c.h.b16 %v139
    %v399 = vunpack.c.l.b16 %v140
    %v400 = vunpack.c.h.b16 %v140
    %v401 = vunpack.c.l.b16 %v141
    %v402 = vunpack.c.h.b16 %v141
    %v403 = vunpack.c.l.b16 %v142
    %v404 = vunpack.c.h.b16 %v142
    %v405 = vunpack.c.l.b16 %v143
    %v406 = vunpack.c.h.b16 %v143
    %v407 = vunpack.c.l.b16 %v144
    %v408 = vunpack.c.h.b16 %v144
    %v409 = vunpack.c.l.b16 %v145
    %v410 = vunpack.c.h.b16 %v145
    %v411 = vunpack.c.l.b16 %v146
    %v412 = vunpack.c.h.b16 %v146
    %v413 = vunpack.c.l.b16 %v147
    %v414 = vunpack.c.h.b16 %v147
    %v415 = vunpack.c.l.b16 %v148
    %v416 = vunpack.c.h.b16 %v148
    %v417 = vunpack.c.l.b16 %v149
    %v418 = vunpack.c.h.b16 %v149
    %v419 = vunpack.c.l.b16 %v150
    %v420 = vunpack.c.h.b16 %v150
    %v421 = vunpack.c.l.b16 %v151
    %v422 = vunpack.c.h.b16 %v151
    %v423 = vunpack.c.l.b16 %v152
    %v424 = vunpack.c.h.b16 %v152
    %v425 = vunpack.c.l.b16 %v153
    %v426 = vunpack.c.h.b16 %v153
    %v427 = vunpack.c.l.b16 %v154
    %v428 = vunpack.c.h.b16 %v154
    %v429 = vunpack.c.l.b16 %v155
    %v430 = vunpack.c.h.b16 %v155
    %v431 = vunpack.c.l.b16 %v156
    %v432 = vunpack.c.h.b16 %v156
    %v433 = vunpack.c.l.b16 %v157
    %v434 = vunpack.c.h.b16 %v157
    %v435 = vunpack.c.l.b16 %v158
    %v436 = vunpack.c.h.b16 %v158
    %v437 = vunpack.c.l.b16 %v159
    %v438 = vunpack.c.h.b16 %v159
    %v439 = vunpack.c.l.b16 %v160
    %v440 = vunpack.c.h.b16 %v160
    %v441 = vunpack.c.l.b16 %v161
    %v442 = vunpack.c.h.b16 %v161
    %v443 = vunpack.c.l.b16 %v162
    %v444 = vunpack.c.h.b16 %v162
    %v445 = vunpack.c.l.b16 %v163
    %v446 = vunpack.c.h.b16 %v163
    %v447 = vunpack.c.l.b16 %v164
    %v448 = vunpack.c.h.b16 %v164
    %v449 = vunpack.c.l.b16 %v165
    %v450 = vunpack.c.h.b16 %v165
    %v451 = vunpack.c.l.b16 %v166
    %v452 = vunpack.c.h.b16 %v166
    %v453 = vunpack.c.l.b16 %v167
    %v454 = vunpack.c.h.b16 %v167
    %v455 = vunpack.c.l.b16 %v168
    %v456 = vunpack.c.h.b16 %v168
    %v457 = vunpack.c.l.b16 %v169
    %v458 = vunpack.c.h.b16 %v169
    %v459 = vunpack.c.l.b16 %v170
    %v460 = vunpack.c.h.b16 %v170
    %v461 = vunpack.c.l.b16 %v171
    %v462 = vunpack.c.h.b16 %v171
    %v463 = vunpack.c.l.b16 %v172
    %v464 = vunpack.c.h.b16 %v172
    %v465 = vunpack.c.l.b16 %v173
    %v466 = vunpack.c.h.b16 %v173
    %v467 = vunpack.c.l.b16 %v174
    %v468 = vunpack.c.h.b16 %v174
    %v469 = vunpack.c.l.b16 %v175
    %v470 = vunpack.c.h.b16 %v175
    %v471 = vunpack.c.l.b16 %v176
    %v472 = vunpack.c.h.b16 %v176
    %v473 = vunpack.c.l.b16 %v177
    %v474 = vunpack.c.h.b16 %v177
    %v475 = vunpack.c.l.b16 %v178
    %v476 = vunpack.c.h.b16 %v178
    %v477 = vunpack.c.l.b16 %v179
    %v478 = vunpack.c.h.b16 %v179
    %v479 = vunpack.c.l.b16 %v180
    %v480 = vunpack.c.h.b16 %v180
    %v481 = vunpack.c.l.b16 %v181
    %v482 = vunpack.c.h.b16 %v181
    %v483 = vunpack.c.l.b16 %v182
    %v484 = vunpack.c.h.b16 %v182
    %v485 = vunpack.c.l.b16 %v183
    %v486 = vunpack.c.h.b16 %v183
    %v487 = vunpack.c.l.b16 %v184
    %v488 = vunpack.c.h.b16 %v184
    %v489 = vunpack.c.l.b16 %v185
    %v490 = vunpack.c.h.b16 %v185
    %v491 = vunpack.c.l.b16 %v186
    %v492 = vunpack.c.h.b16 %v186
    %v493 = vunpack.c.l.b16 %v187
    %v494 = vunpack.c.h.b16 %v187
    %v495 = vunpack.c.l.b16 %v188
    %v496 = vunpack.c.h.b16 %v188
    %v497 = vunpack.c.l.b16 %v189
    %v498 = vunpack.c.h.b16 %v189
    %v499 = vunpack.c.l.b16 %v190
    %v500 = vunpack.c.h.b16 %v190
    %v501 = vunpack.c.l.b16 %v191
    %v502 = vunpack.c.h.b16 %v191
    %v503 = vunpack.c.l.b16 %v192
    %v504 = vunpack.c.h.b16 %v192
    %v505 = vunpack.c.l.b16 %v193
    %v506 = vunpack.c.h.b16 %v193
    %v507 = vunpack.c.l.b16 %v194
    %v508 = vunpack.c.h.b16 %v194
    %v509 = vunpack.c.l.b16 %v195
    %v510 = vunpack.c.h.b16 %v195
    %v511 = vunpack.c.l.b16 %v196
    %v512 = vunpack.c.h.b16 %v196
    %v513 = vunpack.c.l.b16 %v197
    %v514 = vunpack.c.h.b16 %v197
    %v515 = vunpack.c.l.b16 %v198
    %v516 = vunpack.c.h.b16 %v198
    %v517 = vunpack.c.l.b16 %v199
    %v518 = vunpack.c.h.b16 %v199
    %v519 = vunpack.c.l.b16 %v200
    %v520 = vunpack.c.h.b16 %v200
    %v521 = vpack.c.b16 %v335, %v329
    %v522 = vpack.c.b16 %v336, %v330
    %v523 = vpack.c.b16 %v337, %v331
    %v524 = vpack.c.b16 %v338, %v332
    %v525 = vpack.c.b16 %v339, %v333
    %v526 = vpack.c.b16 %v340, %v334
    %v527 = vpack.c.b16 %v347, %v341
    %v528 = vpack.c.b16 %v348, %v342
    %v529 = vpack.c.b16 %v349, %v343
    %v530 = vpack.c.b16 %v350, %v344
    %v531 = vpack.c.b16 %v351, %v345
    %v532 = vpack.c.b16 %v352, %v346
    %v533 = vpack.c.b16 %v359, %v353
    %v534 = vpack.c.b16 %v360, %v354
    %v535 = vpack.c.b16 %v361, %v355
    %v536 = vpack.c.b16 %v362, %v356
    %v537 = vpack.c.b16 %v363, %v357
    %v538 = vpack.c.b16 %v364, %v358
    %v539 = vpack.c.b16 %v371, %v365
    %v540 = vpack.c.b16 %v372, %v366
    %v541 = vpack.c.b16 %v373, %v367
    %v542 = vpack.c.b16 %v374, %v368
    %v543 = vpack.c.b16 %v375, %v369
    %v544 = vpack.c.b16 %v376, %v370
    %v545 = vpack.c.b16 %v383, %v377
    %v546 = vpack.c.b16 %v384, %v378
    %v547 = vpack.c.b16 %v385, %v379
    %v548 = vpack.c.b16 %v386, %v380
    %v549 = vpack.c.b16 %v387, %v381
    %v550 = vpack.c.b16 %v388, %v382
    %v551 = vpack.c.b16 %v395, %v389
    %v552 = vpack.c.b16 %v396, %v390
    %v553 = vpack.c.b16 %v397, %v391
    %v554 = vpack.c.b16 %v398, %v392
    %v555 = vpack.c.b16 %v399, %v393
    %v556 = vpack.c.b16 %v400, %v394
    %v557 = vpack.c.b16 %v407, %v401
    %v558 = vpack.c.b16 %v408, %v402
    %v559 = vpack.c.b16 %v409, %v403
    %v560 = vpack.c.b16 %v410, %v404
    %v561 = vpack.c.b16 %v411, %v405
    %v562 = vpack.c.b16 %v412, %v406
    %v563 = vpack.c.b16 %v419, %v413
    %v564 = vpack.c.b16 %v420, %v414
    %v565 = vpack.c.b16 %v421, %v415
    %v566 = vpack.c.b16 %v422, %v416
    %v567 = vpack.c.b16 %v423, %v417
    %v568 = vpack.c.b16 %v424, %v418
    %v569 = vpack.c.b16 %v431, %v425
    %v570 = vpack.c.b16 %v432, %v426
    %v571 = vpack.c.b16 %v433, %v427
    %v572 = vpack.c.b16 %v434, %v428
    %v573 = vpack.c.b16 %v435, %v429
    %v574 = vpack.c.b16 %v436, %v430
    %v575 = vpack.c.b16 %v443, %v437
    %v576 = vpack.c.b16 %v444, %v438
    %v577 = vpack.c.b16 %v445, %v439
    %v578 = vpack.c.b16 %v446, %v440
    %v579 = vpack.c.b16 %v447, %v441
    %v580 = vpack.c.b16 %v448, %v442
    %v581 = vpack.c.b16 %v455, %v449
    %v582 = vpack.c.b16 %v456, %v450
    %v583 = vpack.c.b16 %v457, %v451
    %v584 = vpack.c.b16 %v458, %v452
    %v585 = vpack.c.b16 %v459, %v453
    %v586 = vpack.c.b16 %v460, %v454
    %v587 = vpack.c.b16 %v467, %v461
    %v588 = vpack.c.b16 %v468, %v462
    %v589 = vpack.c.b16 %v469, %v463
    %v590 = vpack.c.b16 %v470, %v464
    %v591 = vpack.c.b16 %v471, %v465
    %v592 = vpack.c.b16 %v472, %v466
    %v593 = vpack.c.b16 %v479, %v473
    %v594 = vpack.c.b16 %v480, %v474
    %v595 = vpack.c.b16 %v481, %v475
    %v596 = vpack.c.b16 %v482, %v476
    %v597 = vpack.c.b16 %v483, %v477
    %v598 = vpack.c.b16 %v484, %v478
    %v599 = vpack.c.b16 %v491, %v485
    %v600 = vpack.c.b16 %v492, %v486
    %v601 = vpack.c.b16 %v493, %v487
    %v602 = vpack.c.b16 %v494, %v488
    %v603 = vpack.c.b16 %v495, %v489
    %v604 = vpack.c.b16 %v496, %v490
    %v605 = vpack.c.b16 %v503, %v497
    %v606 = vpack.c.b16 %v504, %v498
    %v607 = vpack.c.b16 %v505, %v499
    %v608 = vpack.c.b16 %v506, %v500
    %v609 = vpack.c.b16 %v507, %v501
    %v610 = vpack.c.b16 %v508, %v502
    %v611 = vpack.c.b16 %v515, %v509
    %v612 = vpack.c.b16 %v516, %v510
    %v613 = vpack.c.b16 %v517, %v511
    %v614 = vpack.c.b16 %v518, %v512
    %v615 = vpack.c.b16 %v519, %v513
    %v616 = vpack.c.b16 %v520, %v514
    %713 = vmatprep.subr.bf16.mxu0 %v564
    %714 = vmatpush1.bf16.msra.mxu0 %v563
    %715 = vmatprep.subr.bf16.mxu0 %v558
    %716 = vmatpush1.bf16.msra.mxu0 %v557
    %717 = vmatprep.subr.bf16.mxu0 %v552
    %718 = vmatpush1.bf16.msra.mxu0 %v551
    %719 = vmatprep.subr.bf16.mxu0 %v546
    %720 = vmatpush1.bf16.msra.mxu0 %v545
    %721 = vmatprep.subr.bf16.mxu0 %v540
    %722 = vmatpush1.bf16.msra.mxu0 %v539
    %723 = vmatprep.subr.bf16.mxu0 %v534
    %724 = vmatpush1.bf16.msra.mxu0 %v533
    %725 = vmatprep.subr.bf16.mxu0 %v528
    %726 = vmatpush1.bf16.msra.mxu0 %v527
    %727 = vmatprep.subr.bf16.mxu0 %v522
    %728 = vmatpush1.bf16.msra.mxu0 %v521
    %729 = vmatprep.subr.bf16.mxu0 %v612
    %730 = vmatpush2.bf16.msra.mxu0 %v611
    %731 = vmatprep.subr.bf16.mxu0 %v606
    %732 = vmatpush2.bf16.msra.mxu0 %v605
    %733 = vmatprep.subr.bf16.mxu0 %v600
    %734 = vmatpush2.bf16.msra.mxu0 %v599
    %735 = vmatprep.subr.bf16.mxu0 %v594
    %736 = vmatpush2.bf16.msra.mxu0 %v593
    %737 = vmatprep.subr.bf16.mxu0 %v588
    %738 = vmatpush2.bf16.msra.mxu0 %v587
    %739 = vmatprep.subr.bf16.mxu0 %v582
    %740 = vmatpush2.bf16.msra.mxu0 %v581
    %741 = vmatprep.subr.bf16.mxu0 %v576
    %742 = vmatpush2.bf16.msra.mxu0 %v575
    %743 = vmatprep.subr.bf16.mxu0 %v570
    %744 = vmatpush2.bf16.msra.mxu0 %v569
    %745 = vmatprep.mubr.bf16.mxu0 %v104
    %746 = vmatmul.mubr.bf16.gmra.mxu0 %v103
    %v747 = vpop.f32.mrf.mxu0
    %v748 = vadd.f32 %v206, %v747
    %v749 = vpop.f32.mrf.mxu0
    %v750 = vadd.f32 %v210, %v749
    %v751 = vpop.f32.mrf.mxu0
    %v752 = vadd.f32 %v206, %v751
    %v753 = vpop.f32.mrf.mxu0
    %v754 = vadd.f32 %v210, %v753
    %755 = vdwg.mxu0
    %756 = vmatprep.subr.bf16.mxu0 %v566
    %757 = vmatpush1.bf16.msra.mxu0 %v565
    %758 = vmatprep.subr.bf16.mxu0 %v560
    %759 = vmatpush1.bf16.msra.mxu0 %v559
    %760 = vmatprep.subr.bf16.mxu0 %v554
    %761 = vmatpush1.bf16.msra.mxu0 %v553
    %762 = vmatprep.subr.bf16.mxu0 %v548
    %763 = vmatpush1.bf16.msra.mxu0 %v547
    %764 = vmatprep.subr.bf16.mxu0 %v542
    %765 = vmatpush1.bf16.msra.mxu0 %v541
    %766 = vmatprep.subr.bf16.mxu0 %v536
    %767 = vmatpush1.bf16.msra.mxu0 %v535
    %768 = vmatprep.subr.bf16.mxu0 %v530
    %769 = vmatpush1.bf16.msra.mxu0 %v529
    %770 = vmatprep.subr.bf16.mxu0 %v524
    %771 = vmatpush1.bf16.msra.mxu0 %v523
    %772 = vmatprep.subr.bf16.mxu0 %v614
    %773 = vmatpush2.bf16.msra.mxu0 %v613
    %774 = vmatprep.subr.bf16.mxu0 %v608
    %775 = vmatpush2.bf16.msra.mxu0 %v607
    %776 = vmatprep.subr.bf16.mxu0 %v602
    %777 = vmatpush2.bf16.msra.mxu0 %v601
    %778 = vmatprep.subr.bf16.mxu0 %v596
    %779 = vmatpush2.bf16.msra.mxu0 %v595
    %780 = vmatprep.subr.bf16.mxu0 %v590
    %781 = vmatpush2.bf16.msra.mxu0 %v589
    %782 = vmatprep.subr.bf16.mxu0 %v584
    %783 = vmatpush2.bf16.msra.mxu0 %v583
    %784 = vmatprep.subr.bf16.mxu0 %v578
    %785 = vmatpush2.bf16.msra.mxu0 %v577
    %786 = vmatprep.subr.bf16.mxu0 %v572
    %787 = vmatpush2.bf16.msra.mxu0 %v571
    %788 = vmatprep.mubr.bf16.mxu0 %v104
    %789 = vmatmul.mubr.bf16.gmra.mxu0 %v103
    %v790 = vpop.f32.mrf.mxu0
    %v791 = vadd.f32 %v214, %v790
    %v792 = vpop.f32.mrf.mxu0
    %v793 = vadd.f32 %v218, %v792
    %v794 = vpop.f32.mrf.mxu0
    %v795 = vadd.f32 %v214, %v794
    %v796 = vpop.f32.mrf.mxu0
    %v797 = vadd.f32 %v218, %v796
    %798 = vdwg.mxu0
    %799 = vmatprep.subr.bf16.mxu0 %v568
    %800 = vmatpush1.bf16.msra.mxu0 %v567
    %801 = vmatprep.subr.bf16.mxu0 %v562
    %802 = vmatpush1.bf16.msra.mxu0 %v561
    %803 = vmatprep.subr.bf16.mxu0 %v556
    %804 = vmatpush1.bf16.msra.mxu0 %v555
    %805 = vmatprep.subr.bf16.mxu0 %v550
    %806 = vmatpush1.bf16.msra.mxu0 %v549
    %807 = vmatprep.subr.bf16.mxu0 %v544
    %808 = vmatpush1.bf16.msra.mxu0 %v543
    %809 = vmatprep.subr.bf16.mxu0 %v538
    %810 = vmatpush1.bf16.msra.mxu0 %v537
    %811 = vmatprep.subr.bf16.mxu0 %v532
    %812 = vmatpush1.bf16.msra.mxu0 %v531
    %813 = vmatprep.subr.bf16.mxu0 %v526
    %814 = vmatpush1.bf16.msra.mxu0 %v525
    %815 = vmatprep.subr.bf16.mxu0 %v616
    %816 = vmatpush2.bf16.msra.mxu0 %v615
    %817 = vmatprep.subr.bf16.mxu0 %v610
    %818 = vmatpush2.bf16.msra.mxu0 %v609
    %819 = vmatprep.subr.bf16.mxu0 %v604
    %820 = vmatpush2.bf16.msra.mxu0 %v603
    %821 = vmatprep.subr.bf16.mxu0 %v598
    %822 = vmatpush2.bf16.msra.mxu0 %v597
    %823 = vmatprep.subr.bf16.mxu0 %v592
    %824 = vmatpush2.bf16.msra.mxu0 %v591
    %825 = vmatprep.subr.bf16.mxu0 %v586
    %826 = vmatpush2.bf16.msra.mxu0 %v585
    %827 = vmatprep.subr.bf16.mxu0 %v580
    %828 = vmatpush2.bf16.msra.mxu0 %v579
    %829 = vmatprep.subr.bf16.mxu0 %v574
    %830 = vmatpush2.bf16.msra.mxu0 %v573
    %831 = vmatprep.mubr.bf16.mxu0 %v104
    %832 = vmatmul.mubr.bf16.gmra.mxu0 %v103
    %v833 = vpop.f32.mrf.mxu0
    %v834 = vadd.f32 %v222, %v833
    %v835 = vpop.f32.mrf.mxu0
    %v836 = vadd.f32 %v226, %v835
    %v837 = vpop.f32.mrf.mxu0
    %v838 = vadd.f32 %v222, %v837
    %v839 = vpop.f32.mrf.mxu0
    %v840 = vadd.f32 %v226, %v839
    %841 = vdwg.mxu0
    %v842 = vpack.c.bf16 %v752, %v748
    %v843 = vpack.c.bf16 %v754, %v750
    %v844 = vpack.c.bf16 %v795, %v791
    %v845 = vpack.c.bf16 %v797, %v793
    %v846 = vpack.c.bf16 %v838, %v834
    %v847 = vpack.c.bf16 %v840, %v836
    %v854 = vunpack.c.l.b16 %v842
    %v855 = vunpack.c.l.b16 %v843
    %v856 = vunpack.c.l.b16 %v844
    %v857 = vunpack.c.l.b16 %v845
    %v858 = vunpack.c.l.b16 %v846
    %v859 = vunpack.c.l.b16 %v847
    %v860 = vunpack.c.h.b16 %v842
    %v861 = vunpack.c.h.b16 %v843
    %v862 = vunpack.c.h.b16 %v844
    %v863 = vunpack.c.h.b16 %v845
    %v864 = vunpack.c.h.b16 %v846
    %v865 = vunpack.c.h.b16 %v847
    %v866 = vpack.c.b16 %v855, %v854
    %v867 = vpack.c.b16 %v857, %v856
    %v868 = vpack.c.b16 %v859, %v858
    %v869 = vpack.c.b16 %v861, %v860
    %v870 = vpack.c.b16 %v863, %v862
    %v871 = vpack.c.b16 %v865, %v864
    %878 = vst [vmem:[%s5] sm:$0xff] %v866
    %879 = vst [vmem:[%s5 + $0x8] sm:$0xff] %v867
    %880 = vst [vmem:[%s5 + $0x10] sm:$0xff] %v868
    %881 = vst [vmem:[%s5 + $0x18] sm:$0xff] %v869
    %882 = vst [vmem:[%s5 + $0x20] sm:$0xff] %v870
    %883 = vst [vmem:[%s5 + $0x28] sm:$0xff] %v871
    // Predicated region
    $region26: #{transformer_decoder_forward.17} parent=1 // pred_check
      _
    $region27: #{transformer_decoder_forward.17} parent=1 // pred_check_branch
      %885 = sbr.rel (0) target = $region29
    $region28: #{transformer_decoder_forward.17} parent=1 // pred_region
      _
    $region29: #{transformer_decoder_forward.17} parent=1 // pred_fallthru
      _
    // Predicated region
    $region30: #{transformer_decoder_forward.17} parent=1 // pred_check
      _
    $region31: #{transformer_decoder_forward.17} parent=1 // pred_check_branch
      %887 = sbr.rel (0) target = $region33
    $region32: #{transformer_decoder_forward.17} parent=1 // pred_region
      _
    $region33: #{transformer_decoder_forward.17} parent=1 // pred_fallthru
      _
    %888 = vsyncpa [#allocation3], 1

// kernel: transformer_decoder_forward.21
$region0: #{transformer_decoder_forward.21}
  #allocation0 [shape = 'u32[]', space=smem, size = 0x4, offset = 0x4, fixed_abs, tag = 'smem constant byte address 0x4 - core index']
  #allocation1 [shape = 'u32[144,128]{1,0:T(1,128)}', space=vmem, size = 0x12000, scoped, tag = 'internal scratch']
  %s0 = inlined_call_operand.vmem [shape: f32[32,256], index: 0, kind: input, shape index: {}]
  %s1 = inlined_call_operand.vmem [shape: bf16[256,512], index: 1, kind: input, shape index: {}]
  %s2 = inlined_call_operand.vmem [shape: f32[1,512], index: 2, kind: input, shape index: {}]
  %s3 = inlined_call_operand.vmem [shape: bf16[32,512], index: 3, kind: output, shape index: {}]
  %s4 = sld [smem:[#allocation0]]
  $region22: #{transformer_decoder_forward.21} parent=0
    _
  %s6 = ssub.s32 1, %s4
  %s7 = scalar_select 0, %s6, %s4
  // Predicated region
  $region2: #{transformer_decoder_forward.21} parent=0 // pred_check
    _
  $region3: #{transformer_decoder_forward.21} parent=0 // pred_check_branch
    %9 = sbr.rel (0) target = $region5
  $region4: #{transformer_decoder_forward.21} parent=0 // pred_region
    _
  $region5: #{transformer_decoder_forward.21} parent=0 // pred_fallthru
    _
  // Predicated region
  $region6: #{transformer_decoder_forward.21} parent=0 // pred_check
    _
  $region7: #{transformer_decoder_forward.21} parent=0 // pred_check_branch
    %11 = sbr.rel (0) target = $region9
  $region8: #{transformer_decoder_forward.21} parent=0 // pred_region
    _
  $region9: #{transformer_decoder_forward.21} parent=0 // pred_fallthru
    _
  // Predicated region
  $region10: #{transformer_decoder_forward.21} parent=0 // pred_check
    _
  $region11: #{transformer_decoder_forward.21} parent=0 // pred_check_branch
    %13 = sbr.rel (0) target = $region13
  $region12: #{transformer_decoder_forward.21} parent=0 // pred_region
    _
  $region13: #{transformer_decoder_forward.21} parent=0 // pred_fallthru
    _
  %v14 = vld [vmem:[%s0] sm:$0xff]
  %v15 = vld [vmem:[%s0 + $0x8] sm:$0xff]
  %v16 = vld [vmem:[%s0 + $0x10] sm:$0xff]
  %v17 = vld [vmem:[%s0 + $0x18] sm:$0xff]
  %v18 = vld [vmem:[%s0 + $0x20] sm:$0xff]
  %v19 = vld [vmem:[%s0 + $0x28] sm:$0xff]
  %v20 = vld [vmem:[%s0 + $0x30] sm:$0xff]
  %v21 = vld [vmem:[%s0 + $0x38] sm:$0xff]
  %v22 = vpack.c.bf16 %v16, %v14
  %v23 = vpack.c.bf16 %v17, %v15
  %v24 = vpack.c.bf16 %v20, %v18
  %v25 = vpack.c.bf16 %v21, %v19
  %v26 = vld [vmem:[%s1] sm:$0xff]
  %v27 = vld [vmem:[%s1 + $0x8] sm:$0xff]
  %v28 = vld [vmem:[%s1 + $0x10] sm:$0xff]
  %v29 = vld [vmem:[%s1 + $0x18] sm:$0xff]
  %v30 = vld [vmem:[%s1 + $0x20] sm:$0xff]
  %v31 = vld [vmem:[%s1 + $0x28] sm:$0xff]
  %v32 = vld [vmem:[%s1 + $0x30] sm:$0xff]
  %v33 = vld [vmem:[%s1 + $0x38] sm:$0xff]
  %v34 = vld [vmem:[%s1 + $0x40] sm:$0xff]
  %v35 = vld [vmem:[%s1 + $0x48] sm:$0xff]
  %v36 = vld [vmem:[%s1 + $0x50] sm:$0xff]
  %v37 = vld [vmem:[%s1 + $0x58] sm:$0xff]
  %v38 = vld [vmem:[%s1 + $0x60] sm:$0xff]
  %v39 = vld [vmem:[%s1 + $0x68] sm:$0xff]
  %v40 = vld [vmem:[%s1 + $0x70] sm:$0xff]
  %v41 = vld [vmem:[%s1 + $0x78] sm:$0xff]
  %v42 = vld [vmem:[%s1 + $0x80] sm:$0xff]
  %v43 = vld [vmem:[%s1 + $0x88] sm:$0xff]
  %v44 = vld [vmem:[%s1 + $0x90] sm:$0xff]
  %v45 = vld [vmem:[%s1 + $0x98] sm:$0xff]
  %v46 = vld [vmem:[%s1 + $0xa0] sm:$0xff]
  %v47 = vld [vmem:[%s1 + $0xa8] sm:$0xff]
  %v48 = vld [vmem:[%s1 + $0xb0] sm:$0xff]
  %v49 = vld [vmem:[%s1 + $0xb8] sm:$0xff]
  %v50 = vld [vmem:[%s1 + $0xc0] sm:$0xff]
  %v51 = vld [vmem:[%s1 + $0xc8] sm:$0xff]
  %v52 = vld [vmem:[%s1 + $0xd0] sm:$0xff]
  %v53 = vld [vmem:[%s1 + $0xd8] sm:$0xff]
  %v54 = vld [vmem:[%s1 + $0xe0] sm:$0xff]
  %v55 = vld [vmem:[%s1 + $0xe8] sm:$0xff]
  %v56 = vld [vmem:[%s1 + $0xf0] sm:$0xff]
  %v57 = vld [vmem:[%s1 + $0xf8] sm:$0xff]
  %v58 = vld [vmem:[%s1 + $0x100] sm:$0xff]
  %v59 = vld [vmem:[%s1 + $0x108] sm:$0xff]
  %v60 = vld [vmem:[%s1 + $0x110] sm:$0xff]
  %v61 = vld [vmem:[%s1 + $0x118] sm:$0xff]
  %v62 = vld [vmem:[%s1 + $0x120] sm:$0xff]
  %v63 = vld [vmem:[%s1 + $0x128] sm:$0xff]
  %v64 = vld [vmem:[%s1 + $0x130] sm:$0xff]
  %v65 = vld [vmem:[%s1 + $0x138] sm:$0xff]
  %v66 = vld [vmem:[%s1 + $0x140] sm:$0xff]
  %v67 = vld [vmem:[%s1 + $0x148] sm:$0xff]
  %v68 = vld [vmem:[%s1 + $0x150] sm:$0xff]
  %v69 = vld [vmem:[%s1 + $0x158] sm:$0xff]
  %v70 = vld [vmem:[%s1 + $0x160] sm:$0xff]
  %v71 = vld [vmem:[%s1 + $0x168] sm:$0xff]
  %v72 = vld [vmem:[%s1 + $0x170] sm:$0xff]
  %v73 = vld [vmem:[%s1 + $0x178] sm:$0xff]
  %v74 = vld [vmem:[%s1 + $0x180] sm:$0xff]
  %v75 = vld [vmem:[%s1 + $0x188] sm:$0xff]
  %v76 = vld [vmem:[%s1 + $0x190] sm:$0xff]
  %v77 = vld [vmem:[%s1 + $0x198] sm:$0xff]
  %v78 = vld [vmem:[%s1 + $0x1a0] sm:$0xff]
  %v79 = vld [vmem:[%s1 + $0x1a8] sm:$0xff]
  %v80 = vld [vmem:[%s1 + $0x1b0] sm:$0xff]
  %v81 = vld [vmem:[%s1 + $0x1b8] sm:$0xff]
  %v82 = vld [vmem:[%s1 + $0x1c0] sm:$0xff]
  %v83 = vld [vmem:[%s1 + $0x1c8] sm:$0xff]
  %v84 = vld [vmem:[%s1 + $0x1d0] sm:$0xff]
  %v85 = vld [vmem:[%s1 + $0x1d8] sm:$0xff]
  %v86 = vld [vmem:[%s1 + $0x1e0] sm:$0xff]
  %v87 = vld [vmem:[%s1 + $0x1e8] sm:$0xff]
  %v88 = vld [vmem:[%s1 + $0x1f0] sm:$0xff]
  %v89 = vld [vmem:[%s1 + $0x1f8] sm:$0xff]
  %v90 = vld [vmem:[%s2] sm:$0xf]
  %v92 = vlaneseq
  %v93 = vshrl.u32 %v92, 7
  %v94 = vsub.s32 0, %v93
  %v95 = vrot.slane %v90, %v94
  %v96 = vlaneseq
  %v97 = vshrl.u32 %v96, 7
  %v98 = vsub.s32 1, %v97
  %v99 = vrot.slane %v90, %v98
  %v100 = vlaneseq
  %v101 = vshrl.u32 %v100, 7
  %v102 = vsub.s32 2, %v101
  %v103 = vrot.slane %v90, %v102
  %v104 = vlaneseq
  %v105 = vshrl.u32 %v104, 7
  %v106 = vsub.s32 3, %v105
  %v107 = vrot.slane %v90, %v106
  %v176 = vunpack.c.l.b16 %v26
  %v177 = vunpack.c.h.b16 %v26
  %v178 = vunpack.c.l.b16 %v27
  %v179 = vunpack.c.h.b16 %v27
  %v180 = vunpack.c.l.b16 %v28
  %v181 = vunpack.c.h.b16 %v28
  %v182 = vunpack.c.l.b16 %v29
  %v183 = vunpack.c.h.b16 %v29
  %v184 = vunpack.c.l.b16 %v30
  %v185 = vunpack.c.h.b16 %v30
  %v186 = vunpack.c.l.b16 %v31
  %v187 = vunpack.c.h.b16 %v31
  %v188 = vunpack.c.l.b16 %v32
  %v189 = vunpack.c.h.b16 %v32
  %v190 = vunpack.c.l.b16 %v33
  %v191 = vunpack.c.h.b16 %v33
  %v192 = vunpack.c.l.b16 %v34
  %v193 = vunpack.c.h.b16 %v34
  %v194 = vunpack.c.l.b16 %v35
  %v195 = vunpack.c.h.b16 %v35
  %v196 = vunpack.c.l.b16 %v36
  %v197 = vunpack.c.h.b16 %v36
  %v198 = vunpack.c.l.b16 %v37
  %v199 = vunpack.c.h.b16 %v37
  %v200 = vunpack.c.l.b16 %v38
  %v201 = vunpack.c.h.b16 %v38
  %v202 = vunpack.c.l.b16 %v39
  %v203 = vunpack.c.h.b16 %v39
  %v204 = vunpack.c.l.b16 %v40
  %v205 = vunpack.c.h.b16 %v40
  %v206 = vunpack.c.l.b16 %v41
  %v207 = vunpack.c.h.b16 %v41
  %v208 = vunpack.c.l.b16 %v42
  %v209 = vunpack.c.h.b16 %v42
  %v210 = vunpack.c.l.b16 %v43
  %v211 = vunpack.c.h.b16 %v43
  %v212 = vunpack.c.l.b16 %v44
  %v213 = vunpack.c.h.b16 %v44
  %v214 = vunpack.c.l.b16 %v45
  %v215 = vunpack.c.h.b16 %v45
  %v216 = vunpack.c.l.b16 %v46
  %v217 = vunpack.c.h.b16 %v46
  %v218 = vunpack.c.l.b16 %v47
  %v219 = vunpack.c.h.b16 %v47
  %v220 = vunpack.c.l.b16 %v48
  %v221 = vunpack.c.h.b16 %v48
  %v222 = vunpack.c.l.b16 %v49
  %v223 = vunpack.c.h.b16 %v49
  %v224 = vunpack.c.l.b16 %v50
  %v225 = vunpack.c.h.b16 %v50
  %v226 = vunpack.c.l.b16 %v51
  %v227 = vunpack.c.h.b16 %v51
  %v228 = vunpack.c.l.b16 %v52
  %v229 = vunpack.c.h.b16 %v52
  %v230 = vunpack.c.l.b16 %v53
  %v231 = vunpack.c.h.b16 %v53
  %v232 = vunpack.c.l.b16 %v54
  %v233 = vunpack.c.h.b16 %v54
  %v234 = vunpack.c.l.b16 %v55
  %v235 = vunpack.c.h.b16 %v55
  %v236 = vunpack.c.l.b16 %v56
  %v237 = vunpack.c.h.b16 %v56
  %v238 = vunpack.c.l.b16 %v57
  %v239 = vunpack.c.h.b16 %v57
  %v240 = vunpack.c.l.b16 %v58
  %v241 = vunpack.c.h.b16 %v58
  %v242 = vunpack.c.l.b16 %v59
  %v243 = vunpack.c.h.b16 %v59
  %v244 = vunpack.c.l.b16 %v60
  %v245 = vunpack.c.h.b16 %v60
  %v246 = vunpack.c.l.b16 %v61
  %v247 = vunpack.c.h.b16 %v61
  %v248 = vunpack.c.l.b16 %v62
  %v249 = vunpack.c.h.b16 %v62
  %v250 = vunpack.c.l.b16 %v63
  %v251 = vunpack.c.h.b16 %v63
  %v252 = vunpack.c.l.b16 %v64
  %v253 = vunpack.c.h.b16 %v64
  %v254 = vunpack.c.l.b16 %v65
  %v255 = vunpack.c.h.b16 %v65
  %v256 = vunpack.c.l.b16 %v66
  %v257 = vunpack.c.h.b16 %v66
  %v258 = vunpack.c.l.b16 %v67
  %v259 = vunpack.c.h.b16 %v67
  %v260 = vunpack.c.l.b16 %v68
  %v261 = vunpack.c.h.b16 %v68
  %v262 = vunpack.c.l.b16 %v69
  %v263 = vunpack.c.h.b16 %v69
  %v264 = vunpack.c.l.b16 %v70
  %v265 = vunpack.c.h.b16 %v70
  %v266 = vunpack.c.l.b16 %v71
  %v267 = vunpack.c.h.b16 %v71
  %v268 = vunpack.c.l.b16 %v72
  %v269 = vunpack.c.h.b16 %v72
  %v270 = vunpack.c.l.b16 %v73
  %v271 = vunpack.c.h.b16 %v73
  %v272 = vunpack.c.l.b16 %v74
  %v273 = vunpack.c.h.b16 %v74
  %v274 = vunpack.c.l.b16 %v75
  %v275 = vunpack.c.h.b16 %v75
  %v276 = vunpack.c.l.b16 %v76
  %v277 = vunpack.c.h.b16 %v76
  %v278 = vunpack.c.l.b16 %v77
  %v279 = vunpack.c.h.b16 %v77
  %v280 = vunpack.c.l.b16 %v78
  %v281 = vunpack.c.h.b16 %v78
  %v282 = vunpack.c.l.b16 %v79
  %v283 = vunpack.c.h.b16 %v79
  %v284 = vunpack.c.l.b16 %v80
  %v285 = vunpack.c.h.b16 %v80
  %v286 = vunpack.c.l.b16 %v81
  %v287 = vunpack.c.h.b16 %v81
  %v288 = vunpack.c.l.b16 %v82
  %v289 = vunpack.c.h.b16 %v82
  %v290 = vunpack.c.l.b16 %v83
  %v291 = vunpack.c.h.b16 %v83
  %v292 = vunpack.c.l.b16 %v84
  %v293 = vunpack.c.h.b16 %v84
  %v294 = vunpack.c.l.b16 %v85
  %v295 = vunpack.c.h.b16 %v85
  %v296 = vunpack.c.l.b16 %v86
  %v297 = vunpack.c.h.b16 %v86
  %v298 = vunpack.c.l.b16 %v87
  %v299 = vunpack.c.h.b16 %v87
  %v300 = vunpack.c.l.b16 %v88
  %v301 = vunpack.c.h.b16 %v88
  %v302 = vunpack.c.l.b16 %v89
  %v303 = vunpack.c.h.b16 %v89
  %v304 = vpack.c.b16 %v180, %v176
  %v305 = vpack.c.b16 %v181, %v177
  %v306 = vpack.c.b16 %v182, %v178
  %v307 = vpack.c.b16 %v183, %v179
  %v308 = vpack.c.b16 %v188, %v184
  %v309 = vpack.c.b16 %v189, %v185
  %v310 = vpack.c.b16 %v190, %v186
  %v311 = vpack.c.b16 %v191, %v187
  %v312 = vpack.c.b16 %v196, %v192
  %v313 = vpack.c.b16 %v197, %v193
  %v314 = vpack.c.b16 %v198, %v194
  %v315 = vpack.c.b16 %v199, %v195
  %v316 = vpack.c.b16 %v204, %v200
  %v317 = vpack.c.b16 %v205, %v201
  %v318 = vpack.c.b16 %v206, %v202
  %v319 = vpack.c.b16 %v207, %v203
  %v320 = vpack.c.b16 %v212, %v208
  %v321 = vpack.c.b16 %v213, %v209
  %v322 = vpack.c.b16 %v214, %v210
  %v323 = vpack.c.b16 %v215, %v211
  %v324 = vpack.c.b16 %v220, %v216
  %v325 = vpack.c.b16 %v221, %v217
  %v326 = vpack.c.b16 %v222, %v218
  %v327 = vpack.c.b16 %v223, %v219
  %v328 = vpack.c.b16 %v228, %v224
  %v329 = vpack.c.b16 %v229, %v225
  %v330 = vpack.c.b16 %v230, %v226
  %v331 = vpack.c.b16 %v231, %v227
  %v332 = vpack.c.b16 %v236, %v232
  %v333 = vpack.c.b16 %v237, %v233
  %v334 = vpack.c.b16 %v238, %v234
  %v335 = vpack.c.b16 %v239, %v235
  %v336 = vpack.c.b16 %v244, %v240
  %v337 = vpack.c.b16 %v245, %v241
  %v338 = vpack.c.b16 %v246, %v242
  %v339 = vpack.c.b16 %v247, %v243
  %v340 = vpack.c.b16 %v252, %v248
  %v341 = vpack.c.b16 %v253, %v249
  %v342 = vpack.c.b16 %v254, %v250
  %v343 = vpack.c.b16 %v255, %v251
  %v344 = vpack.c.b16 %v260, %v256
  %v345 = vpack.c.b16 %v261, %v257
  %v346 = vpack.c.b16 %v262, %v258
  %v347 = vpack.c.b16 %v263, %v259
  %v348 = vpack.c.b16 %v268, %v264
  %v349 = vpack.c.b16 %v269, %v265
  %v350 = vpack.c.b16 %v270, %v266
  %v351 = vpack.c.b16 %v271, %v267
  %v352 = vpack.c.b16 %v276, %v272
  %v353 = vpack.c.b16 %v277, %v273
  %v354 = vpack.c.b16 %v278, %v274
  %v355 = vpack.c.b16 %v279, %v275
  %v356 = vpack.c.b16 %v284, %v280
  %v357 = vpack.c.b16 %v285, %v281
  %v358 = vpack.c.b16 %v286, %v282
  %v359 = vpack.c.b16 %v287, %v283
  %v360 = vpack.c.b16 %v292, %v288
  %v361 = vpack.c.b16 %v293, %v289
  %v362 = vpack.c.b16 %v294, %v290
  %v363 = vpack.c.b16 %v295, %v291
  %v364 = vpack.c.b16 %v300, %v296
  %v365 = vpack.c.b16 %v301, %v297
  %v366 = vpack.c.b16 %v302, %v298
  %v367 = vpack.c.b16 %v303, %v299
  %432 = vmatprep.subr.bf16.mxu0 %v333
  %433 = vmatpush1.bf16.msra.mxu0 %v332
  %434 = vmatprep.subr.bf16.mxu0 %v329
  %435 = vmatpush1.bf16.msra.mxu0 %v328
  %436 = vmatprep.subr.bf16.mxu0 %v325
  %437 = vmatpush1.bf16.msra.mxu0 %v324
  %438 = vmatprep.subr.bf16.mxu0 %v321
  %439 = vmatpush1.bf16.msra.mxu0 %v320
  %440 = vmatprep.subr.bf16.mxu0 %v317
  %441 = vmatpush1.bf16.msra.mxu0 %v316
  %442 = vmatprep.subr.bf16.mxu0 %v313
  %443 = vmatpush1.bf16.msra.mxu0 %v312
  %444 = vmatprep.subr.bf16.mxu0 %v309
  %445 = vmatpush1.bf16.msra.mxu0 %v308
  %446 = vmatprep.subr.bf16.mxu0 %v305
  %447 = vmatpush1.bf16.msra.mxu0 %v304
  %448 = vmatprep.subr.bf16.mxu0 %v365
  %449 = vmatpush2.bf16.msra.mxu0 %v364
  %450 = vmatprep.subr.bf16.mxu0 %v361
  %451 = vmatpush2.bf16.msra.mxu0 %v360
  %452 = vmatprep.subr.bf16.mxu0 %v357
  %453 = vmatpush2.bf16.msra.mxu0 %v356
  %454 = vmatprep.subr.bf16.mxu0 %v353
  %455 = vmatpush2.bf16.msra.mxu0 %v352
  %456 = vmatprep.subr.bf16.mxu0 %v349
  %457 = vmatpush2.bf16.msra.mxu0 %v348
  %458 = vmatprep.subr.bf16.mxu0 %v345
  %459 = vmatpush2.bf16.msra.mxu0 %v344
  %460 = vmatprep.subr.bf16.mxu0 %v341
  %461 = vmatpush2.bf16.msra.mxu0 %v340
  %462 = vmatprep.subr.bf16.mxu0 %v337
  %463 = vmatpush2.bf16.msra.mxu0 %v336
  %464 = vmatprep.mubr.bf16.mxu0 %v23
  %465 = vmatmul.mubr.bf16.gmra.mxu0 %v22
  %v466 = vpop.f32.mrf.mxu0
  %v467 = vadd.f32 %v95, %v466
  %v468 = vpop.f32.mrf.mxu0
  %v469 = vadd.f32 %v99, %v468
  %v470 = vpop.f32.mrf.mxu0
  %v471 = vadd.f32 %v95, %v470
  %v472 = vpop.f32.mrf.mxu0
  %v473 = vadd.f32 %v99, %v472
  %474 = vmatprep.mubr.bf16.mxu0 %v25
  %475 = vmatmul.mubr.bf16.gmra.mxu0 %v24
  %v476 = vpop.f32.mrf.mxu0
  %v477 = vadd.f32 %v95, %v476
  %v478 = vpop.f32.mrf.mxu0
  %v479 = vadd.f32 %v99, %v478
  %v480 = vpop.f32.mrf.mxu0
  %v481 = vadd.f32 %v95, %v480
  %v482 = vpop.f32.mrf.mxu0
  %v483 = vadd.f32 %v99, %v482
  %484 = vdwg.mxu0
  %485 = vmatprep.subr.bf16.mxu0 %v335
  %486 = vmatpush1.bf16.msra.mxu0 %v334
  %487 = vmatprep.subr.bf16.mxu0 %v331
  %488 = vmatpush1.bf16.msra.mxu0 %v330
  %489 = vmatprep.subr.bf16.mxu0 %v327
  %490 = vmatpush1.bf16.msra.mxu0 %v326
  %491 = vmatprep.subr.bf16.mxu0 %v323
  %492 = vmatpush1.bf16.msra.mxu0 %v322
  %493 = vmatprep.subr.bf16.mxu0 %v319
  %494 = vmatpush1.bf16.msra.mxu0 %v318
  %495 = vmatprep.subr.bf16.mxu0 %v315
  %496 = vmatpush1.bf16.msra.mxu0 %v314
  %497 = vmatprep.subr.bf16.mxu0 %v311
  %498 = vmatpush1.bf16.msra.mxu0 %v310
  %499 = vmatprep.subr.bf16.mxu0 %v307
  %500 = vmatpush1.bf16.msra.mxu0 %v306
  %501 = vmatprep.subr.bf16.mxu0 %v367
  %502 = vmatpush2.bf16.msra.mxu0 %v366
  %503 = vmatprep.subr.bf16.mxu0 %v363
  %504 = vmatpush2.bf16.msra.mxu0 %v362
  %505 = vmatprep.subr.bf16.mxu0 %v359
  %506 = vmatpush2.bf16.msra.mxu0 %v358
  %507 = vmatprep.subr.bf16.mxu0 %v355
  %508 = vmatpush2.bf16.msra.mxu0 %v354
  %509 = vmatprep.subr.bf16.mxu0 %v351
  %510 = vmatpush2.bf16.msra.mxu0 %v350
  %511 = vmatprep.subr.bf16.mxu0 %v347
  %512 = vmatpush2.bf16.msra.mxu0 %v346
  %513 = vmatprep.subr.bf16.mxu0 %v343
  %514 = vmatpush2.bf16.msra.mxu0 %v342
  %515 = vmatprep.subr.bf16.mxu0 %v339
  %516 = vmatpush2.bf16.msra.mxu0 %v338
  %517 = vmatprep.mubr.bf16.mxu0 %v23
  %518 = vmatmul.mubr.bf16.gmra.mxu0 %v22
  %v519 = vpop.f32.mrf.mxu0
  %v520 = vadd.f32 %v103, %v519
  %v521 = vpop.f32.mrf.mxu0
  %v522 = vadd.f32 %v107, %v521
  %v523 = vpop.f32.mrf.mxu0
  %v524 = vadd.f32 %v103, %v523
  %v525 = vpop.f32.mrf.mxu0
  %v526 = vadd.f32 %v107, %v525
  %527 = vmatprep.mubr.bf16.mxu0 %v25
  %528 = vmatmul.mubr.bf16.gmra.mxu0 %v24
  %v529 = vpop.f32.mrf.mxu0
  %v530 = vadd.f32 %v103, %v529
  %v531 = vpop.f32.mrf.mxu0
  %v532 = vadd.f32 %v107, %v531
  %v533 = vpop.f32.mrf.mxu0
  %v534 = vadd.f32 %v103, %v533
  %v535 = vpop.f32.mrf.mxu0
  %v536 = vadd.f32 %v107, %v535
  %537 = vdwg.mxu0
  %v538 = vpack.c.bf16 %v471, %v467
  %v539 = vpack.c.bf16 %v473, %v469
  %v540 = vpack.c.bf16 %v524, %v520
  %v541 = vpack.c.bf16 %v526, %v522
  %v542 = vpack.c.bf16 %v481, %v477
  %v543 = vpack.c.bf16 %v483, %v479
  %v544 = vpack.c.bf16 %v534, %v530
  %v545 = vpack.c.bf16 %v536, %v532
  %v554 = vunpack.c.l.b16 %v538
  %v555 = vunpack.c.l.b16 %v539
  %v556 = vunpack.c.l.b16 %v540
  %v557 = vunpack.c.l.b16 %v541
  %v558 = vunpack.c.h.b16 %v538
  %v559 = vunpack.c.h.b16 %v539
  %v560 = vunpack.c.h.b16 %v540
  %v561 = vunpack.c.h.b16 %v541
  %v562 = vunpack.c.l.b16 %v542
  %v563 = vunpack.c.l.b16 %v543
  %v564 = vunpack.c.l.b16 %v544
  %v565 = vunpack.c.l.b16 %v545
  %v566 = vunpack.c.h.b16 %v542
  %v567 = vunpack.c.h.b16 %v543
  %v568 = vunpack.c.h.b16 %v544
  %v569 = vunpack.c.h.b16 %v545
  %v570 = vpack.c.b16 %v555, %v554
  %v571 = vpack.c.b16 %v557, %v556
  %v572 = vpack.c.b16 %v559, %v558
  %v573 = vpack.c.b16 %v561, %v560
  %v574 = vpack.c.b16 %v563, %v562
  %v575 = vpack.c.b16 %v565, %v564
  %v576 = vpack.c.b16 %v567, %v566
  %v577 = vpack.c.b16 %v569, %v568
  %586 = vst [vmem:[%s3] sm:$0xff] %v570
  %587 = vst [vmem:[%s3 + $0x8] sm:$0xff] %v571
  %588 = vst [vmem:[%s3 + $0x10] sm:$0xff] %v572
  %589 = vst [vmem:[%s3 + $0x18] sm:$0xff] %v573
  %590 = vst [vmem:[%s3 + $0x20] sm:$0xff] %v574
  %591 = vst [vmem:[%s3 + $0x28] sm:$0xff] %v575
  %592 = vst [vmem:[%s3 + $0x30] sm:$0xff] %v576
  %593 = vst [vmem:[%s3 + $0x38] sm:$0xff] %v577
  // Predicated region
  $region14: #{transformer_decoder_forward.21} parent=0 // pred_check
    _
  $region15: #{transformer_decoder_forward.21} parent=0 // pred_check_branch
    %595 = sbr.rel (0) target = $region17
  $region16: #{transformer_decoder_forward.21} parent=0 // pred_region
    _
  $region17: #{transformer_decoder_forward.21} parent=0 // pred_fallthru
    _
  // Predicated region
  $region18: #{transformer_decoder_forward.21} parent=0 // pred_check
    _
  $region19: #{transformer_decoder_forward.21} parent=0 // pred_check_branch
    %597 = sbr.rel (0) target = $region21
  $region20: #{transformer_decoder_forward.21} parent=0 // pred_region
    _
  $region21: #{transformer_decoder_forward.21} parent=0 // pred_fallthru
    _

// kernel: transformer_decoder_forward.22
$region0: #{transformer_decoder_forward.22}
  #allocation0 [shape = 'u32[]', space=smem, size = 0x4, offset = 0x4, fixed_abs, tag = 'smem constant byte address 0x4 - core index']
  #allocation1 [shape = 'u32[144,128]{1,0:T(1,128)}', space=vmem, size = 0x12000, scoped, tag = 'internal scratch']
  #allocation2 [shape = 'f32[1,8,1]{2,1,0:T(8,128)}', space=vmem, size = 0x1000, scoped, tag = 'scratch operand']
  #allocation3 [shape = 'f32[1,8,1]{2,1,0:T(8,128)}', space=vmem, size = 0x1000, scoped, tag = 'scratch operand']
  #allocation4 [shape = 'f32[1,8,128]{2,1,0:T(8,128)}', space=vmem, size = 0x1000, scoped, tag = 'scratch operand']
  %s0 = inlined_call_operand.vmem [shape: s32[2,1,16], index: 0, kind: input, shape index: {}]
  %s1 = inlined_call_operand.vmem [shape: bf16[2,8,256], index: 1, kind: input, shape index: {}]
  %s2 = inlined_call_operand.vmem [shape: bf16[2,16,512], index: 2, kind: input, shape index: {}, may-alias: {2,3}]
  %s3 = inlined_call_operand.vmem [shape: bf16[2,16,512], index: 3, kind: input, shape index: {}, may-alias: {2,3}]
  %s4 = inlined_call_operand.vmem [shape: bf16[2,8,256], index: 4, kind: output, shape index: {}]
  %s5 = sld [smem:[#allocation0]]
  $region139: #{transformer_decoder_forward.22} parent=0
    _
  %s7 = ssub.s32 1, %s5
  %s8 = scalar_select 0, %s7, %s5
  $region1: #{transformer_decoder_forward.22} parent=0
    #allocation5 [shape = 'u8[8192]{0}', space=vmem, size = 0x2000, scoped, tag = 'input window, operand 2']
    #allocation6 [shape = 'u8[8192]{0}', space=vmem, size = 0x2000, scoped, tag = 'input window, operand 3']
    loop: start=0, step=1, limit=6
    $region2: #{transformer_decoder_forward.22} parent=1 // loop_pre_header
      _
    $region3: #{transformer_decoder_forward.22} parent=1 // loop_header
      %s10 = sphi 0, %s14
      %p11 = scmp.ge.s32.totalorder %s10, 6
      %s17 = sphi 0, %s43
      %s18 = sphi 0, %s39
      %s19 = sphi 0, %s35
      %s20 = sphi 0, %s31
      %s21 = sphi 0, %s17
      %s22 = sphi 0, %s18
      %s23 = sphi 0, %s19
      %s24 = sphi 0, %s20
      %s25 = sphi 0, %s21
      %s26 = sphi 0, %s22
      %s27 = sphi 0, %s23
      %s28 = sphi 0, %s24
      %s48 = sphi 0, %s50
      %s51 = sphi 0, %s48
      %s52 = sphi 0, %s51
      %s68 = sphi 0, %s52
      %s78 = sphi 0, %s80
      %s81 = sphi 0, %s78
      %s82 = sphi 0, %s81
      %s98 = sphi 0, %s82
      %s108 = sphi 0, %s110
      %s111 = sphi 0, %s108
      %s112 = sphi 0, %s111
      %s128 = sphi 0, %s112
      %s140 = sphi 0, %s142
      %s143 = sphi 0, %s140
      %s144 = sphi 0, %s143
      %s160 = sphi 0, %s144
      %s170 = sphi 0, %s172
      %s173 = sphi 0, %s170
      %s174 = sphi 0, %s173
      %s190 = sphi 0, %s174
    $region4: #{transformer_decoder_forward.22} parent=1 // loop_header_branch
      %13 = sbr.rel (%p11) target = $region8
    $region5: #{transformer_decoder_forward.22} parent=1 // loop_body
      %s15 = ssub.s32 %s10, 1
      %s16 = ssub.s32 %s10, 2
      %s29 = sadd.s32 1, %s20
      %p30 = scmp.ge.s32.totalorder %s29, 1
      %s31 = scalar_select %p30, 0, %s29
      %s32 = sadd.s32 1, %s19
      %s33 = scalar_select %p30, %s32, %s19
      %p34 = scmp.ge.s32.totalorder %s33, 1
      %s35 = scalar_select %p34, 0, %s33
      %s36 = sadd.s32 1, %s18
      %s37 = scalar_select %p34, %s36, %s18
      %p38 = scmp.ge.s32.totalorder %s37, 2
      %s39 = scalar_select %p38, 0, %s37
      %s40 = sadd.s32 1, %s17
      %s41 = scalar_select %p38, %s40, %s17
      %p42 = scmp.ge.s32.totalorder %s41, 2
      %s43 = scalar_select %p42, 0, %s41
      %s44 = ssub.s32 %s17, %s43
      %s45 = ssub.s32 %s20, %s31
      %s46 = sor.u32 %s44, %s45
      %p47 = scmp.eq.s32.totalorder %s46, 0
      %s49 = sadd.s32 %s48, 1
      %s50 = scalar_select %p47, %s48, %s49
      %p53 = pneg %p47
      %p54 = scmp.eq.s32.totalorder %s10, 3
      %p55 = por %p53, %p54
      %p56 = scmp.ne.s32.totalorder %s48, %s51
      %p57 = scmp.eq.s32.totalorder %s10, 0
      %p58 = por %p56, %p57
      %p59 = scmp.ne.s32.totalorder %s48, %s51
      %p60 = scmp.eq.s32.totalorder %s15, 3
      %p61 = por %p59, %p60
      %p62 = scmp.ne.s32.totalorder %s51, %s52
      %p63 = scmp.eq.s32.totalorder %s15, 0
      %p64 = por %p62, %p63
      %p65 = scmp.ne.s32.totalorder %s51, %s52
      %p66 = scmp.eq.s32.totalorder %s16, 3
      %p67 = por %p65, %p66
      %p69 = scmp.ne.s32.totalorder %s52, %s68
      %p70 = scmp.eq.s32.totalorder %s16, 0
      %p71 = por %p69, %p70
      %s72 = ssub.s32 %s17, %s43
      %s73 = ssub.s32 %s19, %s35
      %s74 = sor.u32 %s72, %s73
      %s75 = ssub.s32 %s18, %s39
      %s76 = sor.u32 %s74, %s75
      %p77 = scmp.eq.s32.totalorder %s76, 0
      %s79 = sadd.s32 %s78, 1
      %s80 = scalar_select %p77, %s78, %s79
      %p83 = pneg %p77
      %p84 = scmp.eq.s32.totalorder %s10, 3
      %p85 = por %p83, %p84
      %p86 = scmp.ne.s32.totalorder %s78, %s81
      %p87 = scmp.eq.s32.totalorder %s10, 0
      %p88 = por %p86, %p87
      %p89 = scmp.ne.s32.totalorder %s78, %s81
      %p90 = scmp.eq.s32.totalorder %s15, 3
      %p91 = por %p89, %p90
      %p92 = scmp.ne.s32.totalorder %s81, %s82
      %p93 = scmp.eq.s32.totalorder %s15, 0
      %p94 = por %p92, %p93
      %p95 = scmp.ne.s32.totalorder %s81, %s82
      %p96 = scmp.eq.s32.totalorder %s16, 3
      %p97 = por %p95, %p96
      %p99 = scmp.ne.s32.totalorder %s82, %s98
      %p100 = scmp.eq.s32.totalorder %s16, 0
      %p101 = por %p99, %p100
      %s102 = ssub.s32 %s17, %s43
      %s103 = ssub.s32 %s20, %s31
      %s104 = sor.u32 %s102, %s103
      %s105 = ssub.s32 %s18, %s39
      %s106 = sor.u32 %s104, %s105
      %p107 = scmp.eq.s32.totalorder %s106, 0
      %s109 = sadd.s32 %s108, 1
      %s110 = scalar_select %p107, %s108, %s109
      %p113 = pneg %p107
      %p114 = scmp.eq.s32.totalorder %s10, 3
      %p115 = por %p113, %p114
      %p116 = scmp.ne.s32.totalorder %s108, %s111
      %p117 = scmp.eq.s32.totalorder %s10, 0
      %p118 = por %p116, %p117
      %p119 = scmp.ne.s32.totalorder %s108, %s111
      %p120 = scmp.eq.s32.totalorder %s15, 3
      %p121 = por %p119, %p120
      %p122 = scmp.ne.s32.totalorder %s111, %s112
      %p123 = scmp.eq.s32.totalorder %s15, 0
      %p124 = por %p122, %p123
      %p125 = scmp.ne.s32.totalorder %s111, %s112
      %p126 = scmp.eq.s32.totalorder %s16, 3
      %p127 = por %p125, %p126
      %p129 = scmp.ne.s32.totalorder %s112, %s128
      %p130 = scmp.eq.s32.totalorder %s16, 0
      %p131 = por %p129, %p130
      %s132 = sadd.s32 %s18, 2
      %s133 = sadd.s32 %s39, 2
      %s134 = ssub.s32 %s17, %s43
      %s135 = ssub.s32 %s20, %s31
      %s136 = sor.u32 %s134, %s135
      %s137 = ssub.s32 %s132, %s133
      %s138 = sor.u32 %s136, %s137
      %p139 = scmp.eq.s32.totalorder %s138, 0
      %s141 = sadd.s32 %s140, 1
      %s142 = scalar_select %p139, %s140, %s141
      %p145 = pneg %p139
      %p146 = scmp.eq.s32.totalorder %s10, 3
      %p147 = por %p145, %p146
      %p148 = scmp.ne.s32.totalorder %s140, %s143
      %p149 = scmp.eq.s32.totalorder %s10, 0
      %p150 = por %p148, %p149
      %p151 = scmp.ne.s32.totalorder %s140, %s143
      %p152 = scmp.eq.s32.totalorder %s15, 3
      %p153 = por %p151, %p152
      %p154 = scmp.ne.s32.totalorder %s143, %s144
      %p155 = scmp.eq.s32.totalorder %s15, 0
      %p156 = por %p154, %p155
      %p157 = scmp.ne.s32.totalorder %s143, %s144
      %p158 = scmp.eq.s32.totalorder %s16, 3
      %p159 = por %p157, %p158
      %p161 = scmp.ne.s32.totalorder %s144, %s160
      %p162 = scmp.eq.s32.totalorder %s16, 0
      %p163 = por %p161, %p162
      %s164 = ssub.s32 %s17, %s43
      %s165 = ssub.s32 %s19, %s35
      %s166 = sor.u32 %s164, %s165
      %s167 = ssub.s32 %s18, %s39
      %s168 = sor.u32 %s166, %s167
      %p169 = scmp.eq.s32.totalorder %s168, 0
      %s171 = sadd.s32 %s170, 1
      %s172 = scalar_select %p169, %s170, %s171
      %p175 = pneg %p169
      %p176 = scmp.eq.s32.totalorder %s10, 3
      %p177 = por %p175, %p176
      %p178 = scmp.ne.s32.totalorder %s170, %s173
      %p179 = scmp.eq.s32.totalorder %s10, 0
      %p180 = por %p178, %p179
      %p181 = scmp.ne.s32.totalorder %s170, %s173
      %p182 = scmp.eq.s32.totalorder %s15, 3
      %p183 = por %p181, %p182
      %p184 = scmp.ne.s32.totalorder %s173, %s174
      %p185 = scmp.eq.s32.totalorder %s15, 0
      %p186 = por %p184, %p185
      %p187 = scmp.ne.s32.totalorder %s173, %s174
      %p188 = scmp.eq.s32.totalorder %s16, 3
      %p189 = por %p187, %p188
      %p191 = scmp.ne.s32.totalorder %s174, %s190
      %p192 = scmp.eq.s32.totalorder %s16, 0
      %p193 = por %p191, %p192
      %p194 = scmp.le.s32.totalorder 1, %s10
      %p195 = scmp.lt.s32.totalorder %s10, 5
      %p196 = pnand %p194, %p195
      %p197 = pneg %p196
      // Predicated region
      $region9: #{transformer_decoder_forward.22} parent=5 // pred_check
        _
      $region10: #{transformer_decoder_forward.22} parent=5 // pred_check_branch
        %199 = sbr.rel (%p196) target = $region12
      $region11: #{transformer_decoder_forward.22} parent=5 // pred_region
        %s200 = ssub.s32 %s10, 1
      $region12: #{transformer_decoder_forward.22} parent=5 // pred_fallthru
        _
      %p201 = scmp.lt.s32.totalorder %s10, 4
      // Predicated region
      $region13: #{transformer_decoder_forward.22} parent=5 // pred_check
        %p202 = pneg %p201
      $region14: #{transformer_decoder_forward.22} parent=5 // pred_check_branch
        %204 = sbr.rel (%p202) target = $region16
      $region15: #{transformer_decoder_forward.22} parent=5 // pred_region
        // Predicated region
        $region17: #{transformer_decoder_forward.22} parent=15 // pred_check
          %p205 = pneg %p58
        $region18: #{transformer_decoder_forward.22} parent=15 // pred_check_branch
          %207 = sbr.rel (%p205) target = $region20
        $region19: #{transformer_decoder_forward.22} parent=15 // pred_region
          %p208 = scmp.lt.s32.totalorder %s17, 1
          %s209 = scalar_select %p208, %s17, 1
          %p210 = scmp.lt.s32.totalorder %s20, 0
          %s211 = scalar_select %p210, %s20, 0
          %s212 = sadd.s32 %s211, %s209
          %s213 = scalar_lea.vmem %s0, %s212
        $region20: #{transformer_decoder_forward.22} parent=15 // pred_fallthru
          _
        // Predicated region
        $region21: #{transformer_decoder_forward.22} parent=15 // pred_check
          %p214 = pneg %p88
        $region22: #{transformer_decoder_forward.22} parent=15 // pred_check_branch
          %216 = sbr.rel (%p214) target = $region24
        $region23: #{transformer_decoder_forward.22} parent=15 // pred_region
          %p217 = scmp.lt.s32.totalorder %s17, 1
          %s218 = scalar_select %p217, %s17, 1
          %p219 = scmp.lt.s32.totalorder %s19, 0
          %s220 = scalar_select %p219, %s19, 0
          %p221 = scmp.lt.s32.totalorder %s18, 1
          %s222 = scalar_select %p221, %s18, 1
          %s223 = smul.addr %s220, 2
          %s224 = sadd.s32 %s222, %s223
          %s225 = smul.addr %s218, 2
          %s226 = sadd.s32 %s224, %s225
          %s227 = smul.addr %s226, 4
          %s228 = scalar_lea.vmem %s1, %s227
        $region24: #{transformer_decoder_forward.22} parent=15 // pred_fallthru
          _
        // Predicated region
        $region25: #{transformer_decoder_forward.22} parent=15 // pred_check
          %p229 = pneg %p118
        $region26: #{transformer_decoder_forward.22} parent=15 // pred_check_branch
          %231 = sbr.rel (%p229) target = $region28
        $region27: #{transformer_decoder_forward.22} parent=15 // pred_region
          %s232 = sand.u32 %s108, 1
          %s233 = sand.u32 %s108, 1
          %s234 = smul.addr %s233, 8
          %s235 = scalar_lea.vmem [#allocation5], %s234
          %s236 = smul.u32 2, %s20
          %s237 = smul.addr %s236, 4
          %s238 = sadd.s32 %s18, %s237
          %s239 = smul.addr %s17, 8
          %s240 = sadd.s32 %s238, %s239
          %s241 = smul.addr %s240, 4
          %s242 = scalar_lea.vmem %s2, %s241
          // Predicated region
          $region29: #{transformer_decoder_forward.22} parent=27 // pred_check
            _
          $region30: #{transformer_decoder_forward.22} parent=27 // pred_check_branch
            %244 = sbr.rel (0) target = $region32
          $region31: #{transformer_decoder_forward.22} parent=27 // pred_region
            // Predicated region
            $region33: #{transformer_decoder_forward.22} parent=31 // pred_check
              _
            $region34: #{transformer_decoder_forward.22} parent=31 // pred_check_branch
              %246 = sbr.rel target = $region36
            $region35: #{transformer_decoder_forward.22} parent=31 // pred_region
              // Predicated region
              $region48: #{transformer_decoder_forward.22} parent=35 // pred_check
                _
              $region49: #{transformer_decoder_forward.22} parent=35 // pred_check_branch
                %264 = sbr.rel (0) target = $region51
              $region50: #{transformer_decoder_forward.22} parent=35 // pred_region
                loop: start=0, step=1, limit=1
                $region52: #{transformer_decoder_forward.22} parent=50 // loop_pre_header
                  _
                $region53: #{transformer_decoder_forward.22} parent=50 // loop_header
                  %s266 = sphi 0, %s270
                  %p267 = scmp.ge.s32.totalorder %s266, 1
                  %s271 = sphi %s242, %s242
                  %s272 = sphi %s235, %s235
                $region54: #{transformer_decoder_forward.22} parent=50 // loop_header_branch
                  %269 = sbr.rel (%p267) target = $region58
                $region55: #{transformer_decoder_forward.22} parent=50 // loop_body
                  _
                $region56: #{transformer_decoder_forward.22} parent=50 // loop_footer
                  %s270 = sadd.s32 1, %s266
                $region57: #{transformer_decoder_forward.22} parent=50 // loop_footer_branch
                  %265 = sbr.rel target = $region53
                $region58: #{transformer_decoder_forward.22} parent=50 // loop_exit
                  _
                %s274 = ssub.s32 16, 1
                loop: start=0, step=1, limit=1
                $region59: #{transformer_decoder_forward.22} parent=50 // loop_pre_header
                  _
                $region60: #{transformer_decoder_forward.22} parent=50 // loop_header
                  %s276 = sphi 0, %s280
                  %p277 = scmp.ge.s32.totalorder %s276, 1
                  %s281 = sphi %s242, %s242
                  %s282 = sphi %s235, %s235
                $region61: #{transformer_decoder_forward.22} parent=50 // loop_header_branch
                  %279 = sbr.rel (%p277) target = $region65
                $region62: #{transformer_decoder_forward.22} parent=50 // loop_body
                  %v283 = vld [vmem:[%s281] sm:%s274]
                  %284 = vst [vmem:[%s282] sm:%s274] %v283
                  %v285 = vld [vmem:[%s281 + $0x10] sm:%s274]
                  %286 = vst [vmem:[%s282 + $0x4] sm:%s274] %v285
                $region63: #{transformer_decoder_forward.22} parent=50 // loop_footer
                  %s280 = sadd.s32 1, %s276
                $region64: #{transformer_decoder_forward.22} parent=50 // loop_footer_branch
                  %275 = sbr.rel target = $region60
                $region65: #{transformer_decoder_forward.22} parent=50 // loop_exit
                  _
              $region51: #{transformer_decoder_forward.22} parent=35 // pred_fallthru
                _
            $region36: #{transformer_decoder_forward.22} parent=31 // pred_fallthru
              _
            // Predicated region
            $region37: #{transformer_decoder_forward.22} parent=31 // pred_check
              _
            $region38: #{transformer_decoder_forward.22} parent=31 // pred_check_branch
              %248 = sbr.rel (0) target = $region40
            $region39: #{transformer_decoder_forward.22} parent=31 // pred_region
              %s250 = ssub.s32 16, 1
              loop: start=0, step=1, limit=1
              $region41: #{transformer_decoder_forward.22} parent=39 // loop_pre_header
                _
              $region42: #{transformer_decoder_forward.22} parent=39 // loop_header
                %s252 = sphi 0, %s256
                %p253 = scmp.ge.s32.totalorder %s252, 1
                %s257 = sphi %s242, %s242
                %s258 = sphi %s235, %s235
              $region43: #{transformer_decoder_forward.22} parent=39 // loop_header_branch
                %255 = sbr.rel (%p253) target = $region47
              $region44: #{transformer_decoder_forward.22} parent=39 // loop_body
                %v259 = vld [vmem:[%s257] sm:%s250]
                %260 = vst [vmem:[%s258] sm:%s250] %v259
                %v261 = vld [vmem:[%s257 + $0x10] sm:%s250]
                %262 = vst [vmem:[%s258 + $0x4] sm:%s250] %v261
              $region45: #{transformer_decoder_forward.22} parent=39 // loop_footer
                %s256 = sadd.s32 1, %s252
              $region46: #{transformer_decoder_forward.22} parent=39 // loop_footer_branch
                %251 = sbr.rel target = $region42
              $region47: #{transformer_decoder_forward.22} parent=39 // loop_exit
                _
            $region40: #{transformer_decoder_forward.22} parent=31 // pred_fallthru
              _
          $region32: #{transformer_decoder_forward.22} parent=27 // pred_fallthru
            _
          %287 = vnop
        $region28: #{transformer_decoder_forward.22} parent=15 // pred_fallthru
          _
        // Predicated region
        $region66: #{transformer_decoder_forward.22} parent=15 // pred_check
          %p288 = pneg %p150
        $region67: #{transformer_decoder_forward.22} parent=15 // pred_check_branch
          %290 = sbr.rel (%p288) target = $region69
        $region68: #{transformer_decoder_forward.22} parent=15 // pred_region
          %s291 = sand.u32 %s140, 1
          %s292 = sand.u32 %s140, 1
          %s293 = smul.addr %s292, 8
          %s294 = scalar_lea.vmem [#allocation6], %s293
          %s295 = sadd.s32 %s18, 2
          %s296 = smul.u32 2, %s20
          %s297 = smul.addr %s296, 4
          %s298 = sadd.s32 %s295, %s297
          %s299 = smul.addr %s17, 8
          %s300 = sadd.s32 %s298, %s299
          %s301 = smul.addr %s300, 4
          %s302 = scalar_lea.vmem %s3, %s301
          // Predicated region
          $region70: #{transformer_decoder_forward.22} parent=68 // pred_check
            _
          $region71: #{transformer_decoder_forward.22} parent=68 // pred_check_branch
            %304 = sbr.rel (0) target = $region73
          $region72: #{transformer_decoder_forward.22} parent=68 // pred_region
            // Predicated region
            $region74: #{transformer_decoder_forward.22} parent=72 // pred_check
              _
            $region75: #{transformer_decoder_forward.22} parent=72 // pred_check_branch
              %306 = sbr.rel target = $region77
            $region76: #{transformer_decoder_forward.22} parent=72 // pred_region
              // Predicated region
              $region89: #{transformer_decoder_forward.22} parent=76 // pred_check
                _
              $region90: #{transformer_decoder_forward.22} parent=76 // pred_check_branch
                %324 = sbr.rel (0) target = $region92
              $region91: #{transformer_decoder_forward.22} parent=76 // pred_region
                loop: start=0, step=1, limit=1
                $region93: #{transformer_decoder_forward.22} parent=91 // loop_pre_header
                  _
                $region94: #{transformer_decoder_forward.22} parent=91 // loop_header
                  %s326 = sphi 0, %s330
                  %p327 = scmp.ge.s32.totalorder %s326, 1
                  %s331 = sphi %s302, %s302
                  %s332 = sphi %s294, %s294
                $region95: #{transformer_decoder_forward.22} parent=91 // loop_header_branch
                  %329 = sbr.rel (%p327) target = $region99
                $region96: #{transformer_decoder_forward.22} parent=91 // loop_body
                  _
                $region97: #{transformer_decoder_forward.22} parent=91 // loop_footer
                  %s330 = sadd.s32 1, %s326
                $region98: #{transformer_decoder_forward.22} parent=91 // loop_footer_branch
                  %325 = sbr.rel target = $region94
                $region99: #{transformer_decoder_forward.22} parent=91 // loop_exit
                  _
                %s334 = ssub.s32 16, 1
                loop: start=0, step=1, limit=1
                $region100: #{transformer_decoder_forward.22} parent=91 // loop_pre_header
                  _
                $region101: #{transformer_decoder_forward.22} parent=91 // loop_header
                  %s336 = sphi 0, %s340
                  %p337 = scmp.ge.s32.totalorder %s336, 1
                  %s341 = sphi %s302, %s302
                  %s342 = sphi %s294, %s294
                $region102: #{transformer_decoder_forward.22} parent=91 // loop_header_branch
                  %339 = sbr.rel (%p337) target = $region106
                $region103: #{transformer_decoder_forward.22} parent=91 // loop_body
                  %v343 = vld [vmem:[%s341] sm:%s334]
                  %344 = vst [vmem:[%s342] sm:%s334] %v343
                  %v345 = vld [vmem:[%s341 + $0x10] sm:%s334]
                  %346 = vst [vmem:[%s342 + $0x4] sm:%s334] %v345
                $region104: #{transformer_decoder_forward.22} parent=91 // loop_footer
                  %s340 = sadd.s32 1, %s336
                $region105: #{transformer_decoder_forward.22} parent=91 // loop_footer_branch
                  %335 = sbr.rel target = $region101
                $region106: #{transformer_decoder_forward.22} parent=91 // loop_exit
                  _
              $region92: #{transformer_decoder_forward.22} parent=76 // pred_fallthru
                _
            $region77: #{transformer_decoder_forward.22} parent=72 // pred_fallthru
              _
            // Predicated region
            $region78: #{transformer_decoder_forward.22} parent=72 // pred_check
              _
            $region79: #{transformer_decoder_forward.22} parent=72 // pred_check_branch
              %308 = sbr.rel (0) target = $region81
            $region80: #{transformer_decoder_forward.22} parent=72 // pred_region
              %s310 = ssub.s32 16, 1
              loop: start=0, step=1, limit=1
              $region82: #{transformer_decoder_forward.22} parent=80 // loop_pre_header
                _
              $region83: #{transformer_decoder_forward.22} parent=80 // loop_header
                %s312 = sphi 0, %s316
                %p313 = scmp.ge.s32.totalorder %s312, 1
                %s317 = sphi %s302, %s302
                %s318 = sphi %s294, %s294
              $region84: #{transformer_decoder_forward.22} parent=80 // loop_header_branch
                %315 = sbr.rel (%p313) target = $region88
              $region85: #{transformer_decoder_forward.22} parent=80 // loop_body
                %v319 = vld [vmem:[%s317] sm:%s310]
                %320 = vst [vmem:[%s318] sm:%s310] %v319
                %v321 = vld [vmem:[%s317 + $0x10] sm:%s310]
                %322 = vst [vmem:[%s318 + $0x4] sm:%s310] %v321
              $region86: #{transformer_decoder_forward.22} parent=80 // loop_footer
                %s316 = sadd.s32 1, %s312
              $region87: #{transformer_decoder_forward.22} parent=80 // loop_footer_branch
                %311 = sbr.rel target = $region83
              $region88: #{transformer_decoder_forward.22} parent=80 // loop_exit
                _
            $region81: #{transformer_decoder_forward.22} parent=72 // pred_fallthru
              _
          $region73: #{transformer_decoder_forward.22} parent=68 // pred_fallthru
            _
          %347 = vnop
        $region69: #{transformer_decoder_forward.22} parent=15 // pred_fallthru
          _
      $region16: #{transformer_decoder_forward.22} parent=5 // pred_fallthru
        _
      %p348 = scmp.le.s32.totalorder 1, %s10
      %p349 = scmp.lt.s32.totalorder %s10, 5
      %p350 = pnand %p348, %p349
      %p351 = pneg %p350
      // Predicated region
      $region107: #{transformer_decoder_forward.22} parent=5 // pred_check
        _
      $region108: #{transformer_decoder_forward.22} parent=5 // pred_check_branch
        %353 = sbr.rel (%p350) target = $region110
      $region109: #{transformer_decoder_forward.22} parent=5 // pred_region
        %s354 = ssub.s32 %s10, 1
        %s355 = sand.u32 %s111, 1
        %s356 = sand.u32 %s111, 1
        %s357 = smul.addr %s356, 8
        %s358 = scalar_lea.vmem [#allocation5], %s357
        // Predicated region
        $region111: #{transformer_decoder_forward.22} parent=109 // pred_check
          %p359 = pneg %p124
        $region112: #{transformer_decoder_forward.22} parent=109 // pred_check_branch
          %361 = sbr.rel (%p359) target = $region114
        $region113: #{transformer_decoder_forward.22} parent=109 // pred_region
          _
        $region114: #{transformer_decoder_forward.22} parent=109 // pred_fallthru
          _
        %s362 = sand.u32 %s143, 1
        %s363 = sand.u32 %s143, 1
        %s364 = smul.addr %s363, 8
        %s365 = scalar_lea.vmem [#allocation6], %s364
        // Predicated region
        $region115: #{transformer_decoder_forward.22} parent=109 // pred_check
          %p366 = pneg %p156
        $region116: #{transformer_decoder_forward.22} parent=109 // pred_check_branch
          %368 = sbr.rel (%p366) target = $region118
        $region117: #{transformer_decoder_forward.22} parent=109 // pred_region
          _
        $region118: #{transformer_decoder_forward.22} parent=109 // pred_fallthru
          _
        %p369 = scmp.lt.s32.totalorder %s21, 1
        %s370 = scalar_select %p369, %s21, 1
        %p371 = scmp.lt.s32.totalorder %s24, 0
        %s372 = scalar_select %p371, %s24, 0
        %s373 = sadd.s32 %s372, %s370
        %s374 = scalar_lea.vmem %s0, %s373
        %p375 = pneg %p64
        %p376 = pneg %p61
        %p377 = scmp.lt.s32.totalorder %s21, 1
        %s378 = scalar_select %p377, %s21, 1
        %p379 = scmp.lt.s32.totalorder %s23, 0
        %s380 = scalar_select %p379, %s23, 0
        %p381 = scmp.lt.s32.totalorder %s22, 1
        %s382 = scalar_select %p381, %s22, 1
        %s383 = smul.addr %s380, 2
        %s384 = sadd.s32 %s382, %s383
        %s385 = smul.addr %s378, 2
        %s386 = sadd.s32 %s384, %s385
        %s387 = smul.addr %s386, 4
        %s388 = scalar_lea.vmem %s1, %s387
        %p389 = pneg %p94
        %p390 = pneg %p91
        %s391 = sand.u32 %s111, 1
        %s392 = sand.u32 %s111, 1
        %s393 = smul.addr %s392, 8
        %s394 = scalar_lea.vmem [#allocation5], %s393
        %p395 = pneg %p124
        %p396 = pneg %p121
        %s397 = sand.u32 %s143, 1
        %s398 = sand.u32 %s143, 1
        %s399 = smul.addr %s398, 8
        %s400 = scalar_lea.vmem [#allocation6], %s399
        %p401 = pneg %p156
        %p402 = pneg %p153
        %p403 = pneg %p186
        %p404 = pneg %p183
        %p405 = scmp.lt.s32.totalorder %s21, 1
        %s406 = scalar_select %p405, %s21, 1
        %p407 = scmp.lt.s32.totalorder %s23, 0
        %s408 = scalar_select %p407, %s23, 0
        %p409 = scmp.lt.s32.totalorder %s22, 1
        %s410 = scalar_select %p409, %s22, 1
        %s411 = smul.addr %s408, 2
        %s412 = sadd.s32 %s410, %s411
        %s413 = smul.addr %s406, 2
        %s414 = sadd.s32 %s412, %s413
        %s415 = smul.addr %s414, 4
        %s416 = scalar_lea.vmem %s4, %s415
        %p417 = scmp.lt.s32.totalorder %s21, 1
        %s418 = scalar_select %p417, %s21, 1
        %p419 = scmp.lt.s32.totalorder %s24, 0
        %s420 = scalar_select %p419, %s24, 0
        %s421 = sadd.s32 %s420, %s418
        %s422 = scalar_lea.vmem %s0, %s421
        %p423 = scmp.lt.s32.totalorder %s21, 1
        %s424 = scalar_select %p423, %s21, 1
        %p425 = scmp.lt.s32.totalorder %s23, 0
        %s426 = scalar_select %p425, %s23, 0
        %p427 = scmp.lt.s32.totalorder %s22, 1
        %s428 = scalar_select %p427, %s22, 1
        %s429 = smul.addr %s426, 2
        %s430 = sadd.s32 %s428, %s429
        %s431 = smul.addr %s424, 2
        %s432 = sadd.s32 %s430, %s431
        %s433 = smul.addr %s432, 4
        %s434 = scalar_lea.vmem %s1, %s433
        %s435 = smul.u32 2, %s24
        %s436 = sadd.s32 %s22, 2
        %s437 = smul.u32 2, %s24
        %p438 = scmp.lt.s32.totalorder %s21, 1
        %s439 = scalar_select %p438, %s21, 1
        %p440 = scmp.lt.s32.totalorder %s23, 0
        %s441 = scalar_select %p440, %s23, 0
        %p442 = scmp.lt.s32.totalorder %s22, 1
        %s443 = scalar_select %p442, %s22, 1
        %s444 = smul.addr %s441, 2
        %s445 = sadd.s32 %s443, %s444
        %s446 = smul.addr %s439, 2
        %s447 = sadd.s32 %s445, %s446
        %s448 = smul.addr %s447, 4
        %s449 = scalar_lea.vmem %s4, %s448
        %p451 = scmp.eq.s32.totalorder %s24, 0
        // Predicated region
        $region119: #{transformer_decoder_forward.22} parent=109 // pred_check
          %p452 = pneg %p451
        $region120: #{transformer_decoder_forward.22} parent=109 // pred_check_branch
          %454 = sbr.rel (%p452) target = $region122
        $region121: #{transformer_decoder_forward.22} parent=109 // pred_region
          %vm455 = vcmask 7168
          %456 = vst.msk [vmem:[#allocation2] sm:$0xff] %vm455, -1e+30
          %457 = vst.msk [vmem:[#allocation3] sm:$0xff] %vm455, 0.0
          %458 = vst [vmem:[#allocation4] sm:$0xff] 0.0
        $region122: #{transformer_decoder_forward.22} parent=109 // pred_fallthru
          _
        %v459 = vld [vmem:[%s422] sm:$0x1]
        %vm460 = vcmp.gt.s32.totalorder %v459, 0
        %v461 = vsel %vm460, 1, 0
        %v462 = vlaneseq
        %v463 = vshrl.u32 %v462, 7
        %v464 = vsub.s32 0, %v463
        %v465 = vrot.slane %v461, %v464
        %vm466 = vcmp.eq.s32.totalorder %v465, 1
        %v467 = vld [vmem:[%s434] sm:$0xf]
        %v468 = vld [vmem:[%s358] sm:$0xf]
        %v469 = vld [vmem:[%s358 + $0x4] sm:$0xf]
        %v470 = vld [vmem:[%s365] sm:$0xf]
        %v471 = vld [vmem:[%s365 + $0x4] sm:$0xf]
        %v474 = vunpack.c.l.b16 %v468
        %v475 = vunpack.c.l.b16 %v469
        %v476 = vpack.c.b16 %v475, %v474
        %478 = vmatprep.subr.bf16.mxu0 0
        %479 = vmatpush1.bf16.xpose.msra.mxu0 0
        %480 = vmatprep.subr.bf16.mxu0 0
        %481 = vmatpush1.bf16.xpose.msra.mxu0 0
        %482 = vmatprep.subr.bf16.mxu0 0
        %483 = vmatpush1.bf16.xpose.msra.mxu0 0
        %484 = vmatprep.subr.bf16.mxu0 0
        %485 = vmatpush1.bf16.xpose.msra.mxu0 0
        %486 = vmatprep.subr.bf16.mxu0 0
        %487 = vmatpush1.bf16.xpose.msra.mxu0 0
        %488 = vmatprep.subr.bf16.mxu0 0
        %489 = vmatpush1.bf16.xpose.msra.mxu0 0
        %490 = vmatprep.subr.bf16.mxu0 0
        %491 = vmatpush1.bf16.xpose.msra.mxu0 0
        %492 = vmatprep.subr.bf16.mxu0 0
        %493 = vmatpush1.bf16.xpose.msra.mxu0 %v476
        %494 = vmatprep.subr.bf16.mxu0 0
        %495 = vmatpush2.bf16.xpose.msra.mxu0 0
        %496 = vmatprep.subr.bf16.mxu0 0
        %497 = vmatpush2.bf16.xpose.msra.mxu0 0
        %498 = vmatprep.subr.bf16.mxu0 0
        %499 = vmatpush2.bf16.xpose.msra.mxu0 0
        %500 = vmatprep.subr.bf16.mxu0 0
        %501 = vmatpush2.bf16.xpose.msra.mxu0 0
        %502 = vmatprep.subr.bf16.mxu0 0
        %503 = vmatpush2.bf16.xpose.msra.mxu0 0
        %504 = vmatprep.subr.bf16.mxu0 0
        %505 = vmatpush2.bf16.xpose.msra.mxu0 0
        %506 = vmatprep.subr.bf16.mxu0 0
        %507 = vmatpush2.bf16.xpose.msra.mxu0 0
        %508 = vmatprep.subr.bf16.mxu0 0
        %509 = vmatpush2.bf16.xpose.msra.mxu0 0
        %510 = vmatprep.mubr.bf16.mxu0 0
        %511 = vmatmul.mubr.bf16.gmra.mxu0 %v467
        %v512 = vpop.f32.mrf.mxu0
        %v513 = vadd.f32 0.0, %v512
        %v514 = vpop.f32.mrf.mxu0
        %v515 = vpop.f32.mrf.mxu0
        %v516 = vpop.f32.mrf.mxu0
        %517 = vdwg.mxu0
        %v518 = vsel %vm466, %v513, -1e+30
        %v519 = vld [vmem:[#allocation2] sm:$0xff]
        %vm520 = vcmask 130048
        %v521 = vsel %vm520, %v518, -inf
        %522 = vmax.xlane.f32.xlu0 %v521
        %v523 = vpop.xlane.xlu0 %522
        %v524 = vmax.f32 %v519, %v523
        %v525 = vsub.f32 %v519, %v524
        %v526 = vmul.f32 %v525, 1.442695
        %v527 = vpow.pop %v526
        %529 = vset.pattern.permute.xlu0 0
        %530 = vperm.xlu0 %529, %v524
        %v531 = vpop.permute.xlu0 %530
        %v533 = vsub.f32 %v518, %v531
        %v534 = vmul.f32 %v533, 1.442695
        %v535 = vpow.pop %v534
        %v536 = vld [vmem:[#allocation3] sm:$0xff]
        %v537 = vmul.f32 %v527, %v536
        %v538 = vsel %vm520, %v535, 0.0
        %539 = vadd.xlane.f32.xlu0 %v538
        %v540 = vpop.xlane.xlu0 %539
        %v541 = vadd.f32 %v537, %v540
        %vm542 = vcmask 7168
        %543 = vst.msk [vmem:[#allocation3] sm:$0xff] %vm542, %v541
        %v544 = vld [vmem:[#allocation4] sm:$0xff]
        %546 = vset.pattern.permute.xlu0 0
        %547 = vperm.xlu0 %546, %v527
        %v548 = vpop.permute.xlu0 %547
        %v550 = vmul.f32 %v548, %v544
        %v551 = vpack.c.bf16 %v535, %v535
        %v554 = vunpack.c.l.b16 %v470
        %v555 = vunpack.c.l.b16 %v471
        %v556 = vpack.c.b16 %v555, %v554
        %v559 = vsel %vm520, %v551, 0
        %561 = vmatprep.subr.bf16.mxu0 0
        %562 = vmatpush1.bf16.msra.mxu0 0
        %563 = vmatprep.subr.bf16.mxu0 0
        %564 = vmatpush1.bf16.msra.mxu0 0
        %565 = vmatprep.subr.bf16.mxu0 0
        %566 = vmatpush1.bf16.msra.mxu0 0
        %567 = vmatprep.subr.bf16.mxu0 0
        %568 = vmatpush1.bf16.msra.mxu0 0
        %569 = vmatprep.subr.bf16.mxu0 0
        %570 = vmatpush1.bf16.msra.mxu0 0
        %571 = vmatprep.subr.bf16.mxu0 0
        %572 = vmatpush1.bf16.msra.mxu0 0
        %573 = vmatprep.subr.bf16.mxu0 0
        %574 = vmatpush1.bf16.msra.mxu0 0
        %575 = vmatprep.subr.bf16.mxu0 0
        %576 = vmatpush1.bf16.msra.mxu0 %v556
        %577 = vmatprep.subr.bf16.mxu0 0
        %578 = vmatpush2.bf16.msra.mxu0 0
        %579 = vmatprep.subr.bf16.mxu0 0
        %580 = vmatpush2.bf16.msra.mxu0 0
        %581 = vmatprep.subr.bf16.mxu0 0
        %582 = vmatpush2.bf16.msra.mxu0 0
        %583 = vmatprep.subr.bf16.mxu0 0
        %584 = vmatpush2.bf16.msra.mxu0 0
        %585 = vmatprep.subr.bf16.mxu0 0
        %586 = vmatpush2.bf16.msra.mxu0 0
        %587 = vmatprep.subr.bf16.mxu0 0
        %588 = vmatpush2.bf16.msra.mxu0 0
        %589 = vmatprep.subr.bf16.mxu0 0
        %590 = vmatpush2.bf16.msra.mxu0 0
        %591 = vmatprep.subr.bf16.mxu0 0
        %592 = vmatpush2.bf16.msra.mxu0 0
        %593 = vmatprep.mubr.bf16.mxu0 0
        %594 = vmatmul.mubr.bf16.gmra.mxu0 %v559
        %v595 = vpop.f32.mrf.mxu0
        %v596 = vadd.f32 0.0, %v595
        %v597 = vpop.f32.mrf.mxu0
        %v598 = vpop.f32.mrf.mxu0
        %v599 = vpop.f32.mrf.mxu0
        %600 = vdwg.mxu0
        %v601 = vadd.f32 %v550, %v596
        %602 = vst [vmem:[#allocation4] sm:$0xff] %v601
        %603 = vst.msk [vmem:[#allocation2] sm:$0xff] %vm542, %v524
        // Predicated region
        $region123: #{transformer_decoder_forward.22} parent=109 // pred_check
          %p604 = pneg %p451
        $region124: #{transformer_decoder_forward.22} parent=109 // pred_check_branch
          %606 = sbr.rel (%p604) target = $region126
        $region125: #{transformer_decoder_forward.22} parent=109 // pred_region
          %v607 = vld [vmem:[#allocation3] sm:$0xff]
          %v608 = vrcp.pop %v607
          %v609 = vld [vmem:[#allocation4] sm:$0xff]
          %611 = vset.pattern.permute.xlu0 0
          %612 = vperm.xlu0 %611, %v608
          %v613 = vpop.permute.xlu0 %612
          %v615 = vmul.f32 %v609, %v613
          %v616 = vpack.c.bf16 %v615, %v615
          %617 = vst [vmem:[%s449] sm:$0xf] %v616
        $region126: #{transformer_decoder_forward.22} parent=109 // pred_fallthru
          _
        %p618 = scmp.lt.s32.totalorder %s21, 1
        %s619 = scalar_select %p618, %s21, 1
        %p620 = scmp.lt.s32.totalorder %s23, 0
        %s621 = scalar_select %p620, %s23, 0
        %p622 = scmp.lt.s32.totalorder %s22, 1
        %s623 = scalar_select %p622, %s22, 1
        %s624 = smul.addr %s621, 2
        %s625 = sadd.s32 %s623, %s624
        %s626 = smul.addr %s619, 2
        %s627 = sadd.s32 %s625, %s626
        %s628 = smul.addr %s627, 4
        %s629 = scalar_lea.vmem %s4, %s628
        // Predicated region
        $region127: #{transformer_decoder_forward.22} parent=109 // pred_check
          %p630 = pneg %p183
        $region128: #{transformer_decoder_forward.22} parent=109 // pred_check_branch
          %632 = sbr.rel (%p630) target = $region130
        $region129: #{transformer_decoder_forward.22} parent=109 // pred_region
          _
        $region130: #{transformer_decoder_forward.22} parent=109 // pred_fallthru
          _
      $region110: #{transformer_decoder_forward.22} parent=5 // pred_fallthru
        _
      %p633 = scmp.le.s32.totalorder 2, %s10
      // Predicated region
      $region131: #{transformer_decoder_forward.22} parent=5 // pred_check
        %p634 = pneg %p633
      $region132: #{transformer_decoder_forward.22} parent=5 // pred_check_branch
        %636 = sbr.rel (%p634) target = $region134
      $region133: #{transformer_decoder_forward.22} parent=5 // pred_region
        %s637 = ssub.s32 %s10, 2
        // Predicated region
        $region135: #{transformer_decoder_forward.22} parent=133 // pred_check
          %p638 = pneg %p189
        $region136: #{transformer_decoder_forward.22} parent=133 // pred_check_branch
          %640 = sbr.rel (%p638) target = $region138
        $region137: #{transformer_decoder_forward.22} parent=133 // pred_region
          %p641 = scmp.lt.s32.totalorder %s25, 1
          %s642 = scalar_select %p641, %s25, 1
          %p643 = scmp.lt.s32.totalorder %s27, 0
          %s644 = scalar_select %p643, %s27, 0
          %p645 = scmp.lt.s32.totalorder %s26, 1
          %s646 = scalar_select %p645, %s26, 1
          %s647 = smul.addr %s644, 2
          %s648 = sadd.s32 %s646, %s647
          %s649 = smul.addr %s642, 2
          %s650 = sadd.s32 %s648, %s649
          %s651 = smul.addr %s650, 4
          %s652 = scalar_lea.vmem %s4, %s651
        $region138: #{transformer_decoder_forward.22} parent=133 // pred_fallthru
          _
      $region134: #{transformer_decoder_forward.22} parent=5 // pred_fallthru
        _
    $region6: #{transformer_decoder_forward.22} parent=1 // loop_footer
      %s14 = sadd.s32 1, %s10
    $region7: #{transformer_decoder_forward.22} parent=1 // loop_footer_branch
      %9 = sbr.rel target = $region3
    $region8: #{transformer_decoder_forward.22} parent=1 // loop_exit
      _

// kernel: transformer_decoder_forward.23
$region0: #{transformer_decoder_forward.23}
  #allocation0 [shape = 'u32[]', space=smem, size = 0x4, offset = 0x4, fixed_abs, tag = 'smem constant byte address 0x4 - core index']
  #allocation1 [shape = 'u32[144,128]{1,0:T(1,128)}', space=vmem, size = 0x12000, scoped, tag = 'internal scratch']
  %s0 = inlined_call_operand.vmem [shape: bf16[16,256], index: 0, kind: input, shape index: {}]
  %s1 = inlined_call_operand.vmem [shape: bf16[256,256], index: 1, kind: input, shape index: {}]
  %s2 = inlined_call_operand.vmem [shape: f32[1,256], index: 2, kind: input, shape index: {}]
  %s3 = inlined_call_operand.vmem [shape: bf16[16,256], index: 3, kind: input, shape index: {}]
  %s4 = inlined_call_operand.vmem [shape: bf16[16,256], index: 4, kind: output, shape index: {}]
  %s5 = sld [smem:[#allocation0]]
  $region26: #{transformer_decoder_forward.23} parent=0
    _
  %s7 = ssub.s32 1, %s5
  %s8 = scalar_select 0, %s7, %s5
  // Predicated region
  $region2: #{transformer_decoder_forward.23} parent=0 // pred_check
    _
  $region3: #{transformer_decoder_forward.23} parent=0 // pred_check_branch
    %10 = sbr.rel (0) target = $region5
  $region4: #{transformer_decoder_forward.23} parent=0 // pred_region
    _
  $region5: #{transformer_decoder_forward.23} parent=0 // pred_fallthru
    _
  // Predicated region
  $region6: #{transformer_decoder_forward.23} parent=0 // pred_check
    _
  $region7: #{transformer_decoder_forward.23} parent=0 // pred_check_branch
    %12 = sbr.rel (0) target = $region9
  $region8: #{transformer_decoder_forward.23} parent=0 // pred_region
    _
  $region9: #{transformer_decoder_forward.23} parent=0 // pred_fallthru
    _
  // Predicated region
  $region10: #{transformer_decoder_forward.23} parent=0 // pred_check
    _
  $region11: #{transformer_decoder_forward.23} parent=0 // pred_check_branch
    %14 = sbr.rel (0) target = $region13
  $region12: #{transformer_decoder_forward.23} parent=0 // pred_region
    _
  $region13: #{transformer_decoder_forward.23} parent=0 // pred_fallthru
    _
  // Predicated region
  $region14: #{transformer_decoder_forward.23} parent=0 // pred_check
    _
  $region15: #{transformer_decoder_forward.23} parent=0 // pred_check_branch
    %16 = sbr.rel (0) target = $region17
  $region16: #{transformer_decoder_forward.23} parent=0 // pred_region
    _
  $region17: #{transformer_decoder_forward.23} parent=0 // pred_fallthru
    _
  %v17 = vld [vmem:[%s0] sm:$0xff]
  %v18 = vld [vmem:[%s0 + $0x8] sm:$0xff]
  %v19 = vld [vmem:[%s1] sm:$0xff]
  %v20 = vld [vmem:[%s1 + $0x8] sm:$0xff]
  %v21 = vld [vmem:[%s1 + $0x10] sm:$0xff]
  %v22 = vld [vmem:[%s1 + $0x18] sm:$0xff]
  %v23 = vld [vmem:[%s1 + $0x20] sm:$0xff]
  %v24 = vld [vmem:[%s1 + $0x28] sm:$0xff]
  %v25 = vld [vmem:[%s1 + $0x30] sm:$0xff]
  %v26 = vld [vmem:[%s1 + $0x38] sm:$0xff]
  %v27 = vld [vmem:[%s1 + $0x40] sm:$0xff]
  %v28 = vld [vmem:[%s1 + $0x48] sm:$0xff]
  %v29 = vld [vmem:[%s1 + $0x50] sm:$0xff]
  %v30 = vld [vmem:[%s1 + $0x58] sm:$0xff]
  %v31 = vld [vmem:[%s1 + $0x60] sm:$0xff]
  %v32 = vld [vmem:[%s1 + $0x68] sm:$0xff]
  %v33 = vld [vmem:[%s1 + $0x70] sm:$0xff]
  %v34 = vld [vmem:[%s1 + $0x78] sm:$0xff]
  %v35 = vld [vmem:[%s1 + $0x80] sm:$0xff]
  %v36 = vld [vmem:[%s1 + $0x88] sm:$0xff]
  %v37 = vld [vmem:[%s1 + $0x90] sm:$0xff]
  %v38 = vld [vmem:[%s1 + $0x98] sm:$0xff]
  %v39 = vld [vmem:[%s1 + $0xa0] sm:$0xff]
  %v40 = vld [vmem:[%s1 + $0xa8] sm:$0xff]
  %v41 = vld [vmem:[%s1 + $0xb0] sm:$0xff]
  %v42 = vld [vmem:[%s1 + $0xb8] sm:$0xff]
  %v43 = vld [vmem:[%s1 + $0xc0] sm:$0xff]
  %v44 = vld [vmem:[%s1 + $0xc8] sm:$0xff]
  %v45 = vld [vmem:[%s1 + $0xd0] sm:$0xff]
  %v46 = vld [vmem:[%s1 + $0xd8] sm:$0xff]
  %v47 = vld [vmem:[%s1 + $0xe0] sm:$0xff]
  %v48 = vld [vmem:[%s1 + $0xe8] sm:$0xff]
  %v49 = vld [vmem:[%s1 + $0xf0] sm:$0xff]
  %v50 = vld [vmem:[%s1 + $0xf8] sm:$0xff]
  %v51 = vld [vmem:[%s2] sm:$0x3]
  %v53 = vlaneseq
  %v54 = vshrl.u32 %v53, 7
  %v55 = vsub.s32 0, %v54
  %v56 = vrot.slane %v51, %v55
  %v57 = vlaneseq
  %v58 = vshrl.u32 %v57, 7
  %v59 = vsub.s32 1, %v58
  %v60 = vrot.slane %v51, %v59
  %v65 = vunpack.c.l.b16 %v17
  %v66 = vunpack.c.h.b16 %v17
  %v67 = vunpack.c.l.b16 %v18
  %v68 = vunpack.c.h.b16 %v18
  %v69 = vpack.c.b16 %v67, %v65
  %v70 = vpack.c.b16 %v68, %v66
  %v105 = vunpack.c.l.b16 %v19
  %v106 = vunpack.c.h.b16 %v19
  %v107 = vunpack.c.l.b16 %v20
  %v108 = vunpack.c.h.b16 %v20
  %v109 = vunpack.c.l.b16 %v21
  %v110 = vunpack.c.h.b16 %v21
  %v111 = vunpack.c.l.b16 %v22
  %v112 = vunpack.c.h.b16 %v22
  %v113 = vunpack.c.l.b16 %v23
  %v114 = vunpack.c.h.b16 %v23
  %v115 = vunpack.c.l.b16 %v24
  %v116 = vunpack.c.h.b16 %v24
  %v117 = vunpack.c.l.b16 %v25
  %v118 = vunpack.c.h.b16 %v25
  %v119 = vunpack.c.l.b16 %v26
  %v120 = vunpack.c.h.b16 %v26
  %v121 = vunpack.c.l.b16 %v27
  %v122 = vunpack.c.h.b16 %v27
  %v123 = vunpack.c.l.b16 %v28
  %v124 = vunpack.c.h.b16 %v28
  %v125 = vunpack.c.l.b16 %v29
  %v126 = vunpack.c.h.b16 %v29
  %v127 = vunpack.c.l.b16 %v30
  %v128 = vunpack.c.h.b16 %v30
  %v129 = vunpack.c.l.b16 %v31
  %v130 = vunpack.c.h.b16 %v31
  %v131 = vunpack.c.l.b16 %v32
  %v132 = vunpack.c.h.b16 %v32
  %v133 = vunpack.c.l.b16 %v33
  %v134 = vunpack.c.h.b16 %v33
  %v135 = vunpack.c.l.b16 %v34
  %v136 = vunpack.c.h.b16 %v34
  %v137 = vunpack.c.l.b16 %v35
  %v138 = vunpack.c.h.b16 %v35
  %v139 = vunpack.c.l.b16 %v36
  %v140 = vunpack.c.h.b16 %v36
  %v141 = vunpack.c.l.b16 %v37
  %v142 = vunpack.c.h.b16 %v37
  %v143 = vunpack.c.l.b16 %v38
  %v144 = vunpack.c.h.b16 %v38
  %v145 = vunpack.c.l.b16 %v39
  %v146 = vunpack.c.h.b16 %v39
  %v147 = vunpack.c.l.b16 %v40
  %v148 = vunpack.c.h.b16 %v40
  %v149 = vunpack.c.l.b16 %v41
  %v150 = vunpack.c.h.b16 %v41
  %v151 = vunpack.c.l.b16 %v42
  %v152 = vunpack.c.h.b16 %v42
  %v153 = vunpack.c.l.b16 %v43
  %v154 = vunpack.c.h.b16 %v43
  %v155 = vunpack.c.l.b16 %v44
  %v156 = vunpack.c.h.b16 %v44
  %v157 = vunpack.c.l.b16 %v45
  %v158 = vunpack.c.h.b16 %v45
  %v159 = vunpack.c.l.b16 %v46
  %v160 = vunpack.c.h.b16 %v46
  %v161 = vunpack.c.l.b16 %v47
  %v162 = vunpack.c.h.b16 %v47
  %v163 = vunpack.c.l.b16 %v48
  %v164 = vunpack.c.h.b16 %v48
  %v165 = vunpack.c.l.b16 %v49
  %v166 = vunpack.c.h.b16 %v49
  %v167 = vunpack.c.l.b16 %v50
  %v168 = vunpack.c.h.b16 %v50
  %v169 = vpack.c.b16 %v107, %v105
  %v170 = vpack.c.b16 %v108, %v106
  %v171 = vpack.c.b16 %v111, %v109
  %v172 = vpack.c.b16 %v112, %v110
  %v173 = vpack.c.b16 %v115, %v113
  %v174 = vpack.c.b16 %v116, %v114
  %v175 = vpack.c.b16 %v119, %v117
  %v176 = vpack.c.b16 %v120, %v118
  %v177 = vpack.c.b16 %v123, %v121
  %v178 = vpack.c.b16 %v124, %v122
  %v179 = vpack.c.b16 %v127, %v125
  %v180 = vpack.c.b16 %v128, %v126
  %v181 = vpack.c.b16 %v131, %v129
  %v182 = vpack.c.b16 %v132, %v130
  %v183 = vpack.c.b16 %v135, %v133
  %v184 = vpack.c.b16 %v136, %v134
  %v185 = vpack.c.b16 %v139, %v137
  %v186 = vpack.c.b16 %v140, %v138
  %v187 = vpack.c.b16 %v143, %v141
  %v188 = vpack.c.b16 %v144, %v142
  %v189 = vpack.c.b16 %v147, %v145
  %v190 = vpack.c.b16 %v148, %v146
  %v191 = vpack.c.b16 %v151, %v149
  %v192 = vpack.c.b16 %v152, %v150
  %v193 = vpack.c.b16 %v155, %v153
  %v194 = vpack.c.b16 %v156, %v154
  %v195 = vpack.c.b16 %v159, %v157
  %v196 = vpack.c.b16 %v160, %v158
  %v197 = vpack.c.b16 %v163, %v161
  %v198 = vpack.c.b16 %v164, %v162
  %v199 = vpack.c.b16 %v167, %v165
  %v200 = vpack.c.b16 %v168, %v166
  %233 = vmatprep.subr.bf16.mxu0 %v184
  %234 = vmatpush1.bf16.msra.mxu0 %v183
  %235 = vmatprep.subr.bf16.mxu0 %v182
  %236 = vmatpush1.bf16.msra.mxu0 %v181
  %237 = vmatprep.subr.bf16.mxu0 %v180
  %238 = vmatpush1.bf16.msra.mxu0 %v179
  %239 = vmatprep.subr.bf16.mxu0 %v178
  %240 = vmatpush1.bf16.msra.mxu0 %v177
  %241 = vmatprep.subr.bf16.mxu0 %v176
  %242 = vmatpush1.bf16.msra.mxu0 %v175
  %243 = vmatprep.subr.bf16.mxu0 %v174
  %244 = vmatpush1.bf16.msra.mxu0 %v173
  %245 = vmatprep.subr.bf16.mxu0 %v172
  %246 = vmatpush1.bf16.msra.mxu0 %v171
  %247 = vmatprep.subr.bf16.mxu0 %v170
  %248 = vmatpush1.bf16.msra.mxu0 %v169
  %249 = vmatprep.subr.bf16.mxu0 %v200
  %250 = vmatpush2.bf16.msra.mxu0 %v199
  %251 = vmatprep.subr.bf16.mxu0 %v198
  %252 = vmatpush2.bf16.msra.mxu0 %v197
  %253 = vmatprep.subr.bf16.mxu0 %v196
  %254 = vmatpush2.bf16.msra.mxu0 %v195
  %255 = vmatprep.subr.bf16.mxu0 %v194
  %256 = vmatpush2.bf16.msra.mxu0 %v193
  %257 = vmatprep.subr.bf16.mxu0 %v192
  %258 = vmatpush2.bf16.msra.mxu0 %v191
  %259 = vmatprep.subr.bf16.mxu0 %v190
  %260 = vmatpush2.bf16.msra.mxu0 %v189
  %261 = vmatprep.subr.bf16.mxu0 %v188
  %262 = vmatpush2.bf16.msra.mxu0 %v187
  %263 = vmatprep.subr.bf16.mxu0 %v186
  %264 = vmatpush2.bf16.msra.mxu0 %v185
  %265 = vmatprep.mubr.bf16.mxu0 %v70
  %266 = vmatmul.mubr.bf16.gmra.mxu0 %v69
  %v267 = vpop.f32.mrf.mxu0
  %v268 = vadd.f32 %v56, %v267
  %v269 = vpop.f32.mrf.mxu0
  %v270 = vadd.f32 %v60, %v269
  %v271 = vpop.f32.mrf.mxu0
  %v272 = vadd.f32 %v56, %v271
  %v273 = vpop.f32.mrf.mxu0
  %v274 = vadd.f32 %v60, %v273
  %275 = vdwg.mxu0
  %v276 = vld [vmem:[%s3] sm:$0xff]
  %v277 = vld [vmem:[%s3 + $0x8] sm:$0xff]
  %v278 = vunpack.c.l.bf16 %v276
  %v279 = vunpack.c.h.bf16 %v276
  %v280 = vunpack.c.l.bf16 %v277
  %v281 = vunpack.c.h.bf16 %v277
  %v282 = vadd.f32 %v268, %v278
  %v283 = vadd.f32 %v270, %v279
  %v284 = vadd.f32 %v272, %v280
  %v285 = vadd.f32 %v274, %v281
  %v286 = vpack.c.bf16 %v284, %v282
  %v287 = vpack.c.bf16 %v285, %v283
  %v290 = vunpack.c.l.b16 %v286
  %v291 = vunpack.c.l.b16 %v287
  %v292 = vunpack.c.h.b16 %v286
  %v293 = vunpack.c.h.b16 %v287
  %v294 = vpack.c.b16 %v291, %v290
  %v295 = vpack.c.b16 %v293, %v292
  %298 = vst [vmem:[%s4] sm:$0xff] %v294
  %299 = vst [vmem:[%s4 + $0x8] sm:$0xff] %v295
  // Predicated region
  $region18: #{transformer_decoder_forward.23} parent=0 // pred_check
    _
  $region19: #{transformer_decoder_forward.23} parent=0 // pred_check_branch
    %301 = sbr.rel (0) target = $region21
  $region20: #{transformer_decoder_forward.23} parent=0 // pred_region
    _
  $region21: #{transformer_decoder_forward.23} parent=0 // pred_fallthru
    _
  // Predicated region
  $region22: #{transformer_decoder_forward.23} parent=0 // pred_check
    _
  $region23: #{transformer_decoder_forward.23} parent=0 // pred_check_branch
    %303 = sbr.rel (0) target = $region25
  $region24: #{transformer_decoder_forward.23} parent=0 // pred_region
    _
  $region25: #{transformer_decoder_forward.23} parent=0 // pred_fallthru
    _

// kernel: transformer_decoder_forward.33
$region0: #{transformer_decoder_forward.33}
  #allocation0 [shape = 'u32[]', space=smem, size = 0x4, offset = 0x4, fixed_abs, tag = 'smem constant byte address 0x4 - core index']
  #allocation1 [shape = 'u32[144,128]{1,0:T(1,128)}', space=vmem, size = 0x12000, scoped, tag = 'internal scratch']
  %s0 = inlined_call_operand.vmem [shape: bf16[16,256], index: 0, kind: input, shape index: {}]
  %s1 = inlined_call_operand.vmem [shape: f32[1,256], index: 1, kind: input, shape index: {}]
  %s2 = inlined_call_operand.vmem [shape: f32[1,256], index: 2, kind: input, shape index: {}]
  %s3 = inlined_call_operand.hbm [shape: f32[16,256], index: 3, kind: output, shape index: {}]
  %s4 = sld [smem:[#allocation0]]
  $region22: #{transformer_decoder_forward.33} parent=0
    _
  %s6 = ssub.s32 1, %s4
  %s7 = scalar_select 0, %s6, %s4
  $region1: #{transformer_decoder_forward.33} parent=0
    #allocation2 [shape = 'u8[16384]{0}', space=vmem, size = 0x4000, scoped, tag = 'output window, operand 0, single buffered']
    #allocation3 [shape = 's32[1]{0}', space=sflag, size = 0x4, scoped, tag = 'scoped memory for transformer_decoder_forward.33']
    %8 = vsyncpa [#allocation3], 0
    // Predicated region
    $region2: #{transformer_decoder_forward.33} parent=1 // pred_check
      _
    $region3: #{transformer_decoder_forward.33} parent=1 // pred_check_branch
      %10 = sbr.rel (0) target = $region5
    $region4: #{transformer_decoder_forward.33} parent=1 // pred_region
      _
    $region5: #{transformer_decoder_forward.33} parent=1 // pred_fallthru
      _
    // Predicated region
    $region6: #{transformer_decoder_forward.33} parent=1 // pred_check
      _
    $region7: #{transformer_decoder_forward.33} parent=1 // pred_check_branch
      %12 = sbr.rel (0) target = $region9
    $region8: #{transformer_decoder_forward.33} parent=1 // pred_region
      _
    $region9: #{transformer_decoder_forward.33} parent=1 // pred_fallthru
      _
    // Predicated region
    $region10: #{transformer_decoder_forward.33} parent=1 // pred_check
      _
    $region11: #{transformer_decoder_forward.33} parent=1 // pred_check_branch
      %14 = sbr.rel (0) target = $region13
    $region12: #{transformer_decoder_forward.33} parent=1 // pred_region
      _
    $region13: #{transformer_decoder_forward.33} parent=1 // pred_fallthru
      _
    %v15 = vld [vmem:[%s0] sm:$0xff]
    %v16 = vld [vmem:[%s0 + $0x8] sm:$0xff]
    %v17 = vunpack.c.l.bf16 %v15
    %v18 = vunpack.c.h.bf16 %v15
    %v19 = vunpack.c.l.bf16 %v16
    %v20 = vunpack.c.h.bf16 %v16
    %v21 = vadd.f32 %v17, %v18
    %22 = vadd.xlane.f32.xlu0 %v21
    %v23 = vpop.xlane.xlu0 %22
    %v24 = vadd.f32 %v19, %v20
    %25 = vadd.xlane.f32.xlu0 %v24
    %v26 = vpop.xlane.xlu0 %25
    %v27 = vrcp.pop 256.0
    %v28 = vmul.f32 %v23, %v27
    %v29 = vmul.f32 %v26, %v27
    %v30 = vsub.f32 %v17, %v28
    %v31 = vsub.f32 %v18, %v28
    %v32 = vsub.f32 %v19, %v29
    %v33 = vsub.f32 %v20, %v29
    %v34 = vmul.f32 %v30, %v30
    %v35 = vmul.f32 %v31, %v31
    %v36 = vmul.f32 %v32, %v32
    %v37 = vmul.f32 %v33, %v33
    %v38 = vadd.f32 %v34, %v35
    %39 = vadd.xlane.f32.xlu0 %v38
    %v40 = vpop.xlane.xlu0 %39
    %v41 = vadd.f32 %v36, %v37
    %42 = vadd.xlane.f32.xlu0 %v41
    %v43 = vpop.xlane.xlu0 %42
    %v44 = vmul.f32 %v40, %v27
    %v45 = vmul.f32 %v43, %v27
    %v46 = vadd.f32 %v44, 1e-06
    %v47 = vadd.f32 %v45, 1e-06
    %v48 = vrsqrt.pop %v46
    %v49 = vrsqrt.pop %v47
    %v50 = vmul.f32 %v30, %v48
    %v51 = vmul.f32 %v31, %v48
    %v52 = vmul.f32 %v32, %v49
    %v53 = vmul.f32 %v33, %v49
    %v54 = vld [vmem:[%s1] sm:$0x3]
    %v56 = vlaneseq
    %v57 = vshrl.u32 %v56, 7
    %v58 = vsub.s32 0, %v57
    %v59 = vrot.slane %v54, %v58
    %v60 = vlaneseq
    %v61 = vshrl.u32 %v60, 7
    %v62 = vsub.s32 1, %v61
    %v63 = vrot.slane %v54, %v62
    %v66 = vmul.f32 %v50, %v59
    %v67 = vmul.f32 %v51, %v63
    %v68 = vmul.f32 %v52, %v59
    %v69 = vmul.f32 %v53, %v63
    %v70 = vld [vmem:[%s2] sm:$0x3]
    %v72 = vlaneseq
    %v73 = vshrl.u32 %v72, 7
    %v74 = vsub.s32 0, %v73
    %v75 = vrot.slane %v70, %v74
    %v76 = vlaneseq
    %v77 = vshrl.u32 %v76, 7
    %v78 = vsub.s32 1, %v77
    %v79 = vrot.slane %v70, %v78
    %v82 = vadd.f32 %v66, %v75
    %v83 = vadd.f32 %v67, %v79
    %v84 = vadd.f32 %v68, %v75
    %v85 = vadd.f32 %v69, %v79
    %86 = vst [vmem:[#allocation2] sm:$0xff] %v82
    %87 = vst [vmem:[#allocation2 + $0x8] sm:$0xff] %v83
    %88 = vst [vmem:[#allocation2 + $0x10] sm:$0xff] %v84
    %89 = vst [vmem:[#allocation2 + $0x18] sm:$0xff] %v85
    // Predicated region
    $region14: #{transformer_decoder_forward.33} parent=1 // pred_check
      _
    $region15: #{transformer_decoder_forward.33} parent=1 // pred_check_branch
      %91 = sbr.rel (0) target = $region17
    $region16: #{transformer_decoder_forward.33} parent=1 // pred_region
      %s93 = ssub.s32 512, 512
      %94 = vsyncadd [#allocation3], %s93
      %s95 = sshll.u32 [#allocation2], 4
      %s96 = int_to_ptr.vmem [resolvable:$true] %s95
      %101 = dma.vmem_to_hbm [thread:$0]  %s96, 512, %s3, [#allocation3], 256, 256, 16
    $region17: #{transformer_decoder_forward.33} parent=1 // pred_fallthru
      _
    // Predicated region
    $region18: #{transformer_decoder_forward.33} parent=1 // pred_check
      _
    $region19: #{transformer_decoder_forward.33} parent=1 // pred_check_branch
      %103 = sbr.rel (0) target = $region21
    $region20: #{transformer_decoder_forward.33} parent=1 // pred_region
      %104 = dma.done [#allocation3], 512
    $region21: #{transformer_decoder_forward.33} parent=1 // pred_fallthru
      _
    %105 = vsyncpa [#allocation3], 1

// kernel: transformer_decoder_forward.24
$region0: #{transformer_decoder_forward.24}
  #allocation0 [shape = 'u32[]', space=smem, size = 0x4, offset = 0x4, fixed_abs, tag = 'smem constant byte address 0x4 - core index']
  #allocation1 [shape = 'u32[144,128]{1,0:T(1,128)}', space=vmem, size = 0x12000, scoped, tag = 'internal scratch']
  #allocation2 [shape = 'bf16[16,256]{1,0:T(8,128)(2,1)}', space=vmem, size = 0x2000, scoped, tag = 'scratch operand']
  #allocation3 [shape = 'f32[16,256]{1,0:T(8,128)}', space=vmem, size = 0x4000, scoped, tag = 'scratch operand']
  %s0 = inlined_call_operand.vmem [shape: bf16[16,256], index: 0, kind: input, shape index: {}]
  %s1 = inlined_call_operand.vmem [shape: f32[1,256], index: 1, kind: input, shape index: {}]
  %s2 = inlined_call_operand.vmem [shape: f32[1,256], index: 2, kind: input, shape index: {}]
  %s3 = inlined_call_operand.vmem [shape: bf16[256,512], index: 3, kind: input, shape index: {}]
  %s4 = inlined_call_operand.vmem [shape: f32[1,512], index: 4, kind: input, shape index: {}]
  %s5 = inlined_call_operand.vmem [shape: bf16[512,256], index: 5, kind: input, shape index: {}]
  %s6 = inlined_call_operand.vmem [shape: f32[1,256], index: 6, kind: input, shape index: {}]
  %s7 = inlined_call_operand.vmem [shape: bf16[16,256], index: 7, kind: output, shape index: {}]
  %s8 = sld [smem:[#allocation0]]
  $region46: #{transformer_decoder_forward.24} parent=0
    _
  %s10 = ssub.s32 1, %s8
  %s11 = scalar_select 0, %s10, %s8
  // Predicated region
  $region2: #{transformer_decoder_forward.24} parent=0 // pred_check
    _
  $region3: #{transformer_decoder_forward.24} parent=0 // pred_check_branch
    %13 = sbr.rel (0) target = $region5
  $region4: #{transformer_decoder_forward.24} parent=0 // pred_region
    _
  $region5: #{transformer_decoder_forward.24} parent=0 // pred_fallthru
    _
  // Predicated region
  $region6: #{transformer_decoder_forward.24} parent=0 // pred_check
    _
  $region7: #{transformer_decoder_forward.24} parent=0 // pred_check_branch
    %15 = sbr.rel (0) target = $region9
  $region8: #{transformer_decoder_forward.24} parent=0 // pred_region
    _
  $region9: #{transformer_decoder_forward.24} parent=0 // pred_fallthru
    _
  // Predicated region
  $region10: #{transformer_decoder_forward.24} parent=0 // pred_check
    _
  $region11: #{transformer_decoder_forward.24} parent=0 // pred_check_branch
    %17 = sbr.rel (0) target = $region13
  $region12: #{transformer_decoder_forward.24} parent=0 // pred_region
    _
  $region13: #{transformer_decoder_forward.24} parent=0 // pred_fallthru
    _
  // Predicated region
  $region14: #{transformer_decoder_forward.24} parent=0 // pred_check
    _
  $region15: #{transformer_decoder_forward.24} parent=0 // pred_check_branch
    %19 = sbr.rel (0) target = $region17
  $region16: #{transformer_decoder_forward.24} parent=0 // pred_region
    _
  $region17: #{transformer_decoder_forward.24} parent=0 // pred_fallthru
    _
  // Predicated region
  $region18: #{transformer_decoder_forward.24} parent=0 // pred_check
    _
  $region19: #{transformer_decoder_forward.24} parent=0 // pred_check_branch
    %21 = sbr.rel (0) target = $region21
  $region20: #{transformer_decoder_forward.24} parent=0 // pred_region
    _
  $region21: #{transformer_decoder_forward.24} parent=0 // pred_fallthru
    _
  // Predicated region
  $region22: #{transformer_decoder_forward.24} parent=0 // pred_check
    _
  $region23: #{transformer_decoder_forward.24} parent=0 // pred_check_branch
    %23 = sbr.rel (0) target = $region25
  $region24: #{transformer_decoder_forward.24} parent=0 // pred_region
    _
  $region25: #{transformer_decoder_forward.24} parent=0 // pred_fallthru
    _
  // Predicated region
  $region26: #{transformer_decoder_forward.24} parent=0 // pred_check
    _
  $region27: #{transformer_decoder_forward.24} parent=0 // pred_check_branch
    %25 = sbr.rel (0) target = $region29
  $region28: #{transformer_decoder_forward.24} parent=0 // pred_region
    _
  $region29: #{transformer_decoder_forward.24} parent=0 // pred_fallthru
    _
  %p26 = scmp.eq.s32.totalorder 0, 0
  // Predicated region
  $region30: #{transformer_decoder_forward.24} parent=0 // pred_check
    %p27 = pneg %p26
  $region31: #{transformer_decoder_forward.24} parent=0 // pred_check_branch
    %29 = sbr.rel (%p27) target = $region33
  $region32: #{transformer_decoder_forward.24} parent=0 // pred_region
    %v30 = vld [vmem:[%s0] sm:$0xff]
    %v31 = vld [vmem:[%s0 + $0x8] sm:$0xff]
    %v32 = vunpack.c.l.bf16 %v30
    %v33 = vunpack.c.h.bf16 %v30
    %v34 = vunpack.c.l.bf16 %v31
    %v35 = vunpack.c.h.bf16 %v31
    %v36 = vadd.f32 %v32, %v33
    %37 = vadd.xlane.f32.xlu0 %v36
    %v38 = vpop.xlane.xlu0 %37
    %v39 = vadd.f32 %v34, %v35
    %40 = vadd.xlane.f32.xlu0 %v39
    %v41 = vpop.xlane.xlu0 %40
    %v42 = vrcp.pop 256.0
    %v43 = vmul.f32 %v38, %v42
    %v44 = vmul.f32 %v41, %v42
    %v45 = vsub.f32 %v32, %v43
    %v46 = vsub.f32 %v33, %v43
    %v47 = vsub.f32 %v34, %v44
    %v48 = vsub.f32 %v35, %v44
    %v49 = vmul.f32 %v45, %v45
    %v50 = vmul.f32 %v46, %v46
    %v51 = vmul.f32 %v47, %v47
    %v52 = vmul.f32 %v48, %v48
    %v53 = vadd.f32 %v49, %v50
    %54 = vadd.xlane.f32.xlu0 %v53
    %v55 = vpop.xlane.xlu0 %54
    %v56 = vadd.f32 %v51, %v52
    %57 = vadd.xlane.f32.xlu0 %v56
    %v58 = vpop.xlane.xlu0 %57
    %v59 = vmul.f32 %v55, %v42
    %v60 = vmul.f32 %v58, %v42
    %v61 = vadd.f32 %v59, 1e-06
    %v62 = vadd.f32 %v60, 1e-06
    %v63 = vrsqrt.pop %v61
    %v64 = vrsqrt.pop %v62
    %v65 = vmul.f32 %v45, %v63
    %v66 = vmul.f32 %v46, %v63
    %v67 = vmul.f32 %v47, %v64
    %v68 = vmul.f32 %v48, %v64
    %v69 = vld [vmem:[%s1] sm:$0x3]
    %v71 = vlaneseq
    %v72 = vshrl.u32 %v71, 7
    %v73 = vsub.s32 0, %v72
    %v74 = vrot.slane %v69, %v73
    %v75 = vlaneseq
    %v76 = vshrl.u32 %v75, 7
    %v77 = vsub.s32 1, %v76
    %v78 = vrot.slane %v69, %v77
    %v81 = vmul.f32 %v65, %v74
    %v82 = vmul.f32 %v66, %v78
    %v83 = vmul.f32 %v67, %v74
    %v84 = vmul.f32 %v68, %v78
    %v85 = vld [vmem:[%s2] sm:$0x3]
    %v87 = vlaneseq
    %v88 = vshrl.u32 %v87, 7
    %v89 = vsub.s32 0, %v88
    %v90 = vrot.slane %v85, %v89
    %v91 = vlaneseq
    %v92 = vshrl.u32 %v91, 7
    %v93 = vsub.s32 1, %v92
    %v94 = vrot.slane %v85, %v93
    %v97 = vadd.f32 %v81, %v90
    %v98 = vadd.f32 %v82, %v94
    %v99 = vadd.f32 %v83, %v90
    %v100 = vadd.f32 %v84, %v94
    %v101 = vpack.c.bf16 %v99, %v97
    %v102 = vpack.c.bf16 %v100, %v98
    %v105 = vunpack.c.l.b16 %v101
    %v106 = vunpack.c.l.b16 %v102
    %v107 = vunpack.c.h.b16 %v101
    %v108 = vunpack.c.h.b16 %v102
    %v109 = vpack.c.b16 %v106, %v105
    %v110 = vpack.c.b16 %v108, %v107
    %113 = vst [vmem:[#allocation2] sm:$0xff] %v109
    %114 = vst [vmem:[#allocation2 + $0x8] sm:$0xff] %v110
    %115 = vst [vmem:[#allocation3] sm:$0xff] 0.0
    %116 = vst [vmem:[#allocation3 + $0x8] sm:$0xff] 0.0
    %117 = vst [vmem:[#allocation3 + $0x10] sm:$0xff] 0.0
    %118 = vst [vmem:[#allocation3 + $0x18] sm:$0xff] 0.0
  $region33: #{transformer_decoder_forward.24} parent=0 // pred_fallthru
    _
  %v119 = vld [vmem:[#allocation2] sm:$0xff]
  %v120 = vld [vmem:[#allocation2 + $0x8] sm:$0xff]
  %v121 = vld [vmem:[%s3] sm:$0xff]
  %v122 = vld [vmem:[%s3 + $0x8] sm:$0xff]
  %v123 = vld [vmem:[%s3 + $0x10] sm:$0xff]
  %v124 = vld [vmem:[%s3 + $0x18] sm:$0xff]
  %v125 = vld [vmem:[%s3 + $0x20] sm:$0xff]
  %v126 = vld [vmem:[%s3 + $0x28] sm:$0xff]
  %v127 = vld [vmem:[%s3 + $0x30] sm:$0xff]
  %v128 = vld [vmem:[%s3 + $0x38] sm:$0xff]
  %v129 = vld [vmem:[%s3 + $0x40] sm:$0xff]
  %v130 = vld [vmem:[%s3 + $0x48] sm:$0xff]
  %v131 = vld [vmem:[%s3 + $0x50] sm:$0xff]
  %v132 = vld [vmem:[%s3 + $0x58] sm:$0xff]
  %v133 = vld [vmem:[%s3 + $0x60] sm:$0xff]
  %v134 = vld [vmem:[%s3 + $0x68] sm:$0xff]
  %v135 = vld [vmem:[%s3 + $0x70] sm:$0xff]
  %v136 = vld [vmem:[%s3 + $0x78] sm:$0xff]
  %v137 = vld [vmem:[%s3 + $0x80] sm:$0xff]
  %v138 = vld [vmem:[%s3 + $0x88] sm:$0xff]
  %v139 = vld [vmem:[%s3 + $0x90] sm:$0xff]
  %v140 = vld [vmem:[%s3 + $0x98] sm:$0xff]
  %v141 = vld [vmem:[%s3 + $0xa0] sm:$0xff]
  %v142 = vld [vmem:[%s3 + $0xa8] sm:$0xff]
  %v143 = vld [vmem:[%s3 + $0xb0] sm:$0xff]
  %v144 = vld [vmem:[%s3 + $0xb8] sm:$0xff]
  %v145 = vld [vmem:[%s3 + $0xc0] sm:$0xff]
  %v146 = vld [vmem:[%s3 + $0xc8] sm:$0xff]
  %v147 = vld [vmem:[%s3 + $0xd0] sm:$0xff]
  %v148 = vld [vmem:[%s3 + $0xd8] sm:$0xff]
  %v149 = vld [vmem:[%s3 + $0xe0] sm:$0xff]
  %v150 = vld [vmem:[%s3 + $0xe8] sm:$0xff]
  %v151 = vld [vmem:[%s3 + $0xf0] sm:$0xff]
  %v152 = vld [vmem:[%s3 + $0xf8] sm:$0xff]
  %v153 = vld [vmem:[%s3 + $0x100] sm:$0xff]
  %v154 = vld [vmem:[%s3 + $0x108] sm:$0xff]
  %v155 = vld [vmem:[%s3 + $0x110] sm:$0xff]
  %v156 = vld [vmem:[%s3 + $0x118] sm:$0xff]
  %v157 = vld [vmem:[%s3 + $0x120] sm:$0xff]
  %v158 = vld [vmem:[%s3 + $0x128] sm:$0xff]
  %v159 = vld [vmem:[%s3 + $0x130] sm:$0xff]
  %v160 = vld [vmem:[%s3 + $0x138] sm:$0xff]
  %v161 = vld [vmem:[%s3 + $0x140] sm:$0xff]
  %v162 = vld [vmem:[%s3 + $0x148] sm:$0xff]
  %v163 = vld [vmem:[%s3 + $0x150] sm:$0xff]
  %v164 = vld [vmem:[%s3 + $0x158] sm:$0xff]
  %v165 = vld [vmem:[%s3 + $0x160] sm:$0xff]
  %v166 = vld [vmem:[%s3 + $0x168] sm:$0xff]
  %v167 = vld [vmem:[%s3 + $0x170] sm:$0xff]
  %v168 = vld [vmem:[%s3 + $0x178] sm:$0xff]
  %v169 = vld [vmem:[%s3 + $0x180] sm:$0xff]
  %v170 = vld [vmem:[%s3 + $0x188] sm:$0xff]
  %v171 = vld [vmem:[%s3 + $0x190] sm:$0xff]
  %v172 = vld [vmem:[%s3 + $0x198] sm:$0xff]
  %v173 = vld [vmem:[%s3 + $0x1a0] sm:$0xff]
  %v174 = vld [vmem:[%s3 + $0x1a8] sm:$0xff]
  %v175 = vld [vmem:[%s3 + $0x1b0] sm:$0xff]
  %v176 = vld [vmem:[%s3 + $0x1b8] sm:$0xff]
  %v177 = vld [vmem:[%s3 + $0x1c0] sm:$0xff]
  %v178 = vld [vmem:[%s3 + $0x1c8] sm:$0xff]
  %v179 = vld [vmem:[%s3 + $0x1d0] sm:$0xff]
  %v180 = vld [vmem:[%s3 + $0x1d8] sm:$0xff]
  %v181 = vld [vmem:[%s3 + $0x1e0] sm:$0xff]
  %v182 = vld [vmem:[%s3 + $0x1e8] sm:$0xff]
  %v183 = vld [vmem:[%s3 + $0x1f0] sm:$0xff]
  %v184 = vld [vmem:[%s3 + $0x1f8] sm:$0xff]
  %v185 = vld [vmem:[%s4] sm:$0xf]
  %v187 = vlaneseq
  %v188 = vshrl.u32 %v187, 7
  %v189 = vsub.s32 0, %v188
  %v190 = vrot.slane %v185, %v189
  %v191 = vlaneseq
  %v192 = vshrl.u32 %v191, 7
  %v193 = vsub.s32 1, %v192
  %v194 = vrot.slane %v185, %v193
  %v195 = vlaneseq
  %v196 = vshrl.u32 %v195, 7
  %v197 = vsub.s32 2, %v196
  %v198 = vrot.slane %v185, %v197
  %v199 = vlaneseq
  %v200 = vshrl.u32 %v199, 7
  %v201 = vsub.s32 3, %v200
  %v202 = vrot.slane %v185, %v201
  %v209 = vunpack.c.l.b16 %v119
  %v210 = vunpack.c.h.b16 %v119
  %v211 = vunpack.c.l.b16 %v120
  %v212 = vunpack.c.h.b16 %v120
  %v213 = vpack.c.b16 %v211, %v209
  %v214 = vpack.c.b16 %v212, %v210
  %v281 = vunpack.c.l.b16 %v121
  %v282 = vunpack.c.h.b16 %v121
  %v283 = vunpack.c.l.b16 %v122
  %v284 = vunpack.c.h.b16 %v122
  %v285 = vunpack.c.l.b16 %v123
  %v286 = vunpack.c.h.b16 %v123
  %v287 = vunpack.c.l.b16 %v124
  %v288 = vunpack.c.h.b16 %v124
  %v289 = vunpack.c.l.b16 %v125
  %v290 = vunpack.c.h.b16 %v125
  %v291 = vunpack.c.l.b16 %v126
  %v292 = vunpack.c.h.b16 %v126
  %v293 = vunpack.c.l.b16 %v127
  %v294 = vunpack.c.h.b16 %v127
  %v295 = vunpack.c.l.b16 %v128
  %v296 = vunpack.c.h.b16 %v128
  %v297 = vunpack.c.l.b16 %v129
  %v298 = vunpack.c.h.b16 %v129
  %v299 = vunpack.c.l.b16 %v130
  %v300 = vunpack.c.h.b16 %v130
  %v301 = vunpack.c.l.b16 %v131
  %v302 = vunpack.c.h.b16 %v131
  %v303 = vunpack.c.l.b16 %v132
  %v304 = vunpack.c.h.b16 %v132
  %v305 = vunpack.c.l.b16 %v133
  %v306 = vunpack.c.h.b16 %v133
  %v307 = vunpack.c.l.b16 %v134
  %v308 = vunpack.c.h.b16 %v134
  %v309 = vunpack.c.l.b16 %v135
  %v310 = vunpack.c.h.b16 %v135
  %v311 = vunpack.c.l.b16 %v136
  %v312 = vunpack.c.h.b16 %v136
  %v313 = vunpack.c.l.b16 %v137
  %v314 = vunpack.c.h.b16 %v137
  %v315 = vunpack.c.l.b16 %v138
  %v316 = vunpack.c.h.b16 %v138
  %v317 = vunpack.c.l.b16 %v139
  %v318 = vunpack.c.h.b16 %v139
  %v319 = vunpack.c.l.b16 %v140
  %v320 = vunpack.c.h.b16 %v140
  %v321 = vunpack.c.l.b16 %v141
  %v322 = vunpack.c.h.b16 %v141
  %v323 = vunpack.c.l.b16 %v142
  %v324 = vunpack.c.h.b16 %v142
  %v325 = vunpack.c.l.b16 %v143
  %v326 = vunpack.c.h.b16 %v143
  %v327 = vunpack.c.l.b16 %v144
  %v328 = vunpack.c.h.b16 %v144
  %v329 = vunpack.c.l.b16 %v145
  %v330 = vunpack.c.h.b16 %v145
  %v331 = vunpack.c.l.b16 %v146
  %v332 = vunpack.c.h.b16 %v146
  %v333 = vunpack.c.l.b16 %v147
  %v334 = vunpack.c.h.b16 %v147
  %v335 = vunpack.c.l.b16 %v148
  %v336 = vunpack.c.h.b16 %v148
  %v337 = vunpack.c.l.b16 %v149
  %v338 = vunpack.c.h.b16 %v149
  %v339 = vunpack.c.l.b16 %v150
  %v340 = vunpack.c.h.b16 %v150
  %v341 = vunpack.c.l.b16 %v151
  %v342 = vunpack.c.h.b16 %v151
  %v343 = vunpack.c.l.b16 %v152
  %v344 = vunpack.c.h.b16 %v152
  %v345 = vunpack.c.l.b16 %v153
  %v346 = vunpack.c.h.b16 %v153
  %v347 = vunpack.c.l.b16 %v154
  %v348 = vunpack.c.h.b16 %v154
  %v349 = vunpack.c.l.b16 %v155
  %v350 = vunpack.c.h.b16 %v155
  %v351 = vunpack.c.l.b16 %v156
  %v352 = vunpack.c.h.b16 %v156
  %v353 = vunpack.c.l.b16 %v157
  %v354 = vunpack.c.h.b16 %v157
  %v355 = vunpack.c.l.b16 %v158
  %v356 = vunpack.c.h.b16 %v158
  %v357 = vunpack.c.l.b16 %v159
  %v358 = vunpack.c.h.b16 %v159
  %v359 = vunpack.c.l.b16 %v160
  %v360 = vunpack.c.h.b16 %v160
  %v361 = vunpack.c.l.b16 %v161
  %v362 = vunpack.c.h.b16 %v161
  %v363 = vunpack.c.l.b16 %v162
  %v364 = vunpack.c.h.b16 %v162
  %v365 = vunpack.c.l.b16 %v163
  %v366 = vunpack.c.h.b16 %v163
  %v367 = vunpack.c.l.b16 %v164
  %v368 = vunpack.c.h.b16 %v164
  %v369 = vunpack.c.l.b16 %v165
  %v370 = vunpack.c.h.b16 %v165
  %v371 = vunpack.c.l.b16 %v166
  %v372 = vunpack.c.h.b16 %v166
  %v373 = vunpack.c.l.b16 %v167
  %v374 = vunpack.c.h.b16 %v167
  %v375 = vunpack.c.l.b16 %v168
  %v376 = vunpack.c.h.b16 %v168
  %v377 = vunpack.c.l.b16 %v169
  %v378 = vunpack.c.h.b16 %v169
  %v379 = vunpack.c.l.b16 %v170
  %v380 = vunpack.c.h.b16 %v170
  %v381 = vunpack.c.l.b16 %v171
  %v382 = vunpack.c.h.b16 %v171
  %v383 = vunpack.c.l.b16 %v172
  %v384 = vunpack.c.h.b16 %v172
  %v385 = vunpack.c.l.b16 %v173
  %v386 = vunpack.c.h.b16 %v173
  %v387 = vunpack.c.l.b16 %v174
  %v388 = vunpack.c.h.b16 %v174
  %v389 = vunpack.c.l.b16 %v175
  %v390 = vunpack.c.h.b16 %v175
  %v391 = vunpack.c.l.b16 %v176
  %v392 = vunpack.c.h.b16 %v176
  %v393 = vunpack.c.l.b16 %v177
  %v394 = vunpack.c.h.b16 %v177
  %v395 = vunpack.c.l.b16 %v178
  %v396 = vunpack.c.h.b16 %v178
  %v397 = vunpack.c.l.b16 %v179
  %v398 = vunpack.c.h.b16 %v179
  %v399 = vunpack.c.l.b16 %v180
  %v400 = vunpack.c.h.b16 %v180
  %v401 = vunpack.c.l.b16 %v181
  %v402 = vunpack.c.h.b16 %v181
  %v403 = vunpack.c.l.b16 %v182
  %v404 = vunpack.c.h.b16 %v182
  %v405 = vunpack.c.l.b16 %v183
  %v406 = vunpack.c.h.b16 %v183
  %v407 = vunpack.c.l.b16 %v184
  %v408 = vunpack.c.h.b16 %v184
  %v409 = vpack.c.b16 %v285, %v281
  %v410 = vpack.c.b16 %v286, %v282
  %v411 = vpack.c.b16 %v287, %v283
  %v412 = vpack.c.b16 %v288, %v284
  %v413 = vpack.c.b16 %v293, %v289
  %v414 = vpack.c.b16 %v294, %v290
  %v415 = vpack.c.b16 %v295, %v291
  %v416 = vpack.c.b16 %v296, %v292
  %v417 = vpack.c.b16 %v301, %v297
  %v418 = vpack.c.b16 %v302, %v298
  %v419 = vpack.c.b16 %v303, %v299
  %v420 = vpack.c.b16 %v304, %v300
  %v421 = vpack.c.b16 %v309, %v305
  %v422 = vpack.c.b16 %v310, %v306
  %v423 = vpack.c.b16 %v311, %v307
  %v424 = vpack.c.b16 %v312, %v308
  %v425 = vpack.c.b16 %v317, %v313
  %v426 = vpack.c.b16 %v318, %v314
  %v427 = vpack.c.b16 %v319, %v315
  %v428 = vpack.c.b16 %v320, %v316
  %v429 = vpack.c.b16 %v325, %v321
  %v430 = vpack.c.b16 %v326, %v322
  %v431 = vpack.c.b16 %v327, %v323
  %v432 = vpack.c.b16 %v328, %v324
  %v433 = vpack.c.b16 %v333, %v329
  %v434 = vpack.c.b16 %v334, %v330
  %v435 = vpack.c.b16 %v335, %v331
  %v436 = vpack.c.b16 %v336, %v332
  %v437 = vpack.c.b16 %v341, %v337
  %v438 = vpack.c.b16 %v342, %v338
  %v439 = vpack.c.b16 %v343, %v339
  %v440 = vpack.c.b16 %v344, %v340
  %v441 = vpack.c.b16 %v349, %v345
  %v442 = vpack.c.b16 %v350, %v346
  %v443 = vpack.c.b16 %v351, %v347
  %v444 = vpack.c.b16 %v352, %v348
  %v445 = vpack.c.b16 %v357, %v353
  %v446 = vpack.c.b16 %v358, %v354
  %v447 = vpack.c.b16 %v359, %v355
  %v448 = vpack.c.b16 %v360, %v356
  %v449 = vpack.c.b16 %v365, %v361
  %v450 = vpack.c.b16 %v366, %v362
  %v451 = vpack.c.b16 %v367, %v363
  %v452 = vpack.c.b16 %v368, %v364
  %v453 = vpack.c.b16 %v373, %v369
  %v454 = vpack.c.b16 %v374, %v370
  %v455 = vpack.c.b16 %v375, %v371
  %v456 = vpack.c.b16 %v376, %v372
  %v457 = vpack.c.b16 %v381, %v377
  %v458 = vpack.c.b16 %v382, %v378
  %v459 = vpack.c.b16 %v383, %v379
  %v460 = vpack.c.b16 %v384, %v380
  %v461 = vpack.c.b16 %v389, %v385
  %v462 = vpack.c.b16 %v390, %v386
  %v463 = vpack.c.b16 %v391, %v387
  %v464 = vpack.c.b16 %v392, %v388
  %v465 = vpack.c.b16 %v397, %v393
  %v466 = vpack.c.b16 %v398, %v394
  %v467 = vpack.c.b16 %v399, %v395
  %v468 = vpack.c.b16 %v400, %v396
  %v469 = vpack.c.b16 %v405, %v401
  %v470 = vpack.c.b16 %v406, %v402
  %v471 = vpack.c.b16 %v407, %v403
  %v472 = vpack.c.b16 %v408, %v404
  %537 = vmatprep.subr.bf16.mxu0 %v438
  %538 = vmatpush1.bf16.msra.mxu0 %v437
  %539 = vmatprep.subr.bf16.mxu0 %v434
  %540 = vmatpush1.bf16.msra.mxu0 %v433
  %541 = vmatprep.subr.bf16.mxu0 %v430
  %542 = vmatpush1.bf16.msra.mxu0 %v429
  %543 = vmatprep.subr.bf16.mxu0 %v426
  %544 = vmatpush1.bf16.msra.mxu0 %v425
  %545 = vmatprep.subr.bf16.mxu0 %v422
  %546 = vmatpush1.bf16.msra.mxu0 %v421
  %547 = vmatprep.subr.bf16.mxu0 %v418
  %548 = vmatpush1.bf16.msra.mxu0 %v417
  %549 = vmatprep.subr.bf16.mxu0 %v414
  %550 = vmatpush1.bf16.msra.mxu0 %v413
  %551 = vmatprep.subr.bf16.mxu0 %v410
  %552 = vmatpush1.bf16.msra.mxu0 %v409
  %553 = vmatprep.subr.bf16.mxu0 %v470
  %554 = vmatpush2.bf16.msra.mxu0 %v469
  %555 = vmatprep.subr.bf16.mxu0 %v466
  %556 = vmatpush2.bf16.msra.mxu0 %v465
  %557 = vmatprep.subr.bf16.mxu0 %v462
  %558 = vmatpush2.bf16.msra.mxu0 %v461
  %559 = vmatprep.subr.bf16.mxu0 %v458
  %560 = vmatpush2.bf16.msra.mxu0 %v457
  %561 = vmatprep.subr.bf16.mxu0 %v454
  %562 = vmatpush2.bf16.msra.mxu0 %v453
  %563 = vmatprep.subr.bf16.mxu0 %v450
  %564 = vmatpush2.bf16.msra.mxu0 %v449
  %565 = vmatprep.subr.bf16.mxu0 %v446
  %566 = vmatpush2.bf16.msra.mxu0 %v445
  %567 = vmatprep.subr.bf16.mxu0 %v442
  %568 = vmatpush2.bf16.msra.mxu0 %v441
  %569 = vmatprep.mubr.bf16.mxu0 %v214
  %570 = vmatmul.mubr.bf16.gmra.mxu0 %v213
  %v571 = vpop.f32.mrf.mxu0
  %v572 = vadd.f32 %v190, %v571
  %v573 = vpop.f32.mrf.mxu0
  %v574 = vadd.f32 %v194, %v573
  %v575 = vpop.f32.mrf.mxu0
  %v576 = vadd.f32 %v190, %v575
  %v577 = vpop.f32.mrf.mxu0
  %v578 = vadd.f32 %v194, %v577
  %579 = vdwg.mxu0
  %580 = vmatprep.subr.bf16.mxu0 %v440
  %581 = vmatpush1.bf16.msra.mxu0 %v439
  %582 = vmatprep.subr.bf16.mxu0 %v436
  %583 = vmatpush1.bf16.msra.mxu0 %v435
  %584 = vmatprep.subr.bf16.mxu0 %v432
  %585 = vmatpush1.bf16.msra.mxu0 %v431
  %586 = vmatprep.subr.bf16.mxu0 %v428
  %587 = vmatpush1.bf16.msra.mxu0 %v427
  %588 = vmatprep.subr.bf16.mxu0 %v424
  %589 = vmatpush1.bf16.msra.mxu0 %v423
  %590 = vmatprep.subr.bf16.mxu0 %v420
  %591 = vmatpush1.bf16.msra.mxu0 %v419
  %592 = vmatprep.subr.bf16.mxu0 %v416
  %593 = vmatpush1.bf16.msra.mxu0 %v415
  %594 = vmatprep.subr.bf16.mxu0 %v412
  %595 = vmatpush1.bf16.msra.mxu0 %v411
  %596 = vmatprep.subr.bf16.mxu0 %v472
  %597 = vmatpush2.bf16.msra.mxu0 %v471
  %598 = vmatprep.subr.bf16.mxu0 %v468
  %599 = vmatpush2.bf16.msra.mxu0 %v467
  %600 = vmatprep.subr.bf16.mxu0 %v464
  %601 = vmatpush2.bf16.msra.mxu0 %v463
  %602 = vmatprep.subr.bf16.mxu0 %v460
  %603 = vmatpush2.bf16.msra.mxu0 %v459
  %604 = vmatprep.subr.bf16.mxu0 %v456
  %605 = vmatpush2.bf16.msra.mxu0 %v455
  %606 = vmatprep.subr.bf16.mxu0 %v452
  %607 = vmatpush2.bf16.msra.mxu0 %v451
  %608 = vmatprep.subr.bf16.mxu0 %v448
  %609 = vmatpush2.bf16.msra.mxu0 %v447
  %610 = vmatprep.subr.bf16.mxu0 %v444
  %611 = vmatpush2.bf16.msra.mxu0 %v443
  %612 = vmatprep.mubr.bf16.mxu0 %v214
  %613 = vmatmul.mubr.bf16.gmra.mxu0 %v213
  %v614 = vpop.f32.mrf.mxu0
  %v615 = vadd.f32 %v198, %v614
  %v616 = vpop.f32.mrf.mxu0
  %v617 = vadd.f32 %v202, %v616
  %v618 = vpop.f32.mrf.mxu0
  %v619 = vadd.f32 %v198, %v618
  %v620 = vpop.f32.mrf.mxu0
  %v621 = vadd.f32 %v202, %v620
  %622 = vdwg.mxu0
  %v623 = vmax.f32 %v572, 0.0
  %v624 = vmax.f32 %v574, 0.0
  %v625 = vmax.f32 %v615, 0.0
  %v626 = vmax.f32 %v617, 0.0
  %v627 = vmax.f32 %v576, 0.0
  %v628 = vmax.f32 %v578, 0.0
  %v629 = vmax.f32 %v619, 0.0
  %v630 = vmax.f32 %v621, 0.0
  %v631 = vld [vmem:[#allocation3] sm:$0xff]
  %v632 = vld [vmem:[#allocation3 + $0x8] sm:$0xff]
  %v633 = vld [vmem:[#allocation3 + $0x10] sm:$0xff]
  %v634 = vld [vmem:[#allocation3 + $0x18] sm:$0xff]
  %v635 = vpack.c.bf16 %v627, %v623
  %v636 = vpack.c.bf16 %v628, %v624
  %v637 = vpack.c.bf16 %v629, %v625
  %v638 = vpack.c.bf16 %v630, %v626
  %v639 = vld [vmem:[%s5] sm:$0xff]
  %v640 = vld [vmem:[%s5 + $0x8] sm:$0xff]
  %v641 = vld [vmem:[%s5 + $0x10] sm:$0xff]
  %v642 = vld [vmem:[%s5 + $0x18] sm:$0xff]
  %v643 = vld [vmem:[%s5 + $0x20] sm:$0xff]
  %v644 = vld [vmem:[%s5 + $0x28] sm:$0xff]
  %v645 = vld [vmem:[%s5 + $0x30] sm:$0xff]
  %v646 = vld [vmem:[%s5 + $0x38] sm:$0xff]
  %v647 = vld [vmem:[%s5 + $0x40] sm:$0xff]
  %v648 = vld [vmem:[%s5 + $0x48] sm:$0xff]
  %v649 = vld [vmem:[%s5 + $0x50] sm:$0xff]
  %v650 = vld [vmem:[%s5 + $0x58] sm:$0xff]
  %v651 = vld [vmem:[%s5 + $0x60] sm:$0xff]
  %v652 = vld [vmem:[%s5 + $0x68] sm:$0xff]
  %v653 = vld [vmem:[%s5 + $0x70] sm:$0xff]
  %v654 = vld [vmem:[%s5 + $0x78] sm:$0xff]
  %v655 = vld [vmem:[%s5 + $0x80] sm:$0xff]
  %v656 = vld [vmem:[%s5 + $0x88] sm:$0xff]
  %v657 = vld [vmem:[%s5 + $0x90] sm:$0xff]
  %v658 = vld [vmem:[%s5 + $0x98] sm:$0xff]
  %v659 = vld [vmem:[%s5 + $0xa0] sm:$0xff]
  %v660 = vld [vmem:[%s5 + $0xa8] sm:$0xff]
  %v661 = vld [vmem:[%s5 + $0xb0] sm:$0xff]
  %v662 = vld [vmem:[%s5 + $0xb8] sm:$0xff]
  %v663 = vld [vmem:[%s5 + $0xc0] sm:$0xff]
  %v664 = vld [vmem:[%s5 + $0xc8] sm:$0xff]
  %v665 = vld [vmem:[%s5 + $0xd0] sm:$0xff]
  %v666 = vld [vmem:[%s5 + $0xd8] sm:$0xff]
  %v667 = vld [vmem:[%s5 + $0xe0] sm:$0xff]
  %v668 = vld [vmem:[%s5 + $0xe8] sm:$0xff]
  %v669 = vld [vmem:[%s5 + $0xf0] sm:$0xff]
  %v670 = vld [vmem:[%s5 + $0xf8] sm:$0xff]
  %v671 = vld [vmem:[%s5 + $0x100] sm:$0xff]
  %v672 = vld [vmem:[%s5 + $0x108] sm:$0xff]
  %v673 = vld [vmem:[%s5 + $0x110] sm:$0xff]
  %v674 = vld [vmem:[%s5 + $0x118] sm:$0xff]
  %v675 = vld [vmem:[%s5 + $0x120] sm:$0xff]
  %v676 = vld [vmem:[%s5 + $0x128] sm:$0xff]
  %v677 = vld [vmem:[%s5 + $0x130] sm:$0xff]
  %v678 = vld [vmem:[%s5 + $0x138] sm:$0xff]
  %v679 = vld [vmem:[%s5 + $0x140] sm:$0xff]
  %v680 = vld [vmem:[%s5 + $0x148] sm:$0xff]
  %v681 = vld [vmem:[%s5 + $0x150] sm:$0xff]
  %v682 = vld [vmem:[%s5 + $0x158] sm:$0xff]
  %v683 = vld [vmem:[%s5 + $0x160] sm:$0xff]
  %v684 = vld [vmem:[%s5 + $0x168] sm:$0xff]
  %v685 = vld [vmem:[%s5 + $0x170] sm:$0xff]
  %v686 = vld [vmem:[%s5 + $0x178] sm:$0xff]
  %v687 = vld [vmem:[%s5 + $0x180] sm:$0xff]
  %v688 = vld [vmem:[%s5 + $0x188] sm:$0xff]
  %v689 = vld [vmem:[%s5 + $0x190] sm:$0xff]
  %v690 = vld [vmem:[%s5 + $0x198] sm:$0xff]
  %v691 = vld [vmem:[%s5 + $0x1a0] sm:$0xff]
  %v692 = vld [vmem:[%s5 + $0x1a8] sm:$0xff]
  %v693 = vld [vmem:[%s5 + $0x1b0] sm:$0xff]
  %v694 = vld [vmem:[%s5 + $0x1b8] sm:$0xff]
  %v695 = vld [vmem:[%s5 + $0x1c0] sm:$0xff]
  %v696 = vld [vmem:[%s5 + $0x1c8] sm:$0xff]
  %v697 = vld [vmem:[%s5 + $0x1d0] sm:$0xff]
  %v698 = vld [vmem:[%s5 + $0x1d8] sm:$0xff]
  %v699 = vld [vmem:[%s5 + $0x1e0] sm:$0xff]
  %v700 = vld [vmem:[%s5 + $0x1e8] sm:$0xff]
  %v701 = vld [vmem:[%s5 + $0x1f0] sm:$0xff]
  %v702 = vld [vmem:[%s5 + $0x1f8] sm:$0xff]
  %v767 = vunpack.c.l.b16 %v639
  %v768 = vunpack.c.h.b16 %v639
  %v769 = vunpack.c.l.b16 %v640
  %v770 = vunpack.c.h.b16 %v640
  %v771 = vunpack.c.l.b16 %v641
  %v772 = vunpack.c.h.b16 %v641
  %v773 = vunpack.c.l.b16 %v642
  %v774 = vunpack.c.h.b16 %v642
  %v775 = vunpack.c.l.b16 %v643
  %v776 = vunpack.c.h.b16 %v643
  %v777 = vunpack.c.l.b16 %v644
  %v778 = vunpack.c.h.b16 %v644
  %v779 = vunpack.c.l.b16 %v645
  %v780 = vunpack.c.h.b16 %v645
  %v781 = vunpack.c.l.b16 %v646
  %v782 = vunpack.c.h.b16 %v646
  %v783 = vunpack.c.l.b16 %v647
  %v784 = vunpack.c.h.b16 %v647
  %v785 = vunpack.c.l.b16 %v648
  %v786 = vunpack.c.h.b16 %v648
  %v787 = vunpack.c.l.b16 %v649
  %v788 = vunpack.c.h.b16 %v649
  %v789 = vunpack.c.l.b16 %v650
  %v790 = vunpack.c.h.b16 %v650
  %v791 = vunpack.c.l.b16 %v651
  %v792 = vunpack.c.h.b16 %v651
  %v793 = vunpack.c.l.b16 %v652
  %v794 = vunpack.c.h.b16 %v652
  %v795 = vunpack.c.l.b16 %v653
  %v796 = vunpack.c.h.b16 %v653
  %v797 = vunpack.c.l.b16 %v654
  %v798 = vunpack.c.h.b16 %v654
  %v799 = vunpack.c.l.b16 %v655
  %v800 = vunpack.c.h.b16 %v655
  %v801 = vunpack.c.l.b16 %v656
  %v802 = vunpack.c.h.b16 %v656
  %v803 = vunpack.c.l.b16 %v657
  %v804 = vunpack.c.h.b16 %v657
  %v805 = vunpack.c.l.b16 %v658
  %v806 = vunpack.c.h.b16 %v658
  %v807 = vunpack.c.l.b16 %v659
  %v808 = vunpack.c.h.b16 %v659
  %v809 = vunpack.c.l.b16 %v660
  %v810 = vunpack.c.h.b16 %v660
  %v811 = vunpack.c.l.b16 %v661
  %v812 = vunpack.c.h.b16 %v661
  %v813 = vunpack.c.l.b16 %v662
  %v814 = vunpack.c.h.b16 %v662
  %v815 = vunpack.c.l.b16 %v663
  %v816 = vunpack.c.h.b16 %v663
  %v817 = vunpack.c.l.b16 %v664
  %v818 = vunpack.c.h.b16 %v664
  %v819 = vunpack.c.l.b16 %v665
  %v820 = vunpack.c.h.b16 %v665
  %v821 = vunpack.c.l.b16 %v666
  %v822 = vunpack.c.h.b16 %v666
  %v823 = vunpack.c.l.b16 %v667
  %v824 = vunpack.c.h.b16 %v667
  %v825 = vunpack.c.l.b16 %v668
  %v826 = vunpack.c.h.b16 %v668
  %v827 = vunpack.c.l.b16 %v669
  %v828 = vunpack.c.h.b16 %v669
  %v829 = vunpack.c.l.b16 %v670
  %v830 = vunpack.c.h.b16 %v670
  %v831 = vunpack.c.l.b16 %v671
  %v832 = vunpack.c.h.b16 %v671
  %v833 = vunpack.c.l.b16 %v672
  %v834 = vunpack.c.h.b16 %v672
  %v835 = vunpack.c.l.b16 %v673
  %v836 = vunpack.c.h.b16 %v673
  %v837 = vunpack.c.l.b16 %v674
  %v838 = vunpack.c.h.b16 %v674
  %v839 = vunpack.c.l.b16 %v675
  %v840 = vunpack.c.h.b16 %v675
  %v841 = vunpack.c.l.b16 %v676
  %v842 = vunpack.c.h.b16 %v676
  %v843 = vunpack.c.l.b16 %v677
  %v844 = vunpack.c.h.b16 %v677
  %v845 = vunpack.c.l.b16 %v678
  %v846 = vunpack.c.h.b16 %v678
  %v847 = vunpack.c.l.b16 %v679
  %v848 = vunpack.c.h.b16 %v679
  %v849 = vunpack.c.l.b16 %v680
  %v850 = vunpack.c.h.b16 %v680
  %v851 = vunpack.c.l.b16 %v681
  %v852 = vunpack.c.h.b16 %v681
  %v853 = vunpack.c.l.b16 %v682
  %v854 = vunpack.c.h.b16 %v682
  %v855 = vunpack.c.l.b16 %v683
  %v856 = vunpack.c.h.b16 %v683
  %v857 = vunpack.c.l.b16 %v684
  %v858 = vunpack.c.h.b16 %v684
  %v859 = vunpack.c.l.b16 %v685
  %v860 = vunpack.c.h.b16 %v685
  %v861 = vunpack.c.l.b16 %v686
  %v862 = vunpack.c.h.b16 %v686
  %v863 = vunpack.c.l.b16 %v687
  %v864 = vunpack.c.h.b16 %v687
  %v865 = vunpack.c.l.b16 %v688
  %v866 = vunpack.c.h.b16 %v688
  %v867 = vunpack.c.l.b16 %v689
  %v868 = vunpack.c.h.b16 %v689
  %v869 = vunpack.c.l.b16 %v690
  %v870 = vunpack.c.h.b16 %v690
  %v871 = vunpack.c.l.b16 %v691
  %v872 = vunpack.c.h.b16 %v691
  %v873 = vunpack.c.l.b16 %v692
  %v874 = vunpack.c.h.b16 %v692
  %v875 = vunpack.c.l.b16 %v693
  %v876 = vunpack.c.h.b16 %v693
  %v877 = vunpack.c.l.b16 %v694
  %v878 = vunpack.c.h.b16 %v694
  %v879 = vunpack.c.l.b16 %v695
  %v880 = vunpack.c.h.b16 %v695
  %v881 = vunpack.c.l.b16 %v696
  %v882 = vunpack.c.h.b16 %v696
  %v883 = vunpack.c.l.b16 %v697
  %v884 = vunpack.c.h.b16 %v697
  %v885 = vunpack.c.l.b16 %v698
  %v886 = vunpack.c.h.b16 %v698
  %v887 = vunpack.c.l.b16 %v699
  %v888 = vunpack.c.h.b16 %v699
  %v889 = vunpack.c.l.b16 %v700
  %v890 = vunpack.c.h.b16 %v700
  %v891 = vunpack.c.l.b16 %v701
  %v892 = vunpack.c.h.b16 %v701
  %v893 = vunpack.c.l.b16 %v702
  %v894 = vunpack.c.h.b16 %v702
  %v895 = vpack.c.b16 %v769, %v767
  %v896 = vpack.c.b16 %v770, %v768
  %v897 = vpack.c.b16 %v773, %v771
  %v898 = vpack.c.b16 %v774, %v772
  %v899 = vpack.c.b16 %v777, %v775
  %v900 = vpack.c.b16 %v778, %v776
  %v901 = vpack.c.b16 %v781, %v779
  %v902 = vpack.c.b16 %v782, %v780
  %v903 = vpack.c.b16 %v785, %v783
  %v904 = vpack.c.b16 %v786, %v784
  %v905 = vpack.c.b16 %v789, %v787
  %v906 = vpack.c.b16 %v790, %v788
  %v907 = vpack.c.b16 %v793, %v791
  %v908 = vpack.c.b16 %v794, %v792
  %v909 = vpack.c.b16 %v797, %v795
  %v910 = vpack.c.b16 %v798, %v796
  %v911 = vpack.c.b16 %v801, %v799
  %v912 = vpack.c.b16 %v802, %v800
  %v913 = vpack.c.b16 %v805, %v803
  %v914 = vpack.c.b16 %v806, %v804
  %v915 = vpack.c.b16 %v809, %v807
  %v916 = vpack.c.b16 %v810, %v808
  %v917 = vpack.c.b16 %v813, %v811
  %v918 = vpack.c.b16 %v814, %v812
  %v919 = vpack.c.b16 %v817, %v815
  %v920 = vpack.c.b16 %v818, %v816
  %v921 = vpack.c.b16 %v821, %v819
  %v922 = vpack.c.b16 %v822, %v820
  %v923 = vpack.c.b16 %v825, %v823
  %v924 = vpack.c.b16 %v826, %v824
  %v925 = vpack.c.b16 %v829, %v827
  %v926 = vpack.c.b16 %v830, %v828
  %v927 = vpack.c.b16 %v833, %v831
  %v928 = vpack.c.b16 %v834, %v832
  %v929 = vpack.c.b16 %v837, %v835
  %v930 = vpack.c.b16 %v838, %v836
  %v931 = vpack.c.b16 %v841, %v839
  %v932 = vpack.c.b16 %v842, %v840
  %v933 = vpack.c.b16 %v845, %v843
  %v934 = vpack.c.b16 %v846, %v844
  %v935 = vpack.c.b16 %v849, %v847
  %v936 = vpack.c.b16 %v850, %v848
  %v937 = vpack.c.b16 %v853, %v851
  %v938 = vpack.c.b16 %v854, %v852
  %v939 = vpack.c.b16 %v857, %v855
  %v940 = vpack.c.b16 %v858, %v856
  %v941 = vpack.c.b16 %v861, %v859
  %v942 = vpack.c.b16 %v862, %v860
  %v943 = vpack.c.b16 %v865, %v863
  %v944 = vpack.c.b16 %v866, %v864
  %v945 = vpack.c.b16 %v869, %v867
  %v946 = vpack.c.b16 %v870, %v868
  %v947 = vpack.c.b16 %v873, %v871
  %v948 = vpack.c.b16 %v874, %v872
  %v949 = vpack.c.b16 %v877, %v875
  %v950 = vpack.c.b16 %v878, %v876
  %v951 = vpack.c.b16 %v881, %v879
  %v952 = vpack.c.b16 %v882, %v880
  %v953 = vpack.c.b16 %v885, %v883
  %v954 = vpack.c.b16 %v886, %v884
  %v955 = vpack.c.b16 %v889, %v887
  %v956 = vpack.c.b16 %v890, %v888
  %v957 = vpack.c.b16 %v893, %v891
  %v958 = vpack.c.b16 %v894, %v892
  %1023 = vmatprep.subr.bf16.mxu0 %v910
  %1024 = vmatpush1.bf16.msra.mxu0 %v909
  %1025 = vmatprep.subr.bf16.mxu0 %v908
  %1026 = vmatpush1.bf16.msra.mxu0 %v907
  %1027 = vmatprep.subr.bf16.mxu0 %v906
  %1028 = vmatpush1.bf16.msra.mxu0 %v905
  %1029 = vmatprep.subr.bf16.mxu0 %v904
  %1030 = vmatpush1.bf16.msra.mxu0 %v903
  %1031 = vmatprep.subr.bf16.mxu0 %v902
  %1032 = vmatpush1.bf16.msra.mxu0 %v901
  %1033 = vmatprep.subr.bf16.mxu0 %v900
  %1034 = vmatpush1.bf16.msra.mxu0 %v899
  %1035 = vmatprep.subr.bf16.mxu0 %v898
  %1036 = vmatpush1.bf16.msra.mxu0 %v897
  %1037 = vmatprep.subr.bf16.mxu0 %v896
  %1038 = vmatpush1.bf16.msra.mxu0 %v895
  %1039 = vmatprep.subr.bf16.mxu0 %v926
  %1040 = vmatpush2.bf16.msra.mxu0 %v925
  %1041 = vmatprep.subr.bf16.mxu0 %v924
  %1042 = vmatpush2.bf16.msra.mxu0 %v923
  %1043 = vmatprep.subr.bf16.mxu0 %v922
  %1044 = vmatpush2.bf16.msra.mxu0 %v921
  %1045 = vmatprep.subr.bf16.mxu0 %v920
  %1046 = vmatpush2.bf16.msra.mxu0 %v919
  %1047 = vmatprep.subr.bf16.mxu0 %v918
  %1048 = vmatpush2.bf16.msra.mxu0 %v917
  %1049 = vmatprep.subr.bf16.mxu0 %v916
  %1050 = vmatpush2.bf16.msra.mxu0 %v915
  %1051 = vmatprep.subr.bf16.mxu0 %v914
  %1052 = vmatpush2.bf16.msra.mxu0 %v913
  %1053 = vmatprep.subr.bf16.mxu0 %v912
  %1054 = vmatpush2.bf16.msra.mxu0 %v911
  %1055 = vmatprep.mubr.bf16.mxu0 %v636
  %1056 = vmatmul.mubr.bf16.gmra.mxu0 %v635
  %v1057 = vpop.f32.mrf.mxu0
  %v1058 = vadd.f32 0.0, %v1057
  %v1059 = vpop.f32.mrf.mxu0
  %v1060 = vadd.f32 0.0, %v1059
  %v1061 = vpop.f32.mrf.mxu0
  %v1062 = vadd.f32 0.0, %v1061
  %v1063 = vpop.f32.mrf.mxu0
  %v1064 = vadd.f32 0.0, %v1063
  %1065 = vdwg.mxu0
  %1066 = vmatprep.subr.bf16.mxu0 %v942
  %1067 = vmatpush1.bf16.msra.mxu0 %v941
  %1068 = vmatprep.subr.bf16.mxu0 %v940
  %1069 = vmatpush1.bf16.msra.mxu0 %v939
  %1070 = vmatprep.subr.bf16.mxu0 %v938
  %1071 = vmatpush1.bf16.msra.mxu0 %v937
  %1072 = vmatprep.subr.bf16.mxu0 %v936
  %1073 = vmatpush1.bf16.msra.mxu0 %v935
  %1074 = vmatprep.subr.bf16.mxu0 %v934
  %1075 = vmatpush1.bf16.msra.mxu0 %v933
  %1076 = vmatprep.subr.bf16.mxu0 %v932
  %1077 = vmatpush1.bf16.msra.mxu0 %v931
  %1078 = vmatprep.subr.bf16.mxu0 %v930
  %1079 = vmatpush1.bf16.msra.mxu0 %v929
  %1080 = vmatprep.subr.bf16.mxu0 %v928
  %1081 = vmatpush1.bf16.msra.mxu0 %v927
  %1082 = vmatprep.subr.bf16.mxu0 %v958
  %1083 = vmatpush2.bf16.msra.mxu0 %v957
  %1084 = vmatprep.subr.bf16.mxu0 %v956
  %1085 = vmatpush2.bf16.msra.mxu0 %v955
  %1086 = vmatprep.subr.bf16.mxu0 %v954
  %1087 = vmatpush2.bf16.msra.mxu0 %v953
  %1088 = vmatprep.subr.bf16.mxu0 %v952
  %1089 = vmatpush2.bf16.msra.mxu0 %v951
  %1090 = vmatprep.subr.bf16.mxu0 %v950
  %1091 = vmatpush2.bf16.msra.mxu0 %v949
  %1092 = vmatprep.subr.bf16.mxu0 %v948
  %1093 = vmatpush2.bf16.msra.mxu0 %v947
  %1094 = vmatprep.subr.bf16.mxu0 %v946
  %1095 = vmatpush2.bf16.msra.mxu0 %v945
  %1096 = vmatprep.subr.bf16.mxu0 %v944
  %1097 = vmatpush2.bf16.msra.mxu0 %v943
  %1098 = vmatprep.mubr.bf16.mxu0 %v638
  %1099 = vmatmul.mubr.bf16.gmra.mxu0 %v637
  %v1100 = vpop.f32.mrf.mxu0
  %v1101 = vadd.f32 %v1058, %v1100
  %v1102 = vpop.f32.mrf.mxu0
  %v1103 = vadd.f32 %v1060, %v1102
  %v1104 = vpop.f32.mrf.mxu0
  %v1105 = vadd.f32 %v1062, %v1104
  %v1106 = vpop.f32.mrf.mxu0
  %v1107 = vadd.f32 %v1064, %v1106
  %1108 = vdwg.mxu0
  %v1109 = vadd.f32 %v631, %v1101
  %v1110 = vadd.f32 %v632, %v1103
  %v1111 = vadd.f32 %v633, %v1105
  %v1112 = vadd.f32 %v634, %v1107
  %1113 = vst [vmem:[#allocation3] sm:$0xff] %v1109
  %1114 = vst [vmem:[#allocation3 + $0x8] sm:$0xff] %v1110
  %1115 = vst [vmem:[#allocation3 + $0x10] sm:$0xff] %v1111
  %1116 = vst [vmem:[#allocation3 + $0x18] sm:$0xff] %v1112
  // Predicated region
  $region34: #{transformer_decoder_forward.24} parent=0 // pred_check
    %p1117 = pneg %p26
  $region35: #{transformer_decoder_forward.24} parent=0 // pred_check_branch
    %1119 = sbr.rel (%p1117) target = $region37
  $region36: #{transformer_decoder_forward.24} parent=0 // pred_region
    %v1120 = vld [vmem:[#allocation3] sm:$0xff]
    %v1121 = vld [vmem:[#allocation3 + $0x8] sm:$0xff]
    %v1122 = vld [vmem:[#allocation3 + $0x10] sm:$0xff]
    %v1123 = vld [vmem:[#allocation3 + $0x18] sm:$0xff]
    %v1124 = vld [vmem:[%s6] sm:$0x3]
    %v1126 = vlaneseq
    %v1127 = vshrl.u32 %v1126, 7
    %v1128 = vsub.s32 0, %v1127
    %v1129 = vrot.slane %v1124, %v1128
    %v1130 = vlaneseq
    %v1131 = vshrl.u32 %v1130, 7
    %v1132 = vsub.s32 1, %v1131
    %v1133 = vrot.slane %v1124, %v1132
    %v1136 = vadd.f32 %v1120, %v1129
    %v1137 = vadd.f32 %v1121, %v1133
    %v1138 = vadd.f32 %v1122, %v1129
    %v1139 = vadd.f32 %v1123, %v1133
    %v1140 = vld [vmem:[%s0] sm:$0xff]
    %v1141 = vld [vmem:[%s0 + $0x8] sm:$0xff]
    %v1142 = vunpack.c.l.bf16 %v1140
    %v1143 = vunpack.c.h.bf16 %v1140
    %v1144 = vunpack.c.l.bf16 %v1141
    %v1145 = vunpack.c.h.bf16 %v1141
    %v1146 = vadd.f32 %v1136, %v1142
    %v1147 = vadd.f32 %v1137, %v1143
    %v1148 = vadd.f32 %v1138, %v1144
    %v1149 = vadd.f32 %v1139, %v1145
    %v1150 = vpack.c.bf16 %v1148, %v1146
    %v1151 = vpack.c.bf16 %v1149, %v1147
    %v1154 = vunpack.c.l.b16 %v1150
    %v1155 = vunpack.c.l.b16 %v1151
    %v1156 = vunpack.c.h.b16 %v1150
    %v1157 = vunpack.c.h.b16 %v1151
    %v1158 = vpack.c.b16 %v1155, %v1154
    %v1159 = vpack.c.b16 %v1157, %v1156
    %1162 = vst [vmem:[%s7] sm:$0xff] %v1158
    %1163 = vst [vmem:[%s7 + $0x8] sm:$0xff] %v1159
  $region37: #{transformer_decoder_forward.24} parent=0 // pred_fallthru
    _
  // Predicated region
  $region38: #{transformer_decoder_forward.24} parent=0 // pred_check
    _
  $region39: #{transformer_decoder_forward.24} parent=0 // pred_check_branch
    %1165 = sbr.rel (0) target = $region41
  $region40: #{transformer_decoder_forward.24} parent=0 // pred_region
    _
  $region41: #{transformer_decoder_forward.24} parent=0 // pred_fallthru
    _
  // Predicated region
  $region42: #{transformer_decoder_forward.24} parent=0 // pred_check
    _
  $region43: #{transformer_decoder_forward.24} parent=0 // pred_check_branch
    %1167 = sbr.rel (0) target = $region45
  $region44: #{transformer_decoder_forward.24} parent=0 // pred_region
    _
  $region45: #{transformer_decoder_forward.24} parent=0 // pred_fallthru
    _

// kernel: transformer_decoder_forward.25
$region0: #{transformer_decoder_forward.25}
  #allocation0 [shape = 'u32[]', space=smem, size = 0x4, offset = 0x4, fixed_abs, tag = 'smem constant byte address 0x4 - core index']
  #allocation1 [shape = 'u32[144,128]{1,0:T(1,128)}', space=vmem, size = 0x12000, scoped, tag = 'internal scratch']
  %s0 = inlined_call_operand.vmem [shape: bf16[16,256], index: 0, kind: input, shape index: {}]
  %s1 = inlined_call_operand.vmem [shape: f32[1,256], index: 1, kind: input, shape index: {}]
  %s2 = inlined_call_operand.vmem [shape: f32[1,256], index: 2, kind: input, shape index: {}]
  %s3 = inlined_call_operand.vmem [shape: bf16[256,768], index: 3, kind: input, shape index: {}]
  %s4 = inlined_call_operand.vmem [shape: f32[1,768], index: 4, kind: input, shape index: {}]
  %s5 = inlined_call_operand.vmem [shape: bf16[16,768], index: 5, kind: output, shape index: {}]
  %s6 = sld [smem:[#allocation0]]
  $region30: #{transformer_decoder_forward.25} parent=0
    _
  %s8 = ssub.s32 1, %s6
  %s9 = scalar_select 0, %s8, %s6
  // Predicated region
  $region2: #{transformer_decoder_forward.25} parent=0 // pred_check
    _
  $region3: #{transformer_decoder_forward.25} parent=0 // pred_check_branch
    %11 = sbr.rel (0) target = $region5
  $region4: #{transformer_decoder_forward.25} parent=0 // pred_region
    _
  $region5: #{transformer_decoder_forward.25} parent=0 // pred_fallthru
    _
  // Predicated region
  $region6: #{transformer_decoder_forward.25} parent=0 // pred_check
    _
  $region7: #{transformer_decoder_forward.25} parent=0 // pred_check_branch
    %13 = sbr.rel (0) target = $region9
  $region8: #{transformer_decoder_forward.25} parent=0 // pred_region
    _
  $region9: #{transformer_decoder_forward.25} parent=0 // pred_fallthru
    _
  // Predicated region
  $region10: #{transformer_decoder_forward.25} parent=0 // pred_check
    _
  $region11: #{transformer_decoder_forward.25} parent=0 // pred_check_branch
    %15 = sbr.rel (0) target = $region13
  $region12: #{transformer_decoder_forward.25} parent=0 // pred_region
    _
  $region13: #{transformer_decoder_forward.25} parent=0 // pred_fallthru
    _
  // Predicated region
  $region14: #{transformer_decoder_forward.25} parent=0 // pred_check
    _
  $region15: #{transformer_decoder_forward.25} parent=0 // pred_check_branch
    %17 = sbr.rel (0) target = $region17
  $region16: #{transformer_decoder_forward.25} parent=0 // pred_region
    _
  $region17: #{transformer_decoder_forward.25} parent=0 // pred_fallthru
    _
  // Predicated region
  $region18: #{transformer_decoder_forward.25} parent=0 // pred_check
    _
  $region19: #{transformer_decoder_forward.25} parent=0 // pred_check_branch
    %19 = sbr.rel (0) target = $region21
  $region20: #{transformer_decoder_forward.25} parent=0 // pred_region
    _
  $region21: #{transformer_decoder_forward.25} parent=0 // pred_fallthru
    _
  %v20 = vld [vmem:[%s0] sm:$0xff]
  %v21 = vld [vmem:[%s0 + $0x8] sm:$0xff]
  %v22 = vunpack.c.l.bf16 %v20
  %v23 = vunpack.c.h.bf16 %v20
  %v24 = vunpack.c.l.bf16 %v21
  %v25 = vunpack.c.h.bf16 %v21
  %v26 = vadd.f32 %v22, %v23
  %27 = vadd.xlane.f32.xlu0 %v26
  %v28 = vpop.xlane.xlu0 %27
  %v29 = vadd.f32 %v24, %v25
  %30 = vadd.xlane.f32.xlu0 %v29
  %v31 = vpop.xlane.xlu0 %30
  %v32 = vrcp.pop 256.0
  %v33 = vmul.f32 %v28, %v32
  %v34 = vmul.f32 %v31, %v32
  %v35 = vsub.f32 %v22, %v33
  %v36 = vsub.f32 %v23, %v33
  %v37 = vsub.f32 %v24, %v34
  %v38 = vsub.f32 %v25, %v34
  %v39 = vmul.f32 %v35, %v35
  %v40 = vmul.f32 %v36, %v36
  %v41 = vmul.f32 %v37, %v37
  %v42 = vmul.f32 %v38, %v38
  %v43 = vadd.f32 %v39, %v40
  %44 = vadd.xlane.f32.xlu0 %v43
  %v45 = vpop.xlane.xlu0 %44
  %v46 = vadd.f32 %v41, %v42
  %47 = vadd.xlane.f32.xlu0 %v46
  %v48 = vpop.xlane.xlu0 %47
  %v49 = vmul.f32 %v45, %v32
  %v50 = vmul.f32 %v48, %v32
  %v51 = vadd.f32 %v49, 1e-06
  %v52 = vadd.f32 %v50, 1e-06
  %v53 = vrsqrt.pop %v51
  %v54 = vrsqrt.pop %v52
  %v55 = vmul.f32 %v35, %v53
  %v56 = vmul.f32 %v36, %v53
  %v57 = vmul.f32 %v37, %v54
  %v58 = vmul.f32 %v38, %v54
  %v59 = vld [vmem:[%s1] sm:$0x3]
  %v61 = vlaneseq
  %v62 = vshrl.u32 %v61, 7
  %v63 = vsub.s32 0, %v62
  %v64 = vrot.slane %v59, %v63
  %v65 = vlaneseq
  %v66 = vshrl.u32 %v65, 7
  %v67 = vsub.s32 1, %v66
  %v68 = vrot.slane %v59, %v67
  %v71 = vmul.f32 %v55, %v64
  %v72 = vmul.f32 %v56, %v68
  %v73 = vmul.f32 %v57, %v64
  %v74 = vmul.f32 %v58, %v68
  %v75 = vld [vmem:[%s2] sm:$0x3]
  %v77 = vlaneseq
  %v78 = vshrl.u32 %v77, 7
  %v79 = vsub.s32 0, %v78
  %v80 = vrot.slane %v75, %v79
  %v81 = vlaneseq
  %v82 = vshrl.u32 %v81, 7
  %v83 = vsub.s32 1, %v82
  %v84 = vrot.slane %v75, %v83
  %v87 = vadd.f32 %v71, %v80
  %v88 = vadd.f32 %v72, %v84
  %v89 = vadd.f32 %v73, %v80
  %v90 = vadd.f32 %v74, %v84
  %v91 = vpack.c.bf16 %v89, %v87
  %v92 = vpack.c.bf16 %v90, %v88
  %v93 = vld [vmem:[%s3] sm:$0xff]
  %v94 = vld [vmem:[%s3 + $0x8] sm:$0xff]
  %v95 = vld [vmem:[%s3 + $0x10] sm:$0xff]
  %v96 = vld [vmem:[%s3 + $0x18] sm:$0xff]
  %v97 = vld [vmem:[%s3 + $0x20] sm:$0xff]
  %v98 = vld [vmem:[%s3 + $0x28] sm:$0xff]
  %v99 = vld [vmem:[%s3 + $0x30] sm:$0xff]
  %v100 = vld [vmem:[%s3 + $0x38] sm:$0xff]
  %v101 = vld [vmem:[%s3 + $0x40] sm:$0xff]
  %v102 = vld [vmem:[%s3 + $0x48] sm:$0xff]
  %v103 = vld [vmem:[%s3 + $0x50] sm:$0xff]
  %v104 = vld [vmem:[%s3 + $0x58] sm:$0xff]
  %v105 = vld [vmem:[%s3 + $0x60] sm:$0xff]
  %v106 = vld [vmem:[%s3 + $0x68] sm:$0xff]
  %v107 = vld [vmem:[%s3 + $0x70] sm:$0xff]
  %v108 = vld [vmem:[%s3 + $0x78] sm:$0xff]
  %v109 = vld [vmem:[%s3 + $0x80] sm:$0xff]
  %v110 = vld [vmem:[%s3 + $0x88] sm:$0xff]
  %v111 = vld [vmem:[%s3 + $0x90] sm:$0xff]
  %v112 = vld [vmem:[%s3 + $0x98] sm:$0xff]
  %v113 = vld [vmem:[%s3 + $0xa0] sm:$0xff]
  %v114 = vld [vmem:[%s3 + $0xa8] sm:$0xff]
  %v115 = vld [vmem:[%s3 + $0xb0] sm:$0xff]
  %v116 = vld [vmem:[%s3 + $0xb8] sm:$0xff]
  %v117 = vld [vmem:[%s3 + $0xc0] sm:$0xff]
  %v118 = vld [vmem:[%s3 + $0xc8] sm:$0xff]
  %v119 = vld [vmem:[%s3 + $0xd0] sm:$0xff]
  %v120 = vld [vmem:[%s3 + $0xd8] sm:$0xff]
  %v121 = vld [vmem:[%s3 + $0xe0] sm:$0xff]
  %v122 = vld [vmem:[%s3 + $0xe8] sm:$0xff]
  %v123 = vld [vmem:[%s3 + $0xf0] sm:$0xff]
  %v124 = vld [vmem:[%s3 + $0xf8] sm:$0xff]
  %v125 = vld [vmem:[%s3 + $0x100] sm:$0xff]
  %v126 = vld [vmem:[%s3 + $0x108] sm:$0xff]
  %v127 = vld [vmem:[%s3 + $0x110] sm:$0xff]
  %v128 = vld [vmem:[%s3 + $0x118] sm:$0xff]
  %v129 = vld [vmem:[%s3 + $0x120] sm:$0xff]
  %v130 = vld [vmem:[%s3 + $0x128] sm:$0xff]
  %v131 = vld [vmem:[%s3 + $0x130] sm:$0xff]
  %v132 = vld [vmem:[%s3 + $0x138] sm:$0xff]
  %v133 = vld [vmem:[%s3 + $0x140] sm:$0xff]
  %v134 = vld [vmem:[%s3 + $0x148] sm:$0xff]
  %v135 = vld [vmem:[%s3 + $0x150] sm:$0xff]
  %v136 = vld [vmem:[%s3 + $0x158] sm:$0xff]
  %v137 = vld [vmem:[%s3 + $0x160] sm:$0xff]
  %v138 = vld [vmem:[%s3 + $0x168] sm:$0xff]
  %v139 = vld [vmem:[%s3 + $0x170] sm:$0xff]
  %v140 = vld [vmem:[%s3 + $0x178] sm:$0xff]
  %v141 = vld [vmem:[%s3 + $0x180] sm:$0xff]
  %v142 = vld [vmem:[%s3 + $0x188] sm:$0xff]
  %v143 = vld [vmem:[%s3 + $0x190] sm:$0xff]
  %v144 = vld [vmem:[%s3 + $0x198] sm:$0xff]
  %v145 = vld [vmem:[%s3 + $0x1a0] sm:$0xff]
  %v146 = vld [vmem:[%s3 + $0x1a8] sm:$0xff]
  %v147 = vld [vmem:[%s3 + $0x1b0] sm:$0xff]
  %v148 = vld [vmem:[%s3 + $0x1b8] sm:$0xff]
  %v149 = vld [vmem:[%s3 + $0x1c0] sm:$0xff]
  %v150 = vld [vmem:[%s3 + $0x1c8] sm:$0xff]
  %v151 = vld [vmem:[%s3 + $0x1d0] sm:$0xff]
  %v152 = vld [vmem:[%s3 + $0x1d8] sm:$0xff]
  %v153 = vld [vmem:[%s3 + $0x1e0] sm:$0xff]
  %v154 = vld [vmem:[%s3 + $0x1e8] sm:$0xff]
  %v155 = vld [vmem:[%s3 + $0x1f0] sm:$0xff]
  %v156 = vld [vmem:[%s3 + $0x1f8] sm:$0xff]
  %v157 = vld [vmem:[%s3 + $0x200] sm:$0xff]
  %v158 = vld [vmem:[%s3 + $0x208] sm:$0xff]
  %v159 = vld [vmem:[%s3 + $0x210] sm:$0xff]
  %v160 = vld [vmem:[%s3 + $0x218] sm:$0xff]
  %v161 = vld [vmem:[%s3 + $0x220] sm:$0xff]
  %v162 = vld [vmem:[%s3 + $0x228] sm:$0xff]
  %v163 = vld [vmem:[%s3 + $0x230] sm:$0xff]
  %v164 = vld [vmem:[%s3 + $0x238] sm:$0xff]
  %v165 = vld [vmem:[%s3 + $0x240] sm:$0xff]
  %v166 = vld [vmem:[%s3 + $0x248] sm:$0xff]
  %v167 = vld [vmem:[%s3 + $0x250] sm:$0xff]
  %v168 = vld [vmem:[%s3 + $0x258] sm:$0xff]
  %v169 = vld [vmem:[%s3 + $0x260] sm:$0xff]
  %v170 = vld [vmem:[%s3 + $0x268] sm:$0xff]
  %v171 = vld [vmem:[%s3 + $0x270] sm:$0xff]
  %v172 = vld [vmem:[%s3 + $0x278] sm:$0xff]
  %v173 = vld [vmem:[%s3 + $0x280] sm:$0xff]
  %v174 = vld [vmem:[%s3 + $0x288] sm:$0xff]
  %v175 = vld [vmem:[%s3 + $0x290] sm:$0xff]
  %v176 = vld [vmem:[%s3 + $0x298] sm:$0xff]
  %v177 = vld [vmem:[%s3 + $0x2a0] sm:$0xff]
  %v178 = vld [vmem:[%s3 + $0x2a8] sm:$0xff]
  %v179 = vld [vmem:[%s3 + $0x2b0] sm:$0xff]
  %v180 = vld [vmem:[%s3 + $0x2b8] sm:$0xff]
  %v181 = vld [vmem:[%s3 + $0x2c0] sm:$0xff]
  %v182 = vld [vmem:[%s3 + $0x2c8] sm:$0xff]
  %v183 = vld [vmem:[%s3 + $0x2d0] sm:$0xff]
  %v184 = vld [vmem:[%s3 + $0x2d8] sm:$0xff]
  %v185 = vld [vmem:[%s3 + $0x2e0] sm:$0xff]
  %v186 = vld [vmem:[%s3 + $0x2e8] sm:$0xff]
  %v187 = vld [vmem:[%s3 + $0x2f0] sm:$0xff]
  %v188 = vld [vmem:[%s3 + $0x2f8] sm:$0xff]
  %v189 = vld [vmem:[%s4] sm:$0x3f]
  %v191 = vlaneseq
  %v192 = vshrl.u32 %v191, 7
  %v193 = vsub.s32 0, %v192
  %v194 = vrot.slane %v189, %v193
  %v195 = vlaneseq
  %v196 = vshrl.u32 %v195, 7
  %v197 = vsub.s32 1, %v196
  %v198 = vrot.slane %v189, %v197
  %v199 = vlaneseq
  %v200 = vshrl.u32 %v199, 7
  %v201 = vsub.s32 2, %v200
  %v202 = vrot.slane %v189, %v201
  %v203 = vlaneseq
  %v204 = vshrl.u32 %v203, 7
  %v205 = vsub.s32 3, %v204
  %v206 = vrot.slane %v189, %v205
  %v207 = vlaneseq
  %v208 = vshrl.u32 %v207, 7
  %v209 = vsub.s32 4, %v208
  %v210 = vrot.slane %v189, %v209
  %v211 = vlaneseq
  %v212 = vshrl.u32 %v211, 7
  %v213 = vsub.s32 5, %v212
  %v214 = vrot.slane %v189, %v213
  %v317 = vunpack.c.l.b16 %v93
  %v318 = vunpack.c.h.b16 %v93
  %v319 = vunpack.c.l.b16 %v94
  %v320 = vunpack.c.h.b16 %v94
  %v321 = vunpack.c.l.b16 %v95
  %v322 = vunpack.c.h.b16 %v95
  %v323 = vunpack.c.l.b16 %v96
  %v324 = vunpack.c.h.b16 %v96
  %v325 = vunpack.c.l.b16 %v97
  %v326 = vunpack.c.h.b16 %v97
  %v327 = vunpack.c.l.b16 %v98
  %v328 = vunpack.c.h.b16 %v98
  %v329 = vunpack.c.l.b16 %v99
  %v330 = vunpack.c.h.b16 %v99
  %v331 = vunpack.c.l.b16 %v100
  %v332 = vunpack.c.h.b16 %v100
  %v333 = vunpack.c.l.b16 %v101
  %v334 = vunpack.c.h.b16 %v101
  %v335 = vunpack.c.l.b16 %v102
  %v336 = vunpack.c.h.b16 %v102
  %v337 = vunpack.c.l.b16 %v103
  %v338 = vunpack.c.h.b16 %v103
  %v339 = vunpack.c.l.b16 %v104
  %v340 = vunpack.c.h.b16 %v104
  %v341 = vunpack.c.l.b16 %v105
  %v342 = vunpack.c.h.b16 %v105
  %v343 = vunpack.c.l.b16 %v106
  %v344 = vunpack.c.h.b16 %v106
  %v345 = vunpack.c.l.b16 %v107
  %v346 = vunpack.c.h.b16 %v107
  %v347 = vunpack.c.l.b16 %v108
  %v348 = vunpack.c.h.b16 %v108
  %v349 = vunpack.c.l.b16 %v109
  %v350 = vunpack.c.h.b16 %v109
  %v351 = vunpack.c.l.b16 %v110
  %v352 = vunpack.c.h.b16 %v110
  %v353 = vunpack.c.l.b16 %v111
  %v354 = vunpack.c.h.b16 %v111
  %v355 = vunpack.c.l.b16 %v112
  %v356 = vunpack.c.h.b16 %v112
  %v357 = vunpack.c.l.b16 %v113
  %v358 = vunpack.c.h.b16 %v113
  %v359 = vunpack.c.l.b16 %v114
  %v360 = vunpack.c.h.b16 %v114
  %v361 = vunpack.c.l.b16 %v115
  %v362 = vunpack.c.h.b16 %v115
  %v363 = vunpack.c.l.b16 %v116
  %v364 = vunpack.c.h.b16 %v116
  %v365 = vunpack.c.l.b16 %v117
  %v366 = vunpack.c.h.b16 %v117
  %v367 = vunpack.c.l.b16 %v118
  %v368 = vunpack.c.h.b16 %v118
  %v369 = vunpack.c.l.b16 %v119
  %v370 = vunpack.c.h.b16 %v119
  %v371 = vunpack.c.l.b16 %v120
  %v372 = vunpack.c.h.b16 %v120
  %v373 = vunpack.c.l.b16 %v121
  %v374 = vunpack.c.h.b16 %v121
  %v375 = vunpack.c.l.b16 %v122
  %v376 = vunpack.c.h.b16 %v122
  %v377 = vunpack.c.l.b16 %v123
  %v378 = vunpack.c.h.b16 %v123
  %v379 = vunpack.c.l.b16 %v124
  %v380 = vunpack.c.h.b16 %v124
  %v381 = vunpack.c.l.b16 %v125
  %v382 = vunpack.c.h.b16 %v125
  %v383 = vunpack.c.l.b16 %v126
  %v384 = vunpack.c.h.b16 %v126
  %v385 = vunpack.c.l.b16 %v127
  %v386 = vunpack.c.h.b16 %v127
  %v387 = vunpack.c.l.b16 %v128
  %v388 = vunpack.c.h.b16 %v128
  %v389 = vunpack.c.l.b16 %v129
  %v390 = vunpack.c.h.b16 %v129
  %v391 = vunpack.c.l.b16 %v130
  %v392 = vunpack.c.h.b16 %v130
  %v393 = vunpack.c.l.b16 %v131
  %v394 = vunpack.c.h.b16 %v131
  %v395 = vunpack.c.l.b16 %v132
  %v396 = vunpack.c.h.b16 %v132
  %v397 = vunpack.c.l.b16 %v133
  %v398 = vunpack.c.h.b16 %v133
  %v399 = vunpack.c.l.b16 %v134
  %v400 = vunpack.c.h.b16 %v134
  %v401 = vunpack.c.l.b16 %v135
  %v402 = vunpack.c.h.b16 %v135
  %v403 = vunpack.c.l.b16 %v136
  %v404 = vunpack.c.h.b16 %v136
  %v405 = vunpack.c.l.b16 %v137
  %v406 = vunpack.c.h.b16 %v137
  %v407 = vunpack.c.l.b16 %v138
  %v408 = vunpack.c.h.b16 %v138
  %v409 = vunpack.c.l.b16 %v139
  %v410 = vunpack.c.h.b16 %v139
  %v411 = vunpack.c.l.b16 %v140
  %v412 = vunpack.c.h.b16 %v140
  %v413 = vunpack.c.l.b16 %v141
  %v414 = vunpack.c.h.b16 %v141
  %v415 = vunpack.c.l.b16 %v142
  %v416 = vunpack.c.h.b16 %v142
  %v417 = vunpack.c.l.b16 %v143
  %v418 = vunpack.c.h.b16 %v143
  %v419 = vunpack.c.l.b16 %v144
  %v420 = vunpack.c.h.b16 %v144
  %v421 = vunpack.c.l.b16 %v145
  %v422 = vunpack.c.h.b16 %v145
  %v423 = vunpack.c.l.b16 %v146
  %v424 = vunpack.c.h.b16 %v146
  %v425 = vunpack.c.l.b16 %v147
  %v426 = vunpack.c.h.b16 %v147
  %v427 = vunpack.c.l.b16 %v148
  %v428 = vunpack.c.h.b16 %v148
  %v429 = vunpack.c.l.b16 %v149
  %v430 = vunpack.c.h.b16 %v149
  %v431 = vunpack.c.l.b16 %v150
  %v432 = vunpack.c.h.b16 %v150
  %v433 = vunpack.c.l.b16 %v151
  %v434 = vunpack.c.h.b16 %v151
  %v435 = vunpack.c.l.b16 %v152
  %v436 = vunpack.c.h.b16 %v152
  %v437 = vunpack.c.l.b16 %v153
  %v438 = vunpack.c.h.b16 %v153
  %v439 = vunpack.c.l.b16 %v154
  %v440 = vunpack.c.h.b16 %v154
  %v441 = vunpack.c.l.b16 %v155
  %v442 = vunpack.c.h.b16 %v155
  %v443 = vunpack.c.l.b16 %v156
  %v444 = vunpack.c.h.b16 %v156
  %v445 = vunpack.c.l.b16 %v157
  %v446 = vunpack.c.h.b16 %v157
  %v447 = vunpack.c.l.b16 %v158
  %v448 = vunpack.c.h.b16 %v158
  %v449 = vunpack.c.l.b16 %v159
  %v450 = vunpack.c.h.b16 %v159
  %v451 = vunpack.c.l.b16 %v160
  %v452 = vunpack.c.h.b16 %v160
  %v453 = vunpack.c.l.b16 %v161
  %v454 = vunpack.c.h.b16 %v161
  %v455 = vunpack.c.l.b16 %v162
  %v456 = vunpack.c.h.b16 %v162
  %v457 = vunpack.c.l.b16 %v163
  %v458 = vunpack.c.h.b16 %v163
  %v459 = vunpack.c.l.b16 %v164
  %v460 = vunpack.c.h.b16 %v164
  %v461 = vunpack.c.l.b16 %v165
  %v462 = vunpack.c.h.b16 %v165
  %v463 = vunpack.c.l.b16 %v166
  %v464 = vunpack.c.h.b16 %v166
  %v465 = vunpack.c.l.b16 %v167
  %v466 = vunpack.c.h.b16 %v167
  %v467 = vunpack.c.l.b16 %v168
  %v468 = vunpack.c.h.b16 %v168
  %v469 = vunpack.c.l.b16 %v169
  %v470 = vunpack.c.h.b16 %v169
  %v471 = vunpack.c.l.b16 %v170
  %v472 = vunpack.c.h.b16 %v170
  %v473 = vunpack.c.l.b16 %v171
  %v474 = vunpack.c.h.b16 %v171
  %v475 = vunpack.c.l.b16 %v172
  %v476 = vunpack.c.h.b16 %v172
  %v477 = vunpack.c.l.b16 %v173
  %v478 = vunpack.c.h.b16 %v173
  %v479 = vunpack.c.l.b16 %v174
  %v480 = vunpack.c.h.b16 %v174
  %v481 = vunpack.c.l.b16 %v175
  %v482 = vunpack.c.h.b16 %v175
  %v483 = vunpack.c.l.b16 %v176
  %v484 = vunpack.c.h.b16 %v176
  %v485 = vunpack.c.l.b16 %v177
  %v486 = vunpack.c.h.b16 %v177
  %v487 = vunpack.c.l.b16 %v178
  %v488 = vunpack.c.h.b16 %v178
  %v489 = vunpack.c.l.b16 %v179
  %v490 = vunpack.c.h.b16 %v179
  %v491 = vunpack.c.l.b16 %v180
  %v492 = vunpack.c.h.b16 %v180
  %v493 = vunpack.c.l.b16 %v181
  %v494 = vunpack.c.h.b16 %v181
  %v495 = vunpack.c.l.b16 %v182
  %v496 = vunpack.c.h.b16 %v182
  %v497 = vunpack.c.l.b16 %v183
  %v498 = vunpack.c.h.b16 %v183
  %v499 = vunpack.c.l.b16 %v184
  %v500 = vunpack.c.h.b16 %v184
  %v501 = vunpack.c.l.b16 %v185
  %v502 = vunpack.c.h.b16 %v185
  %v503 = vunpack.c.l.b16 %v186
  %v504 = vunpack.c.h.b16 %v186
  %v505 = vunpack.c.l.b16 %v187
  %v506 = vunpack.c.h.b16 %v187
  %v507 = vunpack.c.l.b16 %v188
  %v508 = vunpack.c.h.b16 %v188
  %v509 = vpack.c.b16 %v323, %v317
  %v510 = vpack.c.b16 %v324, %v318
  %v511 = vpack.c.b16 %v325, %v319
  %v512 = vpack.c.b16 %v326, %v320
  %v513 = vpack.c.b16 %v327, %v321
  %v514 = vpack.c.b16 %v328, %v322
  %v515 = vpack.c.b16 %v335, %v329
  %v516 = vpack.c.b16 %v336, %v330
  %v517 = vpack.c.b16 %v337, %v331
  %v518 = vpack.c.b16 %v338, %v332
  %v519 = vpack.c.b16 %v339, %v333
  %v520 = vpack.c.b16 %v340, %v334
  %v521 = vpack.c.b16 %v347, %v341
  %v522 = vpack.c.b16 %v348, %v342
  %v523 = vpack.c.b16 %v349, %v343
  %v524 = vpack.c.b16 %v350, %v344
  %v525 = vpack.c.b16 %v351, %v345
  %v526 = vpack.c.b16 %v352, %v346
  %v527 = vpack.c.b16 %v359, %v353
  %v528 = vpack.c.b16 %v360, %v354
  %v529 = vpack.c.b16 %v361, %v355
  %v530 = vpack.c.b16 %v362, %v356
  %v531 = vpack.c.b16 %v363, %v357
  %v532 = vpack.c.b16 %v364, %v358
  %v533 = vpack.c.b16 %v371, %v365
  %v534 = vpack.c.b16 %v372, %v366
  %v535 = vpack.c.b16 %v373, %v367
  %v536 = vpack.c.b16 %v374, %v368
  %v537 = vpack.c.b16 %v375, %v369
  %v538 = vpack.c.b16 %v376, %v370
  %v539 = vpack.c.b16 %v383, %v377
  %v540 = vpack.c.b16 %v384, %v378
  %v541 = vpack.c.b16 %v385, %v379
  %v542 = vpack.c.b16 %v386, %v380
  %v543 = vpack.c.b16 %v387, %v381
  %v544 = vpack.c.b16 %v388, %v382
  %v545 = vpack.c.b16 %v395, %v389
  %v546 = vpack.c.b16 %v396, %v390
  %v547 = vpack.c.b16 %v397, %v391
  %v548 = vpack.c.b16 %v398, %v392
  %v549 = vpack.c.b16 %v399, %v393
  %v550 = vpack.c.b16 %v400, %v394
  %v551 = vpack.c.b16 %v407, %v401
  %v552 = vpack.c.b16 %v408, %v402
  %v553 = vpack.c.b16 %v409, %v403
  %v554 = vpack.c.b16 %v410, %v404
  %v555 = vpack.c.b16 %v411, %v405
  %v556 = vpack.c.b16 %v412, %v406
  %v557 = vpack.c.b16 %v419, %v413
  %v558 = vpack.c.b16 %v420, %v414
  %v559 = vpack.c.b16 %v421, %v415
  %v560 = vpack.c.b16 %v422, %v416
  %v561 = vpack.c.b16 %v423, %v417
  %v562 = vpack.c.b16 %v424, %v418
  %v563 = vpack.c.b16 %v431, %v425
  %v564 = vpack.c.b16 %v432, %v426
  %v565 = vpack.c.b16 %v433, %v427
  %v566 = vpack.c.b16 %v434, %v428
  %v567 = vpack.c.b16 %v435, %v429
  %v568 = vpack.c.b16 %v436, %v430
  %v569 = vpack.c.b16 %v443, %v437
  %v570 = vpack.c.b16 %v444, %v438
  %v571 = vpack.c.b16 %v445, %v439
  %v572 = vpack.c.b16 %v446, %v440
  %v573 = vpack.c.b16 %v447, %v441
  %v574 = vpack.c.b16 %v448, %v442
  %v575 = vpack.c.b16 %v455, %v449
  %v576 = vpack.c.b16 %v456, %v450
  %v577 = vpack.c.b16 %v457, %v451
  %v578 = vpack.c.b16 %v458, %v452
  %v579 = vpack.c.b16 %v459, %v453
  %v580 = vpack.c.b16 %v460, %v454
  %v581 = vpack.c.b16 %v467, %v461
  %v582 = vpack.c.b16 %v468, %v462
  %v583 = vpack.c.b16 %v469, %v463
  %v584 = vpack.c.b16 %v470, %v464
  %v585 = vpack.c.b16 %v471, %v465
  %v586 = vpack.c.b16 %v472, %v466
  %v587 = vpack.c.b16 %v479, %v473
  %v588 = vpack.c.b16 %v480, %v474
  %v589 = vpack.c.b16 %v481, %v475
  %v590 = vpack.c.b16 %v482, %v476
  %v591 = vpack.c.b16 %v483, %v477
  %v592 = vpack.c.b16 %v484, %v478
  %v593 = vpack.c.b16 %v491, %v485
  %v594 = vpack.c.b16 %v492, %v486
  %v595 = vpack.c.b16 %v493, %v487
  %v596 = vpack.c.b16 %v494, %v488
  %v597 = vpack.c.b16 %v495, %v489
  %v598 = vpack.c.b16 %v496, %v490
  %v599 = vpack.c.b16 %v503, %v497
  %v600 = vpack.c.b16 %v504, %v498
  %v601 = vpack.c.b16 %v505, %v499
  %v602 = vpack.c.b16 %v506, %v500
  %v603 = vpack.c.b16 %v507, %v501
  %v604 = vpack.c.b16 %v508, %v502
  %701 = vmatprep.subr.bf16.mxu0 %v552
  %702 = vmatpush1.bf16.msra.mxu0 %v551
  %703 = vmatprep.subr.bf16.mxu0 %v546
  %704 = vmatpush1.bf16.msra.mxu0 %v545
  %705 = vmatprep.subr.bf16.mxu0 %v540
  %706 = vmatpush1.bf16.msra.mxu0 %v539
  %707 = vmatprep.subr.bf16.mxu0 %v534
  %708 = vmatpush1.bf16.msra.mxu0 %v533
  %709 = vmatprep.subr.bf16.mxu0 %v528
  %710 = vmatpush1.bf16.msra.mxu0 %v527
  %711 = vmatprep.subr.bf16.mxu0 %v522
  %712 = vmatpush1.bf16.msra.mxu0 %v521
  %713 = vmatprep.subr.bf16.mxu0 %v516
  %714 = vmatpush1.bf16.msra.mxu0 %v515
  %715 = vmatprep.subr.bf16.mxu0 %v510
  %716 = vmatpush1.bf16.msra.mxu0 %v509
  %717 = vmatprep.subr.bf16.mxu0 %v600
  %718 = vmatpush2.bf16.msra.mxu0 %v599
  %719 = vmatprep.subr.bf16.mxu0 %v594
  %720 = vmatpush2.bf16.msra.mxu0 %v593
  %721 = vmatprep.subr.bf16.mxu0 %v588
  %722 = vmatpush2.bf16.msra.mxu0 %v587
  %723 = vmatprep.subr.bf16.mxu0 %v582
  %724 = vmatpush2.bf16.msra.mxu0 %v581
  %725 = vmatprep.subr.bf16.mxu0 %v576
  %726 = vmatpush2.bf16.msra.mxu0 %v575
  %727 = vmatprep.subr.bf16.mxu0 %v570
  %728 = vmatpush2.bf16.msra.mxu0 %v569
  %729 = vmatprep.subr.bf16.mxu0 %v564
  %730 = vmatpush2.bf16.msra.mxu0 %v563
  %731 = vmatprep.subr.bf16.mxu0 %v558
  %732 = vmatpush2.bf16.msra.mxu0 %v557
  %733 = vmatprep.mubr.bf16.mxu0 %v92
  %734 = vmatmul.mubr.bf16.gmra.mxu0 %v91
  %v735 = vpop.f32.mrf.mxu0
  %v736 = vadd.f32 %v194, %v735
  %v737 = vpop.f32.mrf.mxu0
  %v738 = vadd.f32 %v198, %v737
  %v739 = vpop.f32.mrf.mxu0
  %v740 = vadd.f32 %v194, %v739
  %v741 = vpop.f32.mrf.mxu0
  %v742 = vadd.f32 %v198, %v741
  %743 = vdwg.mxu0
  %744 = vmatprep.subr.bf16.mxu0 %v554
  %745 = vmatpush1.bf16.msra.mxu0 %v553
  %746 = vmatprep.subr.bf16.mxu0 %v548
  %747 = vmatpush1.bf16.msra.mxu0 %v547
  %748 = vmatprep.subr.bf16.mxu0 %v542
  %749 = vmatpush1.bf16.msra.mxu0 %v541
  %750 = vmatprep.subr.bf16.mxu0 %v536
  %751 = vmatpush1.bf16.msra.mxu0 %v535
  %752 = vmatprep.subr.bf16.mxu0 %v530
  %753 = vmatpush1.bf16.msra.mxu0 %v529
  %754 = vmatprep.subr.bf16.mxu0 %v524
  %755 = vmatpush1.bf16.msra.mxu0 %v523
  %756 = vmatprep.subr.bf16.mxu0 %v518
  %757 = vmatpush1.bf16.msra.mxu0 %v517
  %758 = vmatprep.subr.bf16.mxu0 %v512
  %759 = vmatpush1.bf16.msra.mxu0 %v511
  %760 = vmatprep.subr.bf16.mxu0 %v602
  %761 = vmatpush2.bf16.msra.mxu0 %v601
  %762 = vmatprep.subr.bf16.mxu0 %v596
  %763 = vmatpush2.bf16.msra.mxu0 %v595
  %764 = vmatprep.subr.bf16.mxu0 %v590
  %765 = vmatpush2.bf16.msra.mxu0 %v589
  %766 = vmatprep.subr.bf16.mxu0 %v584
  %767 = vmatpush2.bf16.msra.mxu0 %v583
  %768 = vmatprep.subr.bf16.mxu0 %v578
  %769 = vmatpush2.bf16.msra.mxu0 %v577
  %770 = vmatprep.subr.bf16.mxu0 %v572
  %771 = vmatpush2.bf16.msra.mxu0 %v571
  %772 = vmatprep.subr.bf16.mxu0 %v566
  %773 = vmatpush2.bf16.msra.mxu0 %v565
  %774 = vmatprep.subr.bf16.mxu0 %v560
  %775 = vmatpush2.bf16.msra.mxu0 %v559
  %776 = vmatprep.mubr.bf16.mxu0 %v92
  %777 = vmatmul.mubr.bf16.gmra.mxu0 %v91
  %v778 = vpop.f32.mrf.mxu0
  %v779 = vadd.f32 %v202, %v778
  %v780 = vpop.f32.mrf.mxu0
  %v781 = vadd.f32 %v206, %v780
  %v782 = vpop.f32.mrf.mxu0
  %v783 = vadd.f32 %v202, %v782
  %v784 = vpop.f32.mrf.mxu0
  %v785 = vadd.f32 %v206, %v784
  %786 = vdwg.mxu0
  %787 = vmatprep.subr.bf16.mxu0 %v556
  %788 = vmatpush1.bf16.msra.mxu0 %v555
  %789 = vmatprep.subr.bf16.mxu0 %v550
  %790 = vmatpush1.bf16.msra.mxu0 %v549
  %791 = vmatprep.subr.bf16.mxu0 %v544
  %792 = vmatpush1.bf16.msra.mxu0 %v543
  %793 = vmatprep.subr.bf16.mxu0 %v538
  %794 = vmatpush1.bf16.msra.mxu0 %v537
  %795 = vmatprep.subr.bf16.mxu0 %v532
  %796 = vmatpush1.bf16.msra.mxu0 %v531
  %797 = vmatprep.subr.bf16.mxu0 %v526
  %798 = vmatpush1.bf16.msra.mxu0 %v525
  %799 = vmatprep.subr.bf16.mxu0 %v520
  %800 = vmatpush1.bf16.msra.mxu0 %v519
  %801 = vmatprep.subr.bf16.mxu0 %v514
  %802 = vmatpush1.bf16.msra.mxu0 %v513
  %803 = vmatprep.subr.bf16.mxu0 %v604
  %804 = vmatpush2.bf16.msra.mxu0 %v603
  %805 = vmatprep.subr.bf16.mxu0 %v598
  %806 = vmatpush2.bf16.msra.mxu0 %v597
  %807 = vmatprep.subr.bf16.mxu0 %v592
  %808 = vmatpush2.bf16.msra.mxu0 %v591
  %809 = vmatprep.subr.bf16.mxu0 %v586
  %810 = vmatpush2.bf16.msra.mxu0 %v585
  %811 = vmatprep.subr.bf16.mxu0 %v580
  %812 = vmatpush2.bf16.msra.mxu0 %v579
  %813 = vmatprep.subr.bf16.mxu0 %v574
  %814 = vmatpush2.bf16.msra.mxu0 %v573
  %815 = vmatprep.subr.bf16.mxu0 %v568
  %816 = vmatpush2.bf16.msra.mxu0 %v567
  %817 = vmatprep.subr.bf16.mxu0 %v562
  %818 = vmatpush2.bf16.msra.mxu0 %v561
  %819 = vmatprep.mubr.bf16.mxu0 %v92
  %820 = vmatmul.mubr.bf16.gmra.mxu0 %v91
  %v821 = vpop.f32.mrf.mxu0
  %v822 = vadd.f32 %v210, %v821
  %v823 = vpop.f32.mrf.mxu0
  %v824 = vadd.f32 %v214, %v823
  %v825 = vpop.f32.mrf.mxu0
  %v826 = vadd.f32 %v210, %v825
  %v827 = vpop.f32.mrf.mxu0
  %v828 = vadd.f32 %v214, %v827
  %829 = vdwg.mxu0
  %v830 = vpack.c.bf16 %v740, %v736
  %v831 = vpack.c.bf16 %v742, %v738
  %v832 = vpack.c.bf16 %v783, %v779
  %v833 = vpack.c.bf16 %v785, %v781
  %v834 = vpack.c.bf16 %v826, %v822
  %v835 = vpack.c.bf16 %v828, %v824
  %v842 = vunpack.c.l.b16 %v830
  %v843 = vunpack.c.l.b16 %v831
  %v844 = vunpack.c.l.b16 %v832
  %v845 = vunpack.c.l.b16 %v833
  %v846 = vunpack.c.l.b16 %v834
  %v847 = vunpack.c.l.b16 %v835
  %v848 = vunpack.c.h.b16 %v830
  %v849 = vunpack.c.h.b16 %v831
  %v850 = vunpack.c.h.b16 %v832
  %v851 = vunpack.c.h.b16 %v833
  %v852 = vunpack.c.h.b16 %v834
  %v853 = vunpack.c.h.b16 %v835
  %v854 = vpack.c.b16 %v843, %v842
  %v855 = vpack.c.b16 %v845, %v844
  %v856 = vpack.c.b16 %v847, %v846
  %v857 = vpack.c.b16 %v849, %v848
  %v858 = vpack.c.b16 %v851, %v850
  %v859 = vpack.c.b16 %v853, %v852
  %866 = vst [vmem:[%s5] sm:$0xff] %v854
  %867 = vst [vmem:[%s5 + $0x8] sm:$0xff] %v855
  %868 = vst [vmem:[%s5 + $0x10] sm:$0xff] %v856
  %869 = vst [vmem:[%s5 + $0x18] sm:$0xff] %v857
  %870 = vst [vmem:[%s5 + $0x20] sm:$0xff] %v858
  %871 = vst [vmem:[%s5 + $0x28] sm:$0xff] %v859
  // Predicated region
  $region22: #{transformer_decoder_forward.25} parent=0 // pred_check
    _
  $region23: #{transformer_decoder_forward.25} parent=0 // pred_check_branch
    %873 = sbr.rel (0) target = $region25
  $region24: #{transformer_decoder_forward.25} parent=0 // pred_region
    _
  $region25: #{transformer_decoder_forward.25} parent=0 // pred_fallthru
    _
  // Predicated region
  $region26: #{transformer_decoder_forward.25} parent=0 // pred_check
    _
  $region27: #{transformer_decoder_forward.25} parent=0 // pred_check_branch
    %875 = sbr.rel (0) target = $region29
  $region28: #{transformer_decoder_forward.25} parent=0 // pred_region
    _
  $region29: #{transformer_decoder_forward.25} parent=0 // pred_fallthru
    _

</llo_original>
